<compile_context>
chip_gen: v7x
topology: tpu7x:2x2x1
jax: 0.10.0
libtpu: 0.0.40
codegen_flags: <defaults>
</compile_context>

<pallas_src>
import functools

import jax
import jax.numpy as jnp
import numpy as np
from jax import lax
from jax.experimental import pallas as pl
from jax.experimental.pallas import tpu as pltpu

BN_EPS = 1e-5


# ---------------------------------------------------------------------------
# In-kernel helpers (traced inside the Pallas kernel bodies)
# ---------------------------------------------------------------------------
def _zero_border_write_interior(pad_ref, interior):
    """pad_ref: VMEM scratch (H+2, W+2, C). Zero ONLY the 1-px border, write interior."""
    Hp, Wp, C = pad_ref.shape
    zrow = jnp.zeros((1, Wp, C), pad_ref.dtype)
    zcol = jnp.zeros((Hp, 1, C), pad_ref.dtype)
    pad_ref[0:1, :, :] = zrow
    pad_ref[Hp - 1:Hp, :, :] = zrow
    pad_ref[:, 0:1, :] = zcol
    pad_ref[:, Wp - 1:Wp, :] = zcol
    pad_ref[1:Hp - 1, 1:Wp - 1, :] = interior.astype(pad_ref.dtype)


def _conv3x3(xpad_ref, w, b, stride, Ho, Wo):
    """3x3 conv on a zero-padded VMEM tile (read straight from the scratch ref).

    xpad_ref: (Hp, Wp, C) f32 padded-input scratch ref, w: (3,3,C,Cout) bf16,
    b: (1, Cout) f32.  Returns (Ho*Wo, Cout) f32 (bf16 MXU operands, f32 accumulate).
    """
    C = xpad_ref.shape[-1]
    Cout = w.shape[-1]
    xp_full = None if stride == 1 else xpad_ref[...]   # strided path loads once

    def tap(kh, kw):
        if stride == 1:
            t = xpad_ref[kh:kh + Ho, kw:kw + Wo, :]
        else:
            t = lax.slice(
                xp_full, (kh, kw, 0),
                (kh + (Ho - 1) * stride + 1, kw + (Wo - 1) * stride + 1, C),
                (stride, stride, 1))
        return t.reshape(Ho * Wo, C).astype(jnp.bfloat16)

    if C % 128 == 0:
        # Lane-aligned channels (real ResNet widths): true im2col -> a single
        # wide-K (K = 9*C) MXU matmul, ~9x fewer MXU pushes/pops.
        patches = jnp.concatenate(
            [tap(kh, kw) for kh in range(3) for kw in range(3)], axis=-1)
        w_flat = jnp.concatenate(
            [w[kh, kw] for kh in range(3) for kw in range(3)], axis=0)
        acc = jnp.dot(patches, w_flat, preferred_element_type=jnp.float32)
    else:
        # Small / unaligned C (toy shapes): one MXU push per tap, f32 accumulator.
        acc = jnp.zeros((Ho * Wo, Cout), jnp.float32)
        for kh in range(3):
            for kw in range(3):
                acc = acc + jnp.dot(tap(kh, kw), w[kh, kw],
                                    preferred_element_type=jnp.float32)
    return acc + b


def _store_partial_stats(st_ref, y):
    """st_ref block: (1, 2, C).  Row 0 = per-channel sum, row 1 = sum of squares."""
    C = st_ref.shape[-1]
    st_ref[:, 0:1, :] = jnp.sum(y, axis=0, keepdims=True).reshape(1, 1, C)
    st_ref[:, 1:2, :] = jnp.sum(y * y, axis=0, keepdims=True).reshape(1, 1, C)


# ---------------------------------------------------------------------------
# Stage 1: conv1 (3x3, stride) [+ 1x1 projection shortcut] + BN partial sums
# ---------------------------------------------------------------------------
def _stage1_proj_kernel(x_ref, w1_ref, b1_ref, ws_ref, bs_ref,
                        y1_ref, sraw_ref, st1_ref, sts_ref, xpad_ref,
                        *, stride, Ho, Wo):
    Cin = x_ref.shape[-1]
    Cout = y1_ref.shape[-1]
    HW = Ho * Wo
    x = x_ref[0]                                        # (H, W, Cin) f32

    _zero_border_write_interior(xpad_ref, x)
    y1 = _conv3x3(xpad_ref, w1_ref[...], b1_ref[...], stride, Ho, Wo)
    y1_ref[...] = y1.reshape(1, HW, Cout).astype(y1_ref.dtype)    # bf16 to HBM
    _store_partial_stats(st1_ref, y1)                             # stats from f32

    # shortcut: 1x1 conv with stride (projection)
    if stride == 1:
        xs = x
    else:
        xs = lax.slice(x, (0, 0, 0),
                       ((Ho - 1) * stride + 1, (Wo - 1) * stride + 1, Cin),
                       (stride, stride, 1))
    sc = jnp.dot(xs.reshape(HW, Cin).astype(jnp.bfloat16), ws_ref[...],
                 preferred_element_type=jnp.float32) + bs_ref[...]
    sraw_ref[...] = sc.reshape(1, HW, Cout).astype(sraw_ref.dtype)
    _store_partial_stats(sts_ref, sc)


def _stage1_id_kernel(x_ref, w1_ref, b1_ref,
                      y1_ref, st1_ref, xpad_ref, *, Ho, Wo):
    # Identity shortcut: nothing to compute/store for the shortcut branch here —
    # stage 3 reads the original input directly (stride==1 enforced by the wrapper).
    Cout = y1_ref.shape[-1]
    HW = Ho * Wo
    _zero_border_write_interior(xpad_ref, x_ref[0])
    y1 = _conv3x3(xpad_ref, w1_ref[...], b1_ref[...], 1, Ho, Wo)
    y1_ref[...] = y1.reshape(1, HW, Cout).astype(y1_ref.dtype)
    _store_partial_stats(st1_ref, y1)


# ---------------------------------------------------------------------------
# Stage 2: BN1 normalize + ReLU -> conv2 (3x3, stride 1) + BN2 partial sums
# ---------------------------------------------------------------------------
def _stage2_kernel(y1_ref, scale1_ref, shift1_ref, w2_ref, b2_ref,
                   y2_ref, st2_ref, hpad_ref, *, Ho, Wo):
    Cout = y2_ref.shape[-1]
    HW = Ho * Wo
    # fused BN1 (precomputed scale/shift) + ReLU, single pass over the tile (f32 math)
    h1 = jnp.maximum(
        y1_ref[0].astype(jnp.float32) * scale1_ref[...] + shift1_ref[...], 0.0)

    _zero_border_write_interior(hpad_ref, h1.reshape(Ho, Wo, Cout))
    y2 = _conv3x3(hpad_ref, w2_ref[...], b2_ref[...], 1, Ho, Wo)
    y2_ref[...] = y2.reshape(1, HW, Cout).astype(y2_ref.dtype)
    _store_partial_stats(st2_ref, y2)


# ---------------------------------------------------------------------------
# Stage 3: BN2 (+ BN_shortcut) + residual add + ReLU  (pure elementwise)
# ---------------------------------------------------------------------------
def _stage3_proj_kernel(y2_ref, sraw_ref, scale2_ref, scales_ref, shift_ref, out_ref):
    # shift_ref = shift2 + shift_shortcut, folded on the host.
    y2n = y2_ref[0].astype(jnp.float32) * scale2_ref[...]
    scn = sraw_ref[0].astype(jnp.float32) * scales_ref[...]
    out_ref[...] = jnp.maximum(y2n + scn + shift_ref[...], 0.0).reshape(out_ref.shape)


def _stage3_id_kernel(y2_ref, x_ref, scale2_ref, shift2_ref, out_ref):
    y2n = y2_ref[0].astype(jnp.float32) * scale2_ref[...] + shift2_ref[...]
    out_ref[...] = jnp.maximum(y2n + x_ref[0], 0.0).reshape(out_ref.shape)


# ---------------------------------------------------------------------------
# Host-side glue: combine per-image BN partial sums into per-channel scale/shift
# ---------------------------------------------------------------------------
def _bn_affine(stats, gamma, beta, count):
    """stats: (B, 2, C) per-image [sum, sum_sq].  Returns (1, C) f32 scale, shift."""
    total = jnp.sum(stats.astype(jnp.float32), axis=0)        # (2, C)
    mean = total[0] / count
    var = total[1] / count - mean * mean                       # biased var (training BN)
    scale = gamma.astype(jnp.float32) * lax.rsqrt(var + BN_EPS)
    shift = beta.astype(jnp.float32) - mean * scale
    return scale.reshape(1, -1), shift.reshape(1, -1)


# ---------------------------------------------------------------------------
# Wrapper: NCHW <-> NHWC glue + the three pallas_calls
# ---------------------------------------------------------------------------
def residual_block_pallas(x_nchw, params, stride=1):
    Cin = x_nchw.shape[1]
    Cout = params["w1"].shape[-1]
    use_projection = Cin != Cout
    if not use_projection and stride != 1:
        # The PyTorch module only builds a projection when channels change; with an
        # identity shortcut and stride != 1 its forward would fail the residual add.
        raise ValueError("identity shortcut requires stride == 1")

    x = jnp.transpose(x_nchw, (0, 2, 3, 1)).astype(jnp.float32)     # NCHW -> NHWC
    B, H, W, _ = x.shape
    Ho = (H - 1) // stride + 1
    Wo = (W - 1) // stride + 1
    HW = Ho * Wo
    count = float(B * HW)
    f32 = jnp.float32
    bf16 = jnp.bfloat16

    # weights as bf16 MXU operands (halves weight DMA too); biases stay f32
    w1 = params["w1"].astype(bf16)
    w2 = params["w2"].astype(bf16)
    b1 = params["b1"].reshape(1, Cout).astype(f32)
    b2 = params["b2"].reshape(1, Cout).astype(f32)

    cparams = pltpu.CompilerParams(
        dimension_semantics=("parallel",),          # shard batch over v7x's 2 TCs
        vmem_limit_bytes=48 * 1024 * 1024,          # explicit budget (< v7x 64 MiB)
    )

    row_spec = pl.BlockSpec((1, HW, Cout), lambda b: (b, 0, 0))
    stat_spec = pl.BlockSpec((1, 2, Cout), lambda b: (b, 0, 0))
    vecc_spec = pl.BlockSpec((1, Cout), lambda b: (0, 0))

    s1_common_in = [
        pl.BlockSpec((1, H, W, Cin), lambda b: (b, 0, 0, 0)),       # x (per-image tile)
        pl.BlockSpec((3, 3, Cin, Cout), lambda b: (0, 0, 0, 0)),    # w1
        vecc_spec,                                                  # b1
    ]
    s1_scratch = [pltpu.VMEM((H + 2, W + 2, Cin), f32)]             # halo scratch

    # ---- stage 1: conv1 (+ projection shortcut) + BN partial sums -------------------
    if use_projection:
        ws = params["ws"].astype(bf16)
        bs = params["bs"].reshape(1, Cout).astype(f32)
        y1_raw, s_raw, st1, sts = pl.pallas_call(
            functools.partial(_stage1_proj_kernel, stride=stride, Ho=Ho, Wo=Wo),
            grid=(B,),
            in_specs=s1_common_in + [
                pl.BlockSpec((Cin, Cout), lambda b: (0, 0)),        # ws
                vecc_spec,                                          # bs
            ],
            out_specs=(row_spec, row_spec, stat_spec, stat_spec),
            out_shape=(
                jax.ShapeDtypeStruct((B, HW, Cout), bf16),  # conv1 output (pre-BN)
                jax.ShapeDtypeStruct((B, HW, Cout), bf16),  # shortcut output (pre-BN)
                jax.ShapeDtypeStruct((B, 2, Cout), f32),    # BN1 partial sums
                jax.ShapeDtypeStruct((B, 2, Cout), f32),    # BN_shortcut partial sums
            ),
            scratch_shapes=s1_scratch,
            compiler_params=cparams,
        )(x, w1, b1, ws, bs)
        scale_s, shift_s = _bn_affine(sts, params["gs"], params["bes"], count)
    else:
        y1_raw, st1 = pl.pallas_call(
            functools.partial(_stage1_id_kernel, Ho=Ho, Wo=Wo),
            grid=(B,),
            in_specs=s1_common_in,
            out_specs=(row_spec, stat_spec),
            out_shape=(
                jax.ShapeDtypeStruct((B, HW, Cout), bf16),
                jax.ShapeDtypeStruct((B, 2, Cout), f32),
            ),
            scratch_shapes=s1_scratch,
            compiler_params=cparams,
        )(x, w1, b1)

    scale1, shift1 = _bn_affine(st1, params["g1"], params["be1"], count)

    # ---- stage 2: BN1+ReLU -> conv2 + BN2 partial sums -------------------------------
    y2_raw, st2 = pl.pallas_call(
        functools.partial(_stage2_kernel, Ho=Ho, Wo=Wo),
        grid=(B,),
        in_specs=[row_spec, vecc_spec, vecc_spec,
                  pl.BlockSpec((3, 3, Cout, Cout), lambda b: (0, 0, 0, 0)),
                  vecc_spec],
        out_specs=(row_spec, stat_spec),
        out_shape=(jax.ShapeDtypeStruct((B, HW, Cout), bf16),
                   jax.ShapeDtypeStruct((B, 2, Cout), f32)),
        scratch_shapes=[pltpu.VMEM((Ho + 2, Wo + 2, Cout), f32)],
        compiler_params=cparams,
    )(y1_raw, scale1, shift1, w2, b2)

    scale2, shift2 = _bn_affine(st2, params["g2"], params["be2"], count)

    # ---- stage 3: BN finalize + residual add + ReLU (elementwise) --------------------
    # Channels stay minor: at real ResNet widths (C multiples of 128) these loads/stores
    # are lane-dense; at the toy C=8 the stores are unavoidably masked.
    if use_projection:
        shift_comb = shift2 + shift_s            # fold the two BN shifts into one
        out_flat = pl.pallas_call(
            _stage3_proj_kernel,
            grid=(B,),
            in_specs=[row_spec, row_spec, vecc_spec, vecc_spec, vecc_spec],
            out_specs=row_spec,
            out_shape=jax.ShapeDtypeStruct((B, HW, Cout), f32),
            compiler_params=cparams,
        )(y2_raw, s_raw, scale2, scale_s, shift_comb)
    else:
        # Identity shortcut: feed the original input straight into stage 3 —
        # no extra HBM write of the shortcut tensor in stage 1.
        x_flat = x.reshape(B, HW, Cin)
        out_flat = pl.pallas_call(
            _stage3_id_kernel,
            grid=(B,),
            in_specs=[row_spec, row_spec, vecc_spec, vecc_spec],
            out_specs=row_spec,
            out_shape=jax.ShapeDtypeStruct((B, HW, Cout), f32),
            compiler_params=cparams,
        )(y2_raw, x_flat, scale2, shift2)

    out = out_flat.reshape(B, Ho, Wo, Cout)
    return jnp.transpose(out, (0, 3, 1, 2))                         # NHWC -> NCHW


# ---------------------------------------------------------------------------
# Deterministic parameter init (shapes from the nn.Module __init__)
# ---------------------------------------------------------------------------
def init_params(key, in_channels, out_channels):
    ks = jax.random.split(key, 12)
    p = {
        "w1": 0.1 * jax.random.normal(ks[0], (3, 3, in_channels, out_channels), jnp.float32),
        "b1": 0.1 * jax.random.normal(ks[1], (out_channels,), jnp.float32),
        "g1": 1.0 + 0.1 * jax.random.normal(ks[2], (out_channels,), jnp.float32),
        "be1": 0.1 * jax.random.normal(ks[3], (out_channels,), jnp.float32),
        "w2": 0.1 * jax.random.normal(ks[4], (3, 3, out_channels, out_channels), jnp.float32),
        "b2": 0.1 * jax.random.normal(ks[5], (out_channels,), jnp.float32),
        "g2": 1.0 + 0.1 * jax.random.normal(ks[6], (out_channels,), jnp.float32),
        "be2": 0.1 * jax.random.normal(ks[7], (out_channels,), jnp.float32),
    }
    if in_channels != out_channels:   # projection shortcut parameters only when used
        p["ws"] = 0.1 * jax.random.normal(ks[8], (in_channels, out_channels), jnp.float32)
        p["bs"] = 0.1 * jax.random.normal(ks[9], (out_channels,), jnp.float32)
        p["gs"] = 1.0 + 0.1 * jax.random.normal(ks[10], (out_channels,), jnp.float32)
        p["bes"] = 0.1 * jax.random.normal(ks[11], (out_channels,), jnp.float32)
    return p


# ---------------------------------------------------------------------------
# Pure-JAX reference (training-mode BN, f32) for the correctness check
# ---------------------------------------------------------------------------
def residual_block_ref(x_nchw, params, stride=1):
    x = jnp.transpose(x_nchw, (0, 2, 3, 1)).astype(jnp.float32)

    def conv(x, w, b, s, pad):
        y = lax.conv_general_dilated(x, w, (s, s), ((pad, pad), (pad, pad)),
                                     dimension_numbers=("NHWC", "HWIO", "NHWC"))
        return y + b.reshape(1, 1, 1, -1)

    def bn(x, g, be):
        mean = jnp.mean(x, axis=(0, 1, 2), keepdims=True)
        var = jnp.mean(jnp.square(x - mean), axis=(0, 1, 2), keepdims=True)
        return (x - mean) * lax.rsqrt(var + BN_EPS) * g.reshape(1, 1, 1, -1) \
            + be.reshape(1, 1, 1, -1)

    y = jax.nn.relu(bn(conv(x, params["w1"], params["b1"], stride, 1),
                       params["g1"], params["be1"]))
    y = bn(conv(y, params["w2"], params["b2"], 1, 1), params["g2"], params["be2"])

    in_c, out_c = x.shape[-1], params["w1"].shape[-1]
    if in_c != out_c:
        ws = params["ws"].reshape(1, 1, in_c, out_c)
        sc = bn(conv(x, ws, params["bs"], stride, 0), params["gs"], params["bes"])
    else:
        sc = x
    return jnp.transpose(jax.nn.relu(sc + y), (0, 3, 1, 2))


if __name__ == "__main__":
    key = jax.random.PRNGKey(0)
    k1, k2, k3, k4 = jax.random.split(key, 4)

    fwd = jax.jit(residual_block_pallas, static_argnames=("stride",))

    # Tolerance note: the kernel deliberately feeds the MXU bf16 operands and stores the
    # inter-stage activations in bf16 (f32 accumulate, f32 BN stats/normalization), while
    # the reference runs default-precision f32 convs; the comparison tolerance reflects
    # that precision policy.  Logic errors would be O(1) off.
    TOL = dict(rtol=5e-2, atol=5e-2)

    # Case 1: projection shortcut (Cin != Cout), stride 1.
    B, Cin, H, W, Cout, stride = 2, 4, 16, 16, 8, 1
    x = jax.random.normal(k1, (B, Cin, H, W), jnp.float32)
    params = init_params(k2, Cin, Cout)
    out = jax.block_until_ready(fwd(x, params, stride=stride))
    ref = jax.block_until_ready(residual_block_ref(x, params, stride))
    assert out.shape == (B, Cout, H, W)
    np.testing.assert_allclose(np.asarray(out), np.asarray(ref), **TOL)

    # Case 2: identity shortcut (Cin == Cout), stride 1.
    B2, C2, H2, W2 = 2, 8, 16, 16
    x2 = jax.random.normal(k3, (B2, C2, H2, W2), jnp.float32)
    params2 = init_params(k4, C2, C2)
    out2 = jax.block_until_ready(fwd(x2, params2, stride=1))
    ref2 = jax.block_until_ready(residual_block_ref(x2, params2, 1))
    assert out2.shape == (B2, C2, H2, W2)
    np.testing.assert_allclose(np.asarray(out2), np.asarray(ref2), **TOL)

    print("KERNEL_OK")
</pallas_src>

<mosaic_0001>
module attributes {stable_mosaic.version = 11 : i64} {
  func.func @_stage1_proj_kernel(%arg0: i32, %arg1: memref<1x16x16x4xf32, #tpu.memory_space<vmem>>, %arg2: memref<3x3x4x8xbf16, #tpu.memory_space<vmem>>, %arg3: memref<1x8xf32, #tpu.memory_space<vmem>>, %arg4: memref<4x8xbf16, #tpu.memory_space<vmem>>, %arg5: memref<1x8xf32, #tpu.memory_space<vmem>>, %arg6: memref<1x256x8xbf16, #tpu.memory_space<vmem>>, %arg7: memref<1x256x8xbf16, #tpu.memory_space<vmem>>, %arg8: memref<1x2x8xf32, #tpu.memory_space<vmem>>, %arg9: memref<1x2x8xf32, #tpu.memory_space<vmem>>, %arg10: memref<18x18x4xf32, #tpu.memory_space<vmem>>) attributes {dimension_semantics = [#tpu.dimension_semantics<parallel>], iteration_bounds = array<i64: 2>, scalar_prefetch = 0 : i64, scratch_operands = 1 : i64, tpu.core_type = #tpu.core_type<tc>, window_params = [{transform_indices = @transform_0, window_bounds = array<i64: 1, 16, 16, 4>}, {pipeline_mode = #tpu.pipeline_mode<synchronous>, transform_indices = @transform_1, window_bounds = array<i64: 3, 3, 4, 8>}, {pipeline_mode = #tpu.pipeline_mode<synchronous>, transform_indices = @transform_2, window_bounds = array<i64: 1, 8>}, {pipeline_mode = #tpu.pipeline_mode<synchronous>, transform_indices = @transform_3, window_bounds = array<i64: 4, 8>}, {pipeline_mode = #tpu.pipeline_mode<synchronous>, transform_indices = @transform_4, window_bounds = array<i64: 1, 8>}, {transform_indices = @transform_5, window_bounds = array<i64: 1, 256, 8>}, {transform_indices = @transform_6, window_bounds = array<i64: 1, 256, 8>}, {transform_indices = @transform_7, window_bounds = array<i64: 1, 2, 8>}, {transform_indices = @transform_8, window_bounds = array<i64: 1, 2, 8>}]} {
    %c0 = arith.constant 0 : index
    %c0_0 = arith.constant 0 : index
    %c0_1 = arith.constant 0 : index
    %c0_2 = arith.constant 0 : index
    %0 = vector.load %arg1[%c0, %c0_0, %c0_1, %c0_2] : memref<1x16x16x4xf32, #tpu.memory_space<vmem>>, vector<1x16x16x4xf32>
    %1 = vector.shape_cast %0 : vector<1x16x16x4xf32> to vector<16x16x4xf32>
    %cst = arith.constant 0.000000e+00 : f32
    %2 = vector.broadcast %cst : f32 to vector<1x18x4xf32>
    %cst_3 = arith.constant 0.000000e+00 : f32
    %3 = vector.broadcast %cst_3 : f32 to vector<18x1x4xf32>
    %c0_4 = arith.constant 0 : index
    %c0_5 = arith.constant 0 : index
    %c0_6 = arith.constant 0 : index
    %4 = vector.load %arg10[%c0_4, %c0_5, %c0_6] : memref<18x18x4xf32, #tpu.memory_space<vmem>>, vector<1x18x4xf32>
    tpu.vector_store %arg10[%c0_4, %c0_5, %c0_6], %2 {strides = array<i32>} : memref<18x18x4xf32, #tpu.memory_space<vmem>>, vector<1x18x4xf32>,
    %c17 = arith.constant 17 : index
    %c0_7 = arith.constant 0 : index
    %c0_8 = arith.constant 0 : index
    %5 = vector.load %arg10[%c17, %c0_7, %c0_8] : memref<18x18x4xf32, #tpu.memory_space<vmem>>, vector<1x18x4xf32>
    tpu.vector_store %arg10[%c17, %c0_7, %c0_8], %2 {strides = array<i32>} : memref<18x18x4xf32, #tpu.memory_space<vmem>>, vector<1x18x4xf32>,
    %c0_9 = arith.constant 0 : index
    %c0_10 = arith.constant 0 : index
    %c0_11 = arith.constant 0 : index
    %6 = vector.load %arg10[%c0_9, %c0_10, %c0_11] : memref<18x18x4xf32, #tpu.memory_space<vmem>>, vector<18x1x4xf32>
    tpu.vector_store %arg10[%c0_9, %c0_10, %c0_11], %3 {strides = array<i32>} : memref<18x18x4xf32, #tpu.memory_space<vmem>>, vector<18x1x4xf32>,
    %c0_12 = arith.constant 0 : index
    %c17_13 = arith.constant 17 : index
    %c0_14 = arith.constant 0 : index
    %7 = vector.load %arg10[%c0_12, %c17_13, %c0_14] : memref<18x18x4xf32, #tpu.memory_space<vmem>>, vector<18x1x4xf32>
    tpu.vector_store %arg10[%c0_12, %c17_13, %c0_14], %3 {strides = array<i32>} : memref<18x18x4xf32, #tpu.memory_space<vmem>>, vector<18x1x4xf32>,
    %c1 = arith.constant 1 : index
    %c1_15 = arith.constant 1 : index
    %c0_16 = arith.constant 0 : index
    %8 = vector.load %arg10[%c1, %c1_15, %c0_16] : memref<18x18x4xf32, #tpu.memory_space<vmem>>, vector<16x16x4xf32>
    tpu.vector_store %arg10[%c1, %c1_15, %c0_16], %1 {strides = array<i32>} : memref<18x18x4xf32, #tpu.memory_space<vmem>>, vector<16x16x4xf32>,
    %c0_17 = arith.constant 0 : index
    %c0_18 = arith.constant 0 : index
    %c0_19 = arith.constant 0 : index
    %c0_20 = arith.constant 0 : index
    %9 = vector.load %arg2[%c0_17, %c0_18, %c0_19, %c0_20] : memref<3x3x4x8xbf16, #tpu.memory_space<vmem>>, vector<3x3x4x8xbf16>
    %c0_21 = arith.constant 0 : index
    %c0_22 = arith.constant 0 : index
    %10 = vector.load %arg3[%c0_21, %c0_22] : memref<1x8xf32, #tpu.memory_space<vmem>>, vector<1x8xf32>
    %cst_23 = arith.constant 0.000000e+00 : f32
    %11 = vector.broadcast %cst_23 : f32 to vector<256x8xf32>
    %c0_24 = arith.constant 0 : index
    %c0_25 = arith.constant 0 : index
    %c0_26 = arith.constant 0 : index
    %12 = vector.load %arg10[%c0_24, %c0_25, %c0_26] : memref<18x18x4xf32, #tpu.memory_space<vmem>>, vector<16x16x4xf32>
    %13 = vector.shape_cast %12 : vector<16x16x4xf32> to vector<256x4xf32>
    %14 = arith.truncf %13 : vector<256x4xf32> to vector<256x4xbf16>
    %15 = vector.extract_strided_slice %9 {offsets = [0, 0, 0, 0], sizes = [1, 1, 4, 8], strides = [1, 1, 1, 1]} : vector<3x3x4x8xbf16> to vector<1x1x4x8xbf16>
    %16 = vector.shape_cast %15 : vector<1x1x4x8xbf16> to vector<4x8xbf16>
    %cst_27 = arith.constant dense<0.000000e+00> : vector<256x8xf32>
    %17 = tpu.matmul %14, %16, %cst_27 {dimension_numbers = #tpu.dot_dimension_numbers<[1], [0], [0], [1], [0, 0, 1, 1], [], []>} : vector<256x4xbf16>, vector<4x8xbf16>, vector<256x8xf32> -> vector<256x8xf32>
    %18 = arith.addf %11, %17 : vector<256x8xf32>
    %c0_28 = arith.constant 0 : index
    %c1_29 = arith.constant 1 : index
    %c0_30 = arith.constant 0 : index
    %19 = vector.load %arg10[%c0_28, %c1_29, %c0_30] : memref<18x18x4xf32, #tpu.memory_space<vmem>>, vector<16x16x4xf32>
    %20 = vector.shape_cast %19 : vector<16x16x4xf32> to vector<256x4xf32>
    %21 = arith.truncf %20 : vector<256x4xf32> to vector<256x4xbf16>
    %22 = vector.extract_strided_slice %9 {offsets = [0, 1, 0, 0], sizes = [1, 1, 4, 8], strides = [1, 1, 1, 1]} : vector<3x3x4x8xbf16> to vector<1x1x4x8xbf16>
    %23 = vector.shape_cast %22 : vector<1x1x4x8xbf16> to vector<4x8xbf16>
    %cst_31 = arith.constant dense<0.000000e+00> : vector<256x8xf32>
    %24 = tpu.matmul %21, %23, %cst_31 {dimension_numbers = #tpu.dot_dimension_numbers<[1], [0], [0], [1], [0, 0, 1, 1], [], []>} : vector<256x4xbf16>, vector<4x8xbf16>, vector<256x8xf32> -> vector<256x8xf32>
    %25 = arith.addf %18, %24 : vector<256x8xf32>
    %c0_32 = arith.constant 0 : index
    %c2 = arith.constant 2 : index
    %c0_33 = arith.constant 0 : index
    %26 = vector.load %arg10[%c0_32, %c2, %c0_33] : memref<18x18x4xf32, #tpu.memory_space<vmem>>, vector<16x16x4xf32>
    %27 = vector.shape_cast %26 : vector<16x16x4xf32> to vector<256x4xf32>
    %28 = arith.truncf %27 : vector<256x4xf32> to vector<256x4xbf16>
    %29 = vector.extract_strided_slice %9 {offsets = [0, 2, 0, 0], sizes = [1, 1, 4, 8], strides = [1, 1, 1, 1]} : vector<3x3x4x8xbf16> to vector<1x1x4x8xbf16>
    %30 = vector.shape_cast %29 : vector<1x1x4x8xbf16> to vector<4x8xbf16>
    %cst_34 = arith.constant dense<0.000000e+00> : vector<256x8xf32>
    %31 = tpu.matmul %28, %30, %cst_34 {dimension_numbers = #tpu.dot_dimension_numbers<[1], [0], [0], [1], [0, 0, 1, 1], [], []>} : vector<256x4xbf16>, vector<4x8xbf16>, vector<256x8xf32> -> vector<256x8xf32>
    %32 = arith.addf %25, %31 : vector<256x8xf32>
    %c1_35 = arith.constant 1 : index
    %c0_36 = arith.constant 0 : index
    %c0_37 = arith.constant 0 : index
    %33 = vector.load %arg10[%c1_35, %c0_36, %c0_37] : memref<18x18x4xf32, #tpu.memory_space<vmem>>, vector<16x16x4xf32>
    %34 = vector.shape_cast %33 : vector<16x16x4xf32> to vector<256x4xf32>
    %35 = arith.truncf %34 : vector<256x4xf32> to vector<256x4xbf16>
    %36 = vector.extract_strided_slice %9 {offsets = [1, 0, 0, 0], sizes = [1, 1, 4, 8], strides = [1, 1, 1, 1]} : vector<3x3x4x8xbf16> to vector<1x1x4x8xbf16>
    %37 = vector.shape_cast %36 : vector<1x1x4x8xbf16> to vector<4x8xbf16>
    %cst_38 = arith.constant dense<0.000000e+00> : vector<256x8xf32>
    %38 = tpu.matmul %35, %37, %cst_38 {dimension_numbers = #tpu.dot_dimension_numbers<[1], [0], [0], [1], [0, 0, 1, 1], [], []>} : vector<256x4xbf16>, vector<4x8xbf16>, vector<256x8xf32> -> vector<256x8xf32>
    %39 = arith.addf %32, %38 : vector<256x8xf32>
    %c1_39 = arith.constant 1 : index
    %c1_40 = arith.constant 1 : index
    %c0_41 = arith.constant 0 : index
    %40 = vector.load %arg10[%c1_39, %c1_40, %c0_41] : memref<18x18x4xf32, #tpu.memory_space<vmem>>, vector<16x16x4xf32>
    %41 = vector.shape_cast %40 : vector<16x16x4xf32> to vector<256x4xf32>
    %42 = arith.truncf %41 : vector<256x4xf32> to vector<256x4xbf16>
    %43 = vector.extract_strided_slice %9 {offsets = [1, 1, 0, 0], sizes = [1, 1, 4, 8], strides = [1, 1, 1, 1]} : vector<3x3x4x8xbf16> to vector<1x1x4x8xbf16>
    %44 = vector.shape_cast %43 : vector<1x1x4x8xbf16> to vector<4x8xbf16>
    %cst_42 = arith.constant dense<0.000000e+00> : vector<256x8xf32>
    %45 = tpu.matmul %42, %44, %cst_42 {dimension_numbers = #tpu.dot_dimension_numbers<[1], [0], [0], [1], [0, 0, 1, 1], [], []>} : vector<256x4xbf16>, vector<4x8xbf16>, vector<256x8xf32> -> vector<256x8xf32>
    %46 = arith.addf %39, %45 : vector<256x8xf32>
    %c1_43 = arith.constant 1 : index
    %c2_44 = arith.constant 2 : index
    %c0_45 = arith.constant 0 : index
    %47 = vector.load %arg10[%c1_43, %c2_44, %c0_45] : memref<18x18x4xf32, #tpu.memory_space<vmem>>, vector<16x16x4xf32>
    %48 = vector.shape_cast %47 : vector<16x16x4xf32> to vector<256x4xf32>
    %49 = arith.truncf %48 : vector<256x4xf32> to vector<256x4xbf16>
    %50 = vector.extract_strided_slice %9 {offsets = [1, 2, 0, 0], sizes = [1, 1, 4, 8], strides = [1, 1, 1, 1]} : vector<3x3x4x8xbf16> to vector<1x1x4x8xbf16>
    %51 = vector.shape_cast %50 : vector<1x1x4x8xbf16> to vector<4x8xbf16>
    %cst_46 = arith.constant dense<0.000000e+00> : vector<256x8xf32>
    %52 = tpu.matmul %49, %51, %cst_46 {dimension_numbers = #tpu.dot_dimension_numbers<[1], [0], [0], [1], [0, 0, 1, 1], [], []>} : vector<256x4xbf16>, vector<4x8xbf16>, vector<256x8xf32> -> vector<256x8xf32>
    %53 = arith.addf %46, %52 : vector<256x8xf32>
    %c2_47 = arith.constant 2 : index
    %c0_48 = arith.constant 0 : index
    %c0_49 = arith.constant 0 : index
    %54 = vector.load %arg10[%c2_47, %c0_48, %c0_49] : memref<18x18x4xf32, #tpu.memory_space<vmem>>, vector<16x16x4xf32>
    %55 = vector.shape_cast %54 : vector<16x16x4xf32> to vector<256x4xf32>
    %56 = arith.truncf %55 : vector<256x4xf32> to vector<256x4xbf16>
    %57 = vector.extract_strided_slice %9 {offsets = [2, 0, 0, 0], sizes = [1, 1, 4, 8], strides = [1, 1, 1, 1]} : vector<3x3x4x8xbf16> to vector<1x1x4x8xbf16>
    %58 = vector.shape_cast %57 : vector<1x1x4x8xbf16> to vector<4x8xbf16>
    %cst_50 = arith.constant dense<0.000000e+00> : vector<256x8xf32>
    %59 = tpu.matmul %56, %58, %cst_50 {dimension_numbers = #tpu.dot_dimension_numbers<[1], [0], [0], [1], [0, 0, 1, 1], [], []>} : vector<256x4xbf16>, vector<4x8xbf16>, vector<256x8xf32> -> vector<256x8xf32>
    %60 = arith.addf %53, %59 : vector<256x8xf32>
    %c2_51 = arith.constant 2 : index
    %c1_52 = arith.constant 1 : index
    %c0_53 = arith.constant 0 : index
    %61 = vector.load %arg10[%c2_51, %c1_52, %c0_53] : memref<18x18x4xf32, #tpu.memory_space<vmem>>, vector<16x16x4xf32>
    %62 = vector.shape_cast %61 : vector<16x16x4xf32> to vector<256x4xf32>
    %63 = arith.truncf %62 : vector<256x4xf32> to vector<256x4xbf16>
    %64 = vector.extract_strided_slice %9 {offsets = [2, 1, 0, 0], sizes = [1, 1, 4, 8], strides = [1, 1, 1, 1]} : vector<3x3x4x8xbf16> to vector<1x1x4x8xbf16>
    %65 = vector.shape_cast %64 : vector<1x1x4x8xbf16> to vector<4x8xbf16>
    %cst_54 = arith.constant dense<0.000000e+00> : vector<256x8xf32>
    %66 = tpu.matmul %63, %65, %cst_54 {dimension_numbers = #tpu.dot_dimension_numbers<[1], [0], [0], [1], [0, 0, 1, 1], [], []>} : vector<256x4xbf16>, vector<4x8xbf16>, vector<256x8xf32> -> vector<256x8xf32>
    %67 = arith.addf %60, %66 : vector<256x8xf32>
    %c2_55 = arith.constant 2 : index
    %c2_56 = arith.constant 2 : index
    %c0_57 = arith.constant 0 : index
    %68 = vector.load %arg10[%c2_55, %c2_56, %c0_57] : memref<18x18x4xf32, #tpu.memory_space<vmem>>, vector<16x16x4xf32>
    %69 = vector.shape_cast %68 : vector<16x16x4xf32> to vector<256x4xf32>
    %70 = arith.truncf %69 : vector<256x4xf32> to vector<256x4xbf16>
    %71 = vector.extract_strided_slice %9 {offsets = [2, 2, 0, 0], sizes = [1, 1, 4, 8], strides = [1, 1, 1, 1]} : vector<3x3x4x8xbf16> to vector<1x1x4x8xbf16>
    %72 = vector.shape_cast %71 : vector<1x1x4x8xbf16> to vector<4x8xbf16>
    %cst_58 = arith.constant dense<0.000000e+00> : vector<256x8xf32>
    %73 = tpu.matmul %70, %72, %cst_58 {dimension_numbers = #tpu.dot_dimension_numbers<[1], [0], [0], [1], [0, 0, 1, 1], [], []>} : vector<256x4xbf16>, vector<4x8xbf16>, vector<256x8xf32> -> vector<256x8xf32>
    %74 = arith.addf %67, %73 : vector<256x8xf32>
    %75 = vector.broadcast %10 : vector<1x8xf32> to vector<256x8xf32>
    %76 = arith.addf %74, %75 : vector<256x8xf32>
    %77 = vector.shape_cast %76 : vector<256x8xf32> to vector<1x256x8xf32>
    %78 = arith.truncf %77 : vector<1x256x8xf32> to vector<1x256x8xbf16>
    %c0_59 = arith.constant 0 : index
    %c0_60 = arith.constant 0 : index
    %c0_61 = arith.constant 0 : index
    %79 = vector.load %arg6[%c0_59, %c0_60, %c0_61] : memref<1x256x8xbf16, #tpu.memory_space<vmem>>, vector<1x256x8xbf16>
    tpu.vector_store %arg6[%c0_59, %c0_60, %c0_61], %78 {strides = array<i32>} : memref<1x256x8xbf16, #tpu.memory_space<vmem>>, vector<1x256x8xbf16>,
    %cst_62 = arith.constant dense<0.000000e+00> : vector<8xf32>
    %80 = vector.multi_reduction <add>, %76, %cst_62 [0] : vector<256x8xf32> to vector<8xf32>
    %81 = vector.shape_cast %80 : vector<8xf32> to vector<1x8xf32>
    %82 = vector.shape_cast %81 : vector<1x8xf32> to vector<1x1x8xf32>
    %c0_63 = arith.constant 0 : index
    %c0_64 = arith.constant 0 : index
    %c0_65 = arith.constant 0 : index
    %83 = vector.load %arg8[%c0_63, %c0_64, %c0_65] : memref<1x2x8xf32, #tpu.memory_space<vmem>>, vector<1x1x8xf32>
    tpu.vector_store %arg8[%c0_63, %c0_64, %c0_65], %82 {strides = array<i32>} : memref<1x2x8xf32, #tpu.memory_space<vmem>>, vector<1x1x8xf32>,
    %84 = arith.mulf %76, %76 : vector<256x8xf32>
    %cst_66 = arith.constant dense<0.000000e+00> : vector<8xf32>
    %85 = vector.multi_reduction <add>, %84, %cst_66 [0] : vector<256x8xf32> to vector<8xf32>
    %86 = vector.shape_cast %85 : vector<8xf32> to vector<1x8xf32>
    %87 = vector.shape_cast %86 : vector<1x8xf32> to vector<1x1x8xf32>
    %c0_67 = arith.constant 0 : index
    %c1_68 = arith.constant 1 : index
    %c0_69 = arith.constant 0 : index
    %88 = vector.load %arg8[%c0_67, %c1_68, %c0_69] : memref<1x2x8xf32, #tpu.memory_space<vmem>>, vector<1x1x8xf32>
    tpu.vector_store %arg8[%c0_67, %c1_68, %c0_69], %87 {strides = array<i32>} : memref<1x2x8xf32, #tpu.memory_space<vmem>>, vector<1x1x8xf32>,
    %89 = vector.shape_cast %1 : vector<16x16x4xf32> to vector<256x4xf32>
    %90 = arith.truncf %89 : vector<256x4xf32> to vector<256x4xbf16>
    %c0_70 = arith.constant 0 : index
    %c0_71 = arith.constant 0 : index
    %91 = vector.load %arg4[%c0_70, %c0_71] : memref<4x8xbf16, #tpu.memory_space<vmem>>, vector<4x8xbf16>
    %cst_72 = arith.constant dense<0.000000e+00> : vector<256x8xf32>
    %92 = tpu.matmul %90, %91, %cst_72 {dimension_numbers = #tpu.dot_dimension_numbers<[1], [0], [0], [1], [0, 0, 1, 1], [], []>} : vector<256x4xbf16>, vector<4x8xbf16>, vector<256x8xf32> -> vector<256x8xf32>
    %c0_73 = arith.constant 0 : index
    %c0_74 = arith.constant 0 : index
    %93 = vector.load %arg5[%c0_73, %c0_74] : memref<1x8xf32, #tpu.memory_space<vmem>>, vector<1x8xf32>
    %94 = vector.broadcast %93 : vector<1x8xf32> to vector<256x8xf32>
    %95 = arith.addf %92, %94 : vector<256x8xf32>
    %96 = vector.shape_cast %95 : vector<256x8xf32> to vector<1x256x8xf32>
    %97 = arith.truncf %96 : vector<1x256x8xf32> to vector<1x256x8xbf16>
    %c0_75 = arith.constant 0 : index
    %c0_76 = arith.constant 0 : index
    %c0_77 = arith.constant 0 : index
    %98 = vector.load %arg7[%c0_75, %c0_76, %c0_77] : memref<1x256x8xbf16, #tpu.memory_space<vmem>>, vector<1x256x8xbf16>
    tpu.vector_store %arg7[%c0_75, %c0_76, %c0_77], %97 {strides = array<i32>} : memref<1x256x8xbf16, #tpu.memory_space<vmem>>, vector<1x256x8xbf16>,
    %cst_78 = arith.constant dense<0.000000e+00> : vector<8xf32>
    %99 = vector.multi_reduction <add>, %95, %cst_78 [0] : vector<256x8xf32> to vector<8xf32>
    %100 = vector.shape_cast %99 : vector<8xf32> to vector<1x8xf32>
    %101 = vector.shape_cast %100 : vector<1x8xf32> to vector<1x1x8xf32>
    %c0_79 = arith.constant 0 : index
    %c0_80 = arith.constant 0 : index
    %c0_81 = arith.constant 0 : index
    %102 = vector.load %arg9[%c0_79, %c0_80, %c0_81] : memref<1x2x8xf32, #tpu.memory_space<vmem>>, vector<1x1x8xf32>
    tpu.vector_store %arg9[%c0_79, %c0_80, %c0_81], %101 {strides = array<i32>} : memref<1x2x8xf32, #tpu.memory_space<vmem>>, vector<1x1x8xf32>,
    %103 = arith.mulf %95, %95 : vector<256x8xf32>
    %cst_82 = arith.constant dense<0.000000e+00> : vector<8xf32>
    %104 = vector.multi_reduction <add>, %103, %cst_82 [0] : vector<256x8xf32> to vector<8xf32>
    %105 = vector.shape_cast %104 : vector<8xf32> to vector<1x8xf32>
    %106 = vector.shape_cast %105 : vector<1x8xf32> to vector<1x1x8xf32>
    %c0_83 = arith.constant 0 : index
    %c1_84 = arith.constant 1 : index
    %c0_85 = arith.constant 0 : index
    %107 = vector.load %arg9[%c0_83, %c1_84, %c0_85] : memref<1x2x8xf32, #tpu.memory_space<vmem>>, vector<1x1x8xf32>
    tpu.vector_store %arg9[%c0_83, %c1_84, %c0_85], %106 {strides = array<i32>} : memref<1x2x8xf32, #tpu.memory_space<vmem>>, vector<1x1x8xf32>,
    return
  }
  func.func @transform_0(%arg0: i32) -> (i32, i32, i32, i32) {
    %c0_i32 = arith.constant 0 : i32
    %c0_i32_0 = arith.constant 0 : i32
    %c0_i32_1 = arith.constant 0 : i32
    %c0_i32_2 = arith.constant 0 : i32
    return %arg0, %c0_i32, %c0_i32_0, %c0_i32_1 : i32, i32, i32, i32
  }
  func.func @transform_1(%arg0: i32) -> (i32, i32, i32, i32) {
    %c0_i32 = arith.constant 0 : i32
    %c0_i32_0 = arith.constant 0 : i32
    %c0_i32_1 = arith.constant 0 : i32
    %c0_i32_2 = arith.constant 0 : i32
    %c0_i32_3 = arith.constant 0 : i32
    return %c0_i32, %c0_i32_0, %c0_i32_1, %c0_i32_2 : i32, i32, i32, i32
  }
  func.func @transform_2(%arg0: i32) -> (i32, i32) {
    %c0_i32 = arith.constant 0 : i32
    %c0_i32_0 = arith.constant 0 : i32
    %c0_i32_1 = arith.constant 0 : i32
    return %c0_i32, %c0_i32_0 : i32, i32
  }
  func.func @transform_3(%arg0: i32) -> (i32, i32) {
    %c0_i32 = arith.constant 0 : i32
    %c0_i32_0 = arith.constant 0 : i32
    %c0_i32_1 = arith.constant 0 : i32
    return %c0_i32, %c0_i32_0 : i32, i32
  }
  func.func @transform_4(%arg0: i32) -> (i32, i32) {
    %c0_i32 = arith.constant 0 : i32
    %c0_i32_0 = arith.constant 0 : i32
    %c0_i32_1 = arith.constant 0 : i32
    return %c0_i32, %c0_i32_0 : i32, i32
  }
  func.func @transform_5(%arg0: i32) -> (i32, i32, i32) {
    %c0_i32 = arith.constant 0 : i32
    %c0_i32_0 = arith.constant 0 : i32
    %c0_i32_1 = arith.constant 0 : i32
    return %arg0, %c0_i32, %c0_i32_0 : i32, i32, i32
  }
  func.func @transform_6(%arg0: i32) -> (i32, i32, i32) {
    %c0_i32 = arith.constant 0 : i32
    %c0_i32_0 = arith.constant 0 : i32
    %c0_i32_1 = arith.constant 0 : i32
    return %arg0, %c0_i32, %c0_i32_0 : i32, i32, i32
  }
  func.func @transform_7(%arg0: i32) -> (i32, i32, i32) {
    %c0_i32 = arith.constant 0 : i32
    %c0_i32_0 = arith.constant 0 : i32
    %c0_i32_1 = arith.constant 0 : i32
    return %arg0, %c0_i32, %c0_i32_0 : i32, i32, i32
  }
  func.func @transform_8(%arg0: i32) -> (i32, i32, i32) {
    %c0_i32 = arith.constant 0 : i32
    %c0_i32_0 = arith.constant 0 : i32
    %c0_i32_1 = arith.constant 0 : i32
    return %arg0, %c0_i32, %c0_i32_0 : i32, i32, i32
  }
}

module attributes {stable_mosaic.version = 11 : i64} {
  func.func @_stage3_proj_kernel(%arg0: i32, %arg1: memref<1x256x8xbf16, #tpu.memory_space<vmem>>, %arg2: memref<1x256x8xbf16, #tpu.memory_space<vmem>>, %arg3: memref<1x8xf32, #tpu.memory_space<vmem>>, %arg4: memref<1x8xf32, #tpu.memory_space<vmem>>, %arg5: memref<1x8xf32, #tpu.memory_space<vmem>>, %arg6: memref<1x256x8xf32, #tpu.memory_space<vmem>>) attributes {dimension_semantics = [#tpu.dimension_semantics<parallel>], iteration_bounds = array<i64: 2>, scalar_prefetch = 0 : i64, scratch_operands = 0 : i64, tpu.core_type = #tpu.core_type<tc>, window_params = [{transform_indices = @transform_0, window_bounds = array<i64: 1, 256, 8>}, {transform_indices = @transform_1, window_bounds = array<i64: 1, 256, 8>}, {pipeline_mode = #tpu.pipeline_mode<synchronous>, transform_indices = @transform_2, window_bounds = array<i64: 1, 8>}, {pipeline_mode = #tpu.pipeline_mode<synchronous>, transform_indices = @transform_3, window_bounds = array<i64: 1, 8>}, {pipeline_mode = #tpu.pipeline_mode<synchronous>, transform_indices = @transform_4, window_bounds = array<i64: 1, 8>}, {transform_indices = @transform_5, window_bounds = array<i64: 1, 256, 8>}]} {
    %c0 = arith.constant 0 : index
    %c0_0 = arith.constant 0 : index
    %c0_1 = arith.constant 0 : index
    %0 = vector.load %arg1[%c0, %c0_0, %c0_1] : memref<1x256x8xbf16, #tpu.memory_space<vmem>>, vector<1x256x8xbf16>
    %1 = vector.shape_cast %0 : vector<1x256x8xbf16> to vector<256x8xbf16>
    %2 = arith.extf %1 : vector<256x8xbf16> to vector<256x8xf32>
    %c0_2 = arith.constant 0 : index
    %c0_3 = arith.constant 0 : index
    %3 = vector.load %arg3[%c0_2, %c0_3] : memref<1x8xf32, #tpu.memory_space<vmem>>, vector<1x8xf32>
    %4 = vector.broadcast %3 : vector<1x8xf32> to vector<256x8xf32>
    %5 = arith.mulf %2, %4 : vector<256x8xf32>
    %c0_4 = arith.constant 0 : index
    %c0_5 = arith.constant 0 : index
    %c0_6 = arith.constant 0 : index
    %6 = vector.load %arg2[%c0_4, %c0_5, %c0_6] : memref<1x256x8xbf16, #tpu.memory_space<vmem>>, vector<1x256x8xbf16>
    %7 = vector.shape_cast %6 : vector<1x256x8xbf16> to vector<256x8xbf16>
    %8 = arith.extf %7 : vector<256x8xbf16> to vector<256x8xf32>
    %c0_7 = arith.constant 0 : index
    %c0_8 = arith.constant 0 : index
    %9 = vector.load %arg4[%c0_7, %c0_8] : memref<1x8xf32, #tpu.memory_space<vmem>>, vector<1x8xf32>
    %10 = vector.broadcast %9 : vector<1x8xf32> to vector<256x8xf32>
    %11 = arith.mulf %8, %10 : vector<256x8xf32>
    %12 = arith.addf %5, %11 : vector<256x8xf32>
    %c0_9 = arith.constant 0 : index
    %c0_10 = arith.constant 0 : index
    %13 = vector.load %arg5[%c0_9, %c0_10] : memref<1x8xf32, #tpu.memory_space<vmem>>, vector<1x8xf32>
    %14 = vector.broadcast %13 : vector<1x8xf32> to vector<256x8xf32>
    %15 = arith.addf %12, %14 : vector<256x8xf32>
    %cst = arith.constant 0.000000e+00 : f32
    %16 = vector.broadcast %cst : f32 to vector<256x8xf32>
    %17 = arith.maximumf %15, %16 : vector<256x8xf32>
    %18 = vector.shape_cast %17 : vector<256x8xf32> to vector<1x256x8xf32>
    %c0_11 = arith.constant 0 : index
    %c0_12 = arith.constant 0 : index
    %c0_13 = arith.constant 0 : index
    %19 = vector.load %arg6[%c0_11, %c0_12, %c0_13] : memref<1x256x8xf32, #tpu.memory_space<vmem>>, vector<1x256x8xf32>
    tpu.vector_store %arg6[%c0_11, %c0_12, %c0_13], %18 {strides = array<i32>} : memref<1x256x8xf32, #tpu.memory_space<vmem>>, vector<1x256x8xf32>,
    return
  }
  func.func @transform_0(%arg0: i32) -> (i32, i32, i32) {
    %c0_i32 = arith.constant 0 : i32
    %c0_i32_0 = arith.constant 0 : i32
    %c0_i32_1 = arith.constant 0 : i32
    return %arg0, %c0_i32, %c0_i32_0 : i32, i32, i32
  }
  func.func @transform_1(%arg0: i32) -> (i32, i32, i32) {
    %c0_i32 = arith.constant 0 : i32
    %c0_i32_0 = arith.constant 0 : i32
    %c0_i32_1 = arith.constant 0 : i32
    return %arg0, %c0_i32, %c0_i32_0 : i32, i32, i32
  }
  func.func @transform_2(%arg0: i32) -> (i32, i32) {
    %c0_i32 = arith.constant 0 : i32
    %c0_i32_0 = arith.constant 0 : i32
    %c0_i32_1 = arith.constant 0 : i32
    return %c0_i32, %c0_i32_0 : i32, i32
  }
  func.func @transform_3(%arg0: i32) -> (i32, i32) {
    %c0_i32 = arith.constant 0 : i32
    %c0_i32_0 = arith.constant 0 : i32
    %c0_i32_1 = arith.constant 0 : i32
    return %c0_i32, %c0_i32_0 : i32, i32
  }
  func.func @transform_4(%arg0: i32) -> (i32, i32) {
    %c0_i32 = arith.constant 0 : i32
    %c0_i32_0 = arith.constant 0 : i32
    %c0_i32_1 = arith.constant 0 : i32
    return %c0_i32, %c0_i32_0 : i32, i32
  }
  func.func @transform_5(%arg0: i32) -> (i32, i32, i32) {
    %c0_i32 = arith.constant 0 : i32
    %c0_i32_0 = arith.constant 0 : i32
    %c0_i32_1 = arith.constant 0 : i32
    return %arg0, %c0_i32, %c0_i32_0 : i32, i32, i32
  }
}

module attributes {stable_mosaic.version = 11 : i64} {
  func.func @_stage2_kernel(%arg0: i32, %arg1: memref<1x256x8xbf16, #tpu.memory_space<vmem>>, %arg2: memref<1x8xf32, #tpu.memory_space<vmem>>, %arg3: memref<1x8xf32, #tpu.memory_space<vmem>>, %arg4: memref<3x3x8x8xbf16, #tpu.memory_space<vmem>>, %arg5: memref<1x8xf32, #tpu.memory_space<vmem>>, %arg6: memref<1x256x8xbf16, #tpu.memory_space<vmem>>, %arg7: memref<1x2x8xf32, #tpu.memory_space<vmem>>, %arg8: memref<18x18x8xf32, #tpu.memory_space<vmem>>) attributes {dimension_semantics = [#tpu.dimension_semantics<parallel>], iteration_bounds = array<i64: 2>, scalar_prefetch = 0 : i64, scratch_operands = 1 : i64, tpu.core_type = #tpu.core_type<tc>, window_params = [{transform_indices = @transform_0, window_bounds = array<i64: 1, 256, 8>}, {pipeline_mode = #tpu.pipeline_mode<synchronous>, transform_indices = @transform_1, window_bounds = array<i64: 1, 8>}, {pipeline_mode = #tpu.pipeline_mode<synchronous>, transform_indices = @transform_2, window_bounds = array<i64: 1, 8>}, {pipeline_mode = #tpu.pipeline_mode<synchronous>, transform_indices = @transform_3, window_bounds = array<i64: 3, 3, 8, 8>}, {pipeline_mode = #tpu.pipeline_mode<synchronous>, transform_indices = @transform_4, window_bounds = array<i64: 1, 8>}, {transform_indices = @transform_5, window_bounds = array<i64: 1, 256, 8>}, {transform_indices = @transform_6, window_bounds = array<i64: 1, 2, 8>}]} {
    %c0 = arith.constant 0 : index
    %c0_0 = arith.constant 0 : index
    %c0_1 = arith.constant 0 : index
    %0 = vector.load %arg1[%c0, %c0_0, %c0_1] : memref<1x256x8xbf16, #tpu.memory_space<vmem>>, vector<1x256x8xbf16>
    %1 = vector.shape_cast %0 : vector<1x256x8xbf16> to vector<256x8xbf16>
    %2 = arith.extf %1 : vector<256x8xbf16> to vector<256x8xf32>
    %c0_2 = arith.constant 0 : index
    %c0_3 = arith.constant 0 : index
    %3 = vector.load %arg2[%c0_2, %c0_3] : memref<1x8xf32, #tpu.memory_space<vmem>>, vector<1x8xf32>
    %4 = vector.broadcast %3 : vector<1x8xf32> to vector<256x8xf32>
    %5 = arith.mulf %2, %4 : vector<256x8xf32>
    %c0_4 = arith.constant 0 : index
    %c0_5 = arith.constant 0 : index
    %6 = vector.load %arg3[%c0_4, %c0_5] : memref<1x8xf32, #tpu.memory_space<vmem>>, vector<1x8xf32>
    %7 = vector.broadcast %6 : vector<1x8xf32> to vector<256x8xf32>
    %8 = arith.addf %5, %7 : vector<256x8xf32>
    %cst = arith.constant 0.000000e+00 : f32
    %9 = vector.broadcast %cst : f32 to vector<256x8xf32>
    %10 = arith.maximumf %8, %9 : vector<256x8xf32>
    %11 = vector.shape_cast %10 : vector<256x8xf32> to vector<16x16x8xf32>
    %cst_6 = arith.constant 0.000000e+00 : f32
    %12 = vector.broadcast %cst_6 : f32 to vector<1x18x8xf32>
    %cst_7 = arith.constant 0.000000e+00 : f32
    %13 = vector.broadcast %cst_7 : f32 to vector<18x1x8xf32>
    %c0_8 = arith.constant 0 : index
    %c0_9 = arith.constant 0 : index
    %c0_10 = arith.constant 0 : index
    %14 = vector.load %arg8[%c0_8, %c0_9, %c0_10] : memref<18x18x8xf32, #tpu.memory_space<vmem>>, vector<1x18x8xf32>
    tpu.vector_store %arg8[%c0_8, %c0_9, %c0_10], %12 {strides = array<i32>} : memref<18x18x8xf32, #tpu.memory_space<vmem>>, vector<1x18x8xf32>,
    %c17 = arith.constant 17 : index
    %c0_11 = arith.constant 0 : index
    %c0_12 = arith.constant 0 : index
    %15 = vector.load %arg8[%c17, %c0_11, %c0_12] : memref<18x18x8xf32, #tpu.memory_space<vmem>>, vector<1x18x8xf32>
    tpu.vector_store %arg8[%c17, %c0_11, %c0_12], %12 {strides = array<i32>} : memref<18x18x8xf32, #tpu.memory_space<vmem>>, vector<1x18x8xf32>,
    %c0_13 = arith.constant 0 : index
    %c0_14 = arith.constant 0 : index
    %c0_15 = arith.constant 0 : index
    %16 = vector.load %arg8[%c0_13, %c0_14, %c0_15] : memref<18x18x8xf32, #tpu.memory_space<vmem>>, vector<18x1x8xf32>
    tpu.vector_store %arg8[%c0_13, %c0_14, %c0_15], %13 {strides = array<i32>} : memref<18x18x8xf32, #tpu.memory_space<vmem>>, vector<18x1x8xf32>,
    %c0_16 = arith.constant 0 : index
    %c17_17 = arith.constant 17 : index
    %c0_18 = arith.constant 0 : index
    %17 = vector.load %arg8[%c0_16, %c17_17, %c0_18] : memref<18x18x8xf32, #tpu.memory_space<vmem>>, vector<18x1x8xf32>
    tpu.vector_store %arg8[%c0_16, %c17_17, %c0_18], %13 {strides = array<i32>} : memref<18x18x8xf32, #tpu.memory_space<vmem>>, vector<18x1x8xf32>,
    %c1 = arith.constant 1 : index
    %c1_19 = arith.constant 1 : index
    %c0_20 = arith.constant 0 : index
    %18 = vector.load %arg8[%c1, %c1_19, %c0_20] : memref<18x18x8xf32, #tpu.memory_space<vmem>>, vector<16x16x8xf32>
    tpu.vector_store %arg8[%c1, %c1_19, %c0_20], %11 {strides = array<i32>} : memref<18x18x8xf32, #tpu.memory_space<vmem>>, vector<16x16x8xf32>,
    %c0_21 = arith.constant 0 : index
    %c0_22 = arith.constant 0 : index
    %c0_23 = arith.constant 0 : index
    %c0_24 = arith.constant 0 : index
    %19 = vector.load %arg4[%c0_21, %c0_22, %c0_23, %c0_24] : memref<3x3x8x8xbf16, #tpu.memory_space<vmem>>, vector<3x3x8x8xbf16>
    %c0_25 = arith.constant 0 : index
    %c0_26 = arith.constant 0 : index
    %20 = vector.load %arg5[%c0_25, %c0_26] : memref<1x8xf32, #tpu.memory_space<vmem>>, vector<1x8xf32>
    %cst_27 = arith.constant 0.000000e+00 : f32
    %21 = vector.broadcast %cst_27 : f32 to vector<256x8xf32>
    %c0_28 = arith.constant 0 : index
    %c0_29 = arith.constant 0 : index
    %c0_30 = arith.constant 0 : index
    %22 = vector.load %arg8[%c0_28, %c0_29, %c0_30] : memref<18x18x8xf32, #tpu.memory_space<vmem>>, vector<16x16x8xf32>
    %23 = vector.shape_cast %22 : vector<16x16x8xf32> to vector<256x8xf32>
    %24 = arith.truncf %23 : vector<256x8xf32> to vector<256x8xbf16>
    %25 = vector.extract_strided_slice %19 {offsets = [0, 0, 0, 0], sizes = [1, 1, 8, 8], strides = [1, 1, 1, 1]} : vector<3x3x8x8xbf16> to vector<1x1x8x8xbf16>
    %26 = vector.shape_cast %25 : vector<1x1x8x8xbf16> to vector<8x8xbf16>
    %cst_31 = arith.constant dense<0.000000e+00> : vector<256x8xf32>
    %27 = tpu.matmul %24, %26, %cst_31 {dimension_numbers = #tpu.dot_dimension_numbers<[1], [0], [0], [1], [0, 0, 1, 1], [], []>} : vector<256x8xbf16>, vector<8x8xbf16>, vector<256x8xf32> -> vector<256x8xf32>
    %28 = arith.addf %21, %27 : vector<256x8xf32>
    %c0_32 = arith.constant 0 : index
    %c1_33 = arith.constant 1 : index
    %c0_34 = arith.constant 0 : index
    %29 = vector.load %arg8[%c0_32, %c1_33, %c0_34] : memref<18x18x8xf32, #tpu.memory_space<vmem>>, vector<16x16x8xf32>
    %30 = vector.shape_cast %29 : vector<16x16x8xf32> to vector<256x8xf32>
    %31 = arith.truncf %30 : vector<256x8xf32> to vector<256x8xbf16>
    %32 = vector.extract_strided_slice %19 {offsets = [0, 1, 0, 0], sizes = [1, 1, 8, 8], strides = [1, 1, 1, 1]} : vector<3x3x8x8xbf16> to vector<1x1x8x8xbf16>
    %33 = vector.shape_cast %32 : vector<1x1x8x8xbf16> to vector<8x8xbf16>
    %cst_35 = arith.constant dense<0.000000e+00> : vector<256x8xf32>
    %34 = tpu.matmul %31, %33, %cst_35 {dimension_numbers = #tpu.dot_dimension_numbers<[1], [0], [0], [1], [0, 0, 1, 1], [], []>} : vector<256x8xbf16>, vector<8x8xbf16>, vector<256x8xf32> -> vector<256x8xf32>
    %35 = arith.addf %28, %34 : vector<256x8xf32>
    %c0_36 = arith.constant 0 : index
    %c2 = arith.constant 2 : index
    %c0_37 = arith.constant 0 : index
    %36 = vector.load %arg8[%c0_36, %c2, %c0_37] : memref<18x18x8xf32, #tpu.memory_space<vmem>>, vector<16x16x8xf32>
    %37 = vector.shape_cast %36 : vector<16x16x8xf32> to vector<256x8xf32>
    %38 = arith.truncf %37 : vector<256x8xf32> to vector<256x8xbf16>
    %39 = vector.extract_strided_slice %19 {offsets = [0, 2, 0, 0], sizes = [1, 1, 8, 8], strides = [1, 1, 1, 1]} : vector<3x3x8x8xbf16> to vector<1x1x8x8xbf16>
    %40 = vector.shape_cast %39 : vector<1x1x8x8xbf16> to vector<8x8xbf16>
    %cst_38 = arith.constant dense<0.000000e+00> : vector<256x8xf32>
    %41 = tpu.matmul %38, %40, %cst_38 {dimension_numbers = #tpu.dot_dimension_numbers<[1], [0], [0], [1], [0, 0, 1, 1], [], []>} : vector<256x8xbf16>, vector<8x8xbf16>, vector<256x8xf32> -> vector<256x8xf32>
    %42 = arith.addf %35, %41 : vector<256x8xf32>
    %c1_39 = arith.constant 1 : index
    %c0_40 = arith.constant 0 : index
    %c0_41 = arith.constant 0 : index
    %43 = vector.load %arg8[%c1_39, %c0_40, %c0_41] : memref<18x18x8xf32, #tpu.memory_space<vmem>>, vector<16x16x8xf32>
    %44 = vector.shape_cast %43 : vector<16x16x8xf32> to vector<256x8xf32>
    %45 = arith.truncf %44 : vector<256x8xf32> to vector<256x8xbf16>
    %46 = vector.extract_strided_slice %19 {offsets = [1, 0, 0, 0], sizes = [1, 1, 8, 8], strides = [1, 1, 1, 1]} : vector<3x3x8x8xbf16> to vector<1x1x8x8xbf16>
    %47 = vector.shape_cast %46 : vector<1x1x8x8xbf16> to vector<8x8xbf16>
    %cst_42 = arith.constant dense<0.000000e+00> : vector<256x8xf32>
    %48 = tpu.matmul %45, %47, %cst_42 {dimension_numbers = #tpu.dot_dimension_numbers<[1], [0], [0], [1], [0, 0, 1, 1], [], []>} : vector<256x8xbf16>, vector<8x8xbf16>, vector<256x8xf32> -> vector<256x8xf32>
    %49 = arith.addf %42, %48 : vector<256x8xf32>
    %c1_43 = arith.constant 1 : index
    %c1_44 = arith.constant 1 : index
    %c0_45 = arith.constant 0 : index
    %50 = vector.load %arg8[%c1_43, %c1_44, %c0_45] : memref<18x18x8xf32, #tpu.memory_space<vmem>>, vector<16x16x8xf32>
    %51 = vector.shape_cast %50 : vector<16x16x8xf32> to vector<256x8xf32>
    %52 = arith.truncf %51 : vector<256x8xf32> to vector<256x8xbf16>
    %53 = vector.extract_strided_slice %19 {offsets = [1, 1, 0, 0], sizes = [1, 1, 8, 8], strides = [1, 1, 1, 1]} : vector<3x3x8x8xbf16> to vector<1x1x8x8xbf16>
    %54 = vector.shape_cast %53 : vector<1x1x8x8xbf16> to vector<8x8xbf16>
    %cst_46 = arith.constant dense<0.000000e+00> : vector<256x8xf32>
    %55 = tpu.matmul %52, %54, %cst_46 {dimension_numbers = #tpu.dot_dimension_numbers<[1], [0], [0], [1], [0, 0, 1, 1], [], []>} : vector<256x8xbf16>, vector<8x8xbf16>, vector<256x8xf32> -> vector<256x8xf32>
    %56 = arith.addf %49, %55 : vector<256x8xf32>
    %c1_47 = arith.constant 1 : index
    %c2_48 = arith.constant 2 : index
    %c0_49 = arith.constant 0 : index
    %57 = vector.load %arg8[%c1_47, %c2_48, %c0_49] : memref<18x18x8xf32, #tpu.memory_space<vmem>>, vector<16x16x8xf32>
    %58 = vector.shape_cast %57 : vector<16x16x8xf32> to vector<256x8xf32>
    %59 = arith.truncf %58 : vector<256x8xf32> to vector<256x8xbf16>
    %60 = vector.extract_strided_slice %19 {offsets = [1, 2, 0, 0], sizes = [1, 1, 8, 8], strides = [1, 1, 1, 1]} : vector<3x3x8x8xbf16> to vector<1x1x8x8xbf16>
    %61 = vector.shape_cast %60 : vector<1x1x8x8xbf16> to vector<8x8xbf16>
    %cst_50 = arith.constant dense<0.000000e+00> : vector<256x8xf32>
    %62 = tpu.matmul %59, %61, %cst_50 {dimension_numbers = #tpu.dot_dimension_numbers<[1], [0], [0], [1], [0, 0, 1, 1], [], []>} : vector<256x8xbf16>, vector<8x8xbf16>, vector<256x8xf32> -> vector<256x8xf32>
    %63 = arith.addf %56, %62 : vector<256x8xf32>
    %c2_51 = arith.constant 2 : index
    %c0_52 = arith.constant 0 : index
    %c0_53 = arith.constant 0 : index
    %64 = vector.load %arg8[%c2_51, %c0_52, %c0_53] : memref<18x18x8xf32, #tpu.memory_space<vmem>>, vector<16x16x8xf32>
    %65 = vector.shape_cast %64 : vector<16x16x8xf32> to vector<256x8xf32>
    %66 = arith.truncf %65 : vector<256x8xf32> to vector<256x8xbf16>
    %67 = vector.extract_strided_slice %19 {offsets = [2, 0, 0, 0], sizes = [1, 1, 8, 8], strides = [1, 1, 1, 1]} : vector<3x3x8x8xbf16> to vector<1x1x8x8xbf16>
    %68 = vector.shape_cast %67 : vector<1x1x8x8xbf16> to vector<8x8xbf16>
    %cst_54 = arith.constant dense<0.000000e+00> : vector<256x8xf32>
    %69 = tpu.matmul %66, %68, %cst_54 {dimension_numbers = #tpu.dot_dimension_numbers<[1], [0], [0], [1], [0, 0, 1, 1], [], []>} : vector<256x8xbf16>, vector<8x8xbf16>, vector<256x8xf32> -> vector<256x8xf32>
    %70 = arith.addf %63, %69 : vector<256x8xf32>
    %c2_55 = arith.constant 2 : index
    %c1_56 = arith.constant 1 : index
    %c0_57 = arith.constant 0 : index
    %71 = vector.load %arg8[%c2_55, %c1_56, %c0_57] : memref<18x18x8xf32, #tpu.memory_space<vmem>>, vector<16x16x8xf32>
    %72 = vector.shape_cast %71 : vector<16x16x8xf32> to vector<256x8xf32>
    %73 = arith.truncf %72 : vector<256x8xf32> to vector<256x8xbf16>
    %74 = vector.extract_strided_slice %19 {offsets = [2, 1, 0, 0], sizes = [1, 1, 8, 8], strides = [1, 1, 1, 1]} : vector<3x3x8x8xbf16> to vector<1x1x8x8xbf16>
    %75 = vector.shape_cast %74 : vector<1x1x8x8xbf16> to vector<8x8xbf16>
    %cst_58 = arith.constant dense<0.000000e+00> : vector<256x8xf32>
    %76 = tpu.matmul %73, %75, %cst_58 {dimension_numbers = #tpu.dot_dimension_numbers<[1], [0], [0], [1], [0, 0, 1, 1], [], []>} : vector<256x8xbf16>, vector<8x8xbf16>, vector<256x8xf32> -> vector<256x8xf32>
    %77 = arith.addf %70, %76 : vector<256x8xf32>
    %c2_59 = arith.constant 2 : index
    %c2_60 = arith.constant 2 : index
    %c0_61 = arith.constant 0 : index
    %78 = vector.load %arg8[%c2_59, %c2_60, %c0_61] : memref<18x18x8xf32, #tpu.memory_space<vmem>>, vector<16x16x8xf32>
    %79 = vector.shape_cast %78 : vector<16x16x8xf32> to vector<256x8xf32>
    %80 = arith.truncf %79 : vector<256x8xf32> to vector<256x8xbf16>
    %81 = vector.extract_strided_slice %19 {offsets = [2, 2, 0, 0], sizes = [1, 1, 8, 8], strides = [1, 1, 1, 1]} : vector<3x3x8x8xbf16> to vector<1x1x8x8xbf16>
    %82 = vector.shape_cast %81 : vector<1x1x8x8xbf16> to vector<8x8xbf16>
    %cst_62 = arith.constant dense<0.000000e+00> : vector<256x8xf32>
    %83 = tpu.matmul %80, %82, %cst_62 {dimension_numbers = #tpu.dot_dimension_numbers<[1], [0], [0], [1], [0, 0, 1, 1], [], []>} : vector<256x8xbf16>, vector<8x8xbf16>, vector<256x8xf32> -> vector<256x8xf32>
    %84 = arith.addf %77, %83 : vector<256x8xf32>
    %85 = vector.broadcast %20 : vector<1x8xf32> to vector<256x8xf32>
    %86 = arith.addf %84, %85 : vector<256x8xf32>
    %87 = vector.shape_cast %86 : vector<256x8xf32> to vector<1x256x8xf32>
    %88 = arith.truncf %87 : vector<1x256x8xf32> to vector<1x256x8xbf16>
    %c0_63 = arith.constant 0 : index
    %c0_64 = arith.constant 0 : index
    %c0_65 = arith.constant 0 : index
    %89 = vector.load %arg6[%c0_63, %c0_64, %c0_65] : memref<1x256x8xbf16, #tpu.memory_space<vmem>>, vector<1x256x8xbf16>
    tpu.vector_store %arg6[%c0_63, %c0_64, %c0_65], %88 {strides = array<i32>} : memref<1x256x8xbf16, #tpu.memory_space<vmem>>, vector<1x256x8xbf16>,
    %cst_66 = arith.constant dense<0.000000e+00> : vector<8xf32>
    %90 = vector.multi_reduction <add>, %86, %cst_66 [0] : vector<256x8xf32> to vector<8xf32>
    %91 = vector.shape_cast %90 : vector<8xf32> to vector<1x8xf32>
    %92 = vector.shape_cast %91 : vector<1x8xf32> to vector<1x1x8xf32>
    %c0_67 = arith.constant 0 : index
    %c0_68 = arith.constant 0 : index
    %c0_69 = arith.constant 0 : index
    %93 = vector.load %arg7[%c0_67, %c0_68, %c0_69] : memref<1x2x8xf32, #tpu.memory_space<vmem>>, vector<1x1x8xf32>
    tpu.vector_store %arg7[%c0_67, %c0_68, %c0_69], %92 {strides = array<i32>} : memref<1x2x8xf32, #tpu.memory_space<vmem>>, vector<1x1x8xf32>,
    %94 = arith.mulf %86, %86 : vector<256x8xf32>
    %cst_70 = arith.constant dense<0.000000e+00> : vector<8xf32>
    %95 = vector.multi_reduction <add>, %94, %cst_70 [0] : vector<256x8xf32> to vector<8xf32>
    %96 = vector.shape_cast %95 : vector<8xf32> to vector<1x8xf32>
    %97 = vector.shape_cast %96 : vector<1x8xf32> to vector<1x1x8xf32>
    %c0_71 = arith.constant 0 : index
    %c1_72 = arith.constant 1 : index
    %c0_73 = arith.constant 0 : index
    %98 = vector.load %arg7[%c0_71, %c1_72, %c0_73] : memref<1x2x8xf32, #tpu.memory_space<vmem>>, vector<1x1x8xf32>
    tpu.vector_store %arg7[%c0_71, %c1_72, %c0_73], %97 {strides = array<i32>} : memref<1x2x8xf32, #tpu.memory_space<vmem>>, vector<1x1x8xf32>,
    return
  }
  func.func @transform_0(%arg0: i32) -> (i32, i32, i32) {
    %c0_i32 = arith.constant 0 : i32
    %c0_i32_0 = arith.constant 0 : i32
    %c0_i32_1 = arith.constant 0 : i32
    return %arg0, %c0_i32, %c0_i32_0 : i32, i32, i32
  }
  func.func @transform_1(%arg0: i32) -> (i32, i32) {
    %c0_i32 = arith.constant 0 : i32
    %c0_i32_0 = arith.constant 0 : i32
    %c0_i32_1 = arith.constant 0 : i32
    return %c0_i32, %c0_i32_0 : i32, i32
  }
  func.func @transform_2(%arg0: i32) -> (i32, i32) {
    %c0_i32 = arith.constant 0 : i32
    %c0_i32_0 = arith.constant 0 : i32
    %c0_i32_1 = arith.constant 0 : i32
    return %c0_i32, %c0_i32_0 : i32, i32
  }
  func.func @transform_3(%arg0: i32) -> (i32, i32, i32, i32) {
    %c0_i32 = arith.constant 0 : i32
    %c0_i32_0 = arith.constant 0 : i32
    %c0_i32_1 = arith.constant 0 : i32
    %c0_i32_2 = arith.constant 0 : i32
    %c0_i32_3 = arith.constant 0 : i32
    return %c0_i32, %c0_i32_0, %c0_i32_1, %c0_i32_2 : i32, i32, i32, i32
  }
  func.func @transform_4(%arg0: i32) -> (i32, i32) {
    %c0_i32 = arith.constant 0 : i32
    %c0_i32_0 = arith.constant 0 : i32
    %c0_i32_1 = arith.constant 0 : i32
    return %c0_i32, %c0_i32_0 : i32, i32
  }
  func.func @transform_5(%arg0: i32) -> (i32, i32, i32) {
    %c0_i32 = arith.constant 0 : i32
    %c0_i32_0 = arith.constant 0 : i32
    %c0_i32_1 = arith.constant 0 : i32
    return %arg0, %c0_i32, %c0_i32_0 : i32, i32, i32
  }
  func.func @transform_6(%arg0: i32) -> (i32, i32, i32) {
    %c0_i32 = arith.constant 0 : i32
    %c0_i32_0 = arith.constant 0 : i32
    %c0_i32_1 = arith.constant 0 : i32
    return %arg0, %c0_i32, %c0_i32_0 : i32, i32, i32
  }
}

</mosaic_0001>

<llo_original>
// kernel: residual_block_pallas.5
$region0: #{residual_block_pallas.5}
  #allocation0 [shape = 'u32[]', space=smem, size = 0x4, offset = 0x4, fixed_abs, tag = 'smem constant byte address 0x4 - core index']
  #allocation1 [shape = 'u32[144,128]{1,0:T(1,128)}', space=vmem, size = 0x12000, scoped, tag = 'internal scratch']
  %s0 = inlined_call_operand.vmem [shape: bf16[2,256,8], index: 0, kind: input, shape index: {}]
  %s1 = inlined_call_operand.vmem [shape: bf16[2,256,8], index: 1, kind: input, shape index: {}]
  %s2 = inlined_call_operand.vmem [shape: f32[1,8], index: 2, kind: input, shape index: {}]
  %s3 = inlined_call_operand.vmem [shape: f32[1,8], index: 3, kind: input, shape index: {}]
  %s4 = inlined_call_operand.vmem [shape: f32[1,8], index: 4, kind: input, shape index: {}]
  %s5 = inlined_call_operand.vmem [shape: f32[2,256,8], index: 5, kind: output, shape index: {}]
  %s6 = sld [smem:[#allocation0]]
  $region53: #{residual_block_pallas.5} parent=0
    _
  %s8 = ssub.s32 1, %s6
  %s9 = scalar_select 0, %s8, %s6
  loop: start=0, step=1, limit=4
  $region2: #{residual_block_pallas.5} parent=0 // loop_pre_header
    _
  $region3: #{residual_block_pallas.5} parent=0 // loop_header
    %s11 = sphi 0, %s15
    %p12 = scmp.ge.s32.totalorder %s11, 4
    %s21 = sphi 0, %s23
    %s24 = sphi 0, %s21
    %s25 = sphi 0, %s24
    %s41 = sphi 0, %s25
    %s47 = sphi 0, %s49
    %s50 = sphi 0, %s47
    %s51 = sphi 0, %s50
    %s67 = sphi 0, %s51
    %s71 = sphi 0, %s71
    %s73 = sphi 0, %s71
    %s74 = sphi 0, %s73
    %s88 = sphi 0, %s74
    %s92 = sphi 0, %s92
    %s94 = sphi 0, %s92
    %s95 = sphi 0, %s94
    %s109 = sphi 0, %s95
    %s113 = sphi 0, %s113
    %s115 = sphi 0, %s113
    %s116 = sphi 0, %s115
    %s130 = sphi 0, %s116
    %s136 = sphi 0, %s138
    %s139 = sphi 0, %s136
    %s140 = sphi 0, %s139
    %s156 = sphi 0, %s140
  $region4: #{residual_block_pallas.5} parent=0 // loop_header_branch
    %14 = sbr.rel (%p12) target = $region8
  $region5: #{residual_block_pallas.5} parent=0 // loop_body
    %s16 = ssub.s32 %s11, 1
    %s17 = ssub.s32 %s11, 2
    %s18 = sadd.s32 %s11, 1
    %s19 = ssub.s32 %s11, %s18
    %p20 = scmp.eq.s32.totalorder %s19, 0
    %s22 = sadd.s32 %s21, 1
    %s23 = scalar_select %p20, %s21, %s22
    %p26 = pneg %p20
    %p27 = scmp.eq.s32.totalorder %s11, 1
    %p28 = por %p26, %p27
    %p29 = scmp.ne.s32.totalorder %s21, %s24
    %p30 = scmp.eq.s32.totalorder %s11, 0
    %p31 = por %p29, %p30
    %p32 = scmp.ne.s32.totalorder %s21, %s24
    %p33 = scmp.eq.s32.totalorder %s16, 1
    %p34 = por %p32, %p33
    %p35 = scmp.ne.s32.totalorder %s24, %s25
    %p36 = scmp.eq.s32.totalorder %s16, 0
    %p37 = por %p35, %p36
    %p38 = scmp.ne.s32.totalorder %s24, %s25
    %p39 = scmp.eq.s32.totalorder %s17, 1
    %p40 = por %p38, %p39
    %p42 = scmp.ne.s32.totalorder %s25, %s41
    %p43 = scmp.eq.s32.totalorder %s17, 0
    %p44 = por %p42, %p43
    %s45 = ssub.s32 %s11, %s18
    %p46 = scmp.eq.s32.totalorder %s45, 0
    %s48 = sadd.s32 %s47, 1
    %s49 = scalar_select %p46, %s47, %s48
    %p52 = pneg %p46
    %p53 = scmp.eq.s32.totalorder %s11, 1
    %p54 = por %p52, %p53
    %p55 = scmp.ne.s32.totalorder %s47, %s50
    %p56 = scmp.eq.s32.totalorder %s11, 0
    %p57 = por %p55, %p56
    %p58 = scmp.ne.s32.totalorder %s47, %s50
    %p59 = scmp.eq.s32.totalorder %s16, 1
    %p60 = por %p58, %p59
    %p61 = scmp.ne.s32.totalorder %s50, %s51
    %p62 = scmp.eq.s32.totalorder %s16, 0
    %p63 = por %p61, %p62
    %p64 = scmp.ne.s32.totalorder %s50, %s51
    %p65 = scmp.eq.s32.totalorder %s17, 1
    %p66 = por %p64, %p65
    %p68 = scmp.ne.s32.totalorder %s51, %s67
    %p69 = scmp.eq.s32.totalorder %s17, 0
    %p70 = por %p68, %p69
    %s72 = sadd.s32 %s71, 1
    %p75 = scmp.eq.s32.totalorder %s11, 1
    %p76 = scmp.ne.s32.totalorder %s71, %s73
    %p77 = scmp.eq.s32.totalorder %s11, 0
    %p78 = por %p76, %p77
    %p79 = scmp.ne.s32.totalorder %s71, %s73
    %p80 = scmp.eq.s32.totalorder %s16, 1
    %p81 = por %p79, %p80
    %p82 = scmp.ne.s32.totalorder %s73, %s74
    %p83 = scmp.eq.s32.totalorder %s16, 0
    %p84 = por %p82, %p83
    %p85 = scmp.ne.s32.totalorder %s73, %s74
    %p86 = scmp.eq.s32.totalorder %s17, 1
    %p87 = por %p85, %p86
    %p89 = scmp.ne.s32.totalorder %s74, %s88
    %p90 = scmp.eq.s32.totalorder %s17, 0
    %p91 = por %p89, %p90
    %s93 = sadd.s32 %s92, 1
    %p96 = scmp.eq.s32.totalorder %s11, 1
    %p97 = scmp.ne.s32.totalorder %s92, %s94
    %p98 = scmp.eq.s32.totalorder %s11, 0
    %p99 = por %p97, %p98
    %p100 = scmp.ne.s32.totalorder %s92, %s94
    %p101 = scmp.eq.s32.totalorder %s16, 1
    %p102 = por %p100, %p101
    %p103 = scmp.ne.s32.totalorder %s94, %s95
    %p104 = scmp.eq.s32.totalorder %s16, 0
    %p105 = por %p103, %p104
    %p106 = scmp.ne.s32.totalorder %s94, %s95
    %p107 = scmp.eq.s32.totalorder %s17, 1
    %p108 = por %p106, %p107
    %p110 = scmp.ne.s32.totalorder %s95, %s109
    %p111 = scmp.eq.s32.totalorder %s17, 0
    %p112 = por %p110, %p111
    %s114 = sadd.s32 %s113, 1
    %p117 = scmp.eq.s32.totalorder %s11, 1
    %p118 = scmp.ne.s32.totalorder %s113, %s115
    %p119 = scmp.eq.s32.totalorder %s11, 0
    %p120 = por %p118, %p119
    %p121 = scmp.ne.s32.totalorder %s113, %s115
    %p122 = scmp.eq.s32.totalorder %s16, 1
    %p123 = por %p121, %p122
    %p124 = scmp.ne.s32.totalorder %s115, %s116
    %p125 = scmp.eq.s32.totalorder %s16, 0
    %p126 = por %p124, %p125
    %p127 = scmp.ne.s32.totalorder %s115, %s116
    %p128 = scmp.eq.s32.totalorder %s17, 1
    %p129 = por %p127, %p128
    %p131 = scmp.ne.s32.totalorder %s116, %s130
    %p132 = scmp.eq.s32.totalorder %s17, 0
    %p133 = por %p131, %p132
    %s134 = ssub.s32 %s11, %s18
    %p135 = scmp.eq.s32.totalorder %s134, 0
    %s137 = sadd.s32 %s136, 1
    %s138 = scalar_select %p135, %s136, %s137
    %p141 = pneg %p135
    %p142 = scmp.eq.s32.totalorder %s11, 1
    %p143 = por %p141, %p142
    %p144 = scmp.ne.s32.totalorder %s136, %s139
    %p145 = scmp.eq.s32.totalorder %s11, 0
    %p146 = por %p144, %p145
    %p147 = scmp.ne.s32.totalorder %s136, %s139
    %p148 = scmp.eq.s32.totalorder %s16, 1
    %p149 = por %p147, %p148
    %p150 = scmp.ne.s32.totalorder %s139, %s140
    %p151 = scmp.eq.s32.totalorder %s16, 0
    %p152 = por %p150, %p151
    %p153 = scmp.ne.s32.totalorder %s139, %s140
    %p154 = scmp.eq.s32.totalorder %s17, 1
    %p155 = por %p153, %p154
    %p157 = scmp.ne.s32.totalorder %s140, %s156
    %p158 = scmp.eq.s32.totalorder %s17, 0
    %p159 = por %p157, %p158
    %p160 = scmp.le.s32.totalorder 1, %s11
    %p161 = scmp.lt.s32.totalorder %s11, 3
    %p162 = pnand %p160, %p161
    %p163 = pneg %p162
    // Predicated region
    $region9: #{residual_block_pallas.5} parent=5 // pred_check
      _
    $region10: #{residual_block_pallas.5} parent=5 // pred_check_branch
      %165 = sbr.rel (%p162) target = $region12
    $region11: #{residual_block_pallas.5} parent=5 // pred_region
      %s166 = ssub.s32 %s11, 1
      // Predicated region
      $region13: #{residual_block_pallas.5} parent=11 // pred_check
        %p167 = pneg %p84
      $region14: #{residual_block_pallas.5} parent=11 // pred_check_branch
        %169 = sbr.rel (%p167) target = $region16
      $region15: #{residual_block_pallas.5} parent=11 // pred_region
        _
      $region16: #{residual_block_pallas.5} parent=11 // pred_fallthru
        _
      // Predicated region
      $region17: #{residual_block_pallas.5} parent=11 // pred_check
        %p170 = pneg %p105
      $region18: #{residual_block_pallas.5} parent=11 // pred_check_branch
        %172 = sbr.rel (%p170) target = $region20
      $region19: #{residual_block_pallas.5} parent=11 // pred_region
        _
      $region20: #{residual_block_pallas.5} parent=11 // pred_fallthru
        _
      // Predicated region
      $region21: #{residual_block_pallas.5} parent=11 // pred_check
        %p173 = pneg %p126
      $region22: #{residual_block_pallas.5} parent=11 // pred_check_branch
        %175 = sbr.rel (%p173) target = $region24
      $region23: #{residual_block_pallas.5} parent=11 // pred_region
        _
      $region24: #{residual_block_pallas.5} parent=11 // pred_fallthru
        _
    $region12: #{residual_block_pallas.5} parent=5 // pred_fallthru
      _
    %p176 = scmp.lt.s32.totalorder %s11, 2
    // Predicated region
    $region25: #{residual_block_pallas.5} parent=5 // pred_check
      %p177 = pneg %p176
    $region26: #{residual_block_pallas.5} parent=5 // pred_check_branch
      %179 = sbr.rel (%p177) target = $region28
    $region27: #{residual_block_pallas.5} parent=5 // pred_region
      // Predicated region
      $region29: #{residual_block_pallas.5} parent=27 // pred_check
        %p180 = pneg %p31
      $region30: #{residual_block_pallas.5} parent=27 // pred_check_branch
        %182 = sbr.rel (%p180) target = $region32
      $region31: #{residual_block_pallas.5} parent=27 // pred_region
        %p183 = scmp.lt.s32.totalorder %s11, 1
        %s184 = scalar_select %p183, %s11, 1
        %s185 = smul.addr %s184, 32
        %s186 = smul.addr %s185, 4
        %s187 = scalar_lea.vmem %s0, %s186
      $region32: #{residual_block_pallas.5} parent=27 // pred_fallthru
        _
      // Predicated region
      $region33: #{residual_block_pallas.5} parent=27 // pred_check
        %p188 = pneg %p57
      $region34: #{residual_block_pallas.5} parent=27 // pred_check_branch
        %190 = sbr.rel (%p188) target = $region36
      $region35: #{residual_block_pallas.5} parent=27 // pred_region
        %p191 = scmp.lt.s32.totalorder %s11, 1
        %s192 = scalar_select %p191, %s11, 1
        %s193 = smul.addr %s192, 32
        %s194 = smul.addr %s193, 4
        %s195 = scalar_lea.vmem %s1, %s194
      $region36: #{residual_block_pallas.5} parent=27 // pred_fallthru
        _
    $region28: #{residual_block_pallas.5} parent=5 // pred_fallthru
      _
    %p196 = scmp.le.s32.totalorder 1, %s11
    %p197 = scmp.lt.s32.totalorder %s11, 3
    %p198 = pnand %p196, %p197
    %p199 = pneg %p198
    // Predicated region
    $region37: #{residual_block_pallas.5} parent=5 // pred_check
      _
    $region38: #{residual_block_pallas.5} parent=5 // pred_check_branch
      %201 = sbr.rel (%p198) target = $region40
    $region39: #{residual_block_pallas.5} parent=5 // pred_region
      %s202 = ssub.s32 %s11, 1
      %p203 = scmp.lt.s32.totalorder %s16, 1
      %s204 = scalar_select %p203, %s16, 1
      %s205 = smul.addr %s204, 32
      %s206 = smul.addr %s205, 4
      %s207 = scalar_lea.vmem %s0, %s206
      %p208 = pneg %p37
      %p209 = pneg %p34
      %p210 = scmp.lt.s32.totalorder %s16, 1
      %s211 = scalar_select %p210, %s16, 1
      %s212 = smul.addr %s211, 32
      %s213 = smul.addr %s212, 4
      %s214 = scalar_lea.vmem %s1, %s213
      %p215 = pneg %p63
      %p216 = pneg %p60
      %p217 = pneg %p84
      %p218 = pneg %p81
      %p219 = pneg %p105
      %p220 = pneg %p102
      %p221 = pneg %p126
      %p222 = pneg %p123
      %p223 = pneg %p152
      %p224 = pneg %p149
      %p225 = scmp.lt.s32.totalorder %s16, 1
      %s226 = scalar_select %p225, %s16, 1
      %s227 = smul.addr %s226, 32
      %s228 = smul.addr %s227, 8
      %s229 = scalar_lea.vmem %s5, %s228
      %p230 = scmp.lt.s32.totalorder %s16, 1
      %s231 = scalar_select %p230, %s16, 1
      %s232 = smul.addr %s231, 32
      %s233 = smul.addr %s232, 4
      %s234 = scalar_lea.vmem %s0, %s233
      %p235 = scmp.lt.s32.totalorder %s16, 1
      %s236 = scalar_select %p235, %s16, 1
      %s237 = smul.addr %s236, 32
      %s238 = smul.addr %s237, 4
      %s239 = scalar_lea.vmem %s1, %s238
      %p240 = scmp.lt.s32.totalorder %s16, 1
      %s241 = scalar_select %p240, %s16, 1
      %s242 = smul.addr %s241, 32
      %s243 = smul.addr %s242, 8
      %s244 = scalar_lea.vmem %s5, %s243
      %v245 = vld [vmem:[%s234] sm:$0xf]
      %v246 = vld [vmem:[%s234 + $0x4] sm:$0xf]
      %v247 = vld [vmem:[%s234 + $0x8] sm:$0xf]
      %v248 = vld [vmem:[%s234 + $0xc] sm:$0xf]
      %v249 = vld [vmem:[%s234 + $0x10] sm:$0xf]
      %v250 = vld [vmem:[%s234 + $0x14] sm:$0xf]
      %v251 = vld [vmem:[%s234 + $0x18] sm:$0xf]
      %v252 = vld [vmem:[%s234 + $0x1c] sm:$0xf]
      %v253 = vld [vmem:[%s234 + $0x20] sm:$0xf]
      %v254 = vld [vmem:[%s234 + $0x24] sm:$0xf]
      %v255 = vld [vmem:[%s234 + $0x28] sm:$0xf]
      %v256 = vld [vmem:[%s234 + $0x2c] sm:$0xf]
      %v257 = vld [vmem:[%s234 + $0x30] sm:$0xf]
      %v258 = vld [vmem:[%s234 + $0x34] sm:$0xf]
      %v259 = vld [vmem:[%s234 + $0x38] sm:$0xf]
      %v260 = vld [vmem:[%s234 + $0x3c] sm:$0xf]
      %v261 = vld [vmem:[%s234 + $0x40] sm:$0xf]
      %v262 = vld [vmem:[%s234 + $0x44] sm:$0xf]
      %v263 = vld [vmem:[%s234 + $0x48] sm:$0xf]
      %v264 = vld [vmem:[%s234 + $0x4c] sm:$0xf]
      %v265 = vld [vmem:[%s234 + $0x50] sm:$0xf]
      %v266 = vld [vmem:[%s234 + $0x54] sm:$0xf]
      %v267 = vld [vmem:[%s234 + $0x58] sm:$0xf]
      %v268 = vld [vmem:[%s234 + $0x5c] sm:$0xf]
      %v269 = vld [vmem:[%s234 + $0x60] sm:$0xf]
      %v270 = vld [vmem:[%s234 + $0x64] sm:$0xf]
      %v271 = vld [vmem:[%s234 + $0x68] sm:$0xf]
      %v272 = vld [vmem:[%s234 + $0x6c] sm:$0xf]
      %v273 = vld [vmem:[%s234 + $0x70] sm:$0xf]
      %v274 = vld [vmem:[%s234 + $0x74] sm:$0xf]
      %v275 = vld [vmem:[%s234 + $0x78] sm:$0xf]
      %v276 = vld [vmem:[%s234 + $0x7c] sm:$0xf]
      %v277 = vunpack.c.l.bf16 %v245
      %v278 = vunpack.c.l.bf16 %v246
      %v279 = vunpack.c.l.bf16 %v247
      %v280 = vunpack.c.l.bf16 %v248
      %v281 = vunpack.c.l.bf16 %v249
      %v282 = vunpack.c.l.bf16 %v250
      %v283 = vunpack.c.l.bf16 %v251
      %v284 = vunpack.c.l.bf16 %v252
      %v285 = vunpack.c.l.bf16 %v253
      %v286 = vunpack.c.l.bf16 %v254
      %v287 = vunpack.c.l.bf16 %v255
      %v288 = vunpack.c.l.bf16 %v256
      %v289 = vunpack.c.l.bf16 %v257
      %v290 = vunpack.c.l.bf16 %v258
      %v291 = vunpack.c.l.bf16 %v259
      %v292 = vunpack.c.l.bf16 %v260
      %v293 = vunpack.c.l.bf16 %v261
      %v294 = vunpack.c.l.bf16 %v262
      %v295 = vunpack.c.l.bf16 %v263
      %v296 = vunpack.c.l.bf16 %v264
      %v297 = vunpack.c.l.bf16 %v265
      %v298 = vunpack.c.l.bf16 %v266
      %v299 = vunpack.c.l.bf16 %v267
      %v300 = vunpack.c.l.bf16 %v268
      %v301 = vunpack.c.l.bf16 %v269
      %v302 = vunpack.c.l.bf16 %v270
      %v303 = vunpack.c.l.bf16 %v271
      %v304 = vunpack.c.l.bf16 %v272
      %v305 = vunpack.c.l.bf16 %v273
      %v306 = vunpack.c.l.bf16 %v274
      %v307 = vunpack.c.l.bf16 %v275
      %v308 = vunpack.c.l.bf16 %v276
      %v309 = vld [vmem:[%s2] sm:$0x1]
      %v311 = vlaneseq
      %v312 = vshrl.u32 %v311, 7
      %v313 = vsub.s32 0, %v312
      %v314 = vrot.slane %v309, %v313
      %v316 = vmul.f32 %v277, %v314
      %v317 = vmul.f32 %v278, %v314
      %v318 = vmul.f32 %v279, %v314
      %v319 = vmul.f32 %v280, %v314
      %v320 = vmul.f32 %v281, %v314
      %v321 = vmul.f32 %v282, %v314
      %v322 = vmul.f32 %v283, %v314
      %v323 = vmul.f32 %v284, %v314
      %v324 = vmul.f32 %v285, %v314
      %v325 = vmul.f32 %v286, %v314
      %v326 = vmul.f32 %v287, %v314
      %v327 = vmul.f32 %v288, %v314
      %v328 = vmul.f32 %v289, %v314
      %v329 = vmul.f32 %v290, %v314
      %v330 = vmul.f32 %v291, %v314
      %v331 = vmul.f32 %v292, %v314
      %v332 = vmul.f32 %v293, %v314
      %v333 = vmul.f32 %v294, %v314
      %v334 = vmul.f32 %v295, %v314
      %v335 = vmul.f32 %v296, %v314
      %v336 = vmul.f32 %v297, %v314
      %v337 = vmul.f32 %v298, %v314
      %v338 = vmul.f32 %v299, %v314
      %v339 = vmul.f32 %v300, %v314
      %v340 = vmul.f32 %v301, %v314
      %v341 = vmul.f32 %v302, %v314
      %v342 = vmul.f32 %v303, %v314
      %v343 = vmul.f32 %v304, %v314
      %v344 = vmul.f32 %v305, %v314
      %v345 = vmul.f32 %v306, %v314
      %v346 = vmul.f32 %v307, %v314
      %v347 = vmul.f32 %v308, %v314
      %v348 = vld [vmem:[%s239] sm:$0xf]
      %v349 = vld [vmem:[%s239 + $0x4] sm:$0xf]
      %v350 = vld [vmem:[%s239 + $0x8] sm:$0xf]
      %v351 = vld [vmem:[%s239 + $0xc] sm:$0xf]
      %v352 = vld [vmem:[%s239 + $0x10] sm:$0xf]
      %v353 = vld [vmem:[%s239 + $0x14] sm:$0xf]
      %v354 = vld [vmem:[%s239 + $0x18] sm:$0xf]
      %v355 = vld [vmem:[%s239 + $0x1c] sm:$0xf]
      %v356 = vld [vmem:[%s239 + $0x20] sm:$0xf]
      %v357 = vld [vmem:[%s239 + $0x24] sm:$0xf]
      %v358 = vld [vmem:[%s239 + $0x28] sm:$0xf]
      %v359 = vld [vmem:[%s239 + $0x2c] sm:$0xf]
      %v360 = vld [vmem:[%s239 + $0x30] sm:$0xf]
      %v361 = vld [vmem:[%s239 + $0x34] sm:$0xf]
      %v362 = vld [vmem:[%s239 + $0x38] sm:$0xf]
      %v363 = vld [vmem:[%s239 + $0x3c] sm:$0xf]
      %v364 = vld [vmem:[%s239 + $0x40] sm:$0xf]
      %v365 = vld [vmem:[%s239 + $0x44] sm:$0xf]
      %v366 = vld [vmem:[%s239 + $0x48] sm:$0xf]
      %v367 = vld [vmem:[%s239 + $0x4c] sm:$0xf]
      %v368 = vld [vmem:[%s239 + $0x50] sm:$0xf]
      %v369 = vld [vmem:[%s239 + $0x54] sm:$0xf]
      %v370 = vld [vmem:[%s239 + $0x58] sm:$0xf]
      %v371 = vld [vmem:[%s239 + $0x5c] sm:$0xf]
      %v372 = vld [vmem:[%s239 + $0x60] sm:$0xf]
      %v373 = vld [vmem:[%s239 + $0x64] sm:$0xf]
      %v374 = vld [vmem:[%s239 + $0x68] sm:$0xf]
      %v375 = vld [vmem:[%s239 + $0x6c] sm:$0xf]
      %v376 = vld [vmem:[%s239 + $0x70] sm:$0xf]
      %v377 = vld [vmem:[%s239 + $0x74] sm:$0xf]
      %v378 = vld [vmem:[%s239 + $0x78] sm:$0xf]
      %v379 = vld [vmem:[%s239 + $0x7c] sm:$0xf]
      %v380 = vunpack.c.l.bf16 %v348
      %v381 = vunpack.c.l.bf16 %v349
      %v382 = vunpack.c.l.bf16 %v350
      %v383 = vunpack.c.l.bf16 %v351
      %v384 = vunpack.c.l.bf16 %v352
      %v385 = vunpack.c.l.bf16 %v353
      %v386 = vunpack.c.l.bf16 %v354
      %v387 = vunpack.c.l.bf16 %v355
      %v388 = vunpack.c.l.bf16 %v356
      %v389 = vunpack.c.l.bf16 %v357
      %v390 = vunpack.c.l.bf16 %v358
      %v391 = vunpack.c.l.bf16 %v359
      %v392 = vunpack.c.l.bf16 %v360
      %v393 = vunpack.c.l.bf16 %v361
      %v394 = vunpack.c.l.bf16 %v362
      %v395 = vunpack.c.l.bf16 %v363
      %v396 = vunpack.c.l.bf16 %v364
      %v397 = vunpack.c.l.bf16 %v365
      %v398 = vunpack.c.l.bf16 %v366
      %v399 = vunpack.c.l.bf16 %v367
      %v400 = vunpack.c.l.bf16 %v368
      %v401 = vunpack.c.l.bf16 %v369
      %v402 = vunpack.c.l.bf16 %v370
      %v403 = vunpack.c.l.bf16 %v371
      %v404 = vunpack.c.l.bf16 %v372
      %v405 = vunpack.c.l.bf16 %v373
      %v406 = vunpack.c.l.bf16 %v374
      %v407 = vunpack.c.l.bf16 %v375
      %v408 = vunpack.c.l.bf16 %v376
      %v409 = vunpack.c.l.bf16 %v377
      %v410 = vunpack.c.l.bf16 %v378
      %v411 = vunpack.c.l.bf16 %v379
      %v412 = vld [vmem:[%s3] sm:$0x1]
      %v414 = vlaneseq
      %v415 = vshrl.u32 %v414, 7
      %v416 = vsub.s32 0, %v415
      %v417 = vrot.slane %v412, %v416
      %v419 = vmul.f32 %v380, %v417
      %v420 = vmul.f32 %v381, %v417
      %v421 = vmul.f32 %v382, %v417
      %v422 = vmul.f32 %v383, %v417
      %v423 = vmul.f32 %v384, %v417
      %v424 = vmul.f32 %v385, %v417
      %v425 = vmul.f32 %v386, %v417
      %v426 = vmul.f32 %v387, %v417
      %v427 = vmul.f32 %v388, %v417
      %v428 = vmul.f32 %v389, %v417
      %v429 = vmul.f32 %v390, %v417
      %v430 = vmul.f32 %v391, %v417
      %v431 = vmul.f32 %v392, %v417
      %v432 = vmul.f32 %v393, %v417
      %v433 = vmul.f32 %v394, %v417
      %v434 = vmul.f32 %v395, %v417
      %v435 = vmul.f32 %v396, %v417
      %v436 = vmul.f32 %v397, %v417
      %v437 = vmul.f32 %v398, %v417
      %v438 = vmul.f32 %v399, %v417
      %v439 = vmul.f32 %v400, %v417
      %v440 = vmul.f32 %v401, %v417
      %v441 = vmul.f32 %v402, %v417
      %v442 = vmul.f32 %v403, %v417
      %v443 = vmul.f32 %v404, %v417
      %v444 = vmul.f32 %v405, %v417
      %v445 = vmul.f32 %v406, %v417
      %v446 = vmul.f32 %v407, %v417
      %v447 = vmul.f32 %v408, %v417
      %v448 = vmul.f32 %v409, %v417
      %v449 = vmul.f32 %v410, %v417
      %v450 = vmul.f32 %v411, %v417
      %v451 = vadd.f32 %v316, %v419
      %v452 = vadd.f32 %v317, %v420
      %v453 = vadd.f32 %v318, %v421
      %v454 = vadd.f32 %v319, %v422
      %v455 = vadd.f32 %v320, %v423
      %v456 = vadd.f32 %v321, %v424
      %v457 = vadd.f32 %v322, %v425
      %v458 = vadd.f32 %v323, %v426
      %v459 = vadd.f32 %v324, %v427
      %v460 = vadd.f32 %v325, %v428
      %v461 = vadd.f32 %v326, %v429
      %v462 = vadd.f32 %v327, %v430
      %v463 = vadd.f32 %v328, %v431
      %v464 = vadd.f32 %v329, %v432
      %v465 = vadd.f32 %v330, %v433
      %v466 = vadd.f32 %v331, %v434
      %v467 = vadd.f32 %v332, %v435
      %v468 = vadd.f32 %v333, %v436
      %v469 = vadd.f32 %v334, %v437
      %v470 = vadd.f32 %v335, %v438
      %v471 = vadd.f32 %v336, %v439
      %v472 = vadd.f32 %v337, %v440
      %v473 = vadd.f32 %v338, %v441
      %v474 = vadd.f32 %v339, %v442
      %v475 = vadd.f32 %v340, %v443
      %v476 = vadd.f32 %v341, %v444
      %v477 = vadd.f32 %v342, %v445
      %v478 = vadd.f32 %v343, %v446
      %v479 = vadd.f32 %v344, %v447
      %v480 = vadd.f32 %v345, %v448
      %v481 = vadd.f32 %v346, %v449
      %v482 = vadd.f32 %v347, %v450
      %v483 = vld [vmem:[%s4] sm:$0x1]
      %v485 = vlaneseq
      %v486 = vshrl.u32 %v485, 7
      %v487 = vsub.s32 0, %v486
      %v488 = vrot.slane %v483, %v487
      %v490 = vadd.f32 %v451, %v488
      %v491 = vadd.f32 %v452, %v488
      %v492 = vadd.f32 %v453, %v488
      %v493 = vadd.f32 %v454, %v488
      %v494 = vadd.f32 %v455, %v488
      %v495 = vadd.f32 %v456, %v488
      %v496 = vadd.f32 %v457, %v488
      %v497 = vadd.f32 %v458, %v488
      %v498 = vadd.f32 %v459, %v488
      %v499 = vadd.f32 %v460, %v488
      %v500 = vadd.f32 %v461, %v488
      %v501 = vadd.f32 %v462, %v488
      %v502 = vadd.f32 %v463, %v488
      %v503 = vadd.f32 %v464, %v488
      %v504 = vadd.f32 %v465, %v488
      %v505 = vadd.f32 %v466, %v488
      %v506 = vadd.f32 %v467, %v488
      %v507 = vadd.f32 %v468, %v488
      %v508 = vadd.f32 %v469, %v488
      %v509 = vadd.f32 %v470, %v488
      %v510 = vadd.f32 %v471, %v488
      %v511 = vadd.f32 %v472, %v488
      %v512 = vadd.f32 %v473, %v488
      %v513 = vadd.f32 %v474, %v488
      %v514 = vadd.f32 %v475, %v488
      %v515 = vadd.f32 %v476, %v488
      %v516 = vadd.f32 %v477, %v488
      %v517 = vadd.f32 %v478, %v488
      %v518 = vadd.f32 %v479, %v488
      %v519 = vadd.f32 %v480, %v488
      %v520 = vadd.f32 %v481, %v488
      %v521 = vadd.f32 %v482, %v488
      %v522 = vmax.f32 %v490, 0.0
      %v523 = vmax.f32 %v491, 0.0
      %v524 = vmax.f32 %v492, 0.0
      %v525 = vmax.f32 %v493, 0.0
      %v526 = vmax.f32 %v494, 0.0
      %v527 = vmax.f32 %v495, 0.0
      %v528 = vmax.f32 %v496, 0.0
      %v529 = vmax.f32 %v497, 0.0
      %v530 = vmax.f32 %v498, 0.0
      %v531 = vmax.f32 %v499, 0.0
      %v532 = vmax.f32 %v500, 0.0
      %v533 = vmax.f32 %v501, 0.0
      %v534 = vmax.f32 %v502, 0.0
      %v535 = vmax.f32 %v503, 0.0
      %v536 = vmax.f32 %v504, 0.0
      %v537 = vmax.f32 %v505, 0.0
      %v538 = vmax.f32 %v506, 0.0
      %v539 = vmax.f32 %v507, 0.0
      %v540 = vmax.f32 %v508, 0.0
      %v541 = vmax.f32 %v509, 0.0
      %v542 = vmax.f32 %v510, 0.0
      %v543 = vmax.f32 %v511, 0.0
      %v544 = vmax.f32 %v512, 0.0
      %v545 = vmax.f32 %v513, 0.0
      %v546 = vmax.f32 %v514, 0.0
      %v547 = vmax.f32 %v515, 0.0
      %v548 = vmax.f32 %v516, 0.0
      %v549 = vmax.f32 %v517, 0.0
      %v550 = vmax.f32 %v518, 0.0
      %v551 = vmax.f32 %v519, 0.0
      %v552 = vmax.f32 %v520, 0.0
      %v553 = vmax.f32 %v521, 0.0
      %vm554 = vcmask 64512
      %555 = vst.msk [vmem:[%s244] sm:$0xff] %vm554, %v522
      %556 = vst.msk [vmem:[%s244 + $0x8] sm:$0xff] %vm554, %v523
      %557 = vst.msk [vmem:[%s244 + $0x10] sm:$0xff] %vm554, %v524
      %558 = vst.msk [vmem:[%s244 + $0x18] sm:$0xff] %vm554, %v525
      %559 = vst.msk [vmem:[%s244 + $0x20] sm:$0xff] %vm554, %v526
      %560 = vst.msk [vmem:[%s244 + $0x28] sm:$0xff] %vm554, %v527
      %561 = vst.msk [vmem:[%s244 + $0x30] sm:$0xff] %vm554, %v528
      %562 = vst.msk [vmem:[%s244 + $0x38] sm:$0xff] %vm554, %v529
      %563 = vst.msk [vmem:[%s244 + $0x40] sm:$0xff] %vm554, %v530
      %564 = vst.msk [vmem:[%s244 + $0x48] sm:$0xff] %vm554, %v531
      %565 = vst.msk [vmem:[%s244 + $0x50] sm:$0xff] %vm554, %v532
      %566 = vst.msk [vmem:[%s244 + $0x58] sm:$0xff] %vm554, %v533
      %567 = vst.msk [vmem:[%s244 + $0x60] sm:$0xff] %vm554, %v534
      %568 = vst.msk [vmem:[%s244 + $0x68] sm:$0xff] %vm554, %v535
      %569 = vst.msk [vmem:[%s244 + $0x70] sm:$0xff] %vm554, %v536
      %570 = vst.msk [vmem:[%s244 + $0x78] sm:$0xff] %vm554, %v537
      %571 = vst.msk [vmem:[%s244 + $0x80] sm:$0xff] %vm554, %v538
      %572 = vst.msk [vmem:[%s244 + $0x88] sm:$0xff] %vm554, %v539
      %573 = vst.msk [vmem:[%s244 + $0x90] sm:$0xff] %vm554, %v540
      %574 = vst.msk [vmem:[%s244 + $0x98] sm:$0xff] %vm554, %v541
      %575 = vst.msk [vmem:[%s244 + $0xa0] sm:$0xff] %vm554, %v542
      %576 = vst.msk [vmem:[%s244 + $0xa8] sm:$0xff] %vm554, %v543
      %577 = vst.msk [vmem:[%s244 + $0xb0] sm:$0xff] %vm554, %v544
      %578 = vst.msk [vmem:[%s244 + $0xb8] sm:$0xff] %vm554, %v545
      %579 = vst.msk [vmem:[%s244 + $0xc0] sm:$0xff] %vm554, %v546
      %580 = vst.msk [vmem:[%s244 + $0xc8] sm:$0xff] %vm554, %v547
      %581 = vst.msk [vmem:[%s244 + $0xd0] sm:$0xff] %vm554, %v548
      %582 = vst.msk [vmem:[%s244 + $0xd8] sm:$0xff] %vm554, %v549
      %583 = vst.msk [vmem:[%s244 + $0xe0] sm:$0xff] %vm554, %v550
      %584 = vst.msk [vmem:[%s244 + $0xe8] sm:$0xff] %vm554, %v551
      %585 = vst.msk [vmem:[%s244 + $0xf0] sm:$0xff] %vm554, %v552
      %586 = vst.msk [vmem:[%s244 + $0xf8] sm:$0xff] %vm554, %v553
      %p587 = scmp.lt.s32.totalorder %s16, 1
      %s588 = scalar_select %p587, %s16, 1
      %s589 = smul.addr %s588, 32
      %s590 = smul.addr %s589, 8
      %s591 = scalar_lea.vmem %s5, %s590
      // Predicated region
      $region41: #{residual_block_pallas.5} parent=39 // pred_check
        %p592 = pneg %p149
      $region42: #{residual_block_pallas.5} parent=39 // pred_check_branch
        %594 = sbr.rel (%p592) target = $region44
      $region43: #{residual_block_pallas.5} parent=39 // pred_region
        _
      $region44: #{residual_block_pallas.5} parent=39 // pred_fallthru
        _
    $region40: #{residual_block_pallas.5} parent=5 // pred_fallthru
      _
    %p595 = scmp.le.s32.totalorder 2, %s11
    // Predicated region
    $region45: #{residual_block_pallas.5} parent=5 // pred_check
      %p596 = pneg %p595
    $region46: #{residual_block_pallas.5} parent=5 // pred_check_branch
      %598 = sbr.rel (%p596) target = $region48
    $region47: #{residual_block_pallas.5} parent=5 // pred_region
      %s599 = ssub.s32 %s11, 2
      // Predicated region
      $region49: #{residual_block_pallas.5} parent=47 // pred_check
        %p600 = pneg %p155
      $region50: #{residual_block_pallas.5} parent=47 // pred_check_branch
        %602 = sbr.rel (%p600) target = $region52
      $region51: #{residual_block_pallas.5} parent=47 // pred_region
        %p603 = scmp.lt.s32.totalorder %s17, 1
        %s604 = scalar_select %p603, %s17, 1
        %s605 = smul.addr %s604, 32
        %s606 = smul.addr %s605, 8
        %s607 = scalar_lea.vmem %s5, %s606
      $region52: #{residual_block_pallas.5} parent=47 // pred_fallthru
        _
    $region48: #{residual_block_pallas.5} parent=5 // pred_fallthru
      _
  $region6: #{residual_block_pallas.5} parent=0 // loop_footer
    %s15 = sadd.s32 1, %s11
  $region7: #{residual_block_pallas.5} parent=0 // loop_footer_branch
    %10 = sbr.rel target = $region3
  $region8: #{residual_block_pallas.5} parent=0 // loop_exit
    _

// kernel: residual_block_pallas.4
$region0: #{residual_block_pallas.4}
  #allocation0 [shape = 'u32[]', space=smem, size = 0x4, offset = 0x4, fixed_abs, tag = 'smem constant byte address 0x4 - core index']
  #allocation1 [shape = 'u32[144,128]{1,0:T(1,128)}', space=vmem, size = 0x12000, scoped, tag = 'internal scratch']
  #allocation2 [shape = 'f32[18,18,8]{2,1,0:T(8,128)}', space=vmem, size = 0x36000, scoped, tag = 'scratch operand']
  %s0 = inlined_call_operand.vmem [shape: bf16[2,256,8], index: 0, kind: input, shape index: {}]
  %s1 = inlined_call_operand.vmem [shape: f32[1,8], index: 1, kind: input, shape index: {}]
  %s2 = inlined_call_operand.vmem [shape: f32[1,8], index: 2, kind: input, shape index: {}]
  %s3 = inlined_call_operand.vmem [shape: bf16[3,3,8,8], index: 3, kind: input, shape index: {}]
  %s4 = inlined_call_operand.vmem [shape: f32[1,8], index: 4, kind: input, shape index: {}]
  %s5 = inlined_call_operand.vmem [shape: bf16[2,256,8], index: 5, kind: output, shape index: {0}]
  %s6 = inlined_call_operand.vmem [shape: f32[2,2,8], index: 6, kind: output, shape index: {1}]
  %7 = xla_tuple %s5, %s6
  %s8 = sld [smem:[#allocation0]]
  $region61: #{residual_block_pallas.4} parent=0
    _
  %s10 = ssub.s32 1, %s8
  %s11 = scalar_select 0, %s10, %s8
  loop: start=0, step=1, limit=4
  $region2: #{residual_block_pallas.4} parent=0 // loop_pre_header
    _
  $region3: #{residual_block_pallas.4} parent=0 // loop_header
    %s13 = sphi 0, %s17
    %p14 = scmp.ge.s32.totalorder %s13, 4
    %s23 = sphi 0, %s25
    %s26 = sphi 0, %s23
    %s27 = sphi 0, %s26
    %s43 = sphi 0, %s27
    %s47 = sphi 0, %s47
    %s49 = sphi 0, %s47
    %s50 = sphi 0, %s49
    %s64 = sphi 0, %s50
    %s68 = sphi 0, %s68
    %s70 = sphi 0, %s68
    %s71 = sphi 0, %s70
    %s85 = sphi 0, %s71
    %s89 = sphi 0, %s89
    %s91 = sphi 0, %s89
    %s92 = sphi 0, %s91
    %s106 = sphi 0, %s92
    %s110 = sphi 0, %s110
    %s112 = sphi 0, %s110
    %s113 = sphi 0, %s112
    %s127 = sphi 0, %s113
    %s133 = sphi 0, %s135
    %s136 = sphi 0, %s133
    %s137 = sphi 0, %s136
    %s153 = sphi 0, %s137
    %s159 = sphi 0, %s161
    %s162 = sphi 0, %s159
    %s163 = sphi 0, %s162
    %s179 = sphi 0, %s163
  $region4: #{residual_block_pallas.4} parent=0 // loop_header_branch
    %16 = sbr.rel (%p14) target = $region8
  $region5: #{residual_block_pallas.4} parent=0 // loop_body
    %s18 = ssub.s32 %s13, 1
    %s19 = ssub.s32 %s13, 2
    %s20 = sadd.s32 %s13, 1
    %s21 = ssub.s32 %s13, %s20
    %p22 = scmp.eq.s32.totalorder %s21, 0
    %s24 = sadd.s32 %s23, 1
    %s25 = scalar_select %p22, %s23, %s24
    %p28 = pneg %p22
    %p29 = scmp.eq.s32.totalorder %s13, 1
    %p30 = por %p28, %p29
    %p31 = scmp.ne.s32.totalorder %s23, %s26
    %p32 = scmp.eq.s32.totalorder %s13, 0
    %p33 = por %p31, %p32
    %p34 = scmp.ne.s32.totalorder %s23, %s26
    %p35 = scmp.eq.s32.totalorder %s18, 1
    %p36 = por %p34, %p35
    %p37 = scmp.ne.s32.totalorder %s26, %s27
    %p38 = scmp.eq.s32.totalorder %s18, 0
    %p39 = por %p37, %p38
    %p40 = scmp.ne.s32.totalorder %s26, %s27
    %p41 = scmp.eq.s32.totalorder %s19, 1
    %p42 = por %p40, %p41
    %p44 = scmp.ne.s32.totalorder %s27, %s43
    %p45 = scmp.eq.s32.totalorder %s19, 0
    %p46 = por %p44, %p45
    %s48 = sadd.s32 %s47, 1
    %p51 = scmp.eq.s32.totalorder %s13, 1
    %p52 = scmp.ne.s32.totalorder %s47, %s49
    %p53 = scmp.eq.s32.totalorder %s13, 0
    %p54 = por %p52, %p53
    %p55 = scmp.ne.s32.totalorder %s47, %s49
    %p56 = scmp.eq.s32.totalorder %s18, 1
    %p57 = por %p55, %p56
    %p58 = scmp.ne.s32.totalorder %s49, %s50
    %p59 = scmp.eq.s32.totalorder %s18, 0
    %p60 = por %p58, %p59
    %p61 = scmp.ne.s32.totalorder %s49, %s50
    %p62 = scmp.eq.s32.totalorder %s19, 1
    %p63 = por %p61, %p62
    %p65 = scmp.ne.s32.totalorder %s50, %s64
    %p66 = scmp.eq.s32.totalorder %s19, 0
    %p67 = por %p65, %p66
    %s69 = sadd.s32 %s68, 1
    %p72 = scmp.eq.s32.totalorder %s13, 1
    %p73 = scmp.ne.s32.totalorder %s68, %s70
    %p74 = scmp.eq.s32.totalorder %s13, 0
    %p75 = por %p73, %p74
    %p76 = scmp.ne.s32.totalorder %s68, %s70
    %p77 = scmp.eq.s32.totalorder %s18, 1
    %p78 = por %p76, %p77
    %p79 = scmp.ne.s32.totalorder %s70, %s71
    %p80 = scmp.eq.s32.totalorder %s18, 0
    %p81 = por %p79, %p80
    %p82 = scmp.ne.s32.totalorder %s70, %s71
    %p83 = scmp.eq.s32.totalorder %s19, 1
    %p84 = por %p82, %p83
    %p86 = scmp.ne.s32.totalorder %s71, %s85
    %p87 = scmp.eq.s32.totalorder %s19, 0
    %p88 = por %p86, %p87
    %s90 = sadd.s32 %s89, 1
    %p93 = scmp.eq.s32.totalorder %s13, 1
    %p94 = scmp.ne.s32.totalorder %s89, %s91
    %p95 = scmp.eq.s32.totalorder %s13, 0
    %p96 = por %p94, %p95
    %p97 = scmp.ne.s32.totalorder %s89, %s91
    %p98 = scmp.eq.s32.totalorder %s18, 1
    %p99 = por %p97, %p98
    %p100 = scmp.ne.s32.totalorder %s91, %s92
    %p101 = scmp.eq.s32.totalorder %s18, 0
    %p102 = por %p100, %p101
    %p103 = scmp.ne.s32.totalorder %s91, %s92
    %p104 = scmp.eq.s32.totalorder %s19, 1
    %p105 = por %p103, %p104
    %p107 = scmp.ne.s32.totalorder %s92, %s106
    %p108 = scmp.eq.s32.totalorder %s19, 0
    %p109 = por %p107, %p108
    %s111 = sadd.s32 %s110, 1
    %p114 = scmp.eq.s32.totalorder %s13, 1
    %p115 = scmp.ne.s32.totalorder %s110, %s112
    %p116 = scmp.eq.s32.totalorder %s13, 0
    %p117 = por %p115, %p116
    %p118 = scmp.ne.s32.totalorder %s110, %s112
    %p119 = scmp.eq.s32.totalorder %s18, 1
    %p120 = por %p118, %p119
    %p121 = scmp.ne.s32.totalorder %s112, %s113
    %p122 = scmp.eq.s32.totalorder %s18, 0
    %p123 = por %p121, %p122
    %p124 = scmp.ne.s32.totalorder %s112, %s113
    %p125 = scmp.eq.s32.totalorder %s19, 1
    %p126 = por %p124, %p125
    %p128 = scmp.ne.s32.totalorder %s113, %s127
    %p129 = scmp.eq.s32.totalorder %s19, 0
    %p130 = por %p128, %p129
    %s131 = ssub.s32 %s13, %s20
    %p132 = scmp.eq.s32.totalorder %s131, 0
    %s134 = sadd.s32 %s133, 1
    %s135 = scalar_select %p132, %s133, %s134
    %p138 = pneg %p132
    %p139 = scmp.eq.s32.totalorder %s13, 1
    %p140 = por %p138, %p139
    %p141 = scmp.ne.s32.totalorder %s133, %s136
    %p142 = scmp.eq.s32.totalorder %s13, 0
    %p143 = por %p141, %p142
    %p144 = scmp.ne.s32.totalorder %s133, %s136
    %p145 = scmp.eq.s32.totalorder %s18, 1
    %p146 = por %p144, %p145
    %p147 = scmp.ne.s32.totalorder %s136, %s137
    %p148 = scmp.eq.s32.totalorder %s18, 0
    %p149 = por %p147, %p148
    %p150 = scmp.ne.s32.totalorder %s136, %s137
    %p151 = scmp.eq.s32.totalorder %s19, 1
    %p152 = por %p150, %p151
    %p154 = scmp.ne.s32.totalorder %s137, %s153
    %p155 = scmp.eq.s32.totalorder %s19, 0
    %p156 = por %p154, %p155
    %s157 = ssub.s32 %s13, %s20
    %p158 = scmp.eq.s32.totalorder %s157, 0
    %s160 = sadd.s32 %s159, 1
    %s161 = scalar_select %p158, %s159, %s160
    %p164 = pneg %p158
    %p165 = scmp.eq.s32.totalorder %s13, 1
    %p166 = por %p164, %p165
    %p167 = scmp.ne.s32.totalorder %s159, %s162
    %p168 = scmp.eq.s32.totalorder %s13, 0
    %p169 = por %p167, %p168
    %p170 = scmp.ne.s32.totalorder %s159, %s162
    %p171 = scmp.eq.s32.totalorder %s18, 1
    %p172 = por %p170, %p171
    %p173 = scmp.ne.s32.totalorder %s162, %s163
    %p174 = scmp.eq.s32.totalorder %s18, 0
    %p175 = por %p173, %p174
    %p176 = scmp.ne.s32.totalorder %s162, %s163
    %p177 = scmp.eq.s32.totalorder %s19, 1
    %p178 = por %p176, %p177
    %p180 = scmp.ne.s32.totalorder %s163, %s179
    %p181 = scmp.eq.s32.totalorder %s19, 0
    %p182 = por %p180, %p181
    %p183 = scmp.le.s32.totalorder 1, %s13
    %p184 = scmp.lt.s32.totalorder %s13, 3
    %p185 = pnand %p183, %p184
    %p186 = pneg %p185
    // Predicated region
    $region9: #{residual_block_pallas.4} parent=5 // pred_check
      _
    $region10: #{residual_block_pallas.4} parent=5 // pred_check_branch
      %188 = sbr.rel (%p185) target = $region12
    $region11: #{residual_block_pallas.4} parent=5 // pred_region
      %s189 = ssub.s32 %s13, 1
      // Predicated region
      $region13: #{residual_block_pallas.4} parent=11 // pred_check
        %p190 = pneg %p60
      $region14: #{residual_block_pallas.4} parent=11 // pred_check_branch
        %192 = sbr.rel (%p190) target = $region16
      $region15: #{residual_block_pallas.4} parent=11 // pred_region
        _
      $region16: #{residual_block_pallas.4} parent=11 // pred_fallthru
        _
      // Predicated region
      $region17: #{residual_block_pallas.4} parent=11 // pred_check
        %p193 = pneg %p81
      $region18: #{residual_block_pallas.4} parent=11 // pred_check_branch
        %195 = sbr.rel (%p193) target = $region20
      $region19: #{residual_block_pallas.4} parent=11 // pred_region
        _
      $region20: #{residual_block_pallas.4} parent=11 // pred_fallthru
        _
      // Predicated region
      $region21: #{residual_block_pallas.4} parent=11 // pred_check
        %p196 = pneg %p102
      $region22: #{residual_block_pallas.4} parent=11 // pred_check_branch
        %198 = sbr.rel (%p196) target = $region24
      $region23: #{residual_block_pallas.4} parent=11 // pred_region
        _
      $region24: #{residual_block_pallas.4} parent=11 // pred_fallthru
        _
      // Predicated region
      $region25: #{residual_block_pallas.4} parent=11 // pred_check
        %p199 = pneg %p123
      $region26: #{residual_block_pallas.4} parent=11 // pred_check_branch
        %201 = sbr.rel (%p199) target = $region28
      $region27: #{residual_block_pallas.4} parent=11 // pred_region
        _
      $region28: #{residual_block_pallas.4} parent=11 // pred_fallthru
        _
    $region12: #{residual_block_pallas.4} parent=5 // pred_fallthru
      _
    %p202 = scmp.lt.s32.totalorder %s13, 2
    // Predicated region
    $region29: #{residual_block_pallas.4} parent=5 // pred_check
      %p203 = pneg %p202
    $region30: #{residual_block_pallas.4} parent=5 // pred_check_branch
      %205 = sbr.rel (%p203) target = $region32
    $region31: #{residual_block_pallas.4} parent=5 // pred_region
      // Predicated region
      $region33: #{residual_block_pallas.4} parent=31 // pred_check
        %p206 = pneg %p33
      $region34: #{residual_block_pallas.4} parent=31 // pred_check_branch
        %208 = sbr.rel (%p206) target = $region36
      $region35: #{residual_block_pallas.4} parent=31 // pred_region
        %p209 = scmp.lt.s32.totalorder %s13, 1
        %s210 = scalar_select %p209, %s13, 1
        %s211 = smul.addr %s210, 32
        %s212 = smul.addr %s211, 4
        %s213 = scalar_lea.vmem %s0, %s212
      $region36: #{residual_block_pallas.4} parent=31 // pred_fallthru
        _
    $region32: #{residual_block_pallas.4} parent=5 // pred_fallthru
      _
    %p214 = scmp.le.s32.totalorder 1, %s13
    %p215 = scmp.lt.s32.totalorder %s13, 3
    %p216 = pnand %p214, %p215
    %p217 = pneg %p216
    // Predicated region
    $region37: #{residual_block_pallas.4} parent=5 // pred_check
      _
    $region38: #{residual_block_pallas.4} parent=5 // pred_check_branch
      %219 = sbr.rel (%p216) target = $region40
    $region39: #{residual_block_pallas.4} parent=5 // pred_region
      %s220 = ssub.s32 %s13, 1
      %p221 = scmp.lt.s32.totalorder %s18, 1
      %s222 = scalar_select %p221, %s18, 1
      %s223 = smul.addr %s222, 32
      %s224 = smul.addr %s223, 4
      %s225 = scalar_lea.vmem %s0, %s224
      %p226 = pneg %p39
      %p227 = pneg %p36
      %p228 = pneg %p60
      %p229 = pneg %p57
      %p230 = pneg %p81
      %p231 = pneg %p78
      %p232 = pneg %p102
      %p233 = pneg %p99
      %p234 = pneg %p123
      %p235 = pneg %p120
      %p236 = pneg %p149
      %p237 = pneg %p146
      %p238 = scmp.lt.s32.totalorder %s18, 1
      %s239 = scalar_select %p238, %s18, 1
      %s240 = smul.addr %s239, 32
      %s241 = smul.addr %s240, 4
      %s242 = scalar_lea.vmem %s5, %s241
      %p243 = pneg %p175
      %p244 = pneg %p172
      %p245 = scmp.lt.s32.totalorder %s18, 1
      %s246 = scalar_select %p245, %s18, 1
      %s247 = smul.addr %s246, 2
      %s248 = scalar_lea.vmem %s6, %s247
      %p249 = scmp.lt.s32.totalorder %s18, 1
      %s250 = scalar_select %p249, %s18, 1
      %s251 = smul.addr %s250, 32
      %s252 = smul.addr %s251, 4
      %s253 = scalar_lea.vmem %s0, %s252
      %p254 = scmp.lt.s32.totalorder %s18, 1
      %s255 = scalar_select %p254, %s18, 1
      %s256 = smul.addr %s255, 32
      %s257 = smul.addr %s256, 4
      %s258 = scalar_lea.vmem %s5, %s257
      %p259 = scmp.lt.s32.totalorder %s18, 1
      %s260 = scalar_select %p259, %s18, 1
      %s261 = smul.addr %s260, 2
      %s262 = scalar_lea.vmem %s6, %s261
      %v264 = vld [vmem:[%s253] sm:$0xf]
      %v265 = vld [vmem:[%s253 + $0x4] sm:$0xf]
      %v266 = vld [vmem:[%s253 + $0x8] sm:$0xf]
      %v267 = vld [vmem:[%s253 + $0xc] sm:$0xf]
      %v268 = vld [vmem:[%s253 + $0x10] sm:$0xf]
      %v269 = vld [vmem:[%s253 + $0x14] sm:$0xf]
      %v270 = vld [vmem:[%s253 + $0x18] sm:$0xf]
      %v271 = vld [vmem:[%s253 + $0x1c] sm:$0xf]
      %v272 = vld [vmem:[%s253 + $0x20] sm:$0xf]
      %v273 = vld [vmem:[%s253 + $0x24] sm:$0xf]
      %v274 = vld [vmem:[%s253 + $0x28] sm:$0xf]
      %v275 = vld [vmem:[%s253 + $0x2c] sm:$0xf]
      %v276 = vld [vmem:[%s253 + $0x30] sm:$0xf]
      %v277 = vld [vmem:[%s253 + $0x34] sm:$0xf]
      %v278 = vld [vmem:[%s253 + $0x38] sm:$0xf]
      %v279 = vld [vmem:[%s253 + $0x3c] sm:$0xf]
      %v280 = vld [vmem:[%s253 + $0x40] sm:$0xf]
      %v281 = vld [vmem:[%s253 + $0x44] sm:$0xf]
      %v282 = vld [vmem:[%s253 + $0x48] sm:$0xf]
      %v283 = vld [vmem:[%s253 + $0x4c] sm:$0xf]
      %v284 = vld [vmem:[%s253 + $0x50] sm:$0xf]
      %v285 = vld [vmem:[%s253 + $0x54] sm:$0xf]
      %v286 = vld [vmem:[%s253 + $0x58] sm:$0xf]
      %v287 = vld [vmem:[%s253 + $0x5c] sm:$0xf]
      %v288 = vld [vmem:[%s253 + $0x60] sm:$0xf]
      %v289 = vld [vmem:[%s253 + $0x64] sm:$0xf]
      %v290 = vld [vmem:[%s253 + $0x68] sm:$0xf]
      %v291 = vld [vmem:[%s253 + $0x6c] sm:$0xf]
      %v292 = vld [vmem:[%s253 + $0x70] sm:$0xf]
      %v293 = vld [vmem:[%s253 + $0x74] sm:$0xf]
      %v294 = vld [vmem:[%s253 + $0x78] sm:$0xf]
      %v295 = vld [vmem:[%s253 + $0x7c] sm:$0xf]
      %v296 = vunpack.c.l.bf16 %v264
      %v297 = vunpack.c.l.bf16 %v265
      %v298 = vunpack.c.l.bf16 %v266
      %v299 = vunpack.c.l.bf16 %v267
      %v300 = vunpack.c.l.bf16 %v268
      %v301 = vunpack.c.l.bf16 %v269
      %v302 = vunpack.c.l.bf16 %v270
      %v303 = vunpack.c.l.bf16 %v271
      %v304 = vunpack.c.l.bf16 %v272
      %v305 = vunpack.c.l.bf16 %v273
      %v306 = vunpack.c.l.bf16 %v274
      %v307 = vunpack.c.l.bf16 %v275
      %v308 = vunpack.c.l.bf16 %v276
      %v309 = vunpack.c.l.bf16 %v277
      %v310 = vunpack.c.l.bf16 %v278
      %v311 = vunpack.c.l.bf16 %v279
      %v312 = vunpack.c.l.bf16 %v280
      %v313 = vunpack.c.l.bf16 %v281
      %v314 = vunpack.c.l.bf16 %v282
      %v315 = vunpack.c.l.bf16 %v283
      %v316 = vunpack.c.l.bf16 %v284
      %v317 = vunpack.c.l.bf16 %v285
      %v318 = vunpack.c.l.bf16 %v286
      %v319 = vunpack.c.l.bf16 %v287
      %v320 = vunpack.c.l.bf16 %v288
      %v321 = vunpack.c.l.bf16 %v289
      %v322 = vunpack.c.l.bf16 %v290
      %v323 = vunpack.c.l.bf16 %v291
      %v324 = vunpack.c.l.bf16 %v292
      %v325 = vunpack.c.l.bf16 %v293
      %v326 = vunpack.c.l.bf16 %v294
      %v327 = vunpack.c.l.bf16 %v295
      %v328 = vld [vmem:[%s1] sm:$0x1]
      %v330 = vlaneseq
      %v331 = vshrl.u32 %v330, 7
      %v332 = vsub.s32 0, %v331
      %v333 = vrot.slane %v328, %v332
      %v335 = vmul.f32 %v296, %v333
      %v336 = vmul.f32 %v297, %v333
      %v337 = vmul.f32 %v298, %v333
      %v338 = vmul.f32 %v299, %v333
      %v339 = vmul.f32 %v300, %v333
      %v340 = vmul.f32 %v301, %v333
      %v341 = vmul.f32 %v302, %v333
      %v342 = vmul.f32 %v303, %v333
      %v343 = vmul.f32 %v304, %v333
      %v344 = vmul.f32 %v305, %v333
      %v345 = vmul.f32 %v306, %v333
      %v346 = vmul.f32 %v307, %v333
      %v347 = vmul.f32 %v308, %v333
      %v348 = vmul.f32 %v309, %v333
      %v349 = vmul.f32 %v310, %v333
      %v350 = vmul.f32 %v311, %v333
      %v351 = vmul.f32 %v312, %v333
      %v352 = vmul.f32 %v313, %v333
      %v353 = vmul.f32 %v314, %v333
      %v354 = vmul.f32 %v315, %v333
      %v355 = vmul.f32 %v316, %v333
      %v356 = vmul.f32 %v317, %v333
      %v357 = vmul.f32 %v318, %v333
      %v358 = vmul.f32 %v319, %v333
      %v359 = vmul.f32 %v320, %v333
      %v360 = vmul.f32 %v321, %v333
      %v361 = vmul.f32 %v322, %v333
      %v362 = vmul.f32 %v323, %v333
      %v363 = vmul.f32 %v324, %v333
      %v364 = vmul.f32 %v325, %v333
      %v365 = vmul.f32 %v326, %v333
      %v366 = vmul.f32 %v327, %v333
      %v367 = vld [vmem:[%s2] sm:$0x1]
      %v369 = vlaneseq
      %v370 = vshrl.u32 %v369, 7
      %v371 = vsub.s32 0, %v370
      %v372 = vrot.slane %v367, %v371
      %v374 = vadd.f32 %v335, %v372
      %v375 = vadd.f32 %v336, %v372
      %v376 = vadd.f32 %v337, %v372
      %v377 = vadd.f32 %v338, %v372
      %v378 = vadd.f32 %v339, %v372
      %v379 = vadd.f32 %v340, %v372
      %v380 = vadd.f32 %v341, %v372
      %v381 = vadd.f32 %v342, %v372
      %v382 = vadd.f32 %v343, %v372
      %v383 = vadd.f32 %v344, %v372
      %v384 = vadd.f32 %v345, %v372
      %v385 = vadd.f32 %v346, %v372
      %v386 = vadd.f32 %v347, %v372
      %v387 = vadd.f32 %v348, %v372
      %v388 = vadd.f32 %v349, %v372
      %v389 = vadd.f32 %v350, %v372
      %v390 = vadd.f32 %v351, %v372
      %v391 = vadd.f32 %v352, %v372
      %v392 = vadd.f32 %v353, %v372
      %v393 = vadd.f32 %v354, %v372
      %v394 = vadd.f32 %v355, %v372
      %v395 = vadd.f32 %v356, %v372
      %v396 = vadd.f32 %v357, %v372
      %v397 = vadd.f32 %v358, %v372
      %v398 = vadd.f32 %v359, %v372
      %v399 = vadd.f32 %v360, %v372
      %v400 = vadd.f32 %v361, %v372
      %v401 = vadd.f32 %v362, %v372
      %v402 = vadd.f32 %v363, %v372
      %v403 = vadd.f32 %v364, %v372
      %v404 = vadd.f32 %v365, %v372
      %v405 = vadd.f32 %v366, %v372
      %v406 = vmax.f32 %v374, 0.0
      %v407 = vmax.f32 %v375, 0.0
      %v408 = vmax.f32 %v376, 0.0
      %v409 = vmax.f32 %v377, 0.0
      %v410 = vmax.f32 %v378, 0.0
      %v411 = vmax.f32 %v379, 0.0
      %v412 = vmax.f32 %v380, 0.0
      %v413 = vmax.f32 %v381, 0.0
      %v414 = vmax.f32 %v382, 0.0
      %v415 = vmax.f32 %v383, 0.0
      %v416 = vmax.f32 %v384, 0.0
      %v417 = vmax.f32 %v385, 0.0
      %v418 = vmax.f32 %v386, 0.0
      %v419 = vmax.f32 %v387, 0.0
      %v420 = vmax.f32 %v388, 0.0
      %v421 = vmax.f32 %v389, 0.0
      %v422 = vmax.f32 %v390, 0.0
      %v423 = vmax.f32 %v391, 0.0
      %v424 = vmax.f32 %v392, 0.0
      %v425 = vmax.f32 %v393, 0.0
      %v426 = vmax.f32 %v394, 0.0
      %v427 = vmax.f32 %v395, 0.0
      %v428 = vmax.f32 %v396, 0.0
      %v429 = vmax.f32 %v397, 0.0
      %v430 = vmax.f32 %v398, 0.0
      %v431 = vmax.f32 %v399, 0.0
      %v432 = vmax.f32 %v400, 0.0
      %v433 = vmax.f32 %v401, 0.0
      %v434 = vmax.f32 %v402, 0.0
      %v435 = vmax.f32 %v403, 0.0
      %v436 = vmax.f32 %v404, 0.0
      %v437 = vmax.f32 %v405, 0.0
      %vm438 = vcmask 64512
      %439 = vst.msk [vmem:[#allocation2] sm:$0xff] %vm438, 0.0
      %440 = vst.msk [vmem:[#allocation2 + $0x8] sm:$0xff] %vm438, 0.0
      %vm441 = vcmask 58368
      %442 = vst.msk [vmem:[#allocation2 + $0x10] sm:$0x3] %vm441, 0.0
      %s443 = scalar_lea.vmem [#allocation2], 408
      %444 = vst.msk [vmem:[%s443] sm:$0xff] %vm438, 0.0
      %445 = vst.msk [vmem:[%s443 + $0x8] sm:$0xff] %vm438, 0.0
      %446 = vst.msk [vmem:[%s443 + $0x10] sm:$0x3] %vm441, 0.0
      %vm447 = vcmask 57344
      %448 = vst.msk [vmem:[#allocation2] sm:$0x1] %vm447, 0.0
      %449 = vst.msk [vmem:[#allocation2 + $0x18] sm:$0x1] %vm447, 0.0
      %450 = vst.msk [vmem:[#allocation2 + $0x30] sm:$0x1] %vm447, 0.0
      %451 = vst.msk [vmem:[#allocation2 + $0x48] sm:$0x1] %vm447, 0.0
      %452 = vst.msk [vmem:[#allocation2 + $0x60] sm:$0x1] %vm447, 0.0
      %453 = vst.msk [vmem:[#allocation2 + $0x78] sm:$0x1] %vm447, 0.0
      %454 = vst.msk [vmem:[#allocation2 + $0x90] sm:$0x1] %vm447, 0.0
      %455 = vst.msk [vmem:[#allocation2 + $0xa8] sm:$0x1] %vm447, 0.0
      %456 = vst.msk [vmem:[#allocation2 + $0xc0] sm:$0x1] %vm447, 0.0
      %457 = vst.msk [vmem:[#allocation2 + $0xd8] sm:$0x1] %vm447, 0.0
      %458 = vst.msk [vmem:[#allocation2 + $0xf0] sm:$0x1] %vm447, 0.0
      %459 = vst.msk [vmem:[#allocation2 + $0x108] sm:$0x1] %vm447, 0.0
      %460 = vst.msk [vmem:[#allocation2 + $0x120] sm:$0x1] %vm447, 0.0
      %461 = vst.msk [vmem:[#allocation2 + $0x138] sm:$0x1] %vm447, 0.0
      %462 = vst.msk [vmem:[#allocation2 + $0x150] sm:$0x1] %vm447, 0.0
      %463 = vst.msk [vmem:[#allocation2 + $0x168] sm:$0x1] %vm447, 0.0
      %464 = vst.msk [vmem:[#allocation2 + $0x180] sm:$0x1] %vm447, 0.0
      %465 = vst.msk [vmem:[#allocation2 + $0x198] sm:$0x1] %vm447, 0.0
      %466 = vst.msk [vmem:[#allocation2 + $0x11] sm:$0x1] %vm447, 0.0
      %467 = vst.msk [vmem:[#allocation2 + $0x29] sm:$0x1] %vm447, 0.0
      %468 = vst.msk [vmem:[#allocation2 + $0x41] sm:$0x1] %vm447, 0.0
      %469 = vst.msk [vmem:[#allocation2 + $0x59] sm:$0x1] %vm447, 0.0
      %470 = vst.msk [vmem:[#allocation2 + $0x71] sm:$0x1] %vm447, 0.0
      %471 = vst.msk [vmem:[#allocation2 + $0x89] sm:$0x1] %vm447, 0.0
      %472 = vst.msk [vmem:[#allocation2 + $0xa1] sm:$0x1] %vm447, 0.0
      %473 = vst.msk [vmem:[#allocation2 + $0xb9] sm:$0x1] %vm447, 0.0
      %474 = vst.msk [vmem:[#allocation2 + $0xd1] sm:$0x1] %vm447, 0.0
      %475 = vst.msk [vmem:[#allocation2 + $0xe9] sm:$0x1] %vm447, 0.0
      %476 = vst.msk [vmem:[#allocation2 + $0x101] sm:$0x1] %vm447, 0.0
      %477 = vst.msk [vmem:[#allocation2 + $0x119] sm:$0x1] %vm447, 0.0
      %478 = vst.msk [vmem:[#allocation2 + $0x131] sm:$0x1] %vm447, 0.0
      %479 = vst.msk [vmem:[#allocation2 + $0x149] sm:$0x1] %vm447, 0.0
      %480 = vst.msk [vmem:[#allocation2 + $0x161] sm:$0x1] %vm447, 0.0
      %481 = vst.msk [vmem:[#allocation2 + $0x179] sm:$0x1] %vm447, 0.0
      %482 = vst.msk [vmem:[#allocation2 + $0x191] sm:$0x1] %vm447, 0.0
      %483 = vst.msk [vmem:[#allocation2 + $0x1a9] sm:$0x1] %vm447, 0.0
      %s484 = scalar_lea.vmem [#allocation2], 24
      %485 = vst.msk [vmem:[%s484 + $0x1] sm:$0xff] %vm438, %v406
      %486 = vst.msk [vmem:[%s484 + $0x9] sm:$0xff] %vm438, %v407
      %487 = vst.msk [vmem:[%s484 + $0x19] sm:$0xff] %vm438, %v408
      %488 = vst.msk [vmem:[%s484 + $0x21] sm:$0xff] %vm438, %v409
      %489 = vst.msk [vmem:[%s484 + $0x31] sm:$0xff] %vm438, %v410
      %490 = vst.msk [vmem:[%s484 + $0x39] sm:$0xff] %vm438, %v411
      %491 = vst.msk [vmem:[%s484 + $0x49] sm:$0xff] %vm438, %v412
      %492 = vst.msk [vmem:[%s484 + $0x51] sm:$0xff] %vm438, %v413
      %493 = vst.msk [vmem:[%s484 + $0x61] sm:$0xff] %vm438, %v414
      %494 = vst.msk [vmem:[%s484 + $0x69] sm:$0xff] %vm438, %v415
      %495 = vst.msk [vmem:[%s484 + $0x79] sm:$0xff] %vm438, %v416
      %496 = vst.msk [vmem:[%s484 + $0x81] sm:$0xff] %vm438, %v417
      %497 = vst.msk [vmem:[%s484 + $0x91] sm:$0xff] %vm438, %v418
      %498 = vst.msk [vmem:[%s484 + $0x99] sm:$0xff] %vm438, %v419
      %499 = vst.msk [vmem:[%s484 + $0xa9] sm:$0xff] %vm438, %v420
      %500 = vst.msk [vmem:[%s484 + $0xb1] sm:$0xff] %vm438, %v421
      %501 = vst.msk [vmem:[%s484 + $0xc1] sm:$0xff] %vm438, %v422
      %502 = vst.msk [vmem:[%s484 + $0xc9] sm:$0xff] %vm438, %v423
      %503 = vst.msk [vmem:[%s484 + $0xd9] sm:$0xff] %vm438, %v424
      %504 = vst.msk [vmem:[%s484 + $0xe1] sm:$0xff] %vm438, %v425
      %505 = vst.msk [vmem:[%s484 + $0xf1] sm:$0xff] %vm438, %v426
      %506 = vst.msk [vmem:[%s484 + $0xf9] sm:$0xff] %vm438, %v427
      %507 = vst.msk [vmem:[%s484 + $0x109] sm:$0xff] %vm438, %v428
      %508 = vst.msk [vmem:[%s484 + $0x111] sm:$0xff] %vm438, %v429
      %509 = vst.msk [vmem:[%s484 + $0x121] sm:$0xff] %vm438, %v430
      %510 = vst.msk [vmem:[%s484 + $0x129] sm:$0xff] %vm438, %v431
      %511 = vst.msk [vmem:[%s484 + $0x139] sm:$0xff] %vm438, %v432
      %512 = vst.msk [vmem:[%s484 + $0x141] sm:$0xff] %vm438, %v433
      %513 = vst.msk [vmem:[%s484 + $0x151] sm:$0xff] %vm438, %v434
      %514 = vst.msk [vmem:[%s484 + $0x159] sm:$0xff] %vm438, %v435
      %515 = vst.msk [vmem:[%s484 + $0x169] sm:$0xff] %vm438, %v436
      %516 = vst.msk [vmem:[%s484 + $0x171] sm:$0xff] %vm438, %v437
      %v517 = vld [vmem:[%s3] sm:$0xf]
      %v518 = vld [vmem:[%s3 + $0x4] sm:$0xf]
      %v519 = vld [vmem:[%s3 + $0x8] sm:$0xf]
      %v520 = vld [vmem:[%s3 + $0xc] sm:$0xf]
      %v521 = vld [vmem:[%s3 + $0x10] sm:$0xf]
      %v522 = vld [vmem:[%s3 + $0x14] sm:$0xf]
      %v523 = vld [vmem:[%s3 + $0x18] sm:$0xf]
      %v524 = vld [vmem:[%s3 + $0x1c] sm:$0xf]
      %v525 = vld [vmem:[%s3 + $0x20] sm:$0xf]
      %v526 = vld [vmem:[%s4] sm:$0x1]
      %v527 = vld [vmem:[#allocation2] sm:$0xff]
      %v528 = vld [vmem:[#allocation2 + $0x8] sm:$0xff]
      %v529 = vld [vmem:[#allocation2 + $0x18] sm:$0xff]
      %v530 = vld [vmem:[#allocation2 + $0x20] sm:$0xff]
      %v531 = vld [vmem:[#allocation2 + $0x30] sm:$0xff]
      %v532 = vld [vmem:[#allocation2 + $0x38] sm:$0xff]
      %v533 = vld [vmem:[#allocation2 + $0x48] sm:$0xff]
      %v534 = vld [vmem:[#allocation2 + $0x50] sm:$0xff]
      %v535 = vld [vmem:[#allocation2 + $0x60] sm:$0xff]
      %v536 = vld [vmem:[#allocation2 + $0x68] sm:$0xff]
      %v537 = vld [vmem:[#allocation2 + $0x78] sm:$0xff]
      %v538 = vld [vmem:[#allocation2 + $0x80] sm:$0xff]
      %v539 = vld [vmem:[#allocation2 + $0x90] sm:$0xff]
      %v540 = vld [vmem:[#allocation2 + $0x98] sm:$0xff]
      %v541 = vld [vmem:[#allocation2 + $0xa8] sm:$0xff]
      %v542 = vld [vmem:[#allocation2 + $0xb0] sm:$0xff]
      %v543 = vld [vmem:[#allocation2 + $0xc0] sm:$0xff]
      %v544 = vld [vmem:[#allocation2 + $0xc8] sm:$0xff]
      %v545 = vld [vmem:[#allocation2 + $0xd8] sm:$0xff]
      %v546 = vld [vmem:[#allocation2 + $0xe0] sm:$0xff]
      %v547 = vld [vmem:[#allocation2 + $0xf0] sm:$0xff]
      %v548 = vld [vmem:[#allocation2 + $0xf8] sm:$0xff]
      %v549 = vld [vmem:[#allocation2 + $0x108] sm:$0xff]
      %v550 = vld [vmem:[#allocation2 + $0x110] sm:$0xff]
      %v551 = vld [vmem:[#allocation2 + $0x120] sm:$0xff]
      %v552 = vld [vmem:[#allocation2 + $0x128] sm:$0xff]
      %v553 = vld [vmem:[#allocation2 + $0x138] sm:$0xff]
      %v554 = vld [vmem:[#allocation2 + $0x140] sm:$0xff]
      %v555 = vld [vmem:[#allocation2 + $0x150] sm:$0xff]
      %v556 = vld [vmem:[#allocation2 + $0x158] sm:$0xff]
      %v557 = vld [vmem:[#allocation2 + $0x168] sm:$0xff]
      %v558 = vld [vmem:[#allocation2 + $0x170] sm:$0xff]
      %v559 = vpack.c.bf16 %v528, %v527
      %v560 = vpack.c.bf16 %v530, %v529
      %v561 = vpack.c.bf16 %v532, %v531
      %v562 = vpack.c.bf16 %v534, %v533
      %v563 = vpack.c.bf16 %v536, %v535
      %v564 = vpack.c.bf16 %v538, %v537
      %v565 = vpack.c.bf16 %v540, %v539
      %v566 = vpack.c.bf16 %v542, %v541
      %v567 = vpack.c.bf16 %v544, %v543
      %v568 = vpack.c.bf16 %v546, %v545
      %v569 = vpack.c.bf16 %v548, %v547
      %v570 = vpack.c.bf16 %v550, %v549
      %v571 = vpack.c.bf16 %v552, %v551
      %v572 = vpack.c.bf16 %v554, %v553
      %v573 = vpack.c.bf16 %v556, %v555
      %v574 = vpack.c.bf16 %v558, %v557
      %v575 = vld [vmem:[#allocation2 + $0x1] sm:$0xff]
      %v576 = vld [vmem:[#allocation2 + $0x9] sm:$0xff]
      %v577 = vld [vmem:[#allocation2 + $0x19] sm:$0xff]
      %v578 = vld [vmem:[#allocation2 + $0x21] sm:$0xff]
      %v579 = vld [vmem:[#allocation2 + $0x31] sm:$0xff]
      %v580 = vld [vmem:[#allocation2 + $0x39] sm:$0xff]
      %v581 = vld [vmem:[#allocation2 + $0x49] sm:$0xff]
      %v582 = vld [vmem:[#allocation2 + $0x51] sm:$0xff]
      %v583 = vld [vmem:[#allocation2 + $0x61] sm:$0xff]
      %v584 = vld [vmem:[#allocation2 + $0x69] sm:$0xff]
      %v585 = vld [vmem:[#allocation2 + $0x79] sm:$0xff]
      %v586 = vld [vmem:[#allocation2 + $0x81] sm:$0xff]
      %v587 = vld [vmem:[#allocation2 + $0x91] sm:$0xff]
      %v588 = vld [vmem:[#allocation2 + $0x99] sm:$0xff]
      %v589 = vld [vmem:[#allocation2 + $0xa9] sm:$0xff]
      %v590 = vld [vmem:[#allocation2 + $0xb1] sm:$0xff]
      %v591 = vld [vmem:[#allocation2 + $0xc1] sm:$0xff]
      %v592 = vld [vmem:[#allocation2 + $0xc9] sm:$0xff]
      %v593 = vld [vmem:[#allocation2 + $0xd9] sm:$0xff]
      %v594 = vld [vmem:[#allocation2 + $0xe1] sm:$0xff]
      %v595 = vld [vmem:[#allocation2 + $0xf1] sm:$0xff]
      %v596 = vld [vmem:[#allocation2 + $0xf9] sm:$0xff]
      %v597 = vld [vmem:[#allocation2 + $0x109] sm:$0xff]
      %v598 = vld [vmem:[#allocation2 + $0x111] sm:$0xff]
      %v599 = vld [vmem:[#allocation2 + $0x121] sm:$0xff]
      %v600 = vld [vmem:[#allocation2 + $0x129] sm:$0xff]
      %v601 = vld [vmem:[#allocation2 + $0x139] sm:$0xff]
      %v602 = vld [vmem:[#allocation2 + $0x141] sm:$0xff]
      %v603 = vld [vmem:[#allocation2 + $0x151] sm:$0xff]
      %v604 = vld [vmem:[#allocation2 + $0x159] sm:$0xff]
      %v605 = vld [vmem:[#allocation2 + $0x169] sm:$0xff]
      %v606 = vld [vmem:[#allocation2 + $0x171] sm:$0xff]
      %v607 = vpack.c.bf16 %v576, %v575
      %v608 = vpack.c.bf16 %v578, %v577
      %v609 = vpack.c.bf16 %v580, %v579
      %v610 = vpack.c.bf16 %v582, %v581
      %v611 = vpack.c.bf16 %v584, %v583
      %v612 = vpack.c.bf16 %v586, %v585
      %v613 = vpack.c.bf16 %v588, %v587
      %v614 = vpack.c.bf16 %v590, %v589
      %v615 = vpack.c.bf16 %v592, %v591
      %v616 = vpack.c.bf16 %v594, %v593
      %v617 = vpack.c.bf16 %v596, %v595
      %v618 = vpack.c.bf16 %v598, %v597
      %v619 = vpack.c.bf16 %v600, %v599
      %v620 = vpack.c.bf16 %v602, %v601
      %v621 = vpack.c.bf16 %v604, %v603
      %v622 = vpack.c.bf16 %v606, %v605
      %v624 = vsel %vm438, %v607, 0
      %v627 = vsel %vm438, %v608, 0
      %v630 = vsel %vm438, %v609, 0
      %v633 = vsel %vm438, %v610, 0
      %v636 = vsel %vm438, %v611, 0
      %v639 = vsel %vm438, %v612, 0
      %v642 = vsel %vm438, %v613, 0
      %v645 = vsel %vm438, %v614, 0
      %v648 = vsel %vm438, %v615, 0
      %v651 = vsel %vm438, %v616, 0
      %v654 = vsel %vm438, %v617, 0
      %v657 = vsel %vm438, %v618, 0
      %v660 = vsel %vm438, %v619, 0
      %v663 = vsel %vm438, %v620, 0
      %v666 = vsel %vm438, %v621, 0
      %v669 = vsel %vm438, %v622, 0
      %vm671 = vcmask 1043456
      %v673 = vsel %vm671, %v518, 0
      %675 = vmatprep.subr.bf16.mxu0 0
      %676 = vmatpush1.bf16.msra.mxu0 %v673
      %677 = vmatprep.subr.bf16.mxu0 0
      %678 = vmatpush1.bf16.msra.mxu0 0
      %679 = vmatprep.subr.bf16.mxu0 0
      %680 = vmatpush1.bf16.msra.mxu0 0
      %681 = vmatprep.subr.bf16.mxu0 0
      %682 = vmatpush1.bf16.msra.mxu0 0
      %683 = vmatprep.subr.bf16.mxu0 0
      %684 = vmatpush1.bf16.msra.mxu0 0
      %685 = vmatprep.subr.bf16.mxu0 0
      %686 = vmatpush1.bf16.msra.mxu0 0
      %687 = vmatprep.subr.bf16.mxu0 0
      %688 = vmatpush1.bf16.msra.mxu0 0
      %689 = vmatprep.subr.bf16.mxu0 0
      %690 = vmatpush1.bf16.msra.mxu0 0
      %691 = vmatprep.subr.bf16.mxu0 0
      %692 = vmatpush1.bf16.msra.mxu0 0
      %693 = vmatprep.subr.bf16.mxu0 0
      %694 = vmatpush1.bf16.msra.mxu0 0
      %695 = vmatprep.subr.bf16.mxu0 0
      %696 = vmatpush1.bf16.msra.mxu0 0
      %697 = vmatprep.subr.bf16.mxu0 0
      %698 = vmatpush1.bf16.msra.mxu0 0
      %699 = vmatprep.subr.bf16.mxu0 0
      %700 = vmatpush1.bf16.msra.mxu0 0
      %701 = vmatprep.subr.bf16.mxu0 0
      %702 = vmatpush1.bf16.msra.mxu0 0
      %703 = vmatprep.subr.bf16.mxu0 0
      %704 = vmatpush1.bf16.msra.mxu0 0
      %705 = vmatprep.subr.bf16.mxu0 0
      %706 = vmatpush1.bf16.msra.mxu0 0
      %707 = vmatprep.mubr.bf16.mxu0 0
      %708 = vmatmul.mubr.bf16.gmra.mrb[0].mxu0 %v624
      %v709 = vpop.f32.mrb[0].mxu0
      %v710 = vadd.f32 0.0, %v709
      %v711 = vpop.f32.mrb[0].mxu0
      %v712 = vpop.f32.mrb[0].mxu0
      %v713 = vadd.f32 0.0, %v712
      %v714 = vpop.f32.mrb[0].mxu0
      %715 = vmatprep.mubr.bf16.mxu0 0
      %716 = vmatmul.mubr.bf16.gmra.mrb[0].mxu0 %v627
      %v717 = vpop.f32.mrb[0].mxu0
      %v718 = vadd.f32 0.0, %v717
      %v719 = vpop.f32.mrb[0].mxu0
      %v720 = vpop.f32.mrb[0].mxu0
      %v721 = vadd.f32 0.0, %v720
      %v722 = vpop.f32.mrb[0].mxu0
      %723 = vmatprep.mubr.bf16.mxu0 0
      %724 = vmatmul.mubr.bf16.gmra.mrb[0].mxu0 %v630
      %v725 = vpop.f32.mrb[0].mxu0
      %v726 = vadd.f32 0.0, %v725
      %v727 = vpop.f32.mrb[0].mxu0
      %v728 = vpop.f32.mrb[0].mxu0
      %v729 = vadd.f32 0.0, %v728
      %v730 = vpop.f32.mrb[0].mxu0
      %731 = vmatprep.mubr.bf16.mxu0 0
      %732 = vmatmul.mubr.bf16.gmra.mrb[0].mxu0 %v633
      %v733 = vpop.f32.mrb[0].mxu0
      %v734 = vadd.f32 0.0, %v733
      %v735 = vpop.f32.mrb[0].mxu0
      %v736 = vpop.f32.mrb[0].mxu0
      %v737 = vadd.f32 0.0, %v736
      %v738 = vpop.f32.mrb[0].mxu0
      %739 = vmatprep.mubr.bf16.mxu0 0
      %740 = vmatmul.mubr.bf16.gmra.mrb[0].mxu0 %v636
      %v741 = vpop.f32.mrb[0].mxu0
      %v742 = vadd.f32 0.0, %v741
      %v743 = vpop.f32.mrb[0].mxu0
      %v744 = vpop.f32.mrb[0].mxu0
      %v745 = vadd.f32 0.0, %v744
      %v746 = vpop.f32.mrb[0].mxu0
      %747 = vmatprep.mubr.bf16.mxu0 0
      %748 = vmatmul.mubr.bf16.gmra.mrb[0].mxu0 %v639
      %v749 = vpop.f32.mrb[0].mxu0
      %v750 = vadd.f32 0.0, %v749
      %v751 = vpop.f32.mrb[0].mxu0
      %v752 = vpop.f32.mrb[0].mxu0
      %v753 = vadd.f32 0.0, %v752
      %v754 = vpop.f32.mrb[0].mxu0
      %755 = vmatprep.mubr.bf16.mxu0 0
      %756 = vmatmul.mubr.bf16.gmra.mrb[0].mxu0 %v642
      %v757 = vpop.f32.mrb[0].mxu0
      %v758 = vadd.f32 0.0, %v757
      %v759 = vpop.f32.mrb[0].mxu0
      %v760 = vpop.f32.mrb[0].mxu0
      %v761 = vadd.f32 0.0, %v760
      %v762 = vpop.f32.mrb[0].mxu0
      %763 = vmatprep.mubr.bf16.mxu0 0
      %764 = vmatmul.mubr.bf16.gmra.mrb[0].mxu0 %v645
      %v765 = vpop.f32.mrb[0].mxu0
      %v766 = vadd.f32 0.0, %v765
      %v767 = vpop.f32.mrb[0].mxu0
      %v768 = vpop.f32.mrb[0].mxu0
      %v769 = vadd.f32 0.0, %v768
      %v770 = vpop.f32.mrb[0].mxu0
      %771 = vmatprep.mubr.bf16.mxu0 0
      %772 = vmatmul.mubr.bf16.gmra.mrb[0].mxu0 %v648
      %v773 = vpop.f32.mrb[0].mxu0
      %v774 = vadd.f32 0.0, %v773
      %v775 = vpop.f32.mrb[0].mxu0
      %v776 = vpop.f32.mrb[0].mxu0
      %v777 = vadd.f32 0.0, %v776
      %v778 = vpop.f32.mrb[0].mxu0
      %779 = vmatprep.mubr.bf16.mxu0 0
      %780 = vmatmul.mubr.bf16.gmra.mrb[0].mxu0 %v651
      %v781 = vpop.f32.mrb[0].mxu0
      %v782 = vadd.f32 0.0, %v781
      %v783 = vpop.f32.mrb[0].mxu0
      %v784 = vpop.f32.mrb[0].mxu0
      %v785 = vadd.f32 0.0, %v784
      %v786 = vpop.f32.mrb[0].mxu0
      %787 = vmatprep.mubr.bf16.mxu0 0
      %788 = vmatmul.mubr.bf16.gmra.mrb[0].mxu0 %v654
      %v789 = vpop.f32.mrb[0].mxu0
      %v790 = vadd.f32 0.0, %v789
      %v791 = vpop.f32.mrb[0].mxu0
      %v792 = vpop.f32.mrb[0].mxu0
      %v793 = vadd.f32 0.0, %v792
      %v794 = vpop.f32.mrb[0].mxu0
      %795 = vmatprep.mubr.bf16.mxu0 0
      %796 = vmatmul.mubr.bf16.gmra.mrb[0].mxu0 %v657
      %v797 = vpop.f32.mrb[0].mxu0
      %v798 = vadd.f32 0.0, %v797
      %v799 = vpop.f32.mrb[0].mxu0
      %v800 = vpop.f32.mrb[0].mxu0
      %v801 = vadd.f32 0.0, %v800
      %v802 = vpop.f32.mrb[0].mxu0
      %803 = vmatprep.mubr.bf16.mxu0 0
      %804 = vmatmul.mubr.bf16.gmra.mrb[0].mxu0 %v660
      %v805 = vpop.f32.mrb[0].mxu0
      %v806 = vadd.f32 0.0, %v805
      %v807 = vpop.f32.mrb[0].mxu0
      %v808 = vpop.f32.mrb[0].mxu0
      %v809 = vadd.f32 0.0, %v808
      %v810 = vpop.f32.mrb[0].mxu0
      %811 = vmatprep.mubr.bf16.mxu0 0
      %812 = vmatmul.mubr.bf16.gmra.mrb[0].mxu0 %v663
      %v813 = vpop.f32.mrb[0].mxu0
      %v814 = vadd.f32 0.0, %v813
      %v815 = vpop.f32.mrb[0].mxu0
      %v816 = vpop.f32.mrb[0].mxu0
      %v817 = vadd.f32 0.0, %v816
      %v818 = vpop.f32.mrb[0].mxu0
      %819 = vmatprep.mubr.bf16.mxu0 0
      %820 = vmatmul.mubr.bf16.gmra.mrb[0].mxu0 %v666
      %v821 = vpop.f32.mrb[0].mxu0
      %v822 = vadd.f32 0.0, %v821
      %v823 = vpop.f32.mrb[0].mxu0
      %v824 = vpop.f32.mrb[0].mxu0
      %v825 = vadd.f32 0.0, %v824
      %v826 = vpop.f32.mrb[0].mxu0
      %827 = vmatprep.mubr.bf16.mxu0 0
      %828 = vmatmul.mubr.bf16.gmra.mrb[0].mxu0 %v669
      %v829 = vpop.f32.mrb[0].mxu0
      %v830 = vadd.f32 0.0, %v829
      %v831 = vpop.f32.mrb[0].mxu0
      %v832 = vpop.f32.mrb[0].mxu0
      %v833 = vadd.f32 0.0, %v832
      %v834 = vpop.f32.mrb[0].mxu0
      %835 = vdwg.mxu0
      %v837 = vsel %vm438, %v559, 0
      %v840 = vsel %vm438, %v560, 0
      %v843 = vsel %vm438, %v561, 0
      %v846 = vsel %vm438, %v562, 0
      %v849 = vsel %vm438, %v563, 0
      %v852 = vsel %vm438, %v564, 0
      %v855 = vsel %vm438, %v565, 0
      %v858 = vsel %vm438, %v566, 0
      %v861 = vsel %vm438, %v567, 0
      %v864 = vsel %vm438, %v568, 0
      %v867 = vsel %vm438, %v569, 0
      %v870 = vsel %vm438, %v570, 0
      %v873 = vsel %vm438, %v571, 0
      %v876 = vsel %vm438, %v572, 0
      %v879 = vsel %vm438, %v573, 0
      %v882 = vsel %vm438, %v574, 0
      %v885 = vsel %vm671, %v517, 0
      %887 = vmatprep.subr.bf16.mxu0 0
      %888 = vmatpush1.bf16.msra.mxu0 %v885
      %889 = vmatprep.subr.bf16.mxu0 0
      %890 = vmatpush1.bf16.msra.mxu0 0
      %891 = vmatprep.subr.bf16.mxu0 0
      %892 = vmatpush1.bf16.msra.mxu0 0
      %893 = vmatprep.subr.bf16.mxu0 0
      %894 = vmatpush1.bf16.msra.mxu0 0
      %895 = vmatprep.subr.bf16.mxu0 0
      %896 = vmatpush1.bf16.msra.mxu0 0
      %897 = vmatprep.subr.bf16.mxu0 0
      %898 = vmatpush1.bf16.msra.mxu0 0
      %899 = vmatprep.subr.bf16.mxu0 0
      %900 = vmatpush1.bf16.msra.mxu0 0
      %901 = vmatprep.subr.bf16.mxu0 0
      %902 = vmatpush1.bf16.msra.mxu0 0
      %903 = vmatprep.subr.bf16.mxu0 0
      %904 = vmatpush1.bf16.msra.mxu0 0
      %905 = vmatprep.subr.bf16.mxu0 0
      %906 = vmatpush1.bf16.msra.mxu0 0
      %907 = vmatprep.subr.bf16.mxu0 0
      %908 = vmatpush1.bf16.msra.mxu0 0
      %909 = vmatprep.subr.bf16.mxu0 0
      %910 = vmatpush1.bf16.msra.mxu0 0
      %911 = vmatprep.subr.bf16.mxu0 0
      %912 = vmatpush1.bf16.msra.mxu0 0
      %913 = vmatprep.subr.bf16.mxu0 0
      %914 = vmatpush1.bf16.msra.mxu0 0
      %915 = vmatprep.subr.bf16.mxu0 0
      %916 = vmatpush1.bf16.msra.mxu0 0
      %917 = vmatprep.subr.bf16.mxu0 0
      %918 = vmatpush1.bf16.msra.mxu0 0
      %919 = vmatprep.mubr.bf16.mxu0 0
      %920 = vmatmul.mubr.bf16.gmra.mrb[0].mxu0 %v837
      %v921 = vpop.f32.mrb[0].mxu0
      %v922 = vadd.f32 %v710, %v921
      %v923 = vpop.f32.mrb[0].mxu0
      %v924 = vpop.f32.mrb[0].mxu0
      %v925 = vadd.f32 %v713, %v924
      %v926 = vpop.f32.mrb[0].mxu0
      %927 = vmatprep.mubr.bf16.mxu0 0
      %928 = vmatmul.mubr.bf16.gmra.mrb[0].mxu0 %v840
      %v929 = vpop.f32.mrb[0].mxu0
      %v930 = vadd.f32 %v718, %v929
      %v931 = vpop.f32.mrb[0].mxu0
      %v932 = vpop.f32.mrb[0].mxu0
      %v933 = vadd.f32 %v721, %v932
      %v934 = vpop.f32.mrb[0].mxu0
      %935 = vmatprep.mubr.bf16.mxu0 0
      %936 = vmatmul.mubr.bf16.gmra.mrb[0].mxu0 %v843
      %v937 = vpop.f32.mrb[0].mxu0
      %v938 = vadd.f32 %v726, %v937
      %v939 = vpop.f32.mrb[0].mxu0
      %v940 = vpop.f32.mrb[0].mxu0
      %v941 = vadd.f32 %v729, %v940
      %v942 = vpop.f32.mrb[0].mxu0
      %943 = vmatprep.mubr.bf16.mxu0 0
      %944 = vmatmul.mubr.bf16.gmra.mrb[0].mxu0 %v846
      %v945 = vpop.f32.mrb[0].mxu0
      %v946 = vadd.f32 %v734, %v945
      %v947 = vpop.f32.mrb[0].mxu0
      %v948 = vpop.f32.mrb[0].mxu0
      %v949 = vadd.f32 %v737, %v948
      %v950 = vpop.f32.mrb[0].mxu0
      %951 = vmatprep.mubr.bf16.mxu0 0
      %952 = vmatmul.mubr.bf16.gmra.mrb[0].mxu0 %v849
      %v953 = vpop.f32.mrb[0].mxu0
      %v954 = vadd.f32 %v742, %v953
      %v955 = vpop.f32.mrb[0].mxu0
      %v956 = vpop.f32.mrb[0].mxu0
      %v957 = vadd.f32 %v745, %v956
      %v958 = vpop.f32.mrb[0].mxu0
      %959 = vmatprep.mubr.bf16.mxu0 0
      %960 = vmatmul.mubr.bf16.gmra.mrb[0].mxu0 %v852
      %v961 = vpop.f32.mrb[0].mxu0
      %v962 = vadd.f32 %v750, %v961
      %v963 = vpop.f32.mrb[0].mxu0
      %v964 = vpop.f32.mrb[0].mxu0
      %v965 = vadd.f32 %v753, %v964
      %v966 = vpop.f32.mrb[0].mxu0
      %967 = vmatprep.mubr.bf16.mxu0 0
      %968 = vmatmul.mubr.bf16.gmra.mrb[0].mxu0 %v855
      %v969 = vpop.f32.mrb[0].mxu0
      %v970 = vadd.f32 %v758, %v969
      %v971 = vpop.f32.mrb[0].mxu0
      %v972 = vpop.f32.mrb[0].mxu0
      %v973 = vadd.f32 %v761, %v972
      %v974 = vpop.f32.mrb[0].mxu0
      %975 = vmatprep.mubr.bf16.mxu0 0
      %976 = vmatmul.mubr.bf16.gmra.mrb[0].mxu0 %v858
      %v977 = vpop.f32.mrb[0].mxu0
      %v978 = vadd.f32 %v766, %v977
      %v979 = vpop.f32.mrb[0].mxu0
      %v980 = vpop.f32.mrb[0].mxu0
      %v981 = vadd.f32 %v769, %v980
      %v982 = vpop.f32.mrb[0].mxu0
      %983 = vmatprep.mubr.bf16.mxu0 0
      %984 = vmatmul.mubr.bf16.gmra.mrb[0].mxu0 %v861
      %v985 = vpop.f32.mrb[0].mxu0
      %v986 = vadd.f32 %v774, %v985
      %v987 = vpop.f32.mrb[0].mxu0
      %v988 = vpop.f32.mrb[0].mxu0
      %v989 = vadd.f32 %v777, %v988
      %v990 = vpop.f32.mrb[0].mxu0
      %991 = vmatprep.mubr.bf16.mxu0 0
      %992 = vmatmul.mubr.bf16.gmra.mrb[0].mxu0 %v864
      %v993 = vpop.f32.mrb[0].mxu0
      %v994 = vadd.f32 %v782, %v993
      %v995 = vpop.f32.mrb[0].mxu0
      %v996 = vpop.f32.mrb[0].mxu0
      %v997 = vadd.f32 %v785, %v996
      %v998 = vpop.f32.mrb[0].mxu0
      %999 = vmatprep.mubr.bf16.mxu0 0
      %1000 = vmatmul.mubr.bf16.gmra.mrb[0].mxu0 %v867
      %v1001 = vpop.f32.mrb[0].mxu0
      %v1002 = vadd.f32 %v790, %v1001
      %v1003 = vpop.f32.mrb[0].mxu0
      %v1004 = vpop.f32.mrb[0].mxu0
      %v1005 = vadd.f32 %v793, %v1004
      %v1006 = vpop.f32.mrb[0].mxu0
      %1007 = vmatprep.mubr.bf16.mxu0 0
      %1008 = vmatmul.mubr.bf16.gmra.mrb[0].mxu0 %v870
      %v1009 = vpop.f32.mrb[0].mxu0
      %v1010 = vadd.f32 %v798, %v1009
      %v1011 = vpop.f32.mrb[0].mxu0
      %v1012 = vpop.f32.mrb[0].mxu0
      %v1013 = vadd.f32 %v801, %v1012
      %v1014 = vpop.f32.mrb[0].mxu0
      %1015 = vmatprep.mubr.bf16.mxu0 0
      %1016 = vmatmul.mubr.bf16.gmra.mrb[0].mxu0 %v873
      %v1017 = vpop.f32.mrb[0].mxu0
      %v1018 = vadd.f32 %v806, %v1017
      %v1019 = vpop.f32.mrb[0].mxu0
      %v1020 = vpop.f32.mrb[0].mxu0
      %v1021 = vadd.f32 %v809, %v1020
      %v1022 = vpop.f32.mrb[0].mxu0
      %1023 = vmatprep.mubr.bf16.mxu0 0
      %1024 = vmatmul.mubr.bf16.gmra.mrb[0].mxu0 %v876
      %v1025 = vpop.f32.mrb[0].mxu0
      %v1026 = vadd.f32 %v814, %v1025
      %v1027 = vpop.f32.mrb[0].mxu0
      %v1028 = vpop.f32.mrb[0].mxu0
      %v1029 = vadd.f32 %v817, %v1028
      %v1030 = vpop.f32.mrb[0].mxu0
      %1031 = vmatprep.mubr.bf16.mxu0 0
      %1032 = vmatmul.mubr.bf16.gmra.mrb[0].mxu0 %v879
      %v1033 = vpop.f32.mrb[0].mxu0
      %v1034 = vadd.f32 %v822, %v1033
      %v1035 = vpop.f32.mrb[0].mxu0
      %v1036 = vpop.f32.mrb[0].mxu0
      %v1037 = vadd.f32 %v825, %v1036
      %v1038 = vpop.f32.mrb[0].mxu0
      %1039 = vmatprep.mubr.bf16.mxu0 0
      %1040 = vmatmul.mubr.bf16.gmra.mrb[0].mxu0 %v882
      %v1041 = vpop.f32.mrb[0].mxu0
      %v1042 = vadd.f32 %v830, %v1041
      %v1043 = vpop.f32.mrb[0].mxu0
      %v1044 = vpop.f32.mrb[0].mxu0
      %v1045 = vadd.f32 %v833, %v1044
      %v1046 = vpop.f32.mrb[0].mxu0
      %1047 = vdwg.mxu0
      %v1048 = vld [vmem:[#allocation2 + $0x2] sm:$0xff]
      %v1049 = vld [vmem:[#allocation2 + $0xa] sm:$0xff]
      %v1050 = vld [vmem:[#allocation2 + $0x1a] sm:$0xff]
      %v1051 = vld [vmem:[#allocation2 + $0x22] sm:$0xff]
      %v1052 = vld [vmem:[#allocation2 + $0x32] sm:$0xff]
      %v1053 = vld [vmem:[#allocation2 + $0x3a] sm:$0xff]
      %v1054 = vld [vmem:[#allocation2 + $0x4a] sm:$0xff]
      %v1055 = vld [vmem:[#allocation2 + $0x52] sm:$0xff]
      %v1056 = vld [vmem:[#allocation2 + $0x62] sm:$0xff]
      %v1057 = vld [vmem:[#allocation2 + $0x6a] sm:$0xff]
      %v1058 = vld [vmem:[#allocation2 + $0x7a] sm:$0xff]
      %v1059 = vld [vmem:[#allocation2 + $0x82] sm:$0xff]
      %v1060 = vld [vmem:[#allocation2 + $0x92] sm:$0xff]
      %v1061 = vld [vmem:[#allocation2 + $0x9a] sm:$0xff]
      %v1062 = vld [vmem:[#allocation2 + $0xaa] sm:$0xff]
      %v1063 = vld [vmem:[#allocation2 + $0xb2] sm:$0xff]
      %v1064 = vld [vmem:[#allocation2 + $0xc2] sm:$0xff]
      %v1065 = vld [vmem:[#allocation2 + $0xca] sm:$0xff]
      %v1066 = vld [vmem:[#allocation2 + $0xda] sm:$0xff]
      %v1067 = vld [vmem:[#allocation2 + $0xe2] sm:$0xff]
      %v1068 = vld [vmem:[#allocation2 + $0xf2] sm:$0xff]
      %v1069 = vld [vmem:[#allocation2 + $0xfa] sm:$0xff]
      %v1070 = vld [vmem:[#allocation2 + $0x10a] sm:$0xff]
      %v1071 = vld [vmem:[#allocation2 + $0x112] sm:$0xff]
      %v1072 = vld [vmem:[#allocation2 + $0x122] sm:$0xff]
      %v1073 = vld [vmem:[#allocation2 + $0x12a] sm:$0xff]
      %v1074 = vld [vmem:[#allocation2 + $0x13a] sm:$0xff]
      %v1075 = vld [vmem:[#allocation2 + $0x142] sm:$0xff]
      %v1076 = vld [vmem:[#allocation2 + $0x152] sm:$0xff]
      %v1077 = vld [vmem:[#allocation2 + $0x15a] sm:$0xff]
      %v1078 = vld [vmem:[#allocation2 + $0x16a] sm:$0xff]
      %v1079 = vld [vmem:[#allocation2 + $0x172] sm:$0xff]
      %v1080 = vpack.c.bf16 %v1049, %v1048
      %v1081 = vpack.c.bf16 %v1051, %v1050
      %v1082 = vpack.c.bf16 %v1053, %v1052
      %v1083 = vpack.c.bf16 %v1055, %v1054
      %v1084 = vpack.c.bf16 %v1057, %v1056
      %v1085 = vpack.c.bf16 %v1059, %v1058
      %v1086 = vpack.c.bf16 %v1061, %v1060
      %v1087 = vpack.c.bf16 %v1063, %v1062
      %v1088 = vpack.c.bf16 %v1065, %v1064
      %v1089 = vpack.c.bf16 %v1067, %v1066
      %v1090 = vpack.c.bf16 %v1069, %v1068
      %v1091 = vpack.c.bf16 %v1071, %v1070
      %v1092 = vpack.c.bf16 %v1073, %v1072
      %v1093 = vpack.c.bf16 %v1075, %v1074
      %v1094 = vpack.c.bf16 %v1077, %v1076
      %v1095 = vpack.c.bf16 %v1079, %v1078
      %v1097 = vsel %vm438, %v1080, 0
      %v1100 = vsel %vm438, %v1081, 0
      %v1103 = vsel %vm438, %v1082, 0
      %v1106 = vsel %vm438, %v1083, 0
      %v1109 = vsel %vm438, %v1084, 0
      %v1112 = vsel %vm438, %v1085, 0
      %v1115 = vsel %vm438, %v1086, 0
      %v1118 = vsel %vm438, %v1087, 0
      %v1121 = vsel %vm438, %v1088, 0
      %v1124 = vsel %vm438, %v1089, 0
      %v1127 = vsel %vm438, %v1090, 0
      %v1130 = vsel %vm438, %v1091, 0
      %v1133 = vsel %vm438, %v1092, 0
      %v1136 = vsel %vm438, %v1093, 0
      %v1139 = vsel %vm438, %v1094, 0
      %v1142 = vsel %vm438, %v1095, 0
      %v1145 = vsel %vm671, %v519, 0
      %1147 = vmatprep.subr.bf16.mxu0 0
      %1148 = vmatpush1.bf16.msra.mxu0 %v1145
      %1149 = vmatprep.subr.bf16.mxu0 0
      %1150 = vmatpush1.bf16.msra.mxu0 0
      %1151 = vmatprep.subr.bf16.mxu0 0
      %1152 = vmatpush1.bf16.msra.mxu0 0
      %1153 = vmatprep.subr.bf16.mxu0 0
      %1154 = vmatpush1.bf16.msra.mxu0 0
      %1155 = vmatprep.subr.bf16.mxu0 0
      %1156 = vmatpush1.bf16.msra.mxu0 0
      %1157 = vmatprep.subr.bf16.mxu0 0
      %1158 = vmatpush1.bf16.msra.mxu0 0
      %1159 = vmatprep.subr.bf16.mxu0 0
      %1160 = vmatpush1.bf16.msra.mxu0 0
      %1161 = vmatprep.subr.bf16.mxu0 0
      %1162 = vmatpush1.bf16.msra.mxu0 0
      %1163 = vmatprep.subr.bf16.mxu0 0
      %1164 = vmatpush1.bf16.msra.mxu0 0
      %1165 = vmatprep.subr.bf16.mxu0 0
      %1166 = vmatpush1.bf16.msra.mxu0 0
      %1167 = vmatprep.subr.bf16.mxu0 0
      %1168 = vmatpush1.bf16.msra.mxu0 0
      %1169 = vmatprep.subr.bf16.mxu0 0
      %1170 = vmatpush1.bf16.msra.mxu0 0
      %1171 = vmatprep.subr.bf16.mxu0 0
      %1172 = vmatpush1.bf16.msra.mxu0 0
      %1173 = vmatprep.subr.bf16.mxu0 0
      %1174 = vmatpush1.bf16.msra.mxu0 0
      %1175 = vmatprep.subr.bf16.mxu0 0
      %1176 = vmatpush1.bf16.msra.mxu0 0
      %1177 = vmatprep.subr.bf16.mxu0 0
      %1178 = vmatpush1.bf16.msra.mxu0 0
      %1179 = vmatprep.mubr.bf16.mxu0 0
      %1180 = vmatmul.mubr.bf16.gmra.mrb[0].mxu0 %v1097
      %v1181 = vpop.f32.mrb[0].mxu0
      %v1182 = vadd.f32 0.0, %v1181
      %v1183 = vpop.f32.mrb[0].mxu0
      %v1184 = vpop.f32.mrb[0].mxu0
      %v1185 = vadd.f32 0.0, %v1184
      %v1186 = vpop.f32.mrb[0].mxu0
      %1187 = vmatprep.mubr.bf16.mxu0 0
      %1188 = vmatmul.mubr.bf16.gmra.mrb[0].mxu0 %v1100
      %v1189 = vpop.f32.mrb[0].mxu0
      %v1190 = vadd.f32 0.0, %v1189
      %v1191 = vpop.f32.mrb[0].mxu0
      %v1192 = vpop.f32.mrb[0].mxu0
      %v1193 = vadd.f32 0.0, %v1192
      %v1194 = vpop.f32.mrb[0].mxu0
      %1195 = vmatprep.mubr.bf16.mxu0 0
      %1196 = vmatmul.mubr.bf16.gmra.mrb[0].mxu0 %v1103
      %v1197 = vpop.f32.mrb[0].mxu0
      %v1198 = vadd.f32 0.0, %v1197
      %v1199 = vpop.f32.mrb[0].mxu0
      %v1200 = vpop.f32.mrb[0].mxu0
      %v1201 = vadd.f32 0.0, %v1200
      %v1202 = vpop.f32.mrb[0].mxu0
      %1203 = vmatprep.mubr.bf16.mxu0 0
      %1204 = vmatmul.mubr.bf16.gmra.mrb[0].mxu0 %v1106
      %v1205 = vpop.f32.mrb[0].mxu0
      %v1206 = vadd.f32 0.0, %v1205
      %v1207 = vpop.f32.mrb[0].mxu0
      %v1208 = vpop.f32.mrb[0].mxu0
      %v1209 = vadd.f32 0.0, %v1208
      %v1210 = vpop.f32.mrb[0].mxu0
      %1211 = vmatprep.mubr.bf16.mxu0 0
      %1212 = vmatmul.mubr.bf16.gmra.mrb[0].mxu0 %v1109
      %v1213 = vpop.f32.mrb[0].mxu0
      %v1214 = vadd.f32 0.0, %v1213
      %v1215 = vpop.f32.mrb[0].mxu0
      %v1216 = vpop.f32.mrb[0].mxu0
      %v1217 = vadd.f32 0.0, %v1216
      %v1218 = vpop.f32.mrb[0].mxu0
      %1219 = vmatprep.mubr.bf16.mxu0 0
      %1220 = vmatmul.mubr.bf16.gmra.mrb[0].mxu0 %v1112
      %v1221 = vpop.f32.mrb[0].mxu0
      %v1222 = vadd.f32 0.0, %v1221
      %v1223 = vpop.f32.mrb[0].mxu0
      %v1224 = vpop.f32.mrb[0].mxu0
      %v1225 = vadd.f32 0.0, %v1224
      %v1226 = vpop.f32.mrb[0].mxu0
      %1227 = vmatprep.mubr.bf16.mxu0 0
      %1228 = vmatmul.mubr.bf16.gmra.mrb[0].mxu0 %v1115
      %v1229 = vpop.f32.mrb[0].mxu0
      %v1230 = vadd.f32 0.0, %v1229
      %v1231 = vpop.f32.mrb[0].mxu0
      %v1232 = vpop.f32.mrb[0].mxu0
      %v1233 = vadd.f32 0.0, %v1232
      %v1234 = vpop.f32.mrb[0].mxu0
      %1235 = vmatprep.mubr.bf16.mxu0 0
      %1236 = vmatmul.mubr.bf16.gmra.mrb[0].mxu0 %v1118
      %v1237 = vpop.f32.mrb[0].mxu0
      %v1238 = vadd.f32 0.0, %v1237
      %v1239 = vpop.f32.mrb[0].mxu0
      %v1240 = vpop.f32.mrb[0].mxu0
      %v1241 = vadd.f32 0.0, %v1240
      %v1242 = vpop.f32.mrb[0].mxu0
      %1243 = vmatprep.mubr.bf16.mxu0 0
      %1244 = vmatmul.mubr.bf16.gmra.mrb[0].mxu0 %v1121
      %v1245 = vpop.f32.mrb[0].mxu0
      %v1246 = vadd.f32 0.0, %v1245
      %v1247 = vpop.f32.mrb[0].mxu0
      %v1248 = vpop.f32.mrb[0].mxu0
      %v1249 = vadd.f32 0.0, %v1248
      %v1250 = vpop.f32.mrb[0].mxu0
      %1251 = vmatprep.mubr.bf16.mxu0 0
      %1252 = vmatmul.mubr.bf16.gmra.mrb[0].mxu0 %v1124
      %v1253 = vpop.f32.mrb[0].mxu0
      %v1254 = vadd.f32 0.0, %v1253
      %v1255 = vpop.f32.mrb[0].mxu0
      %v1256 = vpop.f32.mrb[0].mxu0
      %v1257 = vadd.f32 0.0, %v1256
      %v1258 = vpop.f32.mrb[0].mxu0
      %1259 = vmatprep.mubr.bf16.mxu0 0
      %1260 = vmatmul.mubr.bf16.gmra.mrb[0].mxu0 %v1127
      %v1261 = vpop.f32.mrb[0].mxu0
      %v1262 = vadd.f32 0.0, %v1261
      %v1263 = vpop.f32.mrb[0].mxu0
      %v1264 = vpop.f32.mrb[0].mxu0
      %v1265 = vadd.f32 0.0, %v1264
      %v1266 = vpop.f32.mrb[0].mxu0
      %1267 = vmatprep.mubr.bf16.mxu0 0
      %1268 = vmatmul.mubr.bf16.gmra.mrb[0].mxu0 %v1130
      %v1269 = vpop.f32.mrb[0].mxu0
      %v1270 = vadd.f32 0.0, %v1269
      %v1271 = vpop.f32.mrb[0].mxu0
      %v1272 = vpop.f32.mrb[0].mxu0
      %v1273 = vadd.f32 0.0, %v1272
      %v1274 = vpop.f32.mrb[0].mxu0
      %1275 = vmatprep.mubr.bf16.mxu0 0
      %1276 = vmatmul.mubr.bf16.gmra.mrb[0].mxu0 %v1133
      %v1277 = vpop.f32.mrb[0].mxu0
      %v1278 = vadd.f32 0.0, %v1277
      %v1279 = vpop.f32.mrb[0].mxu0
      %v1280 = vpop.f32.mrb[0].mxu0
      %v1281 = vadd.f32 0.0, %v1280
      %v1282 = vpop.f32.mrb[0].mxu0
      %1283 = vmatprep.mubr.bf16.mxu0 0
      %1284 = vmatmul.mubr.bf16.gmra.mrb[0].mxu0 %v1136
      %v1285 = vpop.f32.mrb[0].mxu0
      %v1286 = vadd.f32 0.0, %v1285
      %v1287 = vpop.f32.mrb[0].mxu0
      %v1288 = vpop.f32.mrb[0].mxu0
      %v1289 = vadd.f32 0.0, %v1288
      %v1290 = vpop.f32.mrb[0].mxu0
      %1291 = vmatprep.mubr.bf16.mxu0 0
      %1292 = vmatmul.mubr.bf16.gmra.mrb[0].mxu0 %v1139
      %v1293 = vpop.f32.mrb[0].mxu0
      %v1294 = vadd.f32 0.0, %v1293
      %v1295 = vpop.f32.mrb[0].mxu0
      %v1296 = vpop.f32.mrb[0].mxu0
      %v1297 = vadd.f32 0.0, %v1296
      %v1298 = vpop.f32.mrb[0].mxu0
      %1299 = vmatprep.mubr.bf16.mxu0 0
      %1300 = vmatmul.mubr.bf16.gmra.mrb[0].mxu0 %v1142
      %v1301 = vpop.f32.mrb[0].mxu0
      %v1302 = vadd.f32 0.0, %v1301
      %v1303 = vpop.f32.mrb[0].mxu0
      %v1304 = vpop.f32.mrb[0].mxu0
      %v1305 = vadd.f32 0.0, %v1304
      %v1306 = vpop.f32.mrb[0].mxu0
      %1307 = vdwg.mxu0
      %v1308 = vadd.f32 %v922, %v1182
      %v1309 = vadd.f32 %v925, %v1185
      %v1310 = vadd.f32 %v930, %v1190
      %v1311 = vadd.f32 %v933, %v1193
      %v1312 = vadd.f32 %v938, %v1198
      %v1313 = vadd.f32 %v941, %v1201
      %v1314 = vadd.f32 %v946, %v1206
      %v1315 = vadd.f32 %v949, %v1209
      %v1316 = vadd.f32 %v954, %v1214
      %v1317 = vadd.f32 %v957, %v1217
      %v1318 = vadd.f32 %v962, %v1222
      %v1319 = vadd.f32 %v965, %v1225
      %v1320 = vadd.f32 %v970, %v1230
      %v1321 = vadd.f32 %v973, %v1233
      %v1322 = vadd.f32 %v978, %v1238
      %v1323 = vadd.f32 %v981, %v1241
      %v1324 = vadd.f32 %v986, %v1246
      %v1325 = vadd.f32 %v989, %v1249
      %v1326 = vadd.f32 %v994, %v1254
      %v1327 = vadd.f32 %v997, %v1257
      %v1328 = vadd.f32 %v1002, %v1262
      %v1329 = vadd.f32 %v1005, %v1265
      %v1330 = vadd.f32 %v1010, %v1270
      %v1331 = vadd.f32 %v1013, %v1273
      %v1332 = vadd.f32 %v1018, %v1278
      %v1333 = vadd.f32 %v1021, %v1281
      %v1334 = vadd.f32 %v1026, %v1286
      %v1335 = vadd.f32 %v1029, %v1289
      %v1336 = vadd.f32 %v1034, %v1294
      %v1337 = vadd.f32 %v1037, %v1297
      %v1338 = vadd.f32 %v1042, %v1302
      %v1339 = vadd.f32 %v1045, %v1305
      %v1340 = vld [vmem:[%s484] sm:$0xff]
      %v1341 = vld [vmem:[%s484 + $0x8] sm:$0xff]
      %v1342 = vld [vmem:[%s484 + $0x18] sm:$0xff]
      %v1343 = vld [vmem:[%s484 + $0x20] sm:$0xff]
      %v1344 = vld [vmem:[%s484 + $0x30] sm:$0xff]
      %v1345 = vld [vmem:[%s484 + $0x38] sm:$0xff]
      %v1346 = vld [vmem:[%s484 + $0x48] sm:$0xff]
      %v1347 = vld [vmem:[%s484 + $0x50] sm:$0xff]
      %v1348 = vld [vmem:[%s484 + $0x60] sm:$0xff]
      %v1349 = vld [vmem:[%s484 + $0x68] sm:$0xff]
      %v1350 = vld [vmem:[%s484 + $0x78] sm:$0xff]
      %v1351 = vld [vmem:[%s484 + $0x80] sm:$0xff]
      %v1352 = vld [vmem:[%s484 + $0x90] sm:$0xff]
      %v1353 = vld [vmem:[%s484 + $0x98] sm:$0xff]
      %v1354 = vld [vmem:[%s484 + $0xa8] sm:$0xff]
      %v1355 = vld [vmem:[%s484 + $0xb0] sm:$0xff]
      %v1356 = vld [vmem:[%s484 + $0xc0] sm:$0xff]
      %v1357 = vld [vmem:[%s484 + $0xc8] sm:$0xff]
      %v1358 = vld [vmem:[%s484 + $0xd8] sm:$0xff]
      %v1359 = vld [vmem:[%s484 + $0xe0] sm:$0xff]
      %v1360 = vld [vmem:[%s484 + $0xf0] sm:$0xff]
      %v1361 = vld [vmem:[%s484 + $0xf8] sm:$0xff]
      %v1362 = vld [vmem:[%s484 + $0x108] sm:$0xff]
      %v1363 = vld [vmem:[%s484 + $0x110] sm:$0xff]
      %v1364 = vld [vmem:[%s484 + $0x120] sm:$0xff]
      %v1365 = vld [vmem:[%s484 + $0x128] sm:$0xff]
      %v1366 = vld [vmem:[%s484 + $0x138] sm:$0xff]
      %v1367 = vld [vmem:[%s484 + $0x140] sm:$0xff]
      %v1368 = vld [vmem:[%s484 + $0x150] sm:$0xff]
      %v1369 = vld [vmem:[%s484 + $0x158] sm:$0xff]
      %v1370 = vld [vmem:[%s484 + $0x168] sm:$0xff]
      %v1371 = vld [vmem:[%s484 + $0x170] sm:$0xff]
      %v1372 = vpack.c.bf16 %v1341, %v1340
      %v1373 = vpack.c.bf16 %v1343, %v1342
      %v1374 = vpack.c.bf16 %v1345, %v1344
      %v1375 = vpack.c.bf16 %v1347, %v1346
      %v1376 = vpack.c.bf16 %v1349, %v1348
      %v1377 = vpack.c.bf16 %v1351, %v1350
      %v1378 = vpack.c.bf16 %v1353, %v1352
      %v1379 = vpack.c.bf16 %v1355, %v1354
      %v1380 = vpack.c.bf16 %v1357, %v1356
      %v1381 = vpack.c.bf16 %v1359, %v1358
      %v1382 = vpack.c.bf16 %v1361, %v1360
      %v1383 = vpack.c.bf16 %v1363, %v1362
      %v1384 = vpack.c.bf16 %v1365, %v1364
      %v1385 = vpack.c.bf16 %v1367, %v1366
      %v1386 = vpack.c.bf16 %v1369, %v1368
      %v1387 = vpack.c.bf16 %v1371, %v1370
      %v1389 = vsel %vm438, %v1372, 0
      %v1392 = vsel %vm438, %v1373, 0
      %v1395 = vsel %vm438, %v1374, 0
      %v1398 = vsel %vm438, %v1375, 0
      %v1401 = vsel %vm438, %v1376, 0
      %v1404 = vsel %vm438, %v1377, 0
      %v1407 = vsel %vm438, %v1378, 0
      %v1410 = vsel %vm438, %v1379, 0
      %v1413 = vsel %vm438, %v1380, 0
      %v1416 = vsel %vm438, %v1381, 0
      %v1419 = vsel %vm438, %v1382, 0
      %v1422 = vsel %vm438, %v1383, 0
      %v1425 = vsel %vm438, %v1384, 0
      %v1428 = vsel %vm438, %v1385, 0
      %v1431 = vsel %vm438, %v1386, 0
      %v1434 = vsel %vm438, %v1387, 0
      %v1437 = vsel %vm671, %v520, 0
      %1439 = vmatprep.subr.bf16.mxu0 0
      %1440 = vmatpush1.bf16.msra.mxu0 %v1437
      %1441 = vmatprep.subr.bf16.mxu0 0
      %1442 = vmatpush1.bf16.msra.mxu0 0
      %1443 = vmatprep.subr.bf16.mxu0 0
      %1444 = vmatpush1.bf16.msra.mxu0 0
      %1445 = vmatprep.subr.bf16.mxu0 0
      %1446 = vmatpush1.bf16.msra.mxu0 0
      %1447 = vmatprep.subr.bf16.mxu0 0
      %1448 = vmatpush1.bf16.msra.mxu0 0
      %1449 = vmatprep.subr.bf16.mxu0 0
      %1450 = vmatpush1.bf16.msra.mxu0 0
      %1451 = vmatprep.subr.bf16.mxu0 0
      %1452 = vmatpush1.bf16.msra.mxu0 0
      %1453 = vmatprep.subr.bf16.mxu0 0
      %1454 = vmatpush1.bf16.msra.mxu0 0
      %1455 = vmatprep.subr.bf16.mxu0 0
      %1456 = vmatpush1.bf16.msra.mxu0 0
      %1457 = vmatprep.subr.bf16.mxu0 0
      %1458 = vmatpush1.bf16.msra.mxu0 0
      %1459 = vmatprep.subr.bf16.mxu0 0
      %1460 = vmatpush1.bf16.msra.mxu0 0
      %1461 = vmatprep.subr.bf16.mxu0 0
      %1462 = vmatpush1.bf16.msra.mxu0 0
      %1463 = vmatprep.subr.bf16.mxu0 0
      %1464 = vmatpush1.bf16.msra.mxu0 0
      %1465 = vmatprep.subr.bf16.mxu0 0
      %1466 = vmatpush1.bf16.msra.mxu0 0
      %1467 = vmatprep.subr.bf16.mxu0 0
      %1468 = vmatpush1.bf16.msra.mxu0 0
      %1469 = vmatprep.subr.bf16.mxu0 0
      %1470 = vmatpush1.bf16.msra.mxu0 0
      %1471 = vmatprep.mubr.bf16.mxu0 0
      %1472 = vmatmul.mubr.bf16.gmra.mrb[0].mxu0 %v1389
      %v1473 = vpop.f32.mrb[0].mxu0
      %v1474 = vadd.f32 0.0, %v1473
      %v1475 = vpop.f32.mrb[0].mxu0
      %v1476 = vpop.f32.mrb[0].mxu0
      %v1477 = vadd.f32 0.0, %v1476
      %v1478 = vpop.f32.mrb[0].mxu0
      %1479 = vmatprep.mubr.bf16.mxu0 0
      %1480 = vmatmul.mubr.bf16.gmra.mrb[0].mxu0 %v1392
      %v1481 = vpop.f32.mrb[0].mxu0
      %v1482 = vadd.f32 0.0, %v1481
      %v1483 = vpop.f32.mrb[0].mxu0
      %v1484 = vpop.f32.mrb[0].mxu0
      %v1485 = vadd.f32 0.0, %v1484
      %v1486 = vpop.f32.mrb[0].mxu0
      %1487 = vmatprep.mubr.bf16.mxu0 0
      %1488 = vmatmul.mubr.bf16.gmra.mrb[0].mxu0 %v1395
      %v1489 = vpop.f32.mrb[0].mxu0
      %v1490 = vadd.f32 0.0, %v1489
      %v1491 = vpop.f32.mrb[0].mxu0
      %v1492 = vpop.f32.mrb[0].mxu0
      %v1493 = vadd.f32 0.0, %v1492
      %v1494 = vpop.f32.mrb[0].mxu0
      %1495 = vmatprep.mubr.bf16.mxu0 0
      %1496 = vmatmul.mubr.bf16.gmra.mrb[0].mxu0 %v1398
      %v1497 = vpop.f32.mrb[0].mxu0
      %v1498 = vadd.f32 0.0, %v1497
      %v1499 = vpop.f32.mrb[0].mxu0
      %v1500 = vpop.f32.mrb[0].mxu0
      %v1501 = vadd.f32 0.0, %v1500
      %v1502 = vpop.f32.mrb[0].mxu0
      %1503 = vmatprep.mubr.bf16.mxu0 0
      %1504 = vmatmul.mubr.bf16.gmra.mrb[0].mxu0 %v1401
      %v1505 = vpop.f32.mrb[0].mxu0
      %v1506 = vadd.f32 0.0, %v1505
      %v1507 = vpop.f32.mrb[0].mxu0
      %v1508 = vpop.f32.mrb[0].mxu0
      %v1509 = vadd.f32 0.0, %v1508
      %v1510 = vpop.f32.mrb[0].mxu0
      %1511 = vmatprep.mubr.bf16.mxu0 0
      %1512 = vmatmul.mubr.bf16.gmra.mrb[0].mxu0 %v1404
      %v1513 = vpop.f32.mrb[0].mxu0
      %v1514 = vadd.f32 0.0, %v1513
      %v1515 = vpop.f32.mrb[0].mxu0
      %v1516 = vpop.f32.mrb[0].mxu0
      %v1517 = vadd.f32 0.0, %v1516
      %v1518 = vpop.f32.mrb[0].mxu0
      %1519 = vmatprep.mubr.bf16.mxu0 0
      %1520 = vmatmul.mubr.bf16.gmra.mrb[0].mxu0 %v1407
      %v1521 = vpop.f32.mrb[0].mxu0
      %v1522 = vadd.f32 0.0, %v1521
      %v1523 = vpop.f32.mrb[0].mxu0
      %v1524 = vpop.f32.mrb[0].mxu0
      %v1525 = vadd.f32 0.0, %v1524
      %v1526 = vpop.f32.mrb[0].mxu0
      %1527 = vmatprep.mubr.bf16.mxu0 0
      %1528 = vmatmul.mubr.bf16.gmra.mrb[0].mxu0 %v1410
      %v1529 = vpop.f32.mrb[0].mxu0
      %v1530 = vadd.f32 0.0, %v1529
      %v1531 = vpop.f32.mrb[0].mxu0
      %v1532 = vpop.f32.mrb[0].mxu0
      %v1533 = vadd.f32 0.0, %v1532
      %v1534 = vpop.f32.mrb[0].mxu0
      %1535 = vmatprep.mubr.bf16.mxu0 0
      %1536 = vmatmul.mubr.bf16.gmra.mrb[0].mxu0 %v1413
      %v1537 = vpop.f32.mrb[0].mxu0
      %v1538 = vadd.f32 0.0, %v1537
      %v1539 = vpop.f32.mrb[0].mxu0
      %v1540 = vpop.f32.mrb[0].mxu0
      %v1541 = vadd.f32 0.0, %v1540
      %v1542 = vpop.f32.mrb[0].mxu0
      %1543 = vmatprep.mubr.bf16.mxu0 0
      %1544 = vmatmul.mubr.bf16.gmra.mrb[0].mxu0 %v1416
      %v1545 = vpop.f32.mrb[0].mxu0
      %v1546 = vadd.f32 0.0, %v1545
      %v1547 = vpop.f32.mrb[0].mxu0
      %v1548 = vpop.f32.mrb[0].mxu0
      %v1549 = vadd.f32 0.0, %v1548
      %v1550 = vpop.f32.mrb[0].mxu0
      %1551 = vmatprep.mubr.bf16.mxu0 0
      %1552 = vmatmul.mubr.bf16.gmra.mrb[0].mxu0 %v1419
      %v1553 = vpop.f32.mrb[0].mxu0
      %v1554 = vadd.f32 0.0, %v1553
      %v1555 = vpop.f32.mrb[0].mxu0
      %v1556 = vpop.f32.mrb[0].mxu0
      %v1557 = vadd.f32 0.0, %v1556
      %v1558 = vpop.f32.mrb[0].mxu0
      %1559 = vmatprep.mubr.bf16.mxu0 0
      %1560 = vmatmul.mubr.bf16.gmra.mrb[0].mxu0 %v1422
      %v1561 = vpop.f32.mrb[0].mxu0
      %v1562 = vadd.f32 0.0, %v1561
      %v1563 = vpop.f32.mrb[0].mxu0
      %v1564 = vpop.f32.mrb[0].mxu0
      %v1565 = vadd.f32 0.0, %v1564
      %v1566 = vpop.f32.mrb[0].mxu0
      %1567 = vmatprep.mubr.bf16.mxu0 0
      %1568 = vmatmul.mubr.bf16.gmra.mrb[0].mxu0 %v1425
      %v1569 = vpop.f32.mrb[0].mxu0
      %v1570 = vadd.f32 0.0, %v1569
      %v1571 = vpop.f32.mrb[0].mxu0
      %v1572 = vpop.f32.mrb[0].mxu0
      %v1573 = vadd.f32 0.0, %v1572
      %v1574 = vpop.f32.mrb[0].mxu0
      %1575 = vmatprep.mubr.bf16.mxu0 0
      %1576 = vmatmul.mubr.bf16.gmra.mrb[0].mxu0 %v1428
      %v1577 = vpop.f32.mrb[0].mxu0
      %v1578 = vadd.f32 0.0, %v1577
      %v1579 = vpop.f32.mrb[0].mxu0
      %v1580 = vpop.f32.mrb[0].mxu0
      %v1581 = vadd.f32 0.0, %v1580
      %v1582 = vpop.f32.mrb[0].mxu0
      %1583 = vmatprep.mubr.bf16.mxu0 0
      %1584 = vmatmul.mubr.bf16.gmra.mrb[0].mxu0 %v1431
      %v1585 = vpop.f32.mrb[0].mxu0
      %v1586 = vadd.f32 0.0, %v1585
      %v1587 = vpop.f32.mrb[0].mxu0
      %v1588 = vpop.f32.mrb[0].mxu0
      %v1589 = vadd.f32 0.0, %v1588
      %v1590 = vpop.f32.mrb[0].mxu0
      %1591 = vmatprep.mubr.bf16.mxu0 0
      %1592 = vmatmul.mubr.bf16.gmra.mrb[0].mxu0 %v1434
      %v1593 = vpop.f32.mrb[0].mxu0
      %v1594 = vadd.f32 0.0, %v1593
      %v1595 = vpop.f32.mrb[0].mxu0
      %v1596 = vpop.f32.mrb[0].mxu0
      %v1597 = vadd.f32 0.0, %v1596
      %v1598 = vpop.f32.mrb[0].mxu0
      %1599 = vdwg.mxu0
      %v1600 = vadd.f32 %v1308, %v1474
      %v1601 = vadd.f32 %v1309, %v1477
      %v1602 = vadd.f32 %v1310, %v1482
      %v1603 = vadd.f32 %v1311, %v1485
      %v1604 = vadd.f32 %v1312, %v1490
      %v1605 = vadd.f32 %v1313, %v1493
      %v1606 = vadd.f32 %v1314, %v1498
      %v1607 = vadd.f32 %v1315, %v1501
      %v1608 = vadd.f32 %v1316, %v1506
      %v1609 = vadd.f32 %v1317, %v1509
      %v1610 = vadd.f32 %v1318, %v1514
      %v1611 = vadd.f32 %v1319, %v1517
      %v1612 = vadd.f32 %v1320, %v1522
      %v1613 = vadd.f32 %v1321, %v1525
      %v1614 = vadd.f32 %v1322, %v1530
      %v1615 = vadd.f32 %v1323, %v1533
      %v1616 = vadd.f32 %v1324, %v1538
      %v1617 = vadd.f32 %v1325, %v1541
      %v1618 = vadd.f32 %v1326, %v1546
      %v1619 = vadd.f32 %v1327, %v1549
      %v1620 = vadd.f32 %v1328, %v1554
      %v1621 = vadd.f32 %v1329, %v1557
      %v1622 = vadd.f32 %v1330, %v1562
      %v1623 = vadd.f32 %v1331, %v1565
      %v1624 = vadd.f32 %v1332, %v1570
      %v1625 = vadd.f32 %v1333, %v1573
      %v1626 = vadd.f32 %v1334, %v1578
      %v1627 = vadd.f32 %v1335, %v1581
      %v1628 = vadd.f32 %v1336, %v1586
      %v1629 = vadd.f32 %v1337, %v1589
      %v1630 = vadd.f32 %v1338, %v1594
      %v1631 = vadd.f32 %v1339, %v1597
      %v1632 = vld [vmem:[%s484 + $0x1] sm:$0xff]
      %v1633 = vld [vmem:[%s484 + $0x9] sm:$0xff]
      %v1634 = vld [vmem:[%s484 + $0x19] sm:$0xff]
      %v1635 = vld [vmem:[%s484 + $0x21] sm:$0xff]
      %v1636 = vld [vmem:[%s484 + $0x31] sm:$0xff]
      %v1637 = vld [vmem:[%s484 + $0x39] sm:$0xff]
      %v1638 = vld [vmem:[%s484 + $0x49] sm:$0xff]
      %v1639 = vld [vmem:[%s484 + $0x51] sm:$0xff]
      %v1640 = vld [vmem:[%s484 + $0x61] sm:$0xff]
      %v1641 = vld [vmem:[%s484 + $0x69] sm:$0xff]
      %v1642 = vld [vmem:[%s484 + $0x79] sm:$0xff]
      %v1643 = vld [vmem:[%s484 + $0x81] sm:$0xff]
      %v1644 = vld [vmem:[%s484 + $0x91] sm:$0xff]
      %v1645 = vld [vmem:[%s484 + $0x99] sm:$0xff]
      %v1646 = vld [vmem:[%s484 + $0xa9] sm:$0xff]
      %v1647 = vld [vmem:[%s484 + $0xb1] sm:$0xff]
      %v1648 = vld [vmem:[%s484 + $0xc1] sm:$0xff]
      %v1649 = vld [vmem:[%s484 + $0xc9] sm:$0xff]
      %v1650 = vld [vmem:[%s484 + $0xd9] sm:$0xff]
      %v1651 = vld [vmem:[%s484 + $0xe1] sm:$0xff]
      %v1652 = vld [vmem:[%s484 + $0xf1] sm:$0xff]
      %v1653 = vld [vmem:[%s484 + $0xf9] sm:$0xff]
      %v1654 = vld [vmem:[%s484 + $0x109] sm:$0xff]
      %v1655 = vld [vmem:[%s484 + $0x111] sm:$0xff]
      %v1656 = vld [vmem:[%s484 + $0x121] sm:$0xff]
      %v1657 = vld [vmem:[%s484 + $0x129] sm:$0xff]
      %v1658 = vld [vmem:[%s484 + $0x139] sm:$0xff]
      %v1659 = vld [vmem:[%s484 + $0x141] sm:$0xff]
      %v1660 = vld [vmem:[%s484 + $0x151] sm:$0xff]
      %v1661 = vld [vmem:[%s484 + $0x159] sm:$0xff]
      %v1662 = vld [vmem:[%s484 + $0x169] sm:$0xff]
      %v1663 = vld [vmem:[%s484 + $0x171] sm:$0xff]
      %v1664 = vpack.c.bf16 %v1633, %v1632
      %v1665 = vpack.c.bf16 %v1635, %v1634
      %v1666 = vpack.c.bf16 %v1637, %v1636
      %v1667 = vpack.c.bf16 %v1639, %v1638
      %v1668 = vpack.c.bf16 %v1641, %v1640
      %v1669 = vpack.c.bf16 %v1643, %v1642
      %v1670 = vpack.c.bf16 %v1645, %v1644
      %v1671 = vpack.c.bf16 %v1647, %v1646
      %v1672 = vpack.c.bf16 %v1649, %v1648
      %v1673 = vpack.c.bf16 %v1651, %v1650
      %v1674 = vpack.c.bf16 %v1653, %v1652
      %v1675 = vpack.c.bf16 %v1655, %v1654
      %v1676 = vpack.c.bf16 %v1657, %v1656
      %v1677 = vpack.c.bf16 %v1659, %v1658
      %v1678 = vpack.c.bf16 %v1661, %v1660
      %v1679 = vpack.c.bf16 %v1663, %v1662
      %v1681 = vsel %vm438, %v1664, 0
      %v1684 = vsel %vm438, %v1665, 0
      %v1687 = vsel %vm438, %v1666, 0
      %v1690 = vsel %vm438, %v1667, 0
      %v1693 = vsel %vm438, %v1668, 0
      %v1696 = vsel %vm438, %v1669, 0
      %v1699 = vsel %vm438, %v1670, 0
      %v1702 = vsel %vm438, %v1671, 0
      %v1705 = vsel %vm438, %v1672, 0
      %v1708 = vsel %vm438, %v1673, 0
      %v1711 = vsel %vm438, %v1674, 0
      %v1714 = vsel %vm438, %v1675, 0
      %v1717 = vsel %vm438, %v1676, 0
      %v1720 = vsel %vm438, %v1677, 0
      %v1723 = vsel %vm438, %v1678, 0
      %v1726 = vsel %vm438, %v1679, 0
      %v1729 = vsel %vm671, %v521, 0
      %1731 = vmatprep.subr.bf16.mxu0 0
      %1732 = vmatpush1.bf16.msra.mxu0 %v1729
      %1733 = vmatprep.subr.bf16.mxu0 0
      %1734 = vmatpush1.bf16.msra.mxu0 0
      %1735 = vmatprep.subr.bf16.mxu0 0
      %1736 = vmatpush1.bf16.msra.mxu0 0
      %1737 = vmatprep.subr.bf16.mxu0 0
      %1738 = vmatpush1.bf16.msra.mxu0 0
      %1739 = vmatprep.subr.bf16.mxu0 0
      %1740 = vmatpush1.bf16.msra.mxu0 0
      %1741 = vmatprep.subr.bf16.mxu0 0
      %1742 = vmatpush1.bf16.msra.mxu0 0
      %1743 = vmatprep.subr.bf16.mxu0 0
      %1744 = vmatpush1.bf16.msra.mxu0 0
      %1745 = vmatprep.subr.bf16.mxu0 0
      %1746 = vmatpush1.bf16.msra.mxu0 0
      %1747 = vmatprep.subr.bf16.mxu0 0
      %1748 = vmatpush1.bf16.msra.mxu0 0
      %1749 = vmatprep.subr.bf16.mxu0 0
      %1750 = vmatpush1.bf16.msra.mxu0 0
      %1751 = vmatprep.subr.bf16.mxu0 0
      %1752 = vmatpush1.bf16.msra.mxu0 0
      %1753 = vmatprep.subr.bf16.mxu0 0
      %1754 = vmatpush1.bf16.msra.mxu0 0
      %1755 = vmatprep.subr.bf16.mxu0 0
      %1756 = vmatpush1.bf16.msra.mxu0 0
      %1757 = vmatprep.subr.bf16.mxu0 0
      %1758 = vmatpush1.bf16.msra.mxu0 0
      %1759 = vmatprep.subr.bf16.mxu0 0
      %1760 = vmatpush1.bf16.msra.mxu0 0
      %1761 = vmatprep.subr.bf16.mxu0 0
      %1762 = vmatpush1.bf16.msra.mxu0 0
      %1763 = vmatprep.mubr.bf16.mxu0 0
      %1764 = vmatmul.mubr.bf16.gmra.mrb[0].mxu0 %v1681
      %v1765 = vpop.f32.mrb[0].mxu0
      %v1766 = vadd.f32 0.0, %v1765
      %v1767 = vpop.f32.mrb[0].mxu0
      %v1768 = vpop.f32.mrb[0].mxu0
      %v1769 = vadd.f32 0.0, %v1768
      %v1770 = vpop.f32.mrb[0].mxu0
      %1771 = vmatprep.mubr.bf16.mxu0 0
      %1772 = vmatmul.mubr.bf16.gmra.mrb[0].mxu0 %v1684
      %v1773 = vpop.f32.mrb[0].mxu0
      %v1774 = vadd.f32 0.0, %v1773
      %v1775 = vpop.f32.mrb[0].mxu0
      %v1776 = vpop.f32.mrb[0].mxu0
      %v1777 = vadd.f32 0.0, %v1776
      %v1778 = vpop.f32.mrb[0].mxu0
      %1779 = vmatprep.mubr.bf16.mxu0 0
      %1780 = vmatmul.mubr.bf16.gmra.mrb[0].mxu0 %v1687
      %v1781 = vpop.f32.mrb[0].mxu0
      %v1782 = vadd.f32 0.0, %v1781
      %v1783 = vpop.f32.mrb[0].mxu0
      %v1784 = vpop.f32.mrb[0].mxu0
      %v1785 = vadd.f32 0.0, %v1784
      %v1786 = vpop.f32.mrb[0].mxu0
      %1787 = vmatprep.mubr.bf16.mxu0 0
      %1788 = vmatmul.mubr.bf16.gmra.mrb[0].mxu0 %v1690
      %v1789 = vpop.f32.mrb[0].mxu0
      %v1790 = vadd.f32 0.0, %v1789
      %v1791 = vpop.f32.mrb[0].mxu0
      %v1792 = vpop.f32.mrb[0].mxu0
      %v1793 = vadd.f32 0.0, %v1792
      %v1794 = vpop.f32.mrb[0].mxu0
      %1795 = vmatprep.mubr.bf16.mxu0 0
      %1796 = vmatmul.mubr.bf16.gmra.mrb[0].mxu0 %v1693
      %v1797 = vpop.f32.mrb[0].mxu0
      %v1798 = vadd.f32 0.0, %v1797
      %v1799 = vpop.f32.mrb[0].mxu0
      %v1800 = vpop.f32.mrb[0].mxu0
      %v1801 = vadd.f32 0.0, %v1800
      %v1802 = vpop.f32.mrb[0].mxu0
      %1803 = vmatprep.mubr.bf16.mxu0 0
      %1804 = vmatmul.mubr.bf16.gmra.mrb[0].mxu0 %v1696
      %v1805 = vpop.f32.mrb[0].mxu0
      %v1806 = vadd.f32 0.0, %v1805
      %v1807 = vpop.f32.mrb[0].mxu0
      %v1808 = vpop.f32.mrb[0].mxu0
      %v1809 = vadd.f32 0.0, %v1808
      %v1810 = vpop.f32.mrb[0].mxu0
      %1811 = vmatprep.mubr.bf16.mxu0 0
      %1812 = vmatmul.mubr.bf16.gmra.mrb[0].mxu0 %v1699
      %v1813 = vpop.f32.mrb[0].mxu0
      %v1814 = vadd.f32 0.0, %v1813
      %v1815 = vpop.f32.mrb[0].mxu0
      %v1816 = vpop.f32.mrb[0].mxu0
      %v1817 = vadd.f32 0.0, %v1816
      %v1818 = vpop.f32.mrb[0].mxu0
      %1819 = vmatprep.mubr.bf16.mxu0 0
      %1820 = vmatmul.mubr.bf16.gmra.mrb[0].mxu0 %v1702
      %v1821 = vpop.f32.mrb[0].mxu0
      %v1822 = vadd.f32 0.0, %v1821
      %v1823 = vpop.f32.mrb[0].mxu0
      %v1824 = vpop.f32.mrb[0].mxu0
      %v1825 = vadd.f32 0.0, %v1824
      %v1826 = vpop.f32.mrb[0].mxu0
      %1827 = vmatprep.mubr.bf16.mxu0 0
      %1828 = vmatmul.mubr.bf16.gmra.mrb[0].mxu0 %v1705
      %v1829 = vpop.f32.mrb[0].mxu0
      %v1830 = vadd.f32 0.0, %v1829
      %v1831 = vpop.f32.mrb[0].mxu0
      %v1832 = vpop.f32.mrb[0].mxu0
      %v1833 = vadd.f32 0.0, %v1832
      %v1834 = vpop.f32.mrb[0].mxu0
      %1835 = vmatprep.mubr.bf16.mxu0 0
      %1836 = vmatmul.mubr.bf16.gmra.mrb[0].mxu0 %v1708
      %v1837 = vpop.f32.mrb[0].mxu0
      %v1838 = vadd.f32 0.0, %v1837
      %v1839 = vpop.f32.mrb[0].mxu0
      %v1840 = vpop.f32.mrb[0].mxu0
      %v1841 = vadd.f32 0.0, %v1840
      %v1842 = vpop.f32.mrb[0].mxu0
      %1843 = vmatprep.mubr.bf16.mxu0 0
      %1844 = vmatmul.mubr.bf16.gmra.mrb[0].mxu0 %v1711
      %v1845 = vpop.f32.mrb[0].mxu0
      %v1846 = vadd.f32 0.0, %v1845
      %v1847 = vpop.f32.mrb[0].mxu0
      %v1848 = vpop.f32.mrb[0].mxu0
      %v1849 = vadd.f32 0.0, %v1848
      %v1850 = vpop.f32.mrb[0].mxu0
      %1851 = vmatprep.mubr.bf16.mxu0 0
      %1852 = vmatmul.mubr.bf16.gmra.mrb[0].mxu0 %v1714
      %v1853 = vpop.f32.mrb[0].mxu0
      %v1854 = vadd.f32 0.0, %v1853
      %v1855 = vpop.f32.mrb[0].mxu0
      %v1856 = vpop.f32.mrb[0].mxu0
      %v1857 = vadd.f32 0.0, %v1856
      %v1858 = vpop.f32.mrb[0].mxu0
      %1859 = vmatprep.mubr.bf16.mxu0 0
      %1860 = vmatmul.mubr.bf16.gmra.mrb[0].mxu0 %v1717
      %v1861 = vpop.f32.mrb[0].mxu0
      %v1862 = vadd.f32 0.0, %v1861
      %v1863 = vpop.f32.mrb[0].mxu0
      %v1864 = vpop.f32.mrb[0].mxu0
      %v1865 = vadd.f32 0.0, %v1864
      %v1866 = vpop.f32.mrb[0].mxu0
      %1867 = vmatprep.mubr.bf16.mxu0 0
      %1868 = vmatmul.mubr.bf16.gmra.mrb[0].mxu0 %v1720
      %v1869 = vpop.f32.mrb[0].mxu0
      %v1870 = vadd.f32 0.0, %v1869
      %v1871 = vpop.f32.mrb[0].mxu0
      %v1872 = vpop.f32.mrb[0].mxu0
      %v1873 = vadd.f32 0.0, %v1872
      %v1874 = vpop.f32.mrb[0].mxu0
      %1875 = vmatprep.mubr.bf16.mxu0 0
      %1876 = vmatmul.mubr.bf16.gmra.mrb[0].mxu0 %v1723
      %v1877 = vpop.f32.mrb[0].mxu0
      %v1878 = vadd.f32 0.0, %v1877
      %v1879 = vpop.f32.mrb[0].mxu0
      %v1880 = vpop.f32.mrb[0].mxu0
      %v1881 = vadd.f32 0.0, %v1880
      %v1882 = vpop.f32.mrb[0].mxu0
      %1883 = vmatprep.mubr.bf16.mxu0 0
      %1884 = vmatmul.mubr.bf16.gmra.mrb[0].mxu0 %v1726
      %v1885 = vpop.f32.mrb[0].mxu0
      %v1886 = vadd.f32 0.0, %v1885
      %v1887 = vpop.f32.mrb[0].mxu0
      %v1888 = vpop.f32.mrb[0].mxu0
      %v1889 = vadd.f32 0.0, %v1888
      %v1890 = vpop.f32.mrb[0].mxu0
      %1891 = vdwg.mxu0
      %v1892 = vadd.f32 %v1600, %v1766
      %v1893 = vadd.f32 %v1601, %v1769
      %v1894 = vadd.f32 %v1602, %v1774
      %v1895 = vadd.f32 %v1603, %v1777
      %v1896 = vadd.f32 %v1604, %v1782
      %v1897 = vadd.f32 %v1605, %v1785
      %v1898 = vadd.f32 %v1606, %v1790
      %v1899 = vadd.f32 %v1607, %v1793
      %v1900 = vadd.f32 %v1608, %v1798
      %v1901 = vadd.f32 %v1609, %v1801
      %v1902 = vadd.f32 %v1610, %v1806
      %v1903 = vadd.f32 %v1611, %v1809
      %v1904 = vadd.f32 %v1612, %v1814
      %v1905 = vadd.f32 %v1613, %v1817
      %v1906 = vadd.f32 %v1614, %v1822
      %v1907 = vadd.f32 %v1615, %v1825
      %v1908 = vadd.f32 %v1616, %v1830
      %v1909 = vadd.f32 %v1617, %v1833
      %v1910 = vadd.f32 %v1618, %v1838
      %v1911 = vadd.f32 %v1619, %v1841
      %v1912 = vadd.f32 %v1620, %v1846
      %v1913 = vadd.f32 %v1621, %v1849
      %v1914 = vadd.f32 %v1622, %v1854
      %v1915 = vadd.f32 %v1623, %v1857
      %v1916 = vadd.f32 %v1624, %v1862
      %v1917 = vadd.f32 %v1625, %v1865
      %v1918 = vadd.f32 %v1626, %v1870
      %v1919 = vadd.f32 %v1627, %v1873
      %v1920 = vadd.f32 %v1628, %v1878
      %v1921 = vadd.f32 %v1629, %v1881
      %v1922 = vadd.f32 %v1630, %v1886
      %v1923 = vadd.f32 %v1631, %v1889
      %v1924 = vld [vmem:[%s484 + $0x2] sm:$0xff]
      %v1925 = vld [vmem:[%s484 + $0xa] sm:$0xff]
      %v1926 = vld [vmem:[%s484 + $0x1a] sm:$0xff]
      %v1927 = vld [vmem:[%s484 + $0x22] sm:$0xff]
      %v1928 = vld [vmem:[%s484 + $0x32] sm:$0xff]
      %v1929 = vld [vmem:[%s484 + $0x3a] sm:$0xff]
      %v1930 = vld [vmem:[%s484 + $0x4a] sm:$0xff]
      %v1931 = vld [vmem:[%s484 + $0x52] sm:$0xff]
      %v1932 = vld [vmem:[%s484 + $0x62] sm:$0xff]
      %v1933 = vld [vmem:[%s484 + $0x6a] sm:$0xff]
      %v1934 = vld [vmem:[%s484 + $0x7a] sm:$0xff]
      %v1935 = vld [vmem:[%s484 + $0x82] sm:$0xff]
      %v1936 = vld [vmem:[%s484 + $0x92] sm:$0xff]
      %v1937 = vld [vmem:[%s484 + $0x9a] sm:$0xff]
      %v1938 = vld [vmem:[%s484 + $0xaa] sm:$0xff]
      %v1939 = vld [vmem:[%s484 + $0xb2] sm:$0xff]
      %v1940 = vld [vmem:[%s484 + $0xc2] sm:$0xff]
      %v1941 = vld [vmem:[%s484 + $0xca] sm:$0xff]
      %v1942 = vld [vmem:[%s484 + $0xda] sm:$0xff]
      %v1943 = vld [vmem:[%s484 + $0xe2] sm:$0xff]
      %v1944 = vld [vmem:[%s484 + $0xf2] sm:$0xff]
      %v1945 = vld [vmem:[%s484 + $0xfa] sm:$0xff]
      %v1946 = vld [vmem:[%s484 + $0x10a] sm:$0xff]
      %v1947 = vld [vmem:[%s484 + $0x112] sm:$0xff]
      %v1948 = vld [vmem:[%s484 + $0x122] sm:$0xff]
      %v1949 = vld [vmem:[%s484 + $0x12a] sm:$0xff]
      %v1950 = vld [vmem:[%s484 + $0x13a] sm:$0xff]
      %v1951 = vld [vmem:[%s484 + $0x142] sm:$0xff]
      %v1952 = vld [vmem:[%s484 + $0x152] sm:$0xff]
      %v1953 = vld [vmem:[%s484 + $0x15a] sm:$0xff]
      %v1954 = vld [vmem:[%s484 + $0x16a] sm:$0xff]
      %v1955 = vld [vmem:[%s484 + $0x172] sm:$0xff]
      %v1956 = vpack.c.bf16 %v1925, %v1924
      %v1957 = vpack.c.bf16 %v1927, %v1926
      %v1958 = vpack.c.bf16 %v1929, %v1928
      %v1959 = vpack.c.bf16 %v1931, %v1930
      %v1960 = vpack.c.bf16 %v1933, %v1932
      %v1961 = vpack.c.bf16 %v1935, %v1934
      %v1962 = vpack.c.bf16 %v1937, %v1936
      %v1963 = vpack.c.bf16 %v1939, %v1938
      %v1964 = vpack.c.bf16 %v1941, %v1940
      %v1965 = vpack.c.bf16 %v1943, %v1942
      %v1966 = vpack.c.bf16 %v1945, %v1944
      %v1967 = vpack.c.bf16 %v1947, %v1946
      %v1968 = vpack.c.bf16 %v1949, %v1948
      %v1969 = vpack.c.bf16 %v1951, %v1950
      %v1970 = vpack.c.bf16 %v1953, %v1952
      %v1971 = vpack.c.bf16 %v1955, %v1954
      %v1973 = vsel %vm438, %v1956, 0
      %v1976 = vsel %vm438, %v1957, 0
      %v1979 = vsel %vm438, %v1958, 0
      %v1982 = vsel %vm438, %v1959, 0
      %v1985 = vsel %vm438, %v1960, 0
      %v1988 = vsel %vm438, %v1961, 0
      %v1991 = vsel %vm438, %v1962, 0
      %v1994 = vsel %vm438, %v1963, 0
      %v1997 = vsel %vm438, %v1964, 0
      %v2000 = vsel %vm438, %v1965, 0
      %v2003 = vsel %vm438, %v1966, 0
      %v2006 = vsel %vm438, %v1967, 0
      %v2009 = vsel %vm438, %v1968, 0
      %v2012 = vsel %vm438, %v1969, 0
      %v2015 = vsel %vm438, %v1970, 0
      %v2018 = vsel %vm438, %v1971, 0
      %v2021 = vsel %vm671, %v522, 0
      %2023 = vmatprep.subr.bf16.mxu0 0
      %2024 = vmatpush1.bf16.msra.mxu0 %v2021
      %2025 = vmatprep.subr.bf16.mxu0 0
      %2026 = vmatpush1.bf16.msra.mxu0 0
      %2027 = vmatprep.subr.bf16.mxu0 0
      %2028 = vmatpush1.bf16.msra.mxu0 0
      %2029 = vmatprep.subr.bf16.mxu0 0
      %2030 = vmatpush1.bf16.msra.mxu0 0
      %2031 = vmatprep.subr.bf16.mxu0 0
      %2032 = vmatpush1.bf16.msra.mxu0 0
      %2033 = vmatprep.subr.bf16.mxu0 0
      %2034 = vmatpush1.bf16.msra.mxu0 0
      %2035 = vmatprep.subr.bf16.mxu0 0
      %2036 = vmatpush1.bf16.msra.mxu0 0
      %2037 = vmatprep.subr.bf16.mxu0 0
      %2038 = vmatpush1.bf16.msra.mxu0 0
      %2039 = vmatprep.subr.bf16.mxu0 0
      %2040 = vmatpush1.bf16.msra.mxu0 0
      %2041 = vmatprep.subr.bf16.mxu0 0
      %2042 = vmatpush1.bf16.msra.mxu0 0
      %2043 = vmatprep.subr.bf16.mxu0 0
      %2044 = vmatpush1.bf16.msra.mxu0 0
      %2045 = vmatprep.subr.bf16.mxu0 0
      %2046 = vmatpush1.bf16.msra.mxu0 0
      %2047 = vmatprep.subr.bf16.mxu0 0
      %2048 = vmatpush1.bf16.msra.mxu0 0
      %2049 = vmatprep.subr.bf16.mxu0 0
      %2050 = vmatpush1.bf16.msra.mxu0 0
      %2051 = vmatprep.subr.bf16.mxu0 0
      %2052 = vmatpush1.bf16.msra.mxu0 0
      %2053 = vmatprep.subr.bf16.mxu0 0
      %2054 = vmatpush1.bf16.msra.mxu0 0
      %2055 = vmatprep.mubr.bf16.mxu0 0
      %2056 = vmatmul.mubr.bf16.gmra.mrb[0].mxu0 %v1973
      %v2057 = vpop.f32.mrb[0].mxu0
      %v2058 = vadd.f32 0.0, %v2057
      %v2059 = vpop.f32.mrb[0].mxu0
      %v2060 = vpop.f32.mrb[0].mxu0
      %v2061 = vadd.f32 0.0, %v2060
      %v2062 = vpop.f32.mrb[0].mxu0
      %2063 = vmatprep.mubr.bf16.mxu0 0
      %2064 = vmatmul.mubr.bf16.gmra.mrb[0].mxu0 %v1976
      %v2065 = vpop.f32.mrb[0].mxu0
      %v2066 = vadd.f32 0.0, %v2065
      %v2067 = vpop.f32.mrb[0].mxu0
      %v2068 = vpop.f32.mrb[0].mxu0
      %v2069 = vadd.f32 0.0, %v2068
      %v2070 = vpop.f32.mrb[0].mxu0
      %2071 = vmatprep.mubr.bf16.mxu0 0
      %2072 = vmatmul.mubr.bf16.gmra.mrb[0].mxu0 %v1979
      %v2073 = vpop.f32.mrb[0].mxu0
      %v2074 = vadd.f32 0.0, %v2073
      %v2075 = vpop.f32.mrb[0].mxu0
      %v2076 = vpop.f32.mrb[0].mxu0
      %v2077 = vadd.f32 0.0, %v2076
      %v2078 = vpop.f32.mrb[0].mxu0
      %2079 = vmatprep.mubr.bf16.mxu0 0
      %2080 = vmatmul.mubr.bf16.gmra.mrb[0].mxu0 %v1982
      %v2081 = vpop.f32.mrb[0].mxu0
      %v2082 = vadd.f32 0.0, %v2081
      %v2083 = vpop.f32.mrb[0].mxu0
      %v2084 = vpop.f32.mrb[0].mxu0
      %v2085 = vadd.f32 0.0, %v2084
      %v2086 = vpop.f32.mrb[0].mxu0
      %2087 = vmatprep.mubr.bf16.mxu0 0
      %2088 = vmatmul.mubr.bf16.gmra.mrb[0].mxu0 %v1985
      %v2089 = vpop.f32.mrb[0].mxu0
      %v2090 = vadd.f32 0.0, %v2089
      %v2091 = vpop.f32.mrb[0].mxu0
      %v2092 = vpop.f32.mrb[0].mxu0
      %v2093 = vadd.f32 0.0, %v2092
      %v2094 = vpop.f32.mrb[0].mxu0
      %2095 = vmatprep.mubr.bf16.mxu0 0
      %2096 = vmatmul.mubr.bf16.gmra.mrb[0].mxu0 %v1988
      %v2097 = vpop.f32.mrb[0].mxu0
      %v2098 = vadd.f32 0.0, %v2097
      %v2099 = vpop.f32.mrb[0].mxu0
      %v2100 = vpop.f32.mrb[0].mxu0
      %v2101 = vadd.f32 0.0, %v2100
      %v2102 = vpop.f32.mrb[0].mxu0
      %2103 = vmatprep.mubr.bf16.mxu0 0
      %2104 = vmatmul.mubr.bf16.gmra.mrb[0].mxu0 %v1991
      %v2105 = vpop.f32.mrb[0].mxu0
      %v2106 = vadd.f32 0.0, %v2105
      %v2107 = vpop.f32.mrb[0].mxu0
      %v2108 = vpop.f32.mrb[0].mxu0
      %v2109 = vadd.f32 0.0, %v2108
      %v2110 = vpop.f32.mrb[0].mxu0
      %2111 = vmatprep.mubr.bf16.mxu0 0
      %2112 = vmatmul.mubr.bf16.gmra.mrb[0].mxu0 %v1994
      %v2113 = vpop.f32.mrb[0].mxu0
      %v2114 = vadd.f32 0.0, %v2113
      %v2115 = vpop.f32.mrb[0].mxu0
      %v2116 = vpop.f32.mrb[0].mxu0
      %v2117 = vadd.f32 0.0, %v2116
      %v2118 = vpop.f32.mrb[0].mxu0
      %2119 = vmatprep.mubr.bf16.mxu0 0
      %2120 = vmatmul.mubr.bf16.gmra.mrb[0].mxu0 %v1997
      %v2121 = vpop.f32.mrb[0].mxu0
      %v2122 = vadd.f32 0.0, %v2121
      %v2123 = vpop.f32.mrb[0].mxu0
      %v2124 = vpop.f32.mrb[0].mxu0
      %v2125 = vadd.f32 0.0, %v2124
      %v2126 = vpop.f32.mrb[0].mxu0
      %2127 = vmatprep.mubr.bf16.mxu0 0
      %2128 = vmatmul.mubr.bf16.gmra.mrb[0].mxu0 %v2000
      %v2129 = vpop.f32.mrb[0].mxu0
      %v2130 = vadd.f32 0.0, %v2129
      %v2131 = vpop.f32.mrb[0].mxu0
      %v2132 = vpop.f32.mrb[0].mxu0
      %v2133 = vadd.f32 0.0, %v2132
      %v2134 = vpop.f32.mrb[0].mxu0
      %2135 = vmatprep.mubr.bf16.mxu0 0
      %2136 = vmatmul.mubr.bf16.gmra.mrb[0].mxu0 %v2003
      %v2137 = vpop.f32.mrb[0].mxu0
      %v2138 = vadd.f32 0.0, %v2137
      %v2139 = vpop.f32.mrb[0].mxu0
      %v2140 = vpop.f32.mrb[0].mxu0
      %v2141 = vadd.f32 0.0, %v2140
      %v2142 = vpop.f32.mrb[0].mxu0
      %2143 = vmatprep.mubr.bf16.mxu0 0
      %2144 = vmatmul.mubr.bf16.gmra.mrb[0].mxu0 %v2006
      %v2145 = vpop.f32.mrb[0].mxu0
      %v2146 = vadd.f32 0.0, %v2145
      %v2147 = vpop.f32.mrb[0].mxu0
      %v2148 = vpop.f32.mrb[0].mxu0
      %v2149 = vadd.f32 0.0, %v2148
      %v2150 = vpop.f32.mrb[0].mxu0
      %2151 = vmatprep.mubr.bf16.mxu0 0
      %2152 = vmatmul.mubr.bf16.gmra.mrb[0].mxu0 %v2009
      %v2153 = vpop.f32.mrb[0].mxu0
      %v2154 = vadd.f32 0.0, %v2153
      %v2155 = vpop.f32.mrb[0].mxu0
      %v2156 = vpop.f32.mrb[0].mxu0
      %v2157 = vadd.f32 0.0, %v2156
      %v2158 = vpop.f32.mrb[0].mxu0
      %2159 = vmatprep.mubr.bf16.mxu0 0
      %2160 = vmatmul.mubr.bf16.gmra.mrb[0].mxu0 %v2012
      %v2161 = vpop.f32.mrb[0].mxu0
      %v2162 = vadd.f32 0.0, %v2161
      %v2163 = vpop.f32.mrb[0].mxu0
      %v2164 = vpop.f32.mrb[0].mxu0
      %v2165 = vadd.f32 0.0, %v2164
      %v2166 = vpop.f32.mrb[0].mxu0
      %2167 = vmatprep.mubr.bf16.mxu0 0
      %2168 = vmatmul.mubr.bf16.gmra.mrb[0].mxu0 %v2015
      %v2169 = vpop.f32.mrb[0].mxu0
      %v2170 = vadd.f32 0.0, %v2169
      %v2171 = vpop.f32.mrb[0].mxu0
      %v2172 = vpop.f32.mrb[0].mxu0
      %v2173 = vadd.f32 0.0, %v2172
      %v2174 = vpop.f32.mrb[0].mxu0
      %2175 = vmatprep.mubr.bf16.mxu0 0
      %2176 = vmatmul.mubr.bf16.gmra.mrb[0].mxu0 %v2018
      %v2177 = vpop.f32.mrb[0].mxu0
      %v2178 = vadd.f32 0.0, %v2177
      %v2179 = vpop.f32.mrb[0].mxu0
      %v2180 = vpop.f32.mrb[0].mxu0
      %v2181 = vadd.f32 0.0, %v2180
      %v2182 = vpop.f32.mrb[0].mxu0
      %2183 = vdwg.mxu0
      %v2184 = vadd.f32 %v1892, %v2058
      %v2185 = vadd.f32 %v1893, %v2061
      %v2186 = vadd.f32 %v1894, %v2066
      %v2187 = vadd.f32 %v1895, %v2069
      %v2188 = vadd.f32 %v1896, %v2074
      %v2189 = vadd.f32 %v1897, %v2077
      %v2190 = vadd.f32 %v1898, %v2082
      %v2191 = vadd.f32 %v1899, %v2085
      %v2192 = vadd.f32 %v1900, %v2090
      %v2193 = vadd.f32 %v1901, %v2093
      %v2194 = vadd.f32 %v1902, %v2098
      %v2195 = vadd.f32 %v1903, %v2101
      %v2196 = vadd.f32 %v1904, %v2106
      %v2197 = vadd.f32 %v1905, %v2109
      %v2198 = vadd.f32 %v1906, %v2114
      %v2199 = vadd.f32 %v1907, %v2117
      %v2200 = vadd.f32 %v1908, %v2122
      %v2201 = vadd.f32 %v1909, %v2125
      %v2202 = vadd.f32 %v1910, %v2130
      %v2203 = vadd.f32 %v1911, %v2133
      %v2204 = vadd.f32 %v1912, %v2138
      %v2205 = vadd.f32 %v1913, %v2141
      %v2206 = vadd.f32 %v1914, %v2146
      %v2207 = vadd.f32 %v1915, %v2149
      %v2208 = vadd.f32 %v1916, %v2154
      %v2209 = vadd.f32 %v1917, %v2157
      %v2210 = vadd.f32 %v1918, %v2162
      %v2211 = vadd.f32 %v1919, %v2165
      %v2212 = vadd.f32 %v1920, %v2170
      %v2213 = vadd.f32 %v1921, %v2173
      %v2214 = vadd.f32 %v1922, %v2178
      %v2215 = vadd.f32 %v1923, %v2181
      %s2216 = scalar_lea.vmem [#allocation2], 48
      %v2217 = vld [vmem:[%s2216] sm:$0xff]
      %v2218 = vld [vmem:[%s2216 + $0x8] sm:$0xff]
      %v2219 = vld [vmem:[%s2216 + $0x18] sm:$0xff]
      %v2220 = vld [vmem:[%s2216 + $0x20] sm:$0xff]
      %v2221 = vld [vmem:[%s2216 + $0x30] sm:$0xff]
      %v2222 = vld [vmem:[%s2216 + $0x38] sm:$0xff]
      %v2223 = vld [vmem:[%s2216 + $0x48] sm:$0xff]
      %v2224 = vld [vmem:[%s2216 + $0x50] sm:$0xff]
      %v2225 = vld [vmem:[%s2216 + $0x60] sm:$0xff]
      %v2226 = vld [vmem:[%s2216 + $0x68] sm:$0xff]
      %v2227 = vld [vmem:[%s2216 + $0x78] sm:$0xff]
      %v2228 = vld [vmem:[%s2216 + $0x80] sm:$0xff]
      %v2229 = vld [vmem:[%s2216 + $0x90] sm:$0xff]
      %v2230 = vld [vmem:[%s2216 + $0x98] sm:$0xff]
      %v2231 = vld [vmem:[%s2216 + $0xa8] sm:$0xff]
      %v2232 = vld [vmem:[%s2216 + $0xb0] sm:$0xff]
      %v2233 = vld [vmem:[%s2216 + $0xc0] sm:$0xff]
      %v2234 = vld [vmem:[%s2216 + $0xc8] sm:$0xff]
      %v2235 = vld [vmem:[%s2216 + $0xd8] sm:$0xff]
      %v2236 = vld [vmem:[%s2216 + $0xe0] sm:$0xff]
      %v2237 = vld [vmem:[%s2216 + $0xf0] sm:$0xff]
      %v2238 = vld [vmem:[%s2216 + $0xf8] sm:$0xff]
      %v2239 = vld [vmem:[%s2216 + $0x108] sm:$0xff]
      %v2240 = vld [vmem:[%s2216 + $0x110] sm:$0xff]
      %v2241 = vld [vmem:[%s2216 + $0x120] sm:$0xff]
      %v2242 = vld [vmem:[%s2216 + $0x128] sm:$0xff]
      %v2243 = vld [vmem:[%s2216 + $0x138] sm:$0xff]
      %v2244 = vld [vmem:[%s2216 + $0x140] sm:$0xff]
      %v2245 = vld [vmem:[%s2216 + $0x150] sm:$0xff]
      %v2246 = vld [vmem:[%s2216 + $0x158] sm:$0xff]
      %v2247 = vld [vmem:[%s2216 + $0x168] sm:$0xff]
      %v2248 = vld [vmem:[%s2216 + $0x170] sm:$0xff]
      %v2249 = vpack.c.bf16 %v2218, %v2217
      %v2250 = vpack.c.bf16 %v2220, %v2219
      %v2251 = vpack.c.bf16 %v2222, %v2221
      %v2252 = vpack.c.bf16 %v2224, %v2223
      %v2253 = vpack.c.bf16 %v2226, %v2225
      %v2254 = vpack.c.bf16 %v2228, %v2227
      %v2255 = vpack.c.bf16 %v2230, %v2229
      %v2256 = vpack.c.bf16 %v2232, %v2231
      %v2257 = vpack.c.bf16 %v2234, %v2233
      %v2258 = vpack.c.bf16 %v2236, %v2235
      %v2259 = vpack.c.bf16 %v2238, %v2237
      %v2260 = vpack.c.bf16 %v2240, %v2239
      %v2261 = vpack.c.bf16 %v2242, %v2241
      %v2262 = vpack.c.bf16 %v2244, %v2243
      %v2263 = vpack.c.bf16 %v2246, %v2245
      %v2264 = vpack.c.bf16 %v2248, %v2247
      %v2266 = vsel %vm438, %v2249, 0
      %v2269 = vsel %vm438, %v2250, 0
      %v2272 = vsel %vm438, %v2251, 0
      %v2275 = vsel %vm438, %v2252, 0
      %v2278 = vsel %vm438, %v2253, 0
      %v2281 = vsel %vm438, %v2254, 0
      %v2284 = vsel %vm438, %v2255, 0
      %v2287 = vsel %vm438, %v2256, 0
      %v2290 = vsel %vm438, %v2257, 0
      %v2293 = vsel %vm438, %v2258, 0
      %v2296 = vsel %vm438, %v2259, 0
      %v2299 = vsel %vm438, %v2260, 0
      %v2302 = vsel %vm438, %v2261, 0
      %v2305 = vsel %vm438, %v2262, 0
      %v2308 = vsel %vm438, %v2263, 0
      %v2311 = vsel %vm438, %v2264, 0
      %v2314 = vsel %vm671, %v523, 0
      %2316 = vmatprep.subr.bf16.mxu0 0
      %2317 = vmatpush1.bf16.msra.mxu0 %v2314
      %2318 = vmatprep.subr.bf16.mxu0 0
      %2319 = vmatpush1.bf16.msra.mxu0 0
      %2320 = vmatprep.subr.bf16.mxu0 0
      %2321 = vmatpush1.bf16.msra.mxu0 0
      %2322 = vmatprep.subr.bf16.mxu0 0
      %2323 = vmatpush1.bf16.msra.mxu0 0
      %2324 = vmatprep.subr.bf16.mxu0 0
      %2325 = vmatpush1.bf16.msra.mxu0 0
      %2326 = vmatprep.subr.bf16.mxu0 0
      %2327 = vmatpush1.bf16.msra.mxu0 0
      %2328 = vmatprep.subr.bf16.mxu0 0
      %2329 = vmatpush1.bf16.msra.mxu0 0
      %2330 = vmatprep.subr.bf16.mxu0 0
      %2331 = vmatpush1.bf16.msra.mxu0 0
      %2332 = vmatprep.subr.bf16.mxu0 0
      %2333 = vmatpush1.bf16.msra.mxu0 0
      %2334 = vmatprep.subr.bf16.mxu0 0
      %2335 = vmatpush1.bf16.msra.mxu0 0
      %2336 = vmatprep.subr.bf16.mxu0 0
      %2337 = vmatpush1.bf16.msra.mxu0 0
      %2338 = vmatprep.subr.bf16.mxu0 0
      %2339 = vmatpush1.bf16.msra.mxu0 0
      %2340 = vmatprep.subr.bf16.mxu0 0
      %2341 = vmatpush1.bf16.msra.mxu0 0
      %2342 = vmatprep.subr.bf16.mxu0 0
      %2343 = vmatpush1.bf16.msra.mxu0 0
      %2344 = vmatprep.subr.bf16.mxu0 0
      %2345 = vmatpush1.bf16.msra.mxu0 0
      %2346 = vmatprep.subr.bf16.mxu0 0
      %2347 = vmatpush1.bf16.msra.mxu0 0
      %2348 = vmatprep.mubr.bf16.mxu0 0
      %2349 = vmatmul.mubr.bf16.gmra.mrb[0].mxu0 %v2266
      %v2350 = vpop.f32.mrb[0].mxu0
      %v2351 = vadd.f32 0.0, %v2350
      %v2352 = vpop.f32.mrb[0].mxu0
      %v2353 = vpop.f32.mrb[0].mxu0
      %v2354 = vadd.f32 0.0, %v2353
      %v2355 = vpop.f32.mrb[0].mxu0
      %2356 = vmatprep.mubr.bf16.mxu0 0
      %2357 = vmatmul.mubr.bf16.gmra.mrb[0].mxu0 %v2269
      %v2358 = vpop.f32.mrb[0].mxu0
      %v2359 = vadd.f32 0.0, %v2358
      %v2360 = vpop.f32.mrb[0].mxu0
      %v2361 = vpop.f32.mrb[0].mxu0
      %v2362 = vadd.f32 0.0, %v2361
      %v2363 = vpop.f32.mrb[0].mxu0
      %2364 = vmatprep.mubr.bf16.mxu0 0
      %2365 = vmatmul.mubr.bf16.gmra.mrb[0].mxu0 %v2272
      %v2366 = vpop.f32.mrb[0].mxu0
      %v2367 = vadd.f32 0.0, %v2366
      %v2368 = vpop.f32.mrb[0].mxu0
      %v2369 = vpop.f32.mrb[0].mxu0
      %v2370 = vadd.f32 0.0, %v2369
      %v2371 = vpop.f32.mrb[0].mxu0
      %2372 = vmatprep.mubr.bf16.mxu0 0
      %2373 = vmatmul.mubr.bf16.gmra.mrb[0].mxu0 %v2275
      %v2374 = vpop.f32.mrb[0].mxu0
      %v2375 = vadd.f32 0.0, %v2374
      %v2376 = vpop.f32.mrb[0].mxu0
      %v2377 = vpop.f32.mrb[0].mxu0
      %v2378 = vadd.f32 0.0, %v2377
      %v2379 = vpop.f32.mrb[0].mxu0
      %2380 = vmatprep.mubr.bf16.mxu0 0
      %2381 = vmatmul.mubr.bf16.gmra.mrb[0].mxu0 %v2278
      %v2382 = vpop.f32.mrb[0].mxu0
      %v2383 = vadd.f32 0.0, %v2382
      %v2384 = vpop.f32.mrb[0].mxu0
      %v2385 = vpop.f32.mrb[0].mxu0
      %v2386 = vadd.f32 0.0, %v2385
      %v2387 = vpop.f32.mrb[0].mxu0
      %2388 = vmatprep.mubr.bf16.mxu0 0
      %2389 = vmatmul.mubr.bf16.gmra.mrb[0].mxu0 %v2281
      %v2390 = vpop.f32.mrb[0].mxu0
      %v2391 = vadd.f32 0.0, %v2390
      %v2392 = vpop.f32.mrb[0].mxu0
      %v2393 = vpop.f32.mrb[0].mxu0
      %v2394 = vadd.f32 0.0, %v2393
      %v2395 = vpop.f32.mrb[0].mxu0
      %2396 = vmatprep.mubr.bf16.mxu0 0
      %2397 = vmatmul.mubr.bf16.gmra.mrb[0].mxu0 %v2284
      %v2398 = vpop.f32.mrb[0].mxu0
      %v2399 = vadd.f32 0.0, %v2398
      %v2400 = vpop.f32.mrb[0].mxu0
      %v2401 = vpop.f32.mrb[0].mxu0
      %v2402 = vadd.f32 0.0, %v2401
      %v2403 = vpop.f32.mrb[0].mxu0
      %2404 = vmatprep.mubr.bf16.mxu0 0
      %2405 = vmatmul.mubr.bf16.gmra.mrb[0].mxu0 %v2287
      %v2406 = vpop.f32.mrb[0].mxu0
      %v2407 = vadd.f32 0.0, %v2406
      %v2408 = vpop.f32.mrb[0].mxu0
      %v2409 = vpop.f32.mrb[0].mxu0
      %v2410 = vadd.f32 0.0, %v2409
      %v2411 = vpop.f32.mrb[0].mxu0
      %2412 = vmatprep.mubr.bf16.mxu0 0
      %2413 = vmatmul.mubr.bf16.gmra.mrb[0].mxu0 %v2290
      %v2414 = vpop.f32.mrb[0].mxu0
      %v2415 = vadd.f32 0.0, %v2414
      %v2416 = vpop.f32.mrb[0].mxu0
      %v2417 = vpop.f32.mrb[0].mxu0
      %v2418 = vadd.f32 0.0, %v2417
      %v2419 = vpop.f32.mrb[0].mxu0
      %2420 = vmatprep.mubr.bf16.mxu0 0
      %2421 = vmatmul.mubr.bf16.gmra.mrb[0].mxu0 %v2293
      %v2422 = vpop.f32.mrb[0].mxu0
      %v2423 = vadd.f32 0.0, %v2422
      %v2424 = vpop.f32.mrb[0].mxu0
      %v2425 = vpop.f32.mrb[0].mxu0
      %v2426 = vadd.f32 0.0, %v2425
      %v2427 = vpop.f32.mrb[0].mxu0
      %2428 = vmatprep.mubr.bf16.mxu0 0
      %2429 = vmatmul.mubr.bf16.gmra.mrb[0].mxu0 %v2296
      %v2430 = vpop.f32.mrb[0].mxu0
      %v2431 = vadd.f32 0.0, %v2430
      %v2432 = vpop.f32.mrb[0].mxu0
      %v2433 = vpop.f32.mrb[0].mxu0
      %v2434 = vadd.f32 0.0, %v2433
      %v2435 = vpop.f32.mrb[0].mxu0
      %2436 = vmatprep.mubr.bf16.mxu0 0
      %2437 = vmatmul.mubr.bf16.gmra.mrb[0].mxu0 %v2299
      %v2438 = vpop.f32.mrb[0].mxu0
      %v2439 = vadd.f32 0.0, %v2438
      %v2440 = vpop.f32.mrb[0].mxu0
      %v2441 = vpop.f32.mrb[0].mxu0
      %v2442 = vadd.f32 0.0, %v2441
      %v2443 = vpop.f32.mrb[0].mxu0
      %2444 = vmatprep.mubr.bf16.mxu0 0
      %2445 = vmatmul.mubr.bf16.gmra.mrb[0].mxu0 %v2302
      %v2446 = vpop.f32.mrb[0].mxu0
      %v2447 = vadd.f32 0.0, %v2446
      %v2448 = vpop.f32.mrb[0].mxu0
      %v2449 = vpop.f32.mrb[0].mxu0
      %v2450 = vadd.f32 0.0, %v2449
      %v2451 = vpop.f32.mrb[0].mxu0
      %2452 = vmatprep.mubr.bf16.mxu0 0
      %2453 = vmatmul.mubr.bf16.gmra.mrb[0].mxu0 %v2305
      %v2454 = vpop.f32.mrb[0].mxu0
      %v2455 = vadd.f32 0.0, %v2454
      %v2456 = vpop.f32.mrb[0].mxu0
      %v2457 = vpop.f32.mrb[0].mxu0
      %v2458 = vadd.f32 0.0, %v2457
      %v2459 = vpop.f32.mrb[0].mxu0
      %2460 = vmatprep.mubr.bf16.mxu0 0
      %2461 = vmatmul.mubr.bf16.gmra.mrb[0].mxu0 %v2308
      %v2462 = vpop.f32.mrb[0].mxu0
      %v2463 = vadd.f32 0.0, %v2462
      %v2464 = vpop.f32.mrb[0].mxu0
      %v2465 = vpop.f32.mrb[0].mxu0
      %v2466 = vadd.f32 0.0, %v2465
      %v2467 = vpop.f32.mrb[0].mxu0
      %2468 = vmatprep.mubr.bf16.mxu0 0
      %2469 = vmatmul.mubr.bf16.gmra.mrb[0].mxu0 %v2311
      %v2470 = vpop.f32.mrb[0].mxu0
      %v2471 = vadd.f32 0.0, %v2470
      %v2472 = vpop.f32.mrb[0].mxu0
      %v2473 = vpop.f32.mrb[0].mxu0
      %v2474 = vadd.f32 0.0, %v2473
      %v2475 = vpop.f32.mrb[0].mxu0
      %2476 = vdwg.mxu0
      %v2477 = vadd.f32 %v2184, %v2351
      %v2478 = vadd.f32 %v2185, %v2354
      %v2479 = vadd.f32 %v2186, %v2359
      %v2480 = vadd.f32 %v2187, %v2362
      %v2481 = vadd.f32 %v2188, %v2367
      %v2482 = vadd.f32 %v2189, %v2370
      %v2483 = vadd.f32 %v2190, %v2375
      %v2484 = vadd.f32 %v2191, %v2378
      %v2485 = vadd.f32 %v2192, %v2383
      %v2486 = vadd.f32 %v2193, %v2386
      %v2487 = vadd.f32 %v2194, %v2391
      %v2488 = vadd.f32 %v2195, %v2394
      %v2489 = vadd.f32 %v2196, %v2399
      %v2490 = vadd.f32 %v2197, %v2402
      %v2491 = vadd.f32 %v2198, %v2407
      %v2492 = vadd.f32 %v2199, %v2410
      %v2493 = vadd.f32 %v2200, %v2415
      %v2494 = vadd.f32 %v2201, %v2418
      %v2495 = vadd.f32 %v2202, %v2423
      %v2496 = vadd.f32 %v2203, %v2426
      %v2497 = vadd.f32 %v2204, %v2431
      %v2498 = vadd.f32 %v2205, %v2434
      %v2499 = vadd.f32 %v2206, %v2439
      %v2500 = vadd.f32 %v2207, %v2442
      %v2501 = vadd.f32 %v2208, %v2447
      %v2502 = vadd.f32 %v2209, %v2450
      %v2503 = vadd.f32 %v2210, %v2455
      %v2504 = vadd.f32 %v2211, %v2458
      %v2505 = vadd.f32 %v2212, %v2463
      %v2506 = vadd.f32 %v2213, %v2466
      %v2507 = vadd.f32 %v2214, %v2471
      %v2508 = vadd.f32 %v2215, %v2474
      %v2509 = vld [vmem:[%s2216 + $0x1] sm:$0xff]
      %v2510 = vld [vmem:[%s2216 + $0x9] sm:$0xff]
      %v2511 = vld [vmem:[%s2216 + $0x19] sm:$0xff]
      %v2512 = vld [vmem:[%s2216 + $0x21] sm:$0xff]
      %v2513 = vld [vmem:[%s2216 + $0x31] sm:$0xff]
      %v2514 = vld [vmem:[%s2216 + $0x39] sm:$0xff]
      %v2515 = vld [vmem:[%s2216 + $0x49] sm:$0xff]
      %v2516 = vld [vmem:[%s2216 + $0x51] sm:$0xff]
      %v2517 = vld [vmem:[%s2216 + $0x61] sm:$0xff]
      %v2518 = vld [vmem:[%s2216 + $0x69] sm:$0xff]
      %v2519 = vld [vmem:[%s2216 + $0x79] sm:$0xff]
      %v2520 = vld [vmem:[%s2216 + $0x81] sm:$0xff]
      %v2521 = vld [vmem:[%s2216 + $0x91] sm:$0xff]
      %v2522 = vld [vmem:[%s2216 + $0x99] sm:$0xff]
      %v2523 = vld [vmem:[%s2216 + $0xa9] sm:$0xff]
      %v2524 = vld [vmem:[%s2216 + $0xb1] sm:$0xff]
      %v2525 = vld [vmem:[%s2216 + $0xc1] sm:$0xff]
      %v2526 = vld [vmem:[%s2216 + $0xc9] sm:$0xff]
      %v2527 = vld [vmem:[%s2216 + $0xd9] sm:$0xff]
      %v2528 = vld [vmem:[%s2216 + $0xe1] sm:$0xff]
      %v2529 = vld [vmem:[%s2216 + $0xf1] sm:$0xff]
      %v2530 = vld [vmem:[%s2216 + $0xf9] sm:$0xff]
      %v2531 = vld [vmem:[%s2216 + $0x109] sm:$0xff]
      %v2532 = vld [vmem:[%s2216 + $0x111] sm:$0xff]
      %v2533 = vld [vmem:[%s2216 + $0x121] sm:$0xff]
      %v2534 = vld [vmem:[%s2216 + $0x129] sm:$0xff]
      %v2535 = vld [vmem:[%s2216 + $0x139] sm:$0xff]
      %v2536 = vld [vmem:[%s2216 + $0x141] sm:$0xff]
      %v2537 = vld [vmem:[%s2216 + $0x151] sm:$0xff]
      %v2538 = vld [vmem:[%s2216 + $0x159] sm:$0xff]
      %v2539 = vld [vmem:[%s2216 + $0x169] sm:$0xff]
      %v2540 = vld [vmem:[%s2216 + $0x171] sm:$0xff]
      %v2541 = vpack.c.bf16 %v2510, %v2509
      %v2542 = vpack.c.bf16 %v2512, %v2511
      %v2543 = vpack.c.bf16 %v2514, %v2513
      %v2544 = vpack.c.bf16 %v2516, %v2515
      %v2545 = vpack.c.bf16 %v2518, %v2517
      %v2546 = vpack.c.bf16 %v2520, %v2519
      %v2547 = vpack.c.bf16 %v2522, %v2521
      %v2548 = vpack.c.bf16 %v2524, %v2523
      %v2549 = vpack.c.bf16 %v2526, %v2525
      %v2550 = vpack.c.bf16 %v2528, %v2527
      %v2551 = vpack.c.bf16 %v2530, %v2529
      %v2552 = vpack.c.bf16 %v2532, %v2531
      %v2553 = vpack.c.bf16 %v2534, %v2533
      %v2554 = vpack.c.bf16 %v2536, %v2535
      %v2555 = vpack.c.bf16 %v2538, %v2537
      %v2556 = vpack.c.bf16 %v2540, %v2539
      %v2558 = vsel %vm438, %v2541, 0
      %v2561 = vsel %vm438, %v2542, 0
      %v2564 = vsel %vm438, %v2543, 0
      %v2567 = vsel %vm438, %v2544, 0
      %v2570 = vsel %vm438, %v2545, 0
      %v2573 = vsel %vm438, %v2546, 0
      %v2576 = vsel %vm438, %v2547, 0
      %v2579 = vsel %vm438, %v2548, 0
      %v2582 = vsel %vm438, %v2549, 0
      %v2585 = vsel %vm438, %v2550, 0
      %v2588 = vsel %vm438, %v2551, 0
      %v2591 = vsel %vm438, %v2552, 0
      %v2594 = vsel %vm438, %v2553, 0
      %v2597 = vsel %vm438, %v2554, 0
      %v2600 = vsel %vm438, %v2555, 0
      %v2603 = vsel %vm438, %v2556, 0
      %v2606 = vsel %vm671, %v524, 0
      %2608 = vmatprep.subr.bf16.mxu0 0
      %2609 = vmatpush1.bf16.msra.mxu0 %v2606
      %2610 = vmatprep.subr.bf16.mxu0 0
      %2611 = vmatpush1.bf16.msra.mxu0 0
      %2612 = vmatprep.subr.bf16.mxu0 0
      %2613 = vmatpush1.bf16.msra.mxu0 0
      %2614 = vmatprep.subr.bf16.mxu0 0
      %2615 = vmatpush1.bf16.msra.mxu0 0
      %2616 = vmatprep.subr.bf16.mxu0 0
      %2617 = vmatpush1.bf16.msra.mxu0 0
      %2618 = vmatprep.subr.bf16.mxu0 0
      %2619 = vmatpush1.bf16.msra.mxu0 0
      %2620 = vmatprep.subr.bf16.mxu0 0
      %2621 = vmatpush1.bf16.msra.mxu0 0
      %2622 = vmatprep.subr.bf16.mxu0 0
      %2623 = vmatpush1.bf16.msra.mxu0 0
      %2624 = vmatprep.subr.bf16.mxu0 0
      %2625 = vmatpush1.bf16.msra.mxu0 0
      %2626 = vmatprep.subr.bf16.mxu0 0
      %2627 = vmatpush1.bf16.msra.mxu0 0
      %2628 = vmatprep.subr.bf16.mxu0 0
      %2629 = vmatpush1.bf16.msra.mxu0 0
      %2630 = vmatprep.subr.bf16.mxu0 0
      %2631 = vmatpush1.bf16.msra.mxu0 0
      %2632 = vmatprep.subr.bf16.mxu0 0
      %2633 = vmatpush1.bf16.msra.mxu0 0
      %2634 = vmatprep.subr.bf16.mxu0 0
      %2635 = vmatpush1.bf16.msra.mxu0 0
      %2636 = vmatprep.subr.bf16.mxu0 0
      %2637 = vmatpush1.bf16.msra.mxu0 0
      %2638 = vmatprep.subr.bf16.mxu0 0
      %2639 = vmatpush1.bf16.msra.mxu0 0
      %2640 = vmatprep.mubr.bf16.mxu0 0
      %2641 = vmatmul.mubr.bf16.gmra.mrb[0].mxu0 %v2558
      %v2642 = vpop.f32.mrb[0].mxu0
      %v2643 = vadd.f32 0.0, %v2642
      %v2644 = vpop.f32.mrb[0].mxu0
      %v2645 = vpop.f32.mrb[0].mxu0
      %v2646 = vadd.f32 0.0, %v2645
      %v2647 = vpop.f32.mrb[0].mxu0
      %2648 = vmatprep.mubr.bf16.mxu0 0
      %2649 = vmatmul.mubr.bf16.gmra.mrb[0].mxu0 %v2561
      %v2650 = vpop.f32.mrb[0].mxu0
      %v2651 = vadd.f32 0.0, %v2650
      %v2652 = vpop.f32.mrb[0].mxu0
      %v2653 = vpop.f32.mrb[0].mxu0
      %v2654 = vadd.f32 0.0, %v2653
      %v2655 = vpop.f32.mrb[0].mxu0
      %2656 = vmatprep.mubr.bf16.mxu0 0
      %2657 = vmatmul.mubr.bf16.gmra.mrb[0].mxu0 %v2564
      %v2658 = vpop.f32.mrb[0].mxu0
      %v2659 = vadd.f32 0.0, %v2658
      %v2660 = vpop.f32.mrb[0].mxu0
      %v2661 = vpop.f32.mrb[0].mxu0
      %v2662 = vadd.f32 0.0, %v2661
      %v2663 = vpop.f32.mrb[0].mxu0
      %2664 = vmatprep.mubr.bf16.mxu0 0
      %2665 = vmatmul.mubr.bf16.gmra.mrb[0].mxu0 %v2567
      %v2666 = vpop.f32.mrb[0].mxu0
      %v2667 = vadd.f32 0.0, %v2666
      %v2668 = vpop.f32.mrb[0].mxu0
      %v2669 = vpop.f32.mrb[0].mxu0
      %v2670 = vadd.f32 0.0, %v2669
      %v2671 = vpop.f32.mrb[0].mxu0
      %2672 = vmatprep.mubr.bf16.mxu0 0
      %2673 = vmatmul.mubr.bf16.gmra.mrb[0].mxu0 %v2570
      %v2674 = vpop.f32.mrb[0].mxu0
      %v2675 = vadd.f32 0.0, %v2674
      %v2676 = vpop.f32.mrb[0].mxu0
      %v2677 = vpop.f32.mrb[0].mxu0
      %v2678 = vadd.f32 0.0, %v2677
      %v2679 = vpop.f32.mrb[0].mxu0
      %2680 = vmatprep.mubr.bf16.mxu0 0
      %2681 = vmatmul.mubr.bf16.gmra.mrb[0].mxu0 %v2573
      %v2682 = vpop.f32.mrb[0].mxu0
      %v2683 = vadd.f32 0.0, %v2682
      %v2684 = vpop.f32.mrb[0].mxu0
      %v2685 = vpop.f32.mrb[0].mxu0
      %v2686 = vadd.f32 0.0, %v2685
      %v2687 = vpop.f32.mrb[0].mxu0
      %2688 = vmatprep.mubr.bf16.mxu0 0
      %2689 = vmatmul.mubr.bf16.gmra.mrb[0].mxu0 %v2576
      %v2690 = vpop.f32.mrb[0].mxu0
      %v2691 = vadd.f32 0.0, %v2690
      %v2692 = vpop.f32.mrb[0].mxu0
      %v2693 = vpop.f32.mrb[0].mxu0
      %v2694 = vadd.f32 0.0, %v2693
      %v2695 = vpop.f32.mrb[0].mxu0
      %2696 = vmatprep.mubr.bf16.mxu0 0
      %2697 = vmatmul.mubr.bf16.gmra.mrb[0].mxu0 %v2579
      %v2698 = vpop.f32.mrb[0].mxu0
      %v2699 = vadd.f32 0.0, %v2698
      %v2700 = vpop.f32.mrb[0].mxu0
      %v2701 = vpop.f32.mrb[0].mxu0
      %v2702 = vadd.f32 0.0, %v2701
      %v2703 = vpop.f32.mrb[0].mxu0
      %2704 = vmatprep.mubr.bf16.mxu0 0
      %2705 = vmatmul.mubr.bf16.gmra.mrb[0].mxu0 %v2582
      %v2706 = vpop.f32.mrb[0].mxu0
      %v2707 = vadd.f32 0.0, %v2706
      %v2708 = vpop.f32.mrb[0].mxu0
      %v2709 = vpop.f32.mrb[0].mxu0
      %v2710 = vadd.f32 0.0, %v2709
      %v2711 = vpop.f32.mrb[0].mxu0
      %2712 = vmatprep.mubr.bf16.mxu0 0
      %2713 = vmatmul.mubr.bf16.gmra.mrb[0].mxu0 %v2585
      %v2714 = vpop.f32.mrb[0].mxu0
      %v2715 = vadd.f32 0.0, %v2714
      %v2716 = vpop.f32.mrb[0].mxu0
      %v2717 = vpop.f32.mrb[0].mxu0
      %v2718 = vadd.f32 0.0, %v2717
      %v2719 = vpop.f32.mrb[0].mxu0
      %2720 = vmatprep.mubr.bf16.mxu0 0
      %2721 = vmatmul.mubr.bf16.gmra.mrb[0].mxu0 %v2588
      %v2722 = vpop.f32.mrb[0].mxu0
      %v2723 = vadd.f32 0.0, %v2722
      %v2724 = vpop.f32.mrb[0].mxu0
      %v2725 = vpop.f32.mrb[0].mxu0
      %v2726 = vadd.f32 0.0, %v2725
      %v2727 = vpop.f32.mrb[0].mxu0
      %2728 = vmatprep.mubr.bf16.mxu0 0
      %2729 = vmatmul.mubr.bf16.gmra.mrb[0].mxu0 %v2591
      %v2730 = vpop.f32.mrb[0].mxu0
      %v2731 = vadd.f32 0.0, %v2730
      %v2732 = vpop.f32.mrb[0].mxu0
      %v2733 = vpop.f32.mrb[0].mxu0
      %v2734 = vadd.f32 0.0, %v2733
      %v2735 = vpop.f32.mrb[0].mxu0
      %2736 = vmatprep.mubr.bf16.mxu0 0
      %2737 = vmatmul.mubr.bf16.gmra.mrb[0].mxu0 %v2594
      %v2738 = vpop.f32.mrb[0].mxu0
      %v2739 = vadd.f32 0.0, %v2738
      %v2740 = vpop.f32.mrb[0].mxu0
      %v2741 = vpop.f32.mrb[0].mxu0
      %v2742 = vadd.f32 0.0, %v2741
      %v2743 = vpop.f32.mrb[0].mxu0
      %2744 = vmatprep.mubr.bf16.mxu0 0
      %2745 = vmatmul.mubr.bf16.gmra.mrb[0].mxu0 %v2597
      %v2746 = vpop.f32.mrb[0].mxu0
      %v2747 = vadd.f32 0.0, %v2746
      %v2748 = vpop.f32.mrb[0].mxu0
      %v2749 = vpop.f32.mrb[0].mxu0
      %v2750 = vadd.f32 0.0, %v2749
      %v2751 = vpop.f32.mrb[0].mxu0
      %2752 = vmatprep.mubr.bf16.mxu0 0
      %2753 = vmatmul.mubr.bf16.gmra.mrb[0].mxu0 %v2600
      %v2754 = vpop.f32.mrb[0].mxu0
      %v2755 = vadd.f32 0.0, %v2754
      %v2756 = vpop.f32.mrb[0].mxu0
      %v2757 = vpop.f32.mrb[0].mxu0
      %v2758 = vadd.f32 0.0, %v2757
      %v2759 = vpop.f32.mrb[0].mxu0
      %2760 = vmatprep.mubr.bf16.mxu0 0
      %2761 = vmatmul.mubr.bf16.gmra.mrb[0].mxu0 %v2603
      %v2762 = vpop.f32.mrb[0].mxu0
      %v2763 = vadd.f32 0.0, %v2762
      %v2764 = vpop.f32.mrb[0].mxu0
      %v2765 = vpop.f32.mrb[0].mxu0
      %v2766 = vadd.f32 0.0, %v2765
      %v2767 = vpop.f32.mrb[0].mxu0
      %2768 = vdwg.mxu0
      %v2769 = vadd.f32 %v2477, %v2643
      %v2770 = vadd.f32 %v2478, %v2646
      %v2771 = vadd.f32 %v2479, %v2651
      %v2772 = vadd.f32 %v2480, %v2654
      %v2773 = vadd.f32 %v2481, %v2659
      %v2774 = vadd.f32 %v2482, %v2662
      %v2775 = vadd.f32 %v2483, %v2667
      %v2776 = vadd.f32 %v2484, %v2670
      %v2777 = vadd.f32 %v2485, %v2675
      %v2778 = vadd.f32 %v2486, %v2678
      %v2779 = vadd.f32 %v2487, %v2683
      %v2780 = vadd.f32 %v2488, %v2686
      %v2781 = vadd.f32 %v2489, %v2691
      %v2782 = vadd.f32 %v2490, %v2694
      %v2783 = vadd.f32 %v2491, %v2699
      %v2784 = vadd.f32 %v2492, %v2702
      %v2785 = vadd.f32 %v2493, %v2707
      %v2786 = vadd.f32 %v2494, %v2710
      %v2787 = vadd.f32 %v2495, %v2715
      %v2788 = vadd.f32 %v2496, %v2718
      %v2789 = vadd.f32 %v2497, %v2723
      %v2790 = vadd.f32 %v2498, %v2726
      %v2791 = vadd.f32 %v2499, %v2731
      %v2792 = vadd.f32 %v2500, %v2734
      %v2793 = vadd.f32 %v2501, %v2739
      %v2794 = vadd.f32 %v2502, %v2742
      %v2795 = vadd.f32 %v2503, %v2747
      %v2796 = vadd.f32 %v2504, %v2750
      %v2797 = vadd.f32 %v2505, %v2755
      %v2798 = vadd.f32 %v2506, %v2758
      %v2799 = vadd.f32 %v2507, %v2763
      %v2800 = vadd.f32 %v2508, %v2766
      %v2801 = vld [vmem:[%s2216 + $0x2] sm:$0xff]
      %v2802 = vld [vmem:[%s2216 + $0xa] sm:$0xff]
      %v2803 = vld [vmem:[%s2216 + $0x1a] sm:$0xff]
      %v2804 = vld [vmem:[%s2216 + $0x22] sm:$0xff]
      %v2805 = vld [vmem:[%s2216 + $0x32] sm:$0xff]
      %v2806 = vld [vmem:[%s2216 + $0x3a] sm:$0xff]
      %v2807 = vld [vmem:[%s2216 + $0x4a] sm:$0xff]
      %v2808 = vld [vmem:[%s2216 + $0x52] sm:$0xff]
      %v2809 = vld [vmem:[%s2216 + $0x62] sm:$0xff]
      %v2810 = vld [vmem:[%s2216 + $0x6a] sm:$0xff]
      %v2811 = vld [vmem:[%s2216 + $0x7a] sm:$0xff]
      %v2812 = vld [vmem:[%s2216 + $0x82] sm:$0xff]
      %v2813 = vld [vmem:[%s2216 + $0x92] sm:$0xff]
      %v2814 = vld [vmem:[%s2216 + $0x9a] sm:$0xff]
      %v2815 = vld [vmem:[%s2216 + $0xaa] sm:$0xff]
      %v2816 = vld [vmem:[%s2216 + $0xb2] sm:$0xff]
      %v2817 = vld [vmem:[%s2216 + $0xc2] sm:$0xff]
      %v2818 = vld [vmem:[%s2216 + $0xca] sm:$0xff]
      %v2819 = vld [vmem:[%s2216 + $0xda] sm:$0xff]
      %v2820 = vld [vmem:[%s2216 + $0xe2] sm:$0xff]
      %v2821 = vld [vmem:[%s2216 + $0xf2] sm:$0xff]
      %v2822 = vld [vmem:[%s2216 + $0xfa] sm:$0xff]
      %v2823 = vld [vmem:[%s2216 + $0x10a] sm:$0xff]
      %v2824 = vld [vmem:[%s2216 + $0x112] sm:$0xff]
      %v2825 = vld [vmem:[%s2216 + $0x122] sm:$0xff]
      %v2826 = vld [vmem:[%s2216 + $0x12a] sm:$0xff]
      %v2827 = vld [vmem:[%s2216 + $0x13a] sm:$0xff]
      %v2828 = vld [vmem:[%s2216 + $0x142] sm:$0xff]
      %v2829 = vld [vmem:[%s2216 + $0x152] sm:$0xff]
      %v2830 = vld [vmem:[%s2216 + $0x15a] sm:$0xff]
      %v2831 = vld [vmem:[%s2216 + $0x16a] sm:$0xff]
      %v2832 = vld [vmem:[%s2216 + $0x172] sm:$0xff]
      %v2833 = vpack.c.bf16 %v2802, %v2801
      %v2834 = vpack.c.bf16 %v2804, %v2803
      %v2835 = vpack.c.bf16 %v2806, %v2805
      %v2836 = vpack.c.bf16 %v2808, %v2807
      %v2837 = vpack.c.bf16 %v2810, %v2809
      %v2838 = vpack.c.bf16 %v2812, %v2811
      %v2839 = vpack.c.bf16 %v2814, %v2813
      %v2840 = vpack.c.bf16 %v2816, %v2815
      %v2841 = vpack.c.bf16 %v2818, %v2817
      %v2842 = vpack.c.bf16 %v2820, %v2819
      %v2843 = vpack.c.bf16 %v2822, %v2821
      %v2844 = vpack.c.bf16 %v2824, %v2823
      %v2845 = vpack.c.bf16 %v2826, %v2825
      %v2846 = vpack.c.bf16 %v2828, %v2827
      %v2847 = vpack.c.bf16 %v2830, %v2829
      %v2848 = vpack.c.bf16 %v2832, %v2831
      %v2850 = vsel %vm438, %v2833, 0
      %v2853 = vsel %vm438, %v2834, 0
      %v2856 = vsel %vm438, %v2835, 0
      %v2859 = vsel %vm438, %v2836, 0
      %v2862 = vsel %vm438, %v2837, 0
      %v2865 = vsel %vm438, %v2838, 0
      %v2868 = vsel %vm438, %v2839, 0
      %v2871 = vsel %vm438, %v2840, 0
      %v2874 = vsel %vm438, %v2841, 0
      %v2877 = vsel %vm438, %v2842, 0
      %v2880 = vsel %vm438, %v2843, 0
      %v2883 = vsel %vm438, %v2844, 0
      %v2886 = vsel %vm438, %v2845, 0
      %v2889 = vsel %vm438, %v2846, 0
      %v2892 = vsel %vm438, %v2847, 0
      %v2895 = vsel %vm438, %v2848, 0
      %v2898 = vsel %vm671, %v525, 0
      %2900 = vmatprep.subr.bf16.mxu0 0
      %2901 = vmatpush1.bf16.msra.mxu0 %v2898
      %2902 = vmatprep.subr.bf16.mxu0 0
      %2903 = vmatpush1.bf16.msra.mxu0 0
      %2904 = vmatprep.subr.bf16.mxu0 0
      %2905 = vmatpush1.bf16.msra.mxu0 0
      %2906 = vmatprep.subr.bf16.mxu0 0
      %2907 = vmatpush1.bf16.msra.mxu0 0
      %2908 = vmatprep.subr.bf16.mxu0 0
      %2909 = vmatpush1.bf16.msra.mxu0 0
      %2910 = vmatprep.subr.bf16.mxu0 0
      %2911 = vmatpush1.bf16.msra.mxu0 0
      %2912 = vmatprep.subr.bf16.mxu0 0
      %2913 = vmatpush1.bf16.msra.mxu0 0
      %2914 = vmatprep.subr.bf16.mxu0 0
      %2915 = vmatpush1.bf16.msra.mxu0 0
      %2916 = vmatprep.subr.bf16.mxu0 0
      %2917 = vmatpush1.bf16.msra.mxu0 0
      %2918 = vmatprep.subr.bf16.mxu0 0
      %2919 = vmatpush1.bf16.msra.mxu0 0
      %2920 = vmatprep.subr.bf16.mxu0 0
      %2921 = vmatpush1.bf16.msra.mxu0 0
      %2922 = vmatprep.subr.bf16.mxu0 0
      %2923 = vmatpush1.bf16.msra.mxu0 0
      %2924 = vmatprep.subr.bf16.mxu0 0
      %2925 = vmatpush1.bf16.msra.mxu0 0
      %2926 = vmatprep.subr.bf16.mxu0 0
      %2927 = vmatpush1.bf16.msra.mxu0 0
      %2928 = vmatprep.subr.bf16.mxu0 0
      %2929 = vmatpush1.bf16.msra.mxu0 0
      %2930 = vmatprep.subr.bf16.mxu0 0
      %2931 = vmatpush1.bf16.msra.mxu0 0
      %2932 = vmatprep.mubr.bf16.mxu0 0
      %2933 = vmatmul.mubr.bf16.gmra.mrb[0].mxu0 %v2850
      %v2934 = vpop.f32.mrb[0].mxu0
      %v2935 = vadd.f32 0.0, %v2934
      %v2936 = vpop.f32.mrb[0].mxu0
      %v2937 = vpop.f32.mrb[0].mxu0
      %v2938 = vadd.f32 0.0, %v2937
      %v2939 = vpop.f32.mrb[0].mxu0
      %2940 = vmatprep.mubr.bf16.mxu0 0
      %2941 = vmatmul.mubr.bf16.gmra.mrb[0].mxu0 %v2853
      %v2942 = vpop.f32.mrb[0].mxu0
      %v2943 = vadd.f32 0.0, %v2942
      %v2944 = vpop.f32.mrb[0].mxu0
      %v2945 = vpop.f32.mrb[0].mxu0
      %v2946 = vadd.f32 0.0, %v2945
      %v2947 = vpop.f32.mrb[0].mxu0
      %2948 = vmatprep.mubr.bf16.mxu0 0
      %2949 = vmatmul.mubr.bf16.gmra.mrb[0].mxu0 %v2856
      %v2950 = vpop.f32.mrb[0].mxu0
      %v2951 = vadd.f32 0.0, %v2950
      %v2952 = vpop.f32.mrb[0].mxu0
      %v2953 = vpop.f32.mrb[0].mxu0
      %v2954 = vadd.f32 0.0, %v2953
      %v2955 = vpop.f32.mrb[0].mxu0
      %2956 = vmatprep.mubr.bf16.mxu0 0
      %2957 = vmatmul.mubr.bf16.gmra.mrb[0].mxu0 %v2859
      %v2958 = vpop.f32.mrb[0].mxu0
      %v2959 = vadd.f32 0.0, %v2958
      %v2960 = vpop.f32.mrb[0].mxu0
      %v2961 = vpop.f32.mrb[0].mxu0
      %v2962 = vadd.f32 0.0, %v2961
      %v2963 = vpop.f32.mrb[0].mxu0
      %2964 = vmatprep.mubr.bf16.mxu0 0
      %2965 = vmatmul.mubr.bf16.gmra.mrb[0].mxu0 %v2862
      %v2966 = vpop.f32.mrb[0].mxu0
      %v2967 = vadd.f32 0.0, %v2966
      %v2968 = vpop.f32.mrb[0].mxu0
      %v2969 = vpop.f32.mrb[0].mxu0
      %v2970 = vadd.f32 0.0, %v2969
      %v2971 = vpop.f32.mrb[0].mxu0
      %2972 = vmatprep.mubr.bf16.mxu0 0
      %2973 = vmatmul.mubr.bf16.gmra.mrb[0].mxu0 %v2865
      %v2974 = vpop.f32.mrb[0].mxu0
      %v2975 = vadd.f32 0.0, %v2974
      %v2976 = vpop.f32.mrb[0].mxu0
      %v2977 = vpop.f32.mrb[0].mxu0
      %v2978 = vadd.f32 0.0, %v2977
      %v2979 = vpop.f32.mrb[0].mxu0
      %2980 = vmatprep.mubr.bf16.mxu0 0
      %2981 = vmatmul.mubr.bf16.gmra.mrb[0].mxu0 %v2868
      %v2982 = vpop.f32.mrb[0].mxu0
      %v2983 = vadd.f32 0.0, %v2982
      %v2984 = vpop.f32.mrb[0].mxu0
      %v2985 = vpop.f32.mrb[0].mxu0
      %v2986 = vadd.f32 0.0, %v2985
      %v2987 = vpop.f32.mrb[0].mxu0
      %2988 = vmatprep.mubr.bf16.mxu0 0
      %2989 = vmatmul.mubr.bf16.gmra.mrb[0].mxu0 %v2871
      %v2990 = vpop.f32.mrb[0].mxu0
      %v2991 = vadd.f32 0.0, %v2990
      %v2992 = vpop.f32.mrb[0].mxu0
      %v2993 = vpop.f32.mrb[0].mxu0
      %v2994 = vadd.f32 0.0, %v2993
      %v2995 = vpop.f32.mrb[0].mxu0
      %2996 = vmatprep.mubr.bf16.mxu0 0
      %2997 = vmatmul.mubr.bf16.gmra.mrb[0].mxu0 %v2874
      %v2998 = vpop.f32.mrb[0].mxu0
      %v2999 = vadd.f32 0.0, %v2998
      %v3000 = vpop.f32.mrb[0].mxu0
      %v3001 = vpop.f32.mrb[0].mxu0
      %v3002 = vadd.f32 0.0, %v3001
      %v3003 = vpop.f32.mrb[0].mxu0
      %3004 = vmatprep.mubr.bf16.mxu0 0
      %3005 = vmatmul.mubr.bf16.gmra.mrb[0].mxu0 %v2877
      %v3006 = vpop.f32.mrb[0].mxu0
      %v3007 = vadd.f32 0.0, %v3006
      %v3008 = vpop.f32.mrb[0].mxu0
      %v3009 = vpop.f32.mrb[0].mxu0
      %v3010 = vadd.f32 0.0, %v3009
      %v3011 = vpop.f32.mrb[0].mxu0
      %3012 = vmatprep.mubr.bf16.mxu0 0
      %3013 = vmatmul.mubr.bf16.gmra.mrb[0].mxu0 %v2880
      %v3014 = vpop.f32.mrb[0].mxu0
      %v3015 = vadd.f32 0.0, %v3014
      %v3016 = vpop.f32.mrb[0].mxu0
      %v3017 = vpop.f32.mrb[0].mxu0
      %v3018 = vadd.f32 0.0, %v3017
      %v3019 = vpop.f32.mrb[0].mxu0
      %3020 = vmatprep.mubr.bf16.mxu0 0
      %3021 = vmatmul.mubr.bf16.gmra.mrb[0].mxu0 %v2883
      %v3022 = vpop.f32.mrb[0].mxu0
      %v3023 = vadd.f32 0.0, %v3022
      %v3024 = vpop.f32.mrb[0].mxu0
      %v3025 = vpop.f32.mrb[0].mxu0
      %v3026 = vadd.f32 0.0, %v3025
      %v3027 = vpop.f32.mrb[0].mxu0
      %3028 = vmatprep.mubr.bf16.mxu0 0
      %3029 = vmatmul.mubr.bf16.gmra.mrb[0].mxu0 %v2886
      %v3030 = vpop.f32.mrb[0].mxu0
      %v3031 = vadd.f32 0.0, %v3030
      %v3032 = vpop.f32.mrb[0].mxu0
      %v3033 = vpop.f32.mrb[0].mxu0
      %v3034 = vadd.f32 0.0, %v3033
      %v3035 = vpop.f32.mrb[0].mxu0
      %3036 = vmatprep.mubr.bf16.mxu0 0
      %3037 = vmatmul.mubr.bf16.gmra.mrb[0].mxu0 %v2889
      %v3038 = vpop.f32.mrb[0].mxu0
      %v3039 = vadd.f32 0.0, %v3038
      %v3040 = vpop.f32.mrb[0].mxu0
      %v3041 = vpop.f32.mrb[0].mxu0
      %v3042 = vadd.f32 0.0, %v3041
      %v3043 = vpop.f32.mrb[0].mxu0
      %3044 = vmatprep.mubr.bf16.mxu0 0
      %3045 = vmatmul.mubr.bf16.gmra.mrb[0].mxu0 %v2892
      %v3046 = vpop.f32.mrb[0].mxu0
      %v3047 = vadd.f32 0.0, %v3046
      %v3048 = vpop.f32.mrb[0].mxu0
      %v3049 = vpop.f32.mrb[0].mxu0
      %v3050 = vadd.f32 0.0, %v3049
      %v3051 = vpop.f32.mrb[0].mxu0
      %3052 = vmatprep.mubr.bf16.mxu0 0
      %3053 = vmatmul.mubr.bf16.gmra.mrb[0].mxu0 %v2895
      %v3054 = vpop.f32.mrb[0].mxu0
      %v3055 = vadd.f32 0.0, %v3054
      %v3056 = vpop.f32.mrb[0].mxu0
      %v3057 = vpop.f32.mrb[0].mxu0
      %v3058 = vadd.f32 0.0, %v3057
      %v3059 = vpop.f32.mrb[0].mxu0
      %3060 = vdwg.mxu0
      %v3061 = vadd.f32 %v2769, %v2935
      %v3062 = vadd.f32 %v2770, %v2938
      %v3063 = vadd.f32 %v2771, %v2943
      %v3064 = vadd.f32 %v2772, %v2946
      %v3065 = vadd.f32 %v2773, %v2951
      %v3066 = vadd.f32 %v2774, %v2954
      %v3067 = vadd.f32 %v2775, %v2959
      %v3068 = vadd.f32 %v2776, %v2962
      %v3069 = vadd.f32 %v2777, %v2967
      %v3070 = vadd.f32 %v2778, %v2970
      %v3071 = vadd.f32 %v2779, %v2975
      %v3072 = vadd.f32 %v2780, %v2978
      %v3073 = vadd.f32 %v2781, %v2983
      %v3074 = vadd.f32 %v2782, %v2986
      %v3075 = vadd.f32 %v2783, %v2991
      %v3076 = vadd.f32 %v2784, %v2994
      %v3077 = vadd.f32 %v2785, %v2999
      %v3078 = vadd.f32 %v2786, %v3002
      %v3079 = vadd.f32 %v2787, %v3007
      %v3080 = vadd.f32 %v2788, %v3010
      %v3081 = vadd.f32 %v2789, %v3015
      %v3082 = vadd.f32 %v2790, %v3018
      %v3083 = vadd.f32 %v2791, %v3023
      %v3084 = vadd.f32 %v2792, %v3026
      %v3085 = vadd.f32 %v2793, %v3031
      %v3086 = vadd.f32 %v2794, %v3034
      %v3087 = vadd.f32 %v2795, %v3039
      %v3088 = vadd.f32 %v2796, %v3042
      %v3089 = vadd.f32 %v2797, %v3047
      %v3090 = vadd.f32 %v2798, %v3050
      %v3091 = vadd.f32 %v2799, %v3055
      %v3092 = vadd.f32 %v2800, %v3058
      %v3094 = vlaneseq
      %v3095 = vshrl.u32 %v3094, 7
      %v3096 = vsub.s32 0, %v3095
      %v3097 = vrot.slane %v526, %v3096
      %v3099 = vadd.f32 %v3061, %v3097
      %v3100 = vadd.f32 %v3062, %v3097
      %v3101 = vadd.f32 %v3063, %v3097
      %v3102 = vadd.f32 %v3064, %v3097
      %v3103 = vadd.f32 %v3065, %v3097
      %v3104 = vadd.f32 %v3066, %v3097
      %v3105 = vadd.f32 %v3067, %v3097
      %v3106 = vadd.f32 %v3068, %v3097
      %v3107 = vadd.f32 %v3069, %v3097
      %v3108 = vadd.f32 %v3070, %v3097
      %v3109 = vadd.f32 %v3071, %v3097
      %v3110 = vadd.f32 %v3072, %v3097
      %v3111 = vadd.f32 %v3073, %v3097
      %v3112 = vadd.f32 %v3074, %v3097
      %v3113 = vadd.f32 %v3075, %v3097
      %v3114 = vadd.f32 %v3076, %v3097
      %v3115 = vadd.f32 %v3077, %v3097
      %v3116 = vadd.f32 %v3078, %v3097
      %v3117 = vadd.f32 %v3079, %v3097
      %v3118 = vadd.f32 %v3080, %v3097
      %v3119 = vadd.f32 %v3081, %v3097
      %v3120 = vadd.f32 %v3082, %v3097
      %v3121 = vadd.f32 %v3083, %v3097
      %v3122 = vadd.f32 %v3084, %v3097
      %v3123 = vadd.f32 %v3085, %v3097
      %v3124 = vadd.f32 %v3086, %v3097
      %v3125 = vadd.f32 %v3087, %v3097
      %v3126 = vadd.f32 %v3088, %v3097
      %v3127 = vadd.f32 %v3089, %v3097
      %v3128 = vadd.f32 %v3090, %v3097
      %v3129 = vadd.f32 %v3091, %v3097
      %v3130 = vadd.f32 %v3092, %v3097
      %v3131 = vpack.c.bf16 %v3100, %v3099
      %v3132 = vpack.c.bf16 %v3102, %v3101
      %v3133 = vpack.c.bf16 %v3104, %v3103
      %v3134 = vpack.c.bf16 %v3106, %v3105
      %v3135 = vpack.c.bf16 %v3108, %v3107
      %v3136 = vpack.c.bf16 %v3110, %v3109
      %v3137 = vpack.c.bf16 %v3112, %v3111
      %v3138 = vpack.c.bf16 %v3114, %v3113
      %v3139 = vpack.c.bf16 %v3116, %v3115
      %v3140 = vpack.c.bf16 %v3118, %v3117
      %v3141 = vpack.c.bf16 %v3120, %v3119
      %v3142 = vpack.c.bf16 %v3122, %v3121
      %v3143 = vpack.c.bf16 %v3124, %v3123
      %v3144 = vpack.c.bf16 %v3126, %v3125
      %v3145 = vpack.c.bf16 %v3128, %v3127
      %v3146 = vpack.c.bf16 %v3130, %v3129
      %v3163 = vunpack.c.l.b16 %v3131
      %v3164 = vunpack.c.h.b16 %v3131
      %v3165 = vunpack.c.l.b16 %v3132
      %v3166 = vunpack.c.h.b16 %v3132
      %v3167 = vunpack.c.l.b16 %v3133
      %v3168 = vunpack.c.h.b16 %v3133
      %v3169 = vunpack.c.l.b16 %v3134
      %v3170 = vunpack.c.h.b16 %v3134
      %v3171 = vunpack.c.l.b16 %v3135
      %v3172 = vunpack.c.h.b16 %v3135
      %v3173 = vunpack.c.l.b16 %v3136
      %v3174 = vunpack.c.h.b16 %v3136
      %v3175 = vunpack.c.l.b16 %v3137
      %v3176 = vunpack.c.h.b16 %v3137
      %v3177 = vunpack.c.l.b16 %v3138
      %v3178 = vunpack.c.h.b16 %v3138
      %v3179 = vunpack.c.l.b16 %v3139
      %v3180 = vunpack.c.h.b16 %v3139
      %v3181 = vunpack.c.l.b16 %v3140
      %v3182 = vunpack.c.h.b16 %v3140
      %v3183 = vunpack.c.l.b16 %v3141
      %v3184 = vunpack.c.h.b16 %v3141
      %v3185 = vunpack.c.l.b16 %v3142
      %v3186 = vunpack.c.h.b16 %v3142
      %v3187 = vunpack.c.l.b16 %v3143
      %v3188 = vunpack.c.h.b16 %v3143
      %v3189 = vunpack.c.l.b16 %v3144
      %v3190 = vunpack.c.h.b16 %v3144
      %v3191 = vunpack.c.l.b16 %v3145
      %v3192 = vunpack.c.h.b16 %v3145
      %v3193 = vunpack.c.l.b16 %v3146
      %v3194 = vunpack.c.h.b16 %v3146
      %v3195 = vpack.c.b16 %v3163, %v3163
      %v3196 = vpack.c.b16 %v3164, %v3164
      %v3197 = vpack.c.b16 %v3165, %v3165
      %v3198 = vpack.c.b16 %v3166, %v3166
      %v3199 = vpack.c.b16 %v3167, %v3167
      %v3200 = vpack.c.b16 %v3168, %v3168
      %v3201 = vpack.c.b16 %v3169, %v3169
      %v3202 = vpack.c.b16 %v3170, %v3170
      %v3203 = vpack.c.b16 %v3171, %v3171
      %v3204 = vpack.c.b16 %v3172, %v3172
      %v3205 = vpack.c.b16 %v3173, %v3173
      %v3206 = vpack.c.b16 %v3174, %v3174
      %v3207 = vpack.c.b16 %v3175, %v3175
      %v3208 = vpack.c.b16 %v3176, %v3176
      %v3209 = vpack.c.b16 %v3177, %v3177
      %v3210 = vpack.c.b16 %v3178, %v3178
      %v3211 = vpack.c.b16 %v3179, %v3179
      %v3212 = vpack.c.b16 %v3180, %v3180
      %v3213 = vpack.c.b16 %v3181, %v3181
      %v3214 = vpack.c.b16 %v3182, %v3182
      %v3215 = vpack.c.b16 %v3183, %v3183
      %v3216 = vpack.c.b16 %v3184, %v3184
      %v3217 = vpack.c.b16 %v3185, %v3185
      %v3218 = vpack.c.b16 %v3186, %v3186
      %v3219 = vpack.c.b16 %v3187, %v3187
      %v3220 = vpack.c.b16 %v3188, %v3188
      %v3221 = vpack.c.b16 %v3189, %v3189
      %v3222 = vpack.c.b16 %v3190, %v3190
      %v3223 = vpack.c.b16 %v3191, %v3191
      %v3224 = vpack.c.b16 %v3192, %v3192
      %v3225 = vpack.c.b16 %v3193, %v3193
      %v3226 = vpack.c.b16 %v3194, %v3194
      %vm3259 = vcmask 60416
      %3260 = vst.msk [vmem:[%s258] sm:$0xf] %vm3259, %v3195
      %3261 = vst.msk [vmem:[%s258 + $0x4] sm:$0xf] %vm3259, %v3196
      %3262 = vst.msk [vmem:[%s258 + $0x8] sm:$0xf] %vm3259, %v3197
      %3263 = vst.msk [vmem:[%s258 + $0xc] sm:$0xf] %vm3259, %v3198
      %3264 = vst.msk [vmem:[%s258 + $0x10] sm:$0xf] %vm3259, %v3199
      %3265 = vst.msk [vmem:[%s258 + $0x14] sm:$0xf] %vm3259, %v3200
      %3266 = vst.msk [vmem:[%s258 + $0x18] sm:$0xf] %vm3259, %v3201
      %3267 = vst.msk [vmem:[%s258 + $0x1c] sm:$0xf] %vm3259, %v3202
      %3268 = vst.msk [vmem:[%s258 + $0x20] sm:$0xf] %vm3259, %v3203
      %3269 = vst.msk [vmem:[%s258 + $0x24] sm:$0xf] %vm3259, %v3204
      %3270 = vst.msk [vmem:[%s258 + $0x28] sm:$0xf] %vm3259, %v3205
      %3271 = vst.msk [vmem:[%s258 + $0x2c] sm:$0xf] %vm3259, %v3206
      %3272 = vst.msk [vmem:[%s258 + $0x30] sm:$0xf] %vm3259, %v3207
      %3273 = vst.msk [vmem:[%s258 + $0x34] sm:$0xf] %vm3259, %v3208
      %3274 = vst.msk [vmem:[%s258 + $0x38] sm:$0xf] %vm3259, %v3209
      %3275 = vst.msk [vmem:[%s258 + $0x3c] sm:$0xf] %vm3259, %v3210
      %3276 = vst.msk [vmem:[%s258 + $0x40] sm:$0xf] %vm3259, %v3211
      %3277 = vst.msk [vmem:[%s258 + $0x44] sm:$0xf] %vm3259, %v3212
      %3278 = vst.msk [vmem:[%s258 + $0x48] sm:$0xf] %vm3259, %v3213
      %3279 = vst.msk [vmem:[%s258 + $0x4c] sm:$0xf] %vm3259, %v3214
      %3280 = vst.msk [vmem:[%s258 + $0x50] sm:$0xf] %vm3259, %v3215
      %3281 = vst.msk [vmem:[%s258 + $0x54] sm:$0xf] %vm3259, %v3216
      %3282 = vst.msk [vmem:[%s258 + $0x58] sm:$0xf] %vm3259, %v3217
      %3283 = vst.msk [vmem:[%s258 + $0x5c] sm:$0xf] %vm3259, %v3218
      %3284 = vst.msk [vmem:[%s258 + $0x60] sm:$0xf] %vm3259, %v3219
      %3285 = vst.msk [vmem:[%s258 + $0x64] sm:$0xf] %vm3259, %v3220
      %3286 = vst.msk [vmem:[%s258 + $0x68] sm:$0xf] %vm3259, %v3221
      %3287 = vst.msk [vmem:[%s258 + $0x6c] sm:$0xf] %vm3259, %v3222
      %3288 = vst.msk [vmem:[%s258 + $0x70] sm:$0xf] %vm3259, %v3223
      %3289 = vst.msk [vmem:[%s258 + $0x74] sm:$0xf] %vm3259, %v3224
      %3290 = vst.msk [vmem:[%s258 + $0x78] sm:$0xf] %vm3259, %v3225
      %3291 = vst.msk [vmem:[%s258 + $0x7c] sm:$0xf] %vm3259, %v3226
      %v3292 = vsel %vm438, %v3099, 0.0
      %v3293 = vsel %vm438, %v3100, 0.0
      %v3294 = vadd.f32 %v3292, %v3293
      %v3295 = vsel %vm438, %v3101, 0.0
      %v3296 = vadd.f32 %v3294, %v3295
      %v3297 = vsel %vm438, %v3102, 0.0
      %v3298 = vadd.f32 %v3296, %v3297
      %v3299 = vsel %vm438, %v3103, 0.0
      %v3300 = vadd.f32 %v3298, %v3299
      %v3301 = vsel %vm438, %v3104, 0.0
      %v3302 = vadd.f32 %v3300, %v3301
      %v3303 = vsel %vm438, %v3105, 0.0
      %v3304 = vadd.f32 %v3302, %v3303
      %v3305 = vsel %vm438, %v3106, 0.0
      %v3306 = vadd.f32 %v3304, %v3305
      %v3307 = vsel %vm438, %v3107, 0.0
      %v3308 = vadd.f32 %v3306, %v3307
      %v3309 = vsel %vm438, %v3108, 0.0
      %v3310 = vadd.f32 %v3308, %v3309
      %v3311 = vsel %vm438, %v3109, 0.0
      %v3312 = vadd.f32 %v3310, %v3311
      %v3313 = vsel %vm438, %v3110, 0.0
      %v3314 = vadd.f32 %v3312, %v3313
      %v3315 = vsel %vm438, %v3111, 0.0
      %v3316 = vadd.f32 %v3314, %v3315
      %v3317 = vsel %vm438, %v3112, 0.0
      %v3318 = vadd.f32 %v3316, %v3317
      %v3319 = vsel %vm438, %v3113, 0.0
      %v3320 = vadd.f32 %v3318, %v3319
      %v3321 = vsel %vm438, %v3114, 0.0
      %v3322 = vadd.f32 %v3320, %v3321
      %v3323 = vsel %vm438, %v3115, 0.0
      %v3324 = vadd.f32 %v3322, %v3323
      %v3325 = vsel %vm438, %v3116, 0.0
      %v3326 = vadd.f32 %v3324, %v3325
      %v3327 = vsel %vm438, %v3117, 0.0
      %v3328 = vadd.f32 %v3326, %v3327
      %v3329 = vsel %vm438, %v3118, 0.0
      %v3330 = vadd.f32 %v3328, %v3329
      %v3331 = vsel %vm438, %v3119, 0.0
      %v3332 = vadd.f32 %v3330, %v3331
      %v3333 = vsel %vm438, %v3120, 0.0
      %v3334 = vadd.f32 %v3332, %v3333
      %v3335 = vsel %vm438, %v3121, 0.0
      %v3336 = vadd.f32 %v3334, %v3335
      %v3337 = vsel %vm438, %v3122, 0.0
      %v3338 = vadd.f32 %v3336, %v3337
      %v3339 = vsel %vm438, %v3123, 0.0
      %v3340 = vadd.f32 %v3338, %v3339
      %v3341 = vsel %vm438, %v3124, 0.0
      %v3342 = vadd.f32 %v3340, %v3341
      %v3343 = vsel %vm438, %v3125, 0.0
      %v3344 = vadd.f32 %v3342, %v3343
      %v3345 = vsel %vm438, %v3126, 0.0
      %v3346 = vadd.f32 %v3344, %v3345
      %v3347 = vsel %vm438, %v3127, 0.0
      %v3348 = vadd.f32 %v3346, %v3347
      %v3349 = vsel %vm438, %v3128, 0.0
      %v3350 = vadd.f32 %v3348, %v3349
      %v3351 = vsel %vm438, %v3129, 0.0
      %v3352 = vadd.f32 %v3350, %v3351
      %v3353 = vsel %vm438, %v3130, 0.0
      %v3354 = vadd.f32 %v3352, %v3353
      %v3355 = vrot.slane %v3354, 4
      %v3356 = vadd.f32 %v3354, %v3355
      %v3357 = vrot.slane %v3356, 2
      %v3358 = vadd.f32 %v3356, %v3357
      %v3359 = vrot.slane %v3358, 1
      %v3360 = vadd.f32 %v3358, %v3359
      %3361 = vst.msk [vmem:[%s262] sm:$0x1] %vm447, %v3360
      %v3362 = vmul.f32 %v3099, %v3099
      %v3363 = vmul.f32 %v3100, %v3100
      %v3364 = vmul.f32 %v3101, %v3101
      %v3365 = vmul.f32 %v3102, %v3102
      %v3366 = vmul.f32 %v3103, %v3103
      %v3367 = vmul.f32 %v3104, %v3104
      %v3368 = vmul.f32 %v3105, %v3105
      %v3369 = vmul.f32 %v3106, %v3106
      %v3370 = vmul.f32 %v3107, %v3107
      %v3371 = vmul.f32 %v3108, %v3108
      %v3372 = vmul.f32 %v3109, %v3109
      %v3373 = vmul.f32 %v3110, %v3110
      %v3374 = vmul.f32 %v3111, %v3111
      %v3375 = vmul.f32 %v3112, %v3112
      %v3376 = vmul.f32 %v3113, %v3113
      %v3377 = vmul.f32 %v3114, %v3114
      %v3378 = vmul.f32 %v3115, %v3115
      %v3379 = vmul.f32 %v3116, %v3116
      %v3380 = vmul.f32 %v3117, %v3117
      %v3381 = vmul.f32 %v3118, %v3118
      %v3382 = vmul.f32 %v3119, %v3119
      %v3383 = vmul.f32 %v3120, %v3120
      %v3384 = vmul.f32 %v3121, %v3121
      %v3385 = vmul.f32 %v3122, %v3122
      %v3386 = vmul.f32 %v3123, %v3123
      %v3387 = vmul.f32 %v3124, %v3124
      %v3388 = vmul.f32 %v3125, %v3125
      %v3389 = vmul.f32 %v3126, %v3126
      %v3390 = vmul.f32 %v3127, %v3127
      %v3391 = vmul.f32 %v3128, %v3128
      %v3392 = vmul.f32 %v3129, %v3129
      %v3393 = vmul.f32 %v3130, %v3130
      %v3394 = vsel %vm438, %v3362, 0.0
      %v3395 = vsel %vm438, %v3363, 0.0
      %v3396 = vadd.f32 %v3394, %v3395
      %v3397 = vsel %vm438, %v3364, 0.0
      %v3398 = vadd.f32 %v3396, %v3397
      %v3399 = vsel %vm438, %v3365, 0.0
      %v3400 = vadd.f32 %v3398, %v3399
      %v3401 = vsel %vm438, %v3366, 0.0
      %v3402 = vadd.f32 %v3400, %v3401
      %v3403 = vsel %vm438, %v3367, 0.0
      %v3404 = vadd.f32 %v3402, %v3403
      %v3405 = vsel %vm438, %v3368, 0.0
      %v3406 = vadd.f32 %v3404, %v3405
      %v3407 = vsel %vm438, %v3369, 0.0
      %v3408 = vadd.f32 %v3406, %v3407
      %v3409 = vsel %vm438, %v3370, 0.0
      %v3410 = vadd.f32 %v3408, %v3409
      %v3411 = vsel %vm438, %v3371, 0.0
      %v3412 = vadd.f32 %v3410, %v3411
      %v3413 = vsel %vm438, %v3372, 0.0
      %v3414 = vadd.f32 %v3412, %v3413
      %v3415 = vsel %vm438, %v3373, 0.0
      %v3416 = vadd.f32 %v3414, %v3415
      %v3417 = vsel %vm438, %v3374, 0.0
      %v3418 = vadd.f32 %v3416, %v3417
      %v3419 = vsel %vm438, %v3375, 0.0
      %v3420 = vadd.f32 %v3418, %v3419
      %v3421 = vsel %vm438, %v3376, 0.0
      %v3422 = vadd.f32 %v3420, %v3421
      %v3423 = vsel %vm438, %v3377, 0.0
      %v3424 = vadd.f32 %v3422, %v3423
      %v3425 = vsel %vm438, %v3378, 0.0
      %v3426 = vadd.f32 %v3424, %v3425
      %v3427 = vsel %vm438, %v3379, 0.0
      %v3428 = vadd.f32 %v3426, %v3427
      %v3429 = vsel %vm438, %v3380, 0.0
      %v3430 = vadd.f32 %v3428, %v3429
      %v3431 = vsel %vm438, %v3381, 0.0
      %v3432 = vadd.f32 %v3430, %v3431
      %v3433 = vsel %vm438, %v3382, 0.0
      %v3434 = vadd.f32 %v3432, %v3433
      %v3435 = vsel %vm438, %v3383, 0.0
      %v3436 = vadd.f32 %v3434, %v3435
      %v3437 = vsel %vm438, %v3384, 0.0
      %v3438 = vadd.f32 %v3436, %v3437
      %v3439 = vsel %vm438, %v3385, 0.0
      %v3440 = vadd.f32 %v3438, %v3439
      %v3441 = vsel %vm438, %v3386, 0.0
      %v3442 = vadd.f32 %v3440, %v3441
      %v3443 = vsel %vm438, %v3387, 0.0
      %v3444 = vadd.f32 %v3442, %v3443
      %v3445 = vsel %vm438, %v3388, 0.0
      %v3446 = vadd.f32 %v3444, %v3445
      %v3447 = vsel %vm438, %v3389, 0.0
      %v3448 = vadd.f32 %v3446, %v3447
      %v3449 = vsel %vm438, %v3390, 0.0
      %v3450 = vadd.f32 %v3448, %v3449
      %v3451 = vsel %vm438, %v3391, 0.0
      %v3452 = vadd.f32 %v3450, %v3451
      %v3453 = vsel %vm438, %v3392, 0.0
      %v3454 = vadd.f32 %v3452, %v3453
      %v3455 = vsel %vm438, %v3393, 0.0
      %v3456 = vadd.f32 %v3454, %v3455
      %v3457 = vrot.slane %v3456, 4
      %v3458 = vadd.f32 %v3456, %v3457
      %v3459 = vrot.slane %v3458, 2
      %v3460 = vadd.f32 %v3458, %v3459
      %v3461 = vrot.slane %v3460, 1
      %v3462 = vadd.f32 %v3460, %v3461
      %3463 = vst.msk [vmem:[%s262 + $0x1] sm:$0x1] %vm447, %v3462
      %p3464 = scmp.lt.s32.totalorder %s18, 1
      %s3465 = scalar_select %p3464, %s18, 1
      %s3466 = smul.addr %s3465, 32
      %s3467 = smul.addr %s3466, 4
      %s3468 = scalar_lea.vmem %s5, %s3467
      %p3469 = scmp.lt.s32.totalorder %s18, 1
      %s3470 = scalar_select %p3469, %s18, 1
      %s3471 = smul.addr %s3470, 2
      %s3472 = scalar_lea.vmem %s6, %s3471
      // Predicated region
      $region41: #{residual_block_pallas.4} parent=39 // pred_check
        %p3473 = pneg %p146
      $region42: #{residual_block_pallas.4} parent=39 // pred_check_branch
        %3475 = sbr.rel (%p3473) target = $region44
      $region43: #{residual_block_pallas.4} parent=39 // pred_region
        _
      $region44: #{residual_block_pallas.4} parent=39 // pred_fallthru
        _
      // Predicated region
      $region45: #{residual_block_pallas.4} parent=39 // pred_check
        %p3476 = pneg %p172
      $region46: #{residual_block_pallas.4} parent=39 // pred_check_branch
        %3478 = sbr.rel (%p3476) target = $region48
      $region47: #{residual_block_pallas.4} parent=39 // pred_region
        _
      $region48: #{residual_block_pallas.4} parent=39 // pred_fallthru
        _
    $region40: #{residual_block_pallas.4} parent=5 // pred_fallthru
      _
    %p3479 = scmp.le.s32.totalorder 2, %s13
    // Predicated region
    $region49: #{residual_block_pallas.4} parent=5 // pred_check
      %p3480 = pneg %p3479
    $region50: #{residual_block_pallas.4} parent=5 // pred_check_branch
      %3482 = sbr.rel (%p3480) target = $region52
    $region51: #{residual_block_pallas.4} parent=5 // pred_region
      %s3483 = ssub.s32 %s13, 2
      // Predicated region
      $region53: #{residual_block_pallas.4} parent=51 // pred_check
        %p3484 = pneg %p152
      $region54: #{residual_block_pallas.4} parent=51 // pred_check_branch
        %3486 = sbr.rel (%p3484) target = $region56
      $region55: #{residual_block_pallas.4} parent=51 // pred_region
        %p3487 = scmp.lt.s32.totalorder %s19, 1
        %s3488 = scalar_select %p3487, %s19, 1
        %s3489 = smul.addr %s3488, 32
        %s3490 = smul.addr %s3489, 4
        %s3491 = scalar_lea.vmem %s5, %s3490
      $region56: #{residual_block_pallas.4} parent=51 // pred_fallthru
        _
      // Predicated region
      $region57: #{residual_block_pallas.4} parent=51 // pred_check
        %p3492 = pneg %p178
      $region58: #{residual_block_pallas.4} parent=51 // pred_check_branch
        %3494 = sbr.rel (%p3492) target = $region60
      $region59: #{residual_block_pallas.4} parent=51 // pred_region
        %p3495 = scmp.lt.s32.totalorder %s19, 1
        %s3496 = scalar_select %p3495, %s19, 1
        %s3497 = smul.addr %s3496, 2
        %s3498 = scalar_lea.vmem %s6, %s3497
      $region60: #{residual_block_pallas.4} parent=51 // pred_fallthru
        _
    $region52: #{residual_block_pallas.4} parent=5 // pred_fallthru
      _
  $region6: #{residual_block_pallas.4} parent=0 // loop_footer
    %s17 = sadd.s32 1, %s13
  $region7: #{residual_block_pallas.4} parent=0 // loop_footer_branch
    %12 = sbr.rel target = $region3
  $region8: #{residual_block_pallas.4} parent=0 // loop_exit
    _

// kernel: residual_block_pallas.3
$region0: #{residual_block_pallas.3}
  #allocation0 [shape = 'u32[]', space=smem, size = 0x4, offset = 0x4, fixed_abs, tag = 'smem constant byte address 0x4 - core index']
  #allocation1 [shape = 'u32[144,128]{1,0:T(1,128)}', space=vmem, size = 0x12000, scoped, tag = 'internal scratch']
  #allocation2 [shape = 'f32[18,18,4]{2,1,0:T(8,128)}', space=vmem, size = 0x36000, scoped, tag = 'scratch operand']
  %s0 = inlined_call_operand.vmem [shape: f32[2,16,16,4], index: 0, kind: input, shape index: {}]
  %s1 = inlined_call_operand.vmem [shape: bf16[3,3,4,8], index: 1, kind: input, shape index: {}]
  %s2 = inlined_call_operand.vmem [shape: f32[1,8], index: 2, kind: input, shape index: {}]
  %s3 = inlined_call_operand.vmem [shape: bf16[4,8], index: 3, kind: input, shape index: {}]
  %s4 = inlined_call_operand.vmem [shape: f32[1,8], index: 4, kind: input, shape index: {}]
  %s5 = inlined_call_operand.vmem [shape: bf16[2,256,8], index: 5, kind: output, shape index: {0}]
  %s6 = inlined_call_operand.vmem [shape: bf16[2,256,8], index: 6, kind: output, shape index: {1}]
  %s7 = inlined_call_operand.vmem [shape: f32[2,2,8], index: 7, kind: output, shape index: {2}]
  %s8 = inlined_call_operand.vmem [shape: f32[2,2,8], index: 8, kind: output, shape index: {3}]
  %9 = xla_tuple %s5, %s6, %s7, %s8
  %s10 = sld [smem:[#allocation0]]
  $region77: #{residual_block_pallas.3} parent=0
    _
  %s12 = ssub.s32 1, %s10
  %s13 = scalar_select 0, %s12, %s10
  loop: start=0, step=1, limit=4
  $region2: #{residual_block_pallas.3} parent=0 // loop_pre_header
    _
  $region3: #{residual_block_pallas.3} parent=0 // loop_header
    %s15 = sphi 0, %s19
    %p16 = scmp.ge.s32.totalorder %s15, 4
    %s25 = sphi 0, %s27
    %s28 = sphi 0, %s25
    %s29 = sphi 0, %s28
    %s45 = sphi 0, %s29
    %s49 = sphi 0, %s49
    %s51 = sphi 0, %s49
    %s52 = sphi 0, %s51
    %s66 = sphi 0, %s52
    %s70 = sphi 0, %s70
    %s72 = sphi 0, %s70
    %s73 = sphi 0, %s72
    %s87 = sphi 0, %s73
    %s91 = sphi 0, %s91
    %s93 = sphi 0, %s91
    %s94 = sphi 0, %s93
    %s108 = sphi 0, %s94
    %s112 = sphi 0, %s112
    %s114 = sphi 0, %s112
    %s115 = sphi 0, %s114
    %s129 = sphi 0, %s115
    %s135 = sphi 0, %s137
    %s138 = sphi 0, %s135
    %s139 = sphi 0, %s138
    %s155 = sphi 0, %s139
    %s161 = sphi 0, %s163
    %s164 = sphi 0, %s161
    %s165 = sphi 0, %s164
    %s181 = sphi 0, %s165
    %s187 = sphi 0, %s189
    %s190 = sphi 0, %s187
    %s191 = sphi 0, %s190
    %s207 = sphi 0, %s191
    %s213 = sphi 0, %s215
    %s216 = sphi 0, %s213
    %s217 = sphi 0, %s216
    %s233 = sphi 0, %s217
  $region4: #{residual_block_pallas.3} parent=0 // loop_header_branch
    %18 = sbr.rel (%p16) target = $region8
  $region5: #{residual_block_pallas.3} parent=0 // loop_body
    %s20 = ssub.s32 %s15, 1
    %s21 = ssub.s32 %s15, 2
    %s22 = sadd.s32 %s15, 1
    %s23 = ssub.s32 %s15, %s22
    %p24 = scmp.eq.s32.totalorder %s23, 0
    %s26 = sadd.s32 %s25, 1
    %s27 = scalar_select %p24, %s25, %s26
    %p30 = pneg %p24
    %p31 = scmp.eq.s32.totalorder %s15, 1
    %p32 = por %p30, %p31
    %p33 = scmp.ne.s32.totalorder %s25, %s28
    %p34 = scmp.eq.s32.totalorder %s15, 0
    %p35 = por %p33, %p34
    %p36 = scmp.ne.s32.totalorder %s25, %s28
    %p37 = scmp.eq.s32.totalorder %s20, 1
    %p38 = por %p36, %p37
    %p39 = scmp.ne.s32.totalorder %s28, %s29
    %p40 = scmp.eq.s32.totalorder %s20, 0
    %p41 = por %p39, %p40
    %p42 = scmp.ne.s32.totalorder %s28, %s29
    %p43 = scmp.eq.s32.totalorder %s21, 1
    %p44 = por %p42, %p43
    %p46 = scmp.ne.s32.totalorder %s29, %s45
    %p47 = scmp.eq.s32.totalorder %s21, 0
    %p48 = por %p46, %p47
    %s50 = sadd.s32 %s49, 1
    %p53 = scmp.eq.s32.totalorder %s15, 1
    %p54 = scmp.ne.s32.totalorder %s49, %s51
    %p55 = scmp.eq.s32.totalorder %s15, 0
    %p56 = por %p54, %p55
    %p57 = scmp.ne.s32.totalorder %s49, %s51
    %p58 = scmp.eq.s32.totalorder %s20, 1
    %p59 = por %p57, %p58
    %p60 = scmp.ne.s32.totalorder %s51, %s52
    %p61 = scmp.eq.s32.totalorder %s20, 0
    %p62 = por %p60, %p61
    %p63 = scmp.ne.s32.totalorder %s51, %s52
    %p64 = scmp.eq.s32.totalorder %s21, 1
    %p65 = por %p63, %p64
    %p67 = scmp.ne.s32.totalorder %s52, %s66
    %p68 = scmp.eq.s32.totalorder %s21, 0
    %p69 = por %p67, %p68
    %s71 = sadd.s32 %s70, 1
    %p74 = scmp.eq.s32.totalorder %s15, 1
    %p75 = scmp.ne.s32.totalorder %s70, %s72
    %p76 = scmp.eq.s32.totalorder %s15, 0
    %p77 = por %p75, %p76
    %p78 = scmp.ne.s32.totalorder %s70, %s72
    %p79 = scmp.eq.s32.totalorder %s20, 1
    %p80 = por %p78, %p79
    %p81 = scmp.ne.s32.totalorder %s72, %s73
    %p82 = scmp.eq.s32.totalorder %s20, 0
    %p83 = por %p81, %p82
    %p84 = scmp.ne.s32.totalorder %s72, %s73
    %p85 = scmp.eq.s32.totalorder %s21, 1
    %p86 = por %p84, %p85
    %p88 = scmp.ne.s32.totalorder %s73, %s87
    %p89 = scmp.eq.s32.totalorder %s21, 0
    %p90 = por %p88, %p89
    %s92 = sadd.s32 %s91, 1
    %p95 = scmp.eq.s32.totalorder %s15, 1
    %p96 = scmp.ne.s32.totalorder %s91, %s93
    %p97 = scmp.eq.s32.totalorder %s15, 0
    %p98 = por %p96, %p97
    %p99 = scmp.ne.s32.totalorder %s91, %s93
    %p100 = scmp.eq.s32.totalorder %s20, 1
    %p101 = por %p99, %p100
    %p102 = scmp.ne.s32.totalorder %s93, %s94
    %p103 = scmp.eq.s32.totalorder %s20, 0
    %p104 = por %p102, %p103
    %p105 = scmp.ne.s32.totalorder %s93, %s94
    %p106 = scmp.eq.s32.totalorder %s21, 1
    %p107 = por %p105, %p106
    %p109 = scmp.ne.s32.totalorder %s94, %s108
    %p110 = scmp.eq.s32.totalorder %s21, 0
    %p111 = por %p109, %p110
    %s113 = sadd.s32 %s112, 1
    %p116 = scmp.eq.s32.totalorder %s15, 1
    %p117 = scmp.ne.s32.totalorder %s112, %s114
    %p118 = scmp.eq.s32.totalorder %s15, 0
    %p119 = por %p117, %p118
    %p120 = scmp.ne.s32.totalorder %s112, %s114
    %p121 = scmp.eq.s32.totalorder %s20, 1
    %p122 = por %p120, %p121
    %p123 = scmp.ne.s32.totalorder %s114, %s115
    %p124 = scmp.eq.s32.totalorder %s20, 0
    %p125 = por %p123, %p124
    %p126 = scmp.ne.s32.totalorder %s114, %s115
    %p127 = scmp.eq.s32.totalorder %s21, 1
    %p128 = por %p126, %p127
    %p130 = scmp.ne.s32.totalorder %s115, %s129
    %p131 = scmp.eq.s32.totalorder %s21, 0
    %p132 = por %p130, %p131
    %s133 = ssub.s32 %s15, %s22
    %p134 = scmp.eq.s32.totalorder %s133, 0
    %s136 = sadd.s32 %s135, 1
    %s137 = scalar_select %p134, %s135, %s136
    %p140 = pneg %p134
    %p141 = scmp.eq.s32.totalorder %s15, 1
    %p142 = por %p140, %p141
    %p143 = scmp.ne.s32.totalorder %s135, %s138
    %p144 = scmp.eq.s32.totalorder %s15, 0
    %p145 = por %p143, %p144
    %p146 = scmp.ne.s32.totalorder %s135, %s138
    %p147 = scmp.eq.s32.totalorder %s20, 1
    %p148 = por %p146, %p147
    %p149 = scmp.ne.s32.totalorder %s138, %s139
    %p150 = scmp.eq.s32.totalorder %s20, 0
    %p151 = por %p149, %p150
    %p152 = scmp.ne.s32.totalorder %s138, %s139
    %p153 = scmp.eq.s32.totalorder %s21, 1
    %p154 = por %p152, %p153
    %p156 = scmp.ne.s32.totalorder %s139, %s155
    %p157 = scmp.eq.s32.totalorder %s21, 0
    %p158 = por %p156, %p157
    %s159 = ssub.s32 %s15, %s22
    %p160 = scmp.eq.s32.totalorder %s159, 0
    %s162 = sadd.s32 %s161, 1
    %s163 = scalar_select %p160, %s161, %s162
    %p166 = pneg %p160
    %p167 = scmp.eq.s32.totalorder %s15, 1
    %p168 = por %p166, %p167
    %p169 = scmp.ne.s32.totalorder %s161, %s164
    %p170 = scmp.eq.s32.totalorder %s15, 0
    %p171 = por %p169, %p170
    %p172 = scmp.ne.s32.totalorder %s161, %s164
    %p173 = scmp.eq.s32.totalorder %s20, 1
    %p174 = por %p172, %p173
    %p175 = scmp.ne.s32.totalorder %s164, %s165
    %p176 = scmp.eq.s32.totalorder %s20, 0
    %p177 = por %p175, %p176
    %p178 = scmp.ne.s32.totalorder %s164, %s165
    %p179 = scmp.eq.s32.totalorder %s21, 1
    %p180 = por %p178, %p179
    %p182 = scmp.ne.s32.totalorder %s165, %s181
    %p183 = scmp.eq.s32.totalorder %s21, 0
    %p184 = por %p182, %p183
    %s185 = ssub.s32 %s15, %s22
    %p186 = scmp.eq.s32.totalorder %s185, 0
    %s188 = sadd.s32 %s187, 1
    %s189 = scalar_select %p186, %s187, %s188
    %p192 = pneg %p186
    %p193 = scmp.eq.s32.totalorder %s15, 1
    %p194 = por %p192, %p193
    %p195 = scmp.ne.s32.totalorder %s187, %s190
    %p196 = scmp.eq.s32.totalorder %s15, 0
    %p197 = por %p195, %p196
    %p198 = scmp.ne.s32.totalorder %s187, %s190
    %p199 = scmp.eq.s32.totalorder %s20, 1
    %p200 = por %p198, %p199
    %p201 = scmp.ne.s32.totalorder %s190, %s191
    %p202 = scmp.eq.s32.totalorder %s20, 0
    %p203 = por %p201, %p202
    %p204 = scmp.ne.s32.totalorder %s190, %s191
    %p205 = scmp.eq.s32.totalorder %s21, 1
    %p206 = por %p204, %p205
    %p208 = scmp.ne.s32.totalorder %s191, %s207
    %p209 = scmp.eq.s32.totalorder %s21, 0
    %p210 = por %p208, %p209
    %s211 = ssub.s32 %s15, %s22
    %p212 = scmp.eq.s32.totalorder %s211, 0
    %s214 = sadd.s32 %s213, 1
    %s215 = scalar_select %p212, %s213, %s214
    %p218 = pneg %p212
    %p219 = scmp.eq.s32.totalorder %s15, 1
    %p220 = por %p218, %p219
    %p221 = scmp.ne.s32.totalorder %s213, %s216
    %p222 = scmp.eq.s32.totalorder %s15, 0
    %p223 = por %p221, %p222
    %p224 = scmp.ne.s32.totalorder %s213, %s216
    %p225 = scmp.eq.s32.totalorder %s20, 1
    %p226 = por %p224, %p225
    %p227 = scmp.ne.s32.totalorder %s216, %s217
    %p228 = scmp.eq.s32.totalorder %s20, 0
    %p229 = por %p227, %p228
    %p230 = scmp.ne.s32.totalorder %s216, %s217
    %p231 = scmp.eq.s32.totalorder %s21, 1
    %p232 = por %p230, %p231
    %p234 = scmp.ne.s32.totalorder %s217, %s233
    %p235 = scmp.eq.s32.totalorder %s21, 0
    %p236 = por %p234, %p235
    %p237 = scmp.le.s32.totalorder 1, %s15
    %p238 = scmp.lt.s32.totalorder %s15, 3
    %p239 = pnand %p237, %p238
    %p240 = pneg %p239
    // Predicated region
    $region9: #{residual_block_pallas.3} parent=5 // pred_check
      _
    $region10: #{residual_block_pallas.3} parent=5 // pred_check_branch
      %242 = sbr.rel (%p239) target = $region12
    $region11: #{residual_block_pallas.3} parent=5 // pred_region
      %s243 = ssub.s32 %s15, 1
      // Predicated region
      $region13: #{residual_block_pallas.3} parent=11 // pred_check
        %p244 = pneg %p62
      $region14: #{residual_block_pallas.3} parent=11 // pred_check_branch
        %246 = sbr.rel (%p244) target = $region16
      $region15: #{residual_block_pallas.3} parent=11 // pred_region
        _
      $region16: #{residual_block_pallas.3} parent=11 // pred_fallthru
        _
      // Predicated region
      $region17: #{residual_block_pallas.3} parent=11 // pred_check
        %p247 = pneg %p83
      $region18: #{residual_block_pallas.3} parent=11 // pred_check_branch
        %249 = sbr.rel (%p247) target = $region20
      $region19: #{residual_block_pallas.3} parent=11 // pred_region
        _
      $region20: #{residual_block_pallas.3} parent=11 // pred_fallthru
        _
      // Predicated region
      $region21: #{residual_block_pallas.3} parent=11 // pred_check
        %p250 = pneg %p104
      $region22: #{residual_block_pallas.3} parent=11 // pred_check_branch
        %252 = sbr.rel (%p250) target = $region24
      $region23: #{residual_block_pallas.3} parent=11 // pred_region
        _
      $region24: #{residual_block_pallas.3} parent=11 // pred_fallthru
        _
      // Predicated region
      $region25: #{residual_block_pallas.3} parent=11 // pred_check
        %p253 = pneg %p125
      $region26: #{residual_block_pallas.3} parent=11 // pred_check_branch
        %255 = sbr.rel (%p253) target = $region28
      $region27: #{residual_block_pallas.3} parent=11 // pred_region
        _
      $region28: #{residual_block_pallas.3} parent=11 // pred_fallthru
        _
    $region12: #{residual_block_pallas.3} parent=5 // pred_fallthru
      _
    %p256 = scmp.lt.s32.totalorder %s15, 2
    // Predicated region
    $region29: #{residual_block_pallas.3} parent=5 // pred_check
      %p257 = pneg %p256
    $region30: #{residual_block_pallas.3} parent=5 // pred_check_branch
      %259 = sbr.rel (%p257) target = $region32
    $region31: #{residual_block_pallas.3} parent=5 // pred_region
      // Predicated region
      $region33: #{residual_block_pallas.3} parent=31 // pred_check
        %p260 = pneg %p35
      $region34: #{residual_block_pallas.3} parent=31 // pred_check_branch
        %262 = sbr.rel (%p260) target = $region36
      $region35: #{residual_block_pallas.3} parent=31 // pred_region
        %p263 = scmp.lt.s32.totalorder %s15, 1
        %s264 = scalar_select %p263, %s15, 1
        %s265 = smul.addr %s264, 32
        %s266 = smul.addr %s265, 8
        %s267 = scalar_lea.vmem %s0, %s266
      $region36: #{residual_block_pallas.3} parent=31 // pred_fallthru
        _
    $region32: #{residual_block_pallas.3} parent=5 // pred_fallthru
      _
    %p268 = scmp.le.s32.totalorder 1, %s15
    %p269 = scmp.lt.s32.totalorder %s15, 3
    %p270 = pnand %p268, %p269
    %p271 = pneg %p270
    // Predicated region
    $region37: #{residual_block_pallas.3} parent=5 // pred_check
      _
    $region38: #{residual_block_pallas.3} parent=5 // pred_check_branch
      %273 = sbr.rel (%p270) target = $region40
    $region39: #{residual_block_pallas.3} parent=5 // pred_region
      %s274 = ssub.s32 %s15, 1
      %p275 = scmp.lt.s32.totalorder %s20, 1
      %s276 = scalar_select %p275, %s20, 1
      %s277 = smul.addr %s276, 32
      %s278 = smul.addr %s277, 8
      %s279 = scalar_lea.vmem %s0, %s278
      %p280 = pneg %p41
      %p281 = pneg %p38
      %p282 = pneg %p62
      %p283 = pneg %p59
      %p284 = pneg %p83
      %p285 = pneg %p80
      %p286 = pneg %p104
      %p287 = pneg %p101
      %p288 = pneg %p125
      %p289 = pneg %p122
      %p290 = pneg %p151
      %p291 = pneg %p148
      %p292 = scmp.lt.s32.totalorder %s20, 1
      %s293 = scalar_select %p292, %s20, 1
      %s294 = smul.addr %s293, 32
      %s295 = smul.addr %s294, 4
      %s296 = scalar_lea.vmem %s5, %s295
      %p297 = pneg %p177
      %p298 = pneg %p174
      %p299 = scmp.lt.s32.totalorder %s20, 1
      %s300 = scalar_select %p299, %s20, 1
      %s301 = smul.addr %s300, 32
      %s302 = smul.addr %s301, 4
      %s303 = scalar_lea.vmem %s6, %s302
      %p304 = pneg %p203
      %p305 = pneg %p200
      %p306 = scmp.lt.s32.totalorder %s20, 1
      %s307 = scalar_select %p306, %s20, 1
      %s308 = smul.addr %s307, 2
      %s309 = scalar_lea.vmem %s7, %s308
      %p310 = pneg %p229
      %p311 = pneg %p226
      %p312 = scmp.lt.s32.totalorder %s20, 1
      %s313 = scalar_select %p312, %s20, 1
      %s314 = smul.addr %s313, 2
      %s315 = scalar_lea.vmem %s8, %s314
      %p316 = scmp.lt.s32.totalorder %s20, 1
      %s317 = scalar_select %p316, %s20, 1
      %s318 = smul.addr %s317, 32
      %s319 = smul.addr %s318, 8
      %s320 = scalar_lea.vmem %s0, %s319
      %p321 = scmp.lt.s32.totalorder %s20, 1
      %s322 = scalar_select %p321, %s20, 1
      %s323 = smul.addr %s322, 32
      %s324 = smul.addr %s323, 4
      %s325 = scalar_lea.vmem %s5, %s324
      %p326 = scmp.lt.s32.totalorder %s20, 1
      %s327 = scalar_select %p326, %s20, 1
      %s328 = smul.addr %s327, 32
      %s329 = smul.addr %s328, 4
      %s330 = scalar_lea.vmem %s6, %s329
      %p331 = scmp.lt.s32.totalorder %s20, 1
      %s332 = scalar_select %p331, %s20, 1
      %s333 = smul.addr %s332, 2
      %s334 = scalar_lea.vmem %s7, %s333
      %p335 = scmp.lt.s32.totalorder %s20, 1
      %s336 = scalar_select %p335, %s20, 1
      %s337 = smul.addr %s336, 2
      %s338 = scalar_lea.vmem %s8, %s337
      %v340 = vld [vmem:[%s320] sm:$0xff]
      %v341 = vld [vmem:[%s320 + $0x8] sm:$0xff]
      %v342 = vld [vmem:[%s320 + $0x10] sm:$0xff]
      %v343 = vld [vmem:[%s320 + $0x18] sm:$0xff]
      %v344 = vld [vmem:[%s320 + $0x20] sm:$0xff]
      %v345 = vld [vmem:[%s320 + $0x28] sm:$0xff]
      %v346 = vld [vmem:[%s320 + $0x30] sm:$0xff]
      %v347 = vld [vmem:[%s320 + $0x38] sm:$0xff]
      %v348 = vld [vmem:[%s320 + $0x40] sm:$0xff]
      %v349 = vld [vmem:[%s320 + $0x48] sm:$0xff]
      %v350 = vld [vmem:[%s320 + $0x50] sm:$0xff]
      %v351 = vld [vmem:[%s320 + $0x58] sm:$0xff]
      %v352 = vld [vmem:[%s320 + $0x60] sm:$0xff]
      %v353 = vld [vmem:[%s320 + $0x68] sm:$0xff]
      %v354 = vld [vmem:[%s320 + $0x70] sm:$0xff]
      %v355 = vld [vmem:[%s320 + $0x78] sm:$0xff]
      %v356 = vld [vmem:[%s320 + $0x80] sm:$0xff]
      %v357 = vld [vmem:[%s320 + $0x88] sm:$0xff]
      %v358 = vld [vmem:[%s320 + $0x90] sm:$0xff]
      %v359 = vld [vmem:[%s320 + $0x98] sm:$0xff]
      %v360 = vld [vmem:[%s320 + $0xa0] sm:$0xff]
      %v361 = vld [vmem:[%s320 + $0xa8] sm:$0xff]
      %v362 = vld [vmem:[%s320 + $0xb0] sm:$0xff]
      %v363 = vld [vmem:[%s320 + $0xb8] sm:$0xff]
      %v364 = vld [vmem:[%s320 + $0xc0] sm:$0xff]
      %v365 = vld [vmem:[%s320 + $0xc8] sm:$0xff]
      %v366 = vld [vmem:[%s320 + $0xd0] sm:$0xff]
      %v367 = vld [vmem:[%s320 + $0xd8] sm:$0xff]
      %v368 = vld [vmem:[%s320 + $0xe0] sm:$0xff]
      %v369 = vld [vmem:[%s320 + $0xe8] sm:$0xff]
      %v370 = vld [vmem:[%s320 + $0xf0] sm:$0xff]
      %v371 = vld [vmem:[%s320 + $0xf8] sm:$0xff]
      %vm372 = vcmask 31744
      %373 = vst.msk [vmem:[#allocation2] sm:$0xff] %vm372, 0.0
      %374 = vst.msk [vmem:[#allocation2 + $0x8] sm:$0xff] %vm372, 0.0
      %vm375 = vcmask 25600
      %376 = vst.msk [vmem:[#allocation2 + $0x10] sm:$0x3] %vm375, 0.0
      %s377 = scalar_lea.vmem [#allocation2], 408
      %378 = vst.msk [vmem:[%s377] sm:$0xff] %vm372, 0.0
      %379 = vst.msk [vmem:[%s377 + $0x8] sm:$0xff] %vm372, 0.0
      %380 = vst.msk [vmem:[%s377 + $0x10] sm:$0x3] %vm375, 0.0
      %vm381 = vcmask 24576
      %382 = vst.msk [vmem:[#allocation2] sm:$0x1] %vm381, 0.0
      %383 = vst.msk [vmem:[#allocation2 + $0x18] sm:$0x1] %vm381, 0.0
      %384 = vst.msk [vmem:[#allocation2 + $0x30] sm:$0x1] %vm381, 0.0
      %385 = vst.msk [vmem:[#allocation2 + $0x48] sm:$0x1] %vm381, 0.0
      %386 = vst.msk [vmem:[#allocation2 + $0x60] sm:$0x1] %vm381, 0.0
      %387 = vst.msk [vmem:[#allocation2 + $0x78] sm:$0x1] %vm381, 0.0
      %388 = vst.msk [vmem:[#allocation2 + $0x90] sm:$0x1] %vm381, 0.0
      %389 = vst.msk [vmem:[#allocation2 + $0xa8] sm:$0x1] %vm381, 0.0
      %390 = vst.msk [vmem:[#allocation2 + $0xc0] sm:$0x1] %vm381, 0.0
      %391 = vst.msk [vmem:[#allocation2 + $0xd8] sm:$0x1] %vm381, 0.0
      %392 = vst.msk [vmem:[#allocation2 + $0xf0] sm:$0x1] %vm381, 0.0
      %393 = vst.msk [vmem:[#allocation2 + $0x108] sm:$0x1] %vm381, 0.0
      %394 = vst.msk [vmem:[#allocation2 + $0x120] sm:$0x1] %vm381, 0.0
      %395 = vst.msk [vmem:[#allocation2 + $0x138] sm:$0x1] %vm381, 0.0
      %396 = vst.msk [vmem:[#allocation2 + $0x150] sm:$0x1] %vm381, 0.0
      %397 = vst.msk [vmem:[#allocation2 + $0x168] sm:$0x1] %vm381, 0.0
      %398 = vst.msk [vmem:[#allocation2 + $0x180] sm:$0x1] %vm381, 0.0
      %399 = vst.msk [vmem:[#allocation2 + $0x198] sm:$0x1] %vm381, 0.0
      %400 = vst.msk [vmem:[#allocation2 + $0x11] sm:$0x1] %vm381, 0.0
      %401 = vst.msk [vmem:[#allocation2 + $0x29] sm:$0x1] %vm381, 0.0
      %402 = vst.msk [vmem:[#allocation2 + $0x41] sm:$0x1] %vm381, 0.0
      %403 = vst.msk [vmem:[#allocation2 + $0x59] sm:$0x1] %vm381, 0.0
      %404 = vst.msk [vmem:[#allocation2 + $0x71] sm:$0x1] %vm381, 0.0
      %405 = vst.msk [vmem:[#allocation2 + $0x89] sm:$0x1] %vm381, 0.0
      %406 = vst.msk [vmem:[#allocation2 + $0xa1] sm:$0x1] %vm381, 0.0
      %407 = vst.msk [vmem:[#allocation2 + $0xb9] sm:$0x1] %vm381, 0.0
      %408 = vst.msk [vmem:[#allocation2 + $0xd1] sm:$0x1] %vm381, 0.0
      %409 = vst.msk [vmem:[#allocation2 + $0xe9] sm:$0x1] %vm381, 0.0
      %410 = vst.msk [vmem:[#allocation2 + $0x101] sm:$0x1] %vm381, 0.0
      %411 = vst.msk [vmem:[#allocation2 + $0x119] sm:$0x1] %vm381, 0.0
      %412 = vst.msk [vmem:[#allocation2 + $0x131] sm:$0x1] %vm381, 0.0
      %413 = vst.msk [vmem:[#allocation2 + $0x149] sm:$0x1] %vm381, 0.0
      %414 = vst.msk [vmem:[#allocation2 + $0x161] sm:$0x1] %vm381, 0.0
      %415 = vst.msk [vmem:[#allocation2 + $0x179] sm:$0x1] %vm381, 0.0
      %416 = vst.msk [vmem:[#allocation2 + $0x191] sm:$0x1] %vm381, 0.0
      %417 = vst.msk [vmem:[#allocation2 + $0x1a9] sm:$0x1] %vm381, 0.0
      %s418 = scalar_lea.vmem [#allocation2], 24
      %419 = vst.msk [vmem:[%s418 + $0x1] sm:$0xff] %vm372, %v340
      %420 = vst.msk [vmem:[%s418 + $0x9] sm:$0xff] %vm372, %v341
      %421 = vst.msk [vmem:[%s418 + $0x19] sm:$0xff] %vm372, %v342
      %422 = vst.msk [vmem:[%s418 + $0x21] sm:$0xff] %vm372, %v343
      %423 = vst.msk [vmem:[%s418 + $0x31] sm:$0xff] %vm372, %v344
      %424 = vst.msk [vmem:[%s418 + $0x39] sm:$0xff] %vm372, %v345
      %425 = vst.msk [vmem:[%s418 + $0x49] sm:$0xff] %vm372, %v346
      %426 = vst.msk [vmem:[%s418 + $0x51] sm:$0xff] %vm372, %v347
      %427 = vst.msk [vmem:[%s418 + $0x61] sm:$0xff] %vm372, %v348
      %428 = vst.msk [vmem:[%s418 + $0x69] sm:$0xff] %vm372, %v349
      %429 = vst.msk [vmem:[%s418 + $0x79] sm:$0xff] %vm372, %v350
      %430 = vst.msk [vmem:[%s418 + $0x81] sm:$0xff] %vm372, %v351
      %431 = vst.msk [vmem:[%s418 + $0x91] sm:$0xff] %vm372, %v352
      %432 = vst.msk [vmem:[%s418 + $0x99] sm:$0xff] %vm372, %v353
      %433 = vst.msk [vmem:[%s418 + $0xa9] sm:$0xff] %vm372, %v354
      %434 = vst.msk [vmem:[%s418 + $0xb1] sm:$0xff] %vm372, %v355
      %435 = vst.msk [vmem:[%s418 + $0xc1] sm:$0xff] %vm372, %v356
      %436 = vst.msk [vmem:[%s418 + $0xc9] sm:$0xff] %vm372, %v357
      %437 = vst.msk [vmem:[%s418 + $0xd9] sm:$0xff] %vm372, %v358
      %438 = vst.msk [vmem:[%s418 + $0xe1] sm:$0xff] %vm372, %v359
      %439 = vst.msk [vmem:[%s418 + $0xf1] sm:$0xff] %vm372, %v360
      %440 = vst.msk [vmem:[%s418 + $0xf9] sm:$0xff] %vm372, %v361
      %441 = vst.msk [vmem:[%s418 + $0x109] sm:$0xff] %vm372, %v362
      %442 = vst.msk [vmem:[%s418 + $0x111] sm:$0xff] %vm372, %v363
      %443 = vst.msk [vmem:[%s418 + $0x121] sm:$0xff] %vm372, %v364
      %444 = vst.msk [vmem:[%s418 + $0x129] sm:$0xff] %vm372, %v365
      %445 = vst.msk [vmem:[%s418 + $0x139] sm:$0xff] %vm372, %v366
      %446 = vst.msk [vmem:[%s418 + $0x141] sm:$0xff] %vm372, %v367
      %447 = vst.msk [vmem:[%s418 + $0x151] sm:$0xff] %vm372, %v368
      %448 = vst.msk [vmem:[%s418 + $0x159] sm:$0xff] %vm372, %v369
      %449 = vst.msk [vmem:[%s418 + $0x169] sm:$0xff] %vm372, %v370
      %450 = vst.msk [vmem:[%s418 + $0x171] sm:$0xff] %vm372, %v371
      %v451 = vld [vmem:[%s1] sm:$0x3]
      %v452 = vld [vmem:[%s1 + $0x2] sm:$0x3]
      %v453 = vld [vmem:[%s1 + $0x4] sm:$0x3]
      %v454 = vld [vmem:[%s1 + $0x6] sm:$0x3]
      %v455 = vld [vmem:[%s1 + $0x8] sm:$0x3]
      %v456 = vld [vmem:[%s1 + $0xa] sm:$0x3]
      %v457 = vld [vmem:[%s1 + $0xc] sm:$0x3]
      %v458 = vld [vmem:[%s1 + $0xe] sm:$0x3]
      %v459 = vld [vmem:[%s1 + $0x10] sm:$0x3]
      %v460 = vld [vmem:[%s2] sm:$0x1]
      %v461 = vld [vmem:[#allocation2] sm:$0xff]
      %v462 = vld [vmem:[#allocation2 + $0x8] sm:$0xff]
      %v463 = vld [vmem:[#allocation2 + $0x18] sm:$0xff]
      %v464 = vld [vmem:[#allocation2 + $0x20] sm:$0xff]
      %v465 = vld [vmem:[#allocation2 + $0x30] sm:$0xff]
      %v466 = vld [vmem:[#allocation2 + $0x38] sm:$0xff]
      %v467 = vld [vmem:[#allocation2 + $0x48] sm:$0xff]
      %v468 = vld [vmem:[#allocation2 + $0x50] sm:$0xff]
      %v469 = vld [vmem:[#allocation2 + $0x60] sm:$0xff]
      %v470 = vld [vmem:[#allocation2 + $0x68] sm:$0xff]
      %v471 = vld [vmem:[#allocation2 + $0x78] sm:$0xff]
      %v472 = vld [vmem:[#allocation2 + $0x80] sm:$0xff]
      %v473 = vld [vmem:[#allocation2 + $0x90] sm:$0xff]
      %v474 = vld [vmem:[#allocation2 + $0x98] sm:$0xff]
      %v475 = vld [vmem:[#allocation2 + $0xa8] sm:$0xff]
      %v476 = vld [vmem:[#allocation2 + $0xb0] sm:$0xff]
      %v477 = vld [vmem:[#allocation2 + $0xc0] sm:$0xff]
      %v478 = vld [vmem:[#allocation2 + $0xc8] sm:$0xff]
      %v479 = vld [vmem:[#allocation2 + $0xd8] sm:$0xff]
      %v480 = vld [vmem:[#allocation2 + $0xe0] sm:$0xff]
      %v481 = vld [vmem:[#allocation2 + $0xf0] sm:$0xff]
      %v482 = vld [vmem:[#allocation2 + $0xf8] sm:$0xff]
      %v483 = vld [vmem:[#allocation2 + $0x108] sm:$0xff]
      %v484 = vld [vmem:[#allocation2 + $0x110] sm:$0xff]
      %v485 = vld [vmem:[#allocation2 + $0x120] sm:$0xff]
      %v486 = vld [vmem:[#allocation2 + $0x128] sm:$0xff]
      %v487 = vld [vmem:[#allocation2 + $0x138] sm:$0xff]
      %v488 = vld [vmem:[#allocation2 + $0x140] sm:$0xff]
      %v489 = vld [vmem:[#allocation2 + $0x150] sm:$0xff]
      %v490 = vld [vmem:[#allocation2 + $0x158] sm:$0xff]
      %v491 = vld [vmem:[#allocation2 + $0x168] sm:$0xff]
      %v492 = vld [vmem:[#allocation2 + $0x170] sm:$0xff]
      %v493 = vpack.c.bf16 %v462, %v461
      %v494 = vpack.c.bf16 %v464, %v463
      %v495 = vpack.c.bf16 %v466, %v465
      %v496 = vpack.c.bf16 %v468, %v467
      %v497 = vpack.c.bf16 %v470, %v469
      %v498 = vpack.c.bf16 %v472, %v471
      %v499 = vpack.c.bf16 %v474, %v473
      %v500 = vpack.c.bf16 %v476, %v475
      %v501 = vpack.c.bf16 %v478, %v477
      %v502 = vpack.c.bf16 %v480, %v479
      %v503 = vpack.c.bf16 %v482, %v481
      %v504 = vpack.c.bf16 %v484, %v483
      %v505 = vpack.c.bf16 %v486, %v485
      %v506 = vpack.c.bf16 %v488, %v487
      %v507 = vpack.c.bf16 %v490, %v489
      %v508 = vpack.c.bf16 %v492, %v491
      %v509 = vld [vmem:[#allocation2 + $0x1] sm:$0xff]
      %v510 = vld [vmem:[#allocation2 + $0x9] sm:$0xff]
      %v511 = vld [vmem:[#allocation2 + $0x19] sm:$0xff]
      %v512 = vld [vmem:[#allocation2 + $0x21] sm:$0xff]
      %v513 = vld [vmem:[#allocation2 + $0x31] sm:$0xff]
      %v514 = vld [vmem:[#allocation2 + $0x39] sm:$0xff]
      %v515 = vld [vmem:[#allocation2 + $0x49] sm:$0xff]
      %v516 = vld [vmem:[#allocation2 + $0x51] sm:$0xff]
      %v517 = vld [vmem:[#allocation2 + $0x61] sm:$0xff]
      %v518 = vld [vmem:[#allocation2 + $0x69] sm:$0xff]
      %v519 = vld [vmem:[#allocation2 + $0x79] sm:$0xff]
      %v520 = vld [vmem:[#allocation2 + $0x81] sm:$0xff]
      %v521 = vld [vmem:[#allocation2 + $0x91] sm:$0xff]
      %v522 = vld [vmem:[#allocation2 + $0x99] sm:$0xff]
      %v523 = vld [vmem:[#allocation2 + $0xa9] sm:$0xff]
      %v524 = vld [vmem:[#allocation2 + $0xb1] sm:$0xff]
      %v525 = vld [vmem:[#allocation2 + $0xc1] sm:$0xff]
      %v526 = vld [vmem:[#allocation2 + $0xc9] sm:$0xff]
      %v527 = vld [vmem:[#allocation2 + $0xd9] sm:$0xff]
      %v528 = vld [vmem:[#allocation2 + $0xe1] sm:$0xff]
      %v529 = vld [vmem:[#allocation2 + $0xf1] sm:$0xff]
      %v530 = vld [vmem:[#allocation2 + $0xf9] sm:$0xff]
      %v531 = vld [vmem:[#allocation2 + $0x109] sm:$0xff]
      %v532 = vld [vmem:[#allocation2 + $0x111] sm:$0xff]
      %v533 = vld [vmem:[#allocation2 + $0x121] sm:$0xff]
      %v534 = vld [vmem:[#allocation2 + $0x129] sm:$0xff]
      %v535 = vld [vmem:[#allocation2 + $0x139] sm:$0xff]
      %v536 = vld [vmem:[#allocation2 + $0x141] sm:$0xff]
      %v537 = vld [vmem:[#allocation2 + $0x151] sm:$0xff]
      %v538 = vld [vmem:[#allocation2 + $0x159] sm:$0xff]
      %v539 = vld [vmem:[#allocation2 + $0x169] sm:$0xff]
      %v540 = vld [vmem:[#allocation2 + $0x171] sm:$0xff]
      %v541 = vpack.c.bf16 %v510, %v509
      %v542 = vpack.c.bf16 %v512, %v511
      %v543 = vpack.c.bf16 %v514, %v513
      %v544 = vpack.c.bf16 %v516, %v515
      %v545 = vpack.c.bf16 %v518, %v517
      %v546 = vpack.c.bf16 %v520, %v519
      %v547 = vpack.c.bf16 %v522, %v521
      %v548 = vpack.c.bf16 %v524, %v523
      %v549 = vpack.c.bf16 %v526, %v525
      %v550 = vpack.c.bf16 %v528, %v527
      %v551 = vpack.c.bf16 %v530, %v529
      %v552 = vpack.c.bf16 %v532, %v531
      %v553 = vpack.c.bf16 %v534, %v533
      %v554 = vpack.c.bf16 %v536, %v535
      %v555 = vpack.c.bf16 %v538, %v537
      %v556 = vpack.c.bf16 %v540, %v539
      %v558 = vsel %vm372, %v541, 0
      %v561 = vsel %vm372, %v542, 0
      %v564 = vsel %vm372, %v543, 0
      %v567 = vsel %vm372, %v544, 0
      %v570 = vsel %vm372, %v545, 0
      %v573 = vsel %vm372, %v546, 0
      %v576 = vsel %vm372, %v547, 0
      %v579 = vsel %vm372, %v548, 0
      %v582 = vsel %vm372, %v549, 0
      %v585 = vsel %vm372, %v550, 0
      %v588 = vsel %vm372, %v551, 0
      %v591 = vsel %vm372, %v552, 0
      %v594 = vsel %vm372, %v553, 0
      %v597 = vsel %vm372, %v554, 0
      %v600 = vsel %vm372, %v555, 0
      %v603 = vsel %vm372, %v556, 0
      %vm605 = vcmask 1041408
      %v607 = vsel %vm605, %v452, 0
      %609 = vmatprep.subr.bf16.mxu0 0
      %610 = vmatpush1.bf16.msra.mxu0 %v607
      %611 = vmatprep.subr.bf16.mxu0 0
      %612 = vmatpush1.bf16.msra.mxu0 0
      %613 = vmatprep.subr.bf16.mxu0 0
      %614 = vmatpush1.bf16.msra.mxu0 0
      %615 = vmatprep.subr.bf16.mxu0 0
      %616 = vmatpush1.bf16.msra.mxu0 0
      %617 = vmatprep.subr.bf16.mxu0 0
      %618 = vmatpush1.bf16.msra.mxu0 0
      %619 = vmatprep.subr.bf16.mxu0 0
      %620 = vmatpush1.bf16.msra.mxu0 0
      %621 = vmatprep.subr.bf16.mxu0 0
      %622 = vmatpush1.bf16.msra.mxu0 0
      %623 = vmatprep.subr.bf16.mxu0 0
      %624 = vmatpush1.bf16.msra.mxu0 0
      %625 = vmatprep.subr.bf16.mxu0 0
      %626 = vmatpush1.bf16.msra.mxu0 0
      %627 = vmatprep.subr.bf16.mxu0 0
      %628 = vmatpush1.bf16.msra.mxu0 0
      %629 = vmatprep.subr.bf16.mxu0 0
      %630 = vmatpush1.bf16.msra.mxu0 0
      %631 = vmatprep.subr.bf16.mxu0 0
      %632 = vmatpush1.bf16.msra.mxu0 0
      %633 = vmatprep.subr.bf16.mxu0 0
      %634 = vmatpush1.bf16.msra.mxu0 0
      %635 = vmatprep.subr.bf16.mxu0 0
      %636 = vmatpush1.bf16.msra.mxu0 0
      %637 = vmatprep.subr.bf16.mxu0 0
      %638 = vmatpush1.bf16.msra.mxu0 0
      %639 = vmatprep.subr.bf16.mxu0 0
      %640 = vmatpush1.bf16.msra.mxu0 0
      %641 = vmatprep.mubr.bf16.mxu0 0
      %642 = vmatmul.mubr.bf16.gmra.mrb[0].mxu0 %v558
      %v643 = vpop.f32.mrb[0].mxu0
      %v644 = vadd.f32 0.0, %v643
      %v645 = vpop.f32.mrb[0].mxu0
      %v646 = vpop.f32.mrb[0].mxu0
      %v647 = vadd.f32 0.0, %v646
      %v648 = vpop.f32.mrb[0].mxu0
      %649 = vmatprep.mubr.bf16.mxu0 0
      %650 = vmatmul.mubr.bf16.gmra.mrb[0].mxu0 %v561
      %v651 = vpop.f32.mrb[0].mxu0
      %v652 = vadd.f32 0.0, %v651
      %v653 = vpop.f32.mrb[0].mxu0
      %v654 = vpop.f32.mrb[0].mxu0
      %v655 = vadd.f32 0.0, %v654
      %v656 = vpop.f32.mrb[0].mxu0
      %657 = vmatprep.mubr.bf16.mxu0 0
      %658 = vmatmul.mubr.bf16.gmra.mrb[0].mxu0 %v564
      %v659 = vpop.f32.mrb[0].mxu0
      %v660 = vadd.f32 0.0, %v659
      %v661 = vpop.f32.mrb[0].mxu0
      %v662 = vpop.f32.mrb[0].mxu0
      %v663 = vadd.f32 0.0, %v662
      %v664 = vpop.f32.mrb[0].mxu0
      %665 = vmatprep.mubr.bf16.mxu0 0
      %666 = vmatmul.mubr.bf16.gmra.mrb[0].mxu0 %v567
      %v667 = vpop.f32.mrb[0].mxu0
      %v668 = vadd.f32 0.0, %v667
      %v669 = vpop.f32.mrb[0].mxu0
      %v670 = vpop.f32.mrb[0].mxu0
      %v671 = vadd.f32 0.0, %v670
      %v672 = vpop.f32.mrb[0].mxu0
      %673 = vmatprep.mubr.bf16.mxu0 0
      %674 = vmatmul.mubr.bf16.gmra.mrb[0].mxu0 %v570
      %v675 = vpop.f32.mrb[0].mxu0
      %v676 = vadd.f32 0.0, %v675
      %v677 = vpop.f32.mrb[0].mxu0
      %v678 = vpop.f32.mrb[0].mxu0
      %v679 = vadd.f32 0.0, %v678
      %v680 = vpop.f32.mrb[0].mxu0
      %681 = vmatprep.mubr.bf16.mxu0 0
      %682 = vmatmul.mubr.bf16.gmra.mrb[0].mxu0 %v573
      %v683 = vpop.f32.mrb[0].mxu0
      %v684 = vadd.f32 0.0, %v683
      %v685 = vpop.f32.mrb[0].mxu0
      %v686 = vpop.f32.mrb[0].mxu0
      %v687 = vadd.f32 0.0, %v686
      %v688 = vpop.f32.mrb[0].mxu0
      %689 = vmatprep.mubr.bf16.mxu0 0
      %690 = vmatmul.mubr.bf16.gmra.mrb[0].mxu0 %v576
      %v691 = vpop.f32.mrb[0].mxu0
      %v692 = vadd.f32 0.0, %v691
      %v693 = vpop.f32.mrb[0].mxu0
      %v694 = vpop.f32.mrb[0].mxu0
      %v695 = vadd.f32 0.0, %v694
      %v696 = vpop.f32.mrb[0].mxu0
      %697 = vmatprep.mubr.bf16.mxu0 0
      %698 = vmatmul.mubr.bf16.gmra.mrb[0].mxu0 %v579
      %v699 = vpop.f32.mrb[0].mxu0
      %v700 = vadd.f32 0.0, %v699
      %v701 = vpop.f32.mrb[0].mxu0
      %v702 = vpop.f32.mrb[0].mxu0
      %v703 = vadd.f32 0.0, %v702
      %v704 = vpop.f32.mrb[0].mxu0
      %705 = vmatprep.mubr.bf16.mxu0 0
      %706 = vmatmul.mubr.bf16.gmra.mrb[0].mxu0 %v582
      %v707 = vpop.f32.mrb[0].mxu0
      %v708 = vadd.f32 0.0, %v707
      %v709 = vpop.f32.mrb[0].mxu0
      %v710 = vpop.f32.mrb[0].mxu0
      %v711 = vadd.f32 0.0, %v710
      %v712 = vpop.f32.mrb[0].mxu0
      %713 = vmatprep.mubr.bf16.mxu0 0
      %714 = vmatmul.mubr.bf16.gmra.mrb[0].mxu0 %v585
      %v715 = vpop.f32.mrb[0].mxu0
      %v716 = vadd.f32 0.0, %v715
      %v717 = vpop.f32.mrb[0].mxu0
      %v718 = vpop.f32.mrb[0].mxu0
      %v719 = vadd.f32 0.0, %v718
      %v720 = vpop.f32.mrb[0].mxu0
      %721 = vmatprep.mubr.bf16.mxu0 0
      %722 = vmatmul.mubr.bf16.gmra.mrb[0].mxu0 %v588
      %v723 = vpop.f32.mrb[0].mxu0
      %v724 = vadd.f32 0.0, %v723
      %v725 = vpop.f32.mrb[0].mxu0
      %v726 = vpop.f32.mrb[0].mxu0
      %v727 = vadd.f32 0.0, %v726
      %v728 = vpop.f32.mrb[0].mxu0
      %729 = vmatprep.mubr.bf16.mxu0 0
      %730 = vmatmul.mubr.bf16.gmra.mrb[0].mxu0 %v591
      %v731 = vpop.f32.mrb[0].mxu0
      %v732 = vadd.f32 0.0, %v731
      %v733 = vpop.f32.mrb[0].mxu0
      %v734 = vpop.f32.mrb[0].mxu0
      %v735 = vadd.f32 0.0, %v734
      %v736 = vpop.f32.mrb[0].mxu0
      %737 = vmatprep.mubr.bf16.mxu0 0
      %738 = vmatmul.mubr.bf16.gmra.mrb[0].mxu0 %v594
      %v739 = vpop.f32.mrb[0].mxu0
      %v740 = vadd.f32 0.0, %v739
      %v741 = vpop.f32.mrb[0].mxu0
      %v742 = vpop.f32.mrb[0].mxu0
      %v743 = vadd.f32 0.0, %v742
      %v744 = vpop.f32.mrb[0].mxu0
      %745 = vmatprep.mubr.bf16.mxu0 0
      %746 = vmatmul.mubr.bf16.gmra.mrb[0].mxu0 %v597
      %v747 = vpop.f32.mrb[0].mxu0
      %v748 = vadd.f32 0.0, %v747
      %v749 = vpop.f32.mrb[0].mxu0
      %v750 = vpop.f32.mrb[0].mxu0
      %v751 = vadd.f32 0.0, %v750
      %v752 = vpop.f32.mrb[0].mxu0
      %753 = vmatprep.mubr.bf16.mxu0 0
      %754 = vmatmul.mubr.bf16.gmra.mrb[0].mxu0 %v600
      %v755 = vpop.f32.mrb[0].mxu0
      %v756 = vadd.f32 0.0, %v755
      %v757 = vpop.f32.mrb[0].mxu0
      %v758 = vpop.f32.mrb[0].mxu0
      %v759 = vadd.f32 0.0, %v758
      %v760 = vpop.f32.mrb[0].mxu0
      %761 = vmatprep.mubr.bf16.mxu0 0
      %762 = vmatmul.mubr.bf16.gmra.mrb[0].mxu0 %v603
      %v763 = vpop.f32.mrb[0].mxu0
      %v764 = vadd.f32 0.0, %v763
      %v765 = vpop.f32.mrb[0].mxu0
      %v766 = vpop.f32.mrb[0].mxu0
      %v767 = vadd.f32 0.0, %v766
      %v768 = vpop.f32.mrb[0].mxu0
      %769 = vdwg.mxu0
      %v771 = vsel %vm372, %v493, 0
      %v774 = vsel %vm372, %v494, 0
      %v777 = vsel %vm372, %v495, 0
      %v780 = vsel %vm372, %v496, 0
      %v783 = vsel %vm372, %v497, 0
      %v786 = vsel %vm372, %v498, 0
      %v789 = vsel %vm372, %v499, 0
      %v792 = vsel %vm372, %v500, 0
      %v795 = vsel %vm372, %v501, 0
      %v798 = vsel %vm372, %v502, 0
      %v801 = vsel %vm372, %v503, 0
      %v804 = vsel %vm372, %v504, 0
      %v807 = vsel %vm372, %v505, 0
      %v810 = vsel %vm372, %v506, 0
      %v813 = vsel %vm372, %v507, 0
      %v816 = vsel %vm372, %v508, 0
      %v819 = vsel %vm605, %v451, 0
      %821 = vmatprep.subr.bf16.mxu0 0
      %822 = vmatpush1.bf16.msra.mxu0 %v819
      %823 = vmatprep.subr.bf16.mxu0 0
      %824 = vmatpush1.bf16.msra.mxu0 0
      %825 = vmatprep.subr.bf16.mxu0 0
      %826 = vmatpush1.bf16.msra.mxu0 0
      %827 = vmatprep.subr.bf16.mxu0 0
      %828 = vmatpush1.bf16.msra.mxu0 0
      %829 = vmatprep.subr.bf16.mxu0 0
      %830 = vmatpush1.bf16.msra.mxu0 0
      %831 = vmatprep.subr.bf16.mxu0 0
      %832 = vmatpush1.bf16.msra.mxu0 0
      %833 = vmatprep.subr.bf16.mxu0 0
      %834 = vmatpush1.bf16.msra.mxu0 0
      %835 = vmatprep.subr.bf16.mxu0 0
      %836 = vmatpush1.bf16.msra.mxu0 0
      %837 = vmatprep.subr.bf16.mxu0 0
      %838 = vmatpush1.bf16.msra.mxu0 0
      %839 = vmatprep.subr.bf16.mxu0 0
      %840 = vmatpush1.bf16.msra.mxu0 0
      %841 = vmatprep.subr.bf16.mxu0 0
      %842 = vmatpush1.bf16.msra.mxu0 0
      %843 = vmatprep.subr.bf16.mxu0 0
      %844 = vmatpush1.bf16.msra.mxu0 0
      %845 = vmatprep.subr.bf16.mxu0 0
      %846 = vmatpush1.bf16.msra.mxu0 0
      %847 = vmatprep.subr.bf16.mxu0 0
      %848 = vmatpush1.bf16.msra.mxu0 0
      %849 = vmatprep.subr.bf16.mxu0 0
      %850 = vmatpush1.bf16.msra.mxu0 0
      %851 = vmatprep.subr.bf16.mxu0 0
      %852 = vmatpush1.bf16.msra.mxu0 0
      %853 = vmatprep.mubr.bf16.mxu0 0
      %854 = vmatmul.mubr.bf16.gmra.mrb[0].mxu0 %v771
      %v855 = vpop.f32.mrb[0].mxu0
      %v856 = vadd.f32 %v644, %v855
      %v857 = vpop.f32.mrb[0].mxu0
      %v858 = vpop.f32.mrb[0].mxu0
      %v859 = vadd.f32 %v647, %v858
      %v860 = vpop.f32.mrb[0].mxu0
      %861 = vmatprep.mubr.bf16.mxu0 0
      %862 = vmatmul.mubr.bf16.gmra.mrb[0].mxu0 %v774
      %v863 = vpop.f32.mrb[0].mxu0
      %v864 = vadd.f32 %v652, %v863
      %v865 = vpop.f32.mrb[0].mxu0
      %v866 = vpop.f32.mrb[0].mxu0
      %v867 = vadd.f32 %v655, %v866
      %v868 = vpop.f32.mrb[0].mxu0
      %869 = vmatprep.mubr.bf16.mxu0 0
      %870 = vmatmul.mubr.bf16.gmra.mrb[0].mxu0 %v777
      %v871 = vpop.f32.mrb[0].mxu0
      %v872 = vadd.f32 %v660, %v871
      %v873 = vpop.f32.mrb[0].mxu0
      %v874 = vpop.f32.mrb[0].mxu0
      %v875 = vadd.f32 %v663, %v874
      %v876 = vpop.f32.mrb[0].mxu0
      %877 = vmatprep.mubr.bf16.mxu0 0
      %878 = vmatmul.mubr.bf16.gmra.mrb[0].mxu0 %v780
      %v879 = vpop.f32.mrb[0].mxu0
      %v880 = vadd.f32 %v668, %v879
      %v881 = vpop.f32.mrb[0].mxu0
      %v882 = vpop.f32.mrb[0].mxu0
      %v883 = vadd.f32 %v671, %v882
      %v884 = vpop.f32.mrb[0].mxu0
      %885 = vmatprep.mubr.bf16.mxu0 0
      %886 = vmatmul.mubr.bf16.gmra.mrb[0].mxu0 %v783
      %v887 = vpop.f32.mrb[0].mxu0
      %v888 = vadd.f32 %v676, %v887
      %v889 = vpop.f32.mrb[0].mxu0
      %v890 = vpop.f32.mrb[0].mxu0
      %v891 = vadd.f32 %v679, %v890
      %v892 = vpop.f32.mrb[0].mxu0
      %893 = vmatprep.mubr.bf16.mxu0 0
      %894 = vmatmul.mubr.bf16.gmra.mrb[0].mxu0 %v786
      %v895 = vpop.f32.mrb[0].mxu0
      %v896 = vadd.f32 %v684, %v895
      %v897 = vpop.f32.mrb[0].mxu0
      %v898 = vpop.f32.mrb[0].mxu0
      %v899 = vadd.f32 %v687, %v898
      %v900 = vpop.f32.mrb[0].mxu0
      %901 = vmatprep.mubr.bf16.mxu0 0
      %902 = vmatmul.mubr.bf16.gmra.mrb[0].mxu0 %v789
      %v903 = vpop.f32.mrb[0].mxu0
      %v904 = vadd.f32 %v692, %v903
      %v905 = vpop.f32.mrb[0].mxu0
      %v906 = vpop.f32.mrb[0].mxu0
      %v907 = vadd.f32 %v695, %v906
      %v908 = vpop.f32.mrb[0].mxu0
      %909 = vmatprep.mubr.bf16.mxu0 0
      %910 = vmatmul.mubr.bf16.gmra.mrb[0].mxu0 %v792
      %v911 = vpop.f32.mrb[0].mxu0
      %v912 = vadd.f32 %v700, %v911
      %v913 = vpop.f32.mrb[0].mxu0
      %v914 = vpop.f32.mrb[0].mxu0
      %v915 = vadd.f32 %v703, %v914
      %v916 = vpop.f32.mrb[0].mxu0
      %917 = vmatprep.mubr.bf16.mxu0 0
      %918 = vmatmul.mubr.bf16.gmra.mrb[0].mxu0 %v795
      %v919 = vpop.f32.mrb[0].mxu0
      %v920 = vadd.f32 %v708, %v919
      %v921 = vpop.f32.mrb[0].mxu0
      %v922 = vpop.f32.mrb[0].mxu0
      %v923 = vadd.f32 %v711, %v922
      %v924 = vpop.f32.mrb[0].mxu0
      %925 = vmatprep.mubr.bf16.mxu0 0
      %926 = vmatmul.mubr.bf16.gmra.mrb[0].mxu0 %v798
      %v927 = vpop.f32.mrb[0].mxu0
      %v928 = vadd.f32 %v716, %v927
      %v929 = vpop.f32.mrb[0].mxu0
      %v930 = vpop.f32.mrb[0].mxu0
      %v931 = vadd.f32 %v719, %v930
      %v932 = vpop.f32.mrb[0].mxu0
      %933 = vmatprep.mubr.bf16.mxu0 0
      %934 = vmatmul.mubr.bf16.gmra.mrb[0].mxu0 %v801
      %v935 = vpop.f32.mrb[0].mxu0
      %v936 = vadd.f32 %v724, %v935
      %v937 = vpop.f32.mrb[0].mxu0
      %v938 = vpop.f32.mrb[0].mxu0
      %v939 = vadd.f32 %v727, %v938
      %v940 = vpop.f32.mrb[0].mxu0
      %941 = vmatprep.mubr.bf16.mxu0 0
      %942 = vmatmul.mubr.bf16.gmra.mrb[0].mxu0 %v804
      %v943 = vpop.f32.mrb[0].mxu0
      %v944 = vadd.f32 %v732, %v943
      %v945 = vpop.f32.mrb[0].mxu0
      %v946 = vpop.f32.mrb[0].mxu0
      %v947 = vadd.f32 %v735, %v946
      %v948 = vpop.f32.mrb[0].mxu0
      %949 = vmatprep.mubr.bf16.mxu0 0
      %950 = vmatmul.mubr.bf16.gmra.mrb[0].mxu0 %v807
      %v951 = vpop.f32.mrb[0].mxu0
      %v952 = vadd.f32 %v740, %v951
      %v953 = vpop.f32.mrb[0].mxu0
      %v954 = vpop.f32.mrb[0].mxu0
      %v955 = vadd.f32 %v743, %v954
      %v956 = vpop.f32.mrb[0].mxu0
      %957 = vmatprep.mubr.bf16.mxu0 0
      %958 = vmatmul.mubr.bf16.gmra.mrb[0].mxu0 %v810
      %v959 = vpop.f32.mrb[0].mxu0
      %v960 = vadd.f32 %v748, %v959
      %v961 = vpop.f32.mrb[0].mxu0
      %v962 = vpop.f32.mrb[0].mxu0
      %v963 = vadd.f32 %v751, %v962
      %v964 = vpop.f32.mrb[0].mxu0
      %965 = vmatprep.mubr.bf16.mxu0 0
      %966 = vmatmul.mubr.bf16.gmra.mrb[0].mxu0 %v813
      %v967 = vpop.f32.mrb[0].mxu0
      %v968 = vadd.f32 %v756, %v967
      %v969 = vpop.f32.mrb[0].mxu0
      %v970 = vpop.f32.mrb[0].mxu0
      %v971 = vadd.f32 %v759, %v970
      %v972 = vpop.f32.mrb[0].mxu0
      %973 = vmatprep.mubr.bf16.mxu0 0
      %974 = vmatmul.mubr.bf16.gmra.mrb[0].mxu0 %v816
      %v975 = vpop.f32.mrb[0].mxu0
      %v976 = vadd.f32 %v764, %v975
      %v977 = vpop.f32.mrb[0].mxu0
      %v978 = vpop.f32.mrb[0].mxu0
      %v979 = vadd.f32 %v767, %v978
      %v980 = vpop.f32.mrb[0].mxu0
      %981 = vdwg.mxu0
      %v982 = vld [vmem:[#allocation2 + $0x2] sm:$0xff]
      %v983 = vld [vmem:[#allocation2 + $0xa] sm:$0xff]
      %v984 = vld [vmem:[#allocation2 + $0x1a] sm:$0xff]
      %v985 = vld [vmem:[#allocation2 + $0x22] sm:$0xff]
      %v986 = vld [vmem:[#allocation2 + $0x32] sm:$0xff]
      %v987 = vld [vmem:[#allocation2 + $0x3a] sm:$0xff]
      %v988 = vld [vmem:[#allocation2 + $0x4a] sm:$0xff]
      %v989 = vld [vmem:[#allocation2 + $0x52] sm:$0xff]
      %v990 = vld [vmem:[#allocation2 + $0x62] sm:$0xff]
      %v991 = vld [vmem:[#allocation2 + $0x6a] sm:$0xff]
      %v992 = vld [vmem:[#allocation2 + $0x7a] sm:$0xff]
      %v993 = vld [vmem:[#allocation2 + $0x82] sm:$0xff]
      %v994 = vld [vmem:[#allocation2 + $0x92] sm:$0xff]
      %v995 = vld [vmem:[#allocation2 + $0x9a] sm:$0xff]
      %v996 = vld [vmem:[#allocation2 + $0xaa] sm:$0xff]
      %v997 = vld [vmem:[#allocation2 + $0xb2] sm:$0xff]
      %v998 = vld [vmem:[#allocation2 + $0xc2] sm:$0xff]
      %v999 = vld [vmem:[#allocation2 + $0xca] sm:$0xff]
      %v1000 = vld [vmem:[#allocation2 + $0xda] sm:$0xff]
      %v1001 = vld [vmem:[#allocation2 + $0xe2] sm:$0xff]
      %v1002 = vld [vmem:[#allocation2 + $0xf2] sm:$0xff]
      %v1003 = vld [vmem:[#allocation2 + $0xfa] sm:$0xff]
      %v1004 = vld [vmem:[#allocation2 + $0x10a] sm:$0xff]
      %v1005 = vld [vmem:[#allocation2 + $0x112] sm:$0xff]
      %v1006 = vld [vmem:[#allocation2 + $0x122] sm:$0xff]
      %v1007 = vld [vmem:[#allocation2 + $0x12a] sm:$0xff]
      %v1008 = vld [vmem:[#allocation2 + $0x13a] sm:$0xff]
      %v1009 = vld [vmem:[#allocation2 + $0x142] sm:$0xff]
      %v1010 = vld [vmem:[#allocation2 + $0x152] sm:$0xff]
      %v1011 = vld [vmem:[#allocation2 + $0x15a] sm:$0xff]
      %v1012 = vld [vmem:[#allocation2 + $0x16a] sm:$0xff]
      %v1013 = vld [vmem:[#allocation2 + $0x172] sm:$0xff]
      %v1014 = vpack.c.bf16 %v983, %v982
      %v1015 = vpack.c.bf16 %v985, %v984
      %v1016 = vpack.c.bf16 %v987, %v986
      %v1017 = vpack.c.bf16 %v989, %v988
      %v1018 = vpack.c.bf16 %v991, %v990
      %v1019 = vpack.c.bf16 %v993, %v992
      %v1020 = vpack.c.bf16 %v995, %v994
      %v1021 = vpack.c.bf16 %v997, %v996
      %v1022 = vpack.c.bf16 %v999, %v998
      %v1023 = vpack.c.bf16 %v1001, %v1000
      %v1024 = vpack.c.bf16 %v1003, %v1002
      %v1025 = vpack.c.bf16 %v1005, %v1004
      %v1026 = vpack.c.bf16 %v1007, %v1006
      %v1027 = vpack.c.bf16 %v1009, %v1008
      %v1028 = vpack.c.bf16 %v1011, %v1010
      %v1029 = vpack.c.bf16 %v1013, %v1012
      %v1031 = vsel %vm372, %v1014, 0
      %v1034 = vsel %vm372, %v1015, 0
      %v1037 = vsel %vm372, %v1016, 0
      %v1040 = vsel %vm372, %v1017, 0
      %v1043 = vsel %vm372, %v1018, 0
      %v1046 = vsel %vm372, %v1019, 0
      %v1049 = vsel %vm372, %v1020, 0
      %v1052 = vsel %vm372, %v1021, 0
      %v1055 = vsel %vm372, %v1022, 0
      %v1058 = vsel %vm372, %v1023, 0
      %v1061 = vsel %vm372, %v1024, 0
      %v1064 = vsel %vm372, %v1025, 0
      %v1067 = vsel %vm372, %v1026, 0
      %v1070 = vsel %vm372, %v1027, 0
      %v1073 = vsel %vm372, %v1028, 0
      %v1076 = vsel %vm372, %v1029, 0
      %v1079 = vsel %vm605, %v453, 0
      %1081 = vmatprep.subr.bf16.mxu0 0
      %1082 = vmatpush1.bf16.msra.mxu0 %v1079
      %1083 = vmatprep.subr.bf16.mxu0 0
      %1084 = vmatpush1.bf16.msra.mxu0 0
      %1085 = vmatprep.subr.bf16.mxu0 0
      %1086 = vmatpush1.bf16.msra.mxu0 0
      %1087 = vmatprep.subr.bf16.mxu0 0
      %1088 = vmatpush1.bf16.msra.mxu0 0
      %1089 = vmatprep.subr.bf16.mxu0 0
      %1090 = vmatpush1.bf16.msra.mxu0 0
      %1091 = vmatprep.subr.bf16.mxu0 0
      %1092 = vmatpush1.bf16.msra.mxu0 0
      %1093 = vmatprep.subr.bf16.mxu0 0
      %1094 = vmatpush1.bf16.msra.mxu0 0
      %1095 = vmatprep.subr.bf16.mxu0 0
      %1096 = vmatpush1.bf16.msra.mxu0 0
      %1097 = vmatprep.subr.bf16.mxu0 0
      %1098 = vmatpush1.bf16.msra.mxu0 0
      %1099 = vmatprep.subr.bf16.mxu0 0
      %1100 = vmatpush1.bf16.msra.mxu0 0
      %1101 = vmatprep.subr.bf16.mxu0 0
      %1102 = vmatpush1.bf16.msra.mxu0 0
      %1103 = vmatprep.subr.bf16.mxu0 0
      %1104 = vmatpush1.bf16.msra.mxu0 0
      %1105 = vmatprep.subr.bf16.mxu0 0
      %1106 = vmatpush1.bf16.msra.mxu0 0
      %1107 = vmatprep.subr.bf16.mxu0 0
      %1108 = vmatpush1.bf16.msra.mxu0 0
      %1109 = vmatprep.subr.bf16.mxu0 0
      %1110 = vmatpush1.bf16.msra.mxu0 0
      %1111 = vmatprep.subr.bf16.mxu0 0
      %1112 = vmatpush1.bf16.msra.mxu0 0
      %1113 = vmatprep.mubr.bf16.mxu0 0
      %1114 = vmatmul.mubr.bf16.gmra.mrb[0].mxu0 %v1031
      %v1115 = vpop.f32.mrb[0].mxu0
      %v1116 = vadd.f32 0.0, %v1115
      %v1117 = vpop.f32.mrb[0].mxu0
      %v1118 = vpop.f32.mrb[0].mxu0
      %v1119 = vadd.f32 0.0, %v1118
      %v1120 = vpop.f32.mrb[0].mxu0
      %1121 = vmatprep.mubr.bf16.mxu0 0
      %1122 = vmatmul.mubr.bf16.gmra.mrb[0].mxu0 %v1034
      %v1123 = vpop.f32.mrb[0].mxu0
      %v1124 = vadd.f32 0.0, %v1123
      %v1125 = vpop.f32.mrb[0].mxu0
      %v1126 = vpop.f32.mrb[0].mxu0
      %v1127 = vadd.f32 0.0, %v1126
      %v1128 = vpop.f32.mrb[0].mxu0
      %1129 = vmatprep.mubr.bf16.mxu0 0
      %1130 = vmatmul.mubr.bf16.gmra.mrb[0].mxu0 %v1037
      %v1131 = vpop.f32.mrb[0].mxu0
      %v1132 = vadd.f32 0.0, %v1131
      %v1133 = vpop.f32.mrb[0].mxu0
      %v1134 = vpop.f32.mrb[0].mxu0
      %v1135 = vadd.f32 0.0, %v1134
      %v1136 = vpop.f32.mrb[0].mxu0
      %1137 = vmatprep.mubr.bf16.mxu0 0
      %1138 = vmatmul.mubr.bf16.gmra.mrb[0].mxu0 %v1040
      %v1139 = vpop.f32.mrb[0].mxu0
      %v1140 = vadd.f32 0.0, %v1139
      %v1141 = vpop.f32.mrb[0].mxu0
      %v1142 = vpop.f32.mrb[0].mxu0
      %v1143 = vadd.f32 0.0, %v1142
      %v1144 = vpop.f32.mrb[0].mxu0
      %1145 = vmatprep.mubr.bf16.mxu0 0
      %1146 = vmatmul.mubr.bf16.gmra.mrb[0].mxu0 %v1043
      %v1147 = vpop.f32.mrb[0].mxu0
      %v1148 = vadd.f32 0.0, %v1147
      %v1149 = vpop.f32.mrb[0].mxu0
      %v1150 = vpop.f32.mrb[0].mxu0
      %v1151 = vadd.f32 0.0, %v1150
      %v1152 = vpop.f32.mrb[0].mxu0
      %1153 = vmatprep.mubr.bf16.mxu0 0
      %1154 = vmatmul.mubr.bf16.gmra.mrb[0].mxu0 %v1046
      %v1155 = vpop.f32.mrb[0].mxu0
      %v1156 = vadd.f32 0.0, %v1155
      %v1157 = vpop.f32.mrb[0].mxu0
      %v1158 = vpop.f32.mrb[0].mxu0
      %v1159 = vadd.f32 0.0, %v1158
      %v1160 = vpop.f32.mrb[0].mxu0
      %1161 = vmatprep.mubr.bf16.mxu0 0
      %1162 = vmatmul.mubr.bf16.gmra.mrb[0].mxu0 %v1049
      %v1163 = vpop.f32.mrb[0].mxu0
      %v1164 = vadd.f32 0.0, %v1163
      %v1165 = vpop.f32.mrb[0].mxu0
      %v1166 = vpop.f32.mrb[0].mxu0
      %v1167 = vadd.f32 0.0, %v1166
      %v1168 = vpop.f32.mrb[0].mxu0
      %1169 = vmatprep.mubr.bf16.mxu0 0
      %1170 = vmatmul.mubr.bf16.gmra.mrb[0].mxu0 %v1052
      %v1171 = vpop.f32.mrb[0].mxu0
      %v1172 = vadd.f32 0.0, %v1171
      %v1173 = vpop.f32.mrb[0].mxu0
      %v1174 = vpop.f32.mrb[0].mxu0
      %v1175 = vadd.f32 0.0, %v1174
      %v1176 = vpop.f32.mrb[0].mxu0
      %1177 = vmatprep.mubr.bf16.mxu0 0
      %1178 = vmatmul.mubr.bf16.gmra.mrb[0].mxu0 %v1055
      %v1179 = vpop.f32.mrb[0].mxu0
      %v1180 = vadd.f32 0.0, %v1179
      %v1181 = vpop.f32.mrb[0].mxu0
      %v1182 = vpop.f32.mrb[0].mxu0
      %v1183 = vadd.f32 0.0, %v1182
      %v1184 = vpop.f32.mrb[0].mxu0
      %1185 = vmatprep.mubr.bf16.mxu0 0
      %1186 = vmatmul.mubr.bf16.gmra.mrb[0].mxu0 %v1058
      %v1187 = vpop.f32.mrb[0].mxu0
      %v1188 = vadd.f32 0.0, %v1187
      %v1189 = vpop.f32.mrb[0].mxu0
      %v1190 = vpop.f32.mrb[0].mxu0
      %v1191 = vadd.f32 0.0, %v1190
      %v1192 = vpop.f32.mrb[0].mxu0
      %1193 = vmatprep.mubr.bf16.mxu0 0
      %1194 = vmatmul.mubr.bf16.gmra.mrb[0].mxu0 %v1061
      %v1195 = vpop.f32.mrb[0].mxu0
      %v1196 = vadd.f32 0.0, %v1195
      %v1197 = vpop.f32.mrb[0].mxu0
      %v1198 = vpop.f32.mrb[0].mxu0
      %v1199 = vadd.f32 0.0, %v1198
      %v1200 = vpop.f32.mrb[0].mxu0
      %1201 = vmatprep.mubr.bf16.mxu0 0
      %1202 = vmatmul.mubr.bf16.gmra.mrb[0].mxu0 %v1064
      %v1203 = vpop.f32.mrb[0].mxu0
      %v1204 = vadd.f32 0.0, %v1203
      %v1205 = vpop.f32.mrb[0].mxu0
      %v1206 = vpop.f32.mrb[0].mxu0
      %v1207 = vadd.f32 0.0, %v1206
      %v1208 = vpop.f32.mrb[0].mxu0
      %1209 = vmatprep.mubr.bf16.mxu0 0
      %1210 = vmatmul.mubr.bf16.gmra.mrb[0].mxu0 %v1067
      %v1211 = vpop.f32.mrb[0].mxu0
      %v1212 = vadd.f32 0.0, %v1211
      %v1213 = vpop.f32.mrb[0].mxu0
      %v1214 = vpop.f32.mrb[0].mxu0
      %v1215 = vadd.f32 0.0, %v1214
      %v1216 = vpop.f32.mrb[0].mxu0
      %1217 = vmatprep.mubr.bf16.mxu0 0
      %1218 = vmatmul.mubr.bf16.gmra.mrb[0].mxu0 %v1070
      %v1219 = vpop.f32.mrb[0].mxu0
      %v1220 = vadd.f32 0.0, %v1219
      %v1221 = vpop.f32.mrb[0].mxu0
      %v1222 = vpop.f32.mrb[0].mxu0
      %v1223 = vadd.f32 0.0, %v1222
      %v1224 = vpop.f32.mrb[0].mxu0
      %1225 = vmatprep.mubr.bf16.mxu0 0
      %1226 = vmatmul.mubr.bf16.gmra.mrb[0].mxu0 %v1073
      %v1227 = vpop.f32.mrb[0].mxu0
      %v1228 = vadd.f32 0.0, %v1227
      %v1229 = vpop.f32.mrb[0].mxu0
      %v1230 = vpop.f32.mrb[0].mxu0
      %v1231 = vadd.f32 0.0, %v1230
      %v1232 = vpop.f32.mrb[0].mxu0
      %1233 = vmatprep.mubr.bf16.mxu0 0
      %1234 = vmatmul.mubr.bf16.gmra.mrb[0].mxu0 %v1076
      %v1235 = vpop.f32.mrb[0].mxu0
      %v1236 = vadd.f32 0.0, %v1235
      %v1237 = vpop.f32.mrb[0].mxu0
      %v1238 = vpop.f32.mrb[0].mxu0
      %v1239 = vadd.f32 0.0, %v1238
      %v1240 = vpop.f32.mrb[0].mxu0
      %1241 = vdwg.mxu0
      %v1242 = vadd.f32 %v856, %v1116
      %v1243 = vadd.f32 %v859, %v1119
      %v1244 = vadd.f32 %v864, %v1124
      %v1245 = vadd.f32 %v867, %v1127
      %v1246 = vadd.f32 %v872, %v1132
      %v1247 = vadd.f32 %v875, %v1135
      %v1248 = vadd.f32 %v880, %v1140
      %v1249 = vadd.f32 %v883, %v1143
      %v1250 = vadd.f32 %v888, %v1148
      %v1251 = vadd.f32 %v891, %v1151
      %v1252 = vadd.f32 %v896, %v1156
      %v1253 = vadd.f32 %v899, %v1159
      %v1254 = vadd.f32 %v904, %v1164
      %v1255 = vadd.f32 %v907, %v1167
      %v1256 = vadd.f32 %v912, %v1172
      %v1257 = vadd.f32 %v915, %v1175
      %v1258 = vadd.f32 %v920, %v1180
      %v1259 = vadd.f32 %v923, %v1183
      %v1260 = vadd.f32 %v928, %v1188
      %v1261 = vadd.f32 %v931, %v1191
      %v1262 = vadd.f32 %v936, %v1196
      %v1263 = vadd.f32 %v939, %v1199
      %v1264 = vadd.f32 %v944, %v1204
      %v1265 = vadd.f32 %v947, %v1207
      %v1266 = vadd.f32 %v952, %v1212
      %v1267 = vadd.f32 %v955, %v1215
      %v1268 = vadd.f32 %v960, %v1220
      %v1269 = vadd.f32 %v963, %v1223
      %v1270 = vadd.f32 %v968, %v1228
      %v1271 = vadd.f32 %v971, %v1231
      %v1272 = vadd.f32 %v976, %v1236
      %v1273 = vadd.f32 %v979, %v1239
      %v1274 = vld [vmem:[%s418] sm:$0xff]
      %v1275 = vld [vmem:[%s418 + $0x8] sm:$0xff]
      %v1276 = vld [vmem:[%s418 + $0x18] sm:$0xff]
      %v1277 = vld [vmem:[%s418 + $0x20] sm:$0xff]
      %v1278 = vld [vmem:[%s418 + $0x30] sm:$0xff]
      %v1279 = vld [vmem:[%s418 + $0x38] sm:$0xff]
      %v1280 = vld [vmem:[%s418 + $0x48] sm:$0xff]
      %v1281 = vld [vmem:[%s418 + $0x50] sm:$0xff]
      %v1282 = vld [vmem:[%s418 + $0x60] sm:$0xff]
      %v1283 = vld [vmem:[%s418 + $0x68] sm:$0xff]
      %v1284 = vld [vmem:[%s418 + $0x78] sm:$0xff]
      %v1285 = vld [vmem:[%s418 + $0x80] sm:$0xff]
      %v1286 = vld [vmem:[%s418 + $0x90] sm:$0xff]
      %v1287 = vld [vmem:[%s418 + $0x98] sm:$0xff]
      %v1288 = vld [vmem:[%s418 + $0xa8] sm:$0xff]
      %v1289 = vld [vmem:[%s418 + $0xb0] sm:$0xff]
      %v1290 = vld [vmem:[%s418 + $0xc0] sm:$0xff]
      %v1291 = vld [vmem:[%s418 + $0xc8] sm:$0xff]
      %v1292 = vld [vmem:[%s418 + $0xd8] sm:$0xff]
      %v1293 = vld [vmem:[%s418 + $0xe0] sm:$0xff]
      %v1294 = vld [vmem:[%s418 + $0xf0] sm:$0xff]
      %v1295 = vld [vmem:[%s418 + $0xf8] sm:$0xff]
      %v1296 = vld [vmem:[%s418 + $0x108] sm:$0xff]
      %v1297 = vld [vmem:[%s418 + $0x110] sm:$0xff]
      %v1298 = vld [vmem:[%s418 + $0x120] sm:$0xff]
      %v1299 = vld [vmem:[%s418 + $0x128] sm:$0xff]
      %v1300 = vld [vmem:[%s418 + $0x138] sm:$0xff]
      %v1301 = vld [vmem:[%s418 + $0x140] sm:$0xff]
      %v1302 = vld [vmem:[%s418 + $0x150] sm:$0xff]
      %v1303 = vld [vmem:[%s418 + $0x158] sm:$0xff]
      %v1304 = vld [vmem:[%s418 + $0x168] sm:$0xff]
      %v1305 = vld [vmem:[%s418 + $0x170] sm:$0xff]
      %v1306 = vpack.c.bf16 %v1275, %v1274
      %v1307 = vpack.c.bf16 %v1277, %v1276
      %v1308 = vpack.c.bf16 %v1279, %v1278
      %v1309 = vpack.c.bf16 %v1281, %v1280
      %v1310 = vpack.c.bf16 %v1283, %v1282
      %v1311 = vpack.c.bf16 %v1285, %v1284
      %v1312 = vpack.c.bf16 %v1287, %v1286
      %v1313 = vpack.c.bf16 %v1289, %v1288
      %v1314 = vpack.c.bf16 %v1291, %v1290
      %v1315 = vpack.c.bf16 %v1293, %v1292
      %v1316 = vpack.c.bf16 %v1295, %v1294
      %v1317 = vpack.c.bf16 %v1297, %v1296
      %v1318 = vpack.c.bf16 %v1299, %v1298
      %v1319 = vpack.c.bf16 %v1301, %v1300
      %v1320 = vpack.c.bf16 %v1303, %v1302
      %v1321 = vpack.c.bf16 %v1305, %v1304
      %v1323 = vsel %vm372, %v1306, 0
      %v1326 = vsel %vm372, %v1307, 0
      %v1329 = vsel %vm372, %v1308, 0
      %v1332 = vsel %vm372, %v1309, 0
      %v1335 = vsel %vm372, %v1310, 0
      %v1338 = vsel %vm372, %v1311, 0
      %v1341 = vsel %vm372, %v1312, 0
      %v1344 = vsel %vm372, %v1313, 0
      %v1347 = vsel %vm372, %v1314, 0
      %v1350 = vsel %vm372, %v1315, 0
      %v1353 = vsel %vm372, %v1316, 0
      %v1356 = vsel %vm372, %v1317, 0
      %v1359 = vsel %vm372, %v1318, 0
      %v1362 = vsel %vm372, %v1319, 0
      %v1365 = vsel %vm372, %v1320, 0
      %v1368 = vsel %vm372, %v1321, 0
      %v1371 = vsel %vm605, %v454, 0
      %1373 = vmatprep.subr.bf16.mxu0 0
      %1374 = vmatpush1.bf16.msra.mxu0 %v1371
      %1375 = vmatprep.subr.bf16.mxu0 0
      %1376 = vmatpush1.bf16.msra.mxu0 0
      %1377 = vmatprep.subr.bf16.mxu0 0
      %1378 = vmatpush1.bf16.msra.mxu0 0
      %1379 = vmatprep.subr.bf16.mxu0 0
      %1380 = vmatpush1.bf16.msra.mxu0 0
      %1381 = vmatprep.subr.bf16.mxu0 0
      %1382 = vmatpush1.bf16.msra.mxu0 0
      %1383 = vmatprep.subr.bf16.mxu0 0
      %1384 = vmatpush1.bf16.msra.mxu0 0
      %1385 = vmatprep.subr.bf16.mxu0 0
      %1386 = vmatpush1.bf16.msra.mxu0 0
      %1387 = vmatprep.subr.bf16.mxu0 0
      %1388 = vmatpush1.bf16.msra.mxu0 0
      %1389 = vmatprep.subr.bf16.mxu0 0
      %1390 = vmatpush1.bf16.msra.mxu0 0
      %1391 = vmatprep.subr.bf16.mxu0 0
      %1392 = vmatpush1.bf16.msra.mxu0 0
      %1393 = vmatprep.subr.bf16.mxu0 0
      %1394 = vmatpush1.bf16.msra.mxu0 0
      %1395 = vmatprep.subr.bf16.mxu0 0
      %1396 = vmatpush1.bf16.msra.mxu0 0
      %1397 = vmatprep.subr.bf16.mxu0 0
      %1398 = vmatpush1.bf16.msra.mxu0 0
      %1399 = vmatprep.subr.bf16.mxu0 0
      %1400 = vmatpush1.bf16.msra.mxu0 0
      %1401 = vmatprep.subr.bf16.mxu0 0
      %1402 = vmatpush1.bf16.msra.mxu0 0
      %1403 = vmatprep.subr.bf16.mxu0 0
      %1404 = vmatpush1.bf16.msra.mxu0 0
      %1405 = vmatprep.mubr.bf16.mxu0 0
      %1406 = vmatmul.mubr.bf16.gmra.mrb[0].mxu0 %v1323
      %v1407 = vpop.f32.mrb[0].mxu0
      %v1408 = vadd.f32 0.0, %v1407
      %v1409 = vpop.f32.mrb[0].mxu0
      %v1410 = vpop.f32.mrb[0].mxu0
      %v1411 = vadd.f32 0.0, %v1410
      %v1412 = vpop.f32.mrb[0].mxu0
      %1413 = vmatprep.mubr.bf16.mxu0 0
      %1414 = vmatmul.mubr.bf16.gmra.mrb[0].mxu0 %v1326
      %v1415 = vpop.f32.mrb[0].mxu0
      %v1416 = vadd.f32 0.0, %v1415
      %v1417 = vpop.f32.mrb[0].mxu0
      %v1418 = vpop.f32.mrb[0].mxu0
      %v1419 = vadd.f32 0.0, %v1418
      %v1420 = vpop.f32.mrb[0].mxu0
      %1421 = vmatprep.mubr.bf16.mxu0 0
      %1422 = vmatmul.mubr.bf16.gmra.mrb[0].mxu0 %v1329
      %v1423 = vpop.f32.mrb[0].mxu0
      %v1424 = vadd.f32 0.0, %v1423
      %v1425 = vpop.f32.mrb[0].mxu0
      %v1426 = vpop.f32.mrb[0].mxu0
      %v1427 = vadd.f32 0.0, %v1426
      %v1428 = vpop.f32.mrb[0].mxu0
      %1429 = vmatprep.mubr.bf16.mxu0 0
      %1430 = vmatmul.mubr.bf16.gmra.mrb[0].mxu0 %v1332
      %v1431 = vpop.f32.mrb[0].mxu0
      %v1432 = vadd.f32 0.0, %v1431
      %v1433 = vpop.f32.mrb[0].mxu0
      %v1434 = vpop.f32.mrb[0].mxu0
      %v1435 = vadd.f32 0.0, %v1434
      %v1436 = vpop.f32.mrb[0].mxu0
      %1437 = vmatprep.mubr.bf16.mxu0 0
      %1438 = vmatmul.mubr.bf16.gmra.mrb[0].mxu0 %v1335
      %v1439 = vpop.f32.mrb[0].mxu0
      %v1440 = vadd.f32 0.0, %v1439
      %v1441 = vpop.f32.mrb[0].mxu0
      %v1442 = vpop.f32.mrb[0].mxu0
      %v1443 = vadd.f32 0.0, %v1442
      %v1444 = vpop.f32.mrb[0].mxu0
      %1445 = vmatprep.mubr.bf16.mxu0 0
      %1446 = vmatmul.mubr.bf16.gmra.mrb[0].mxu0 %v1338
      %v1447 = vpop.f32.mrb[0].mxu0
      %v1448 = vadd.f32 0.0, %v1447
      %v1449 = vpop.f32.mrb[0].mxu0
      %v1450 = vpop.f32.mrb[0].mxu0
      %v1451 = vadd.f32 0.0, %v1450
      %v1452 = vpop.f32.mrb[0].mxu0
      %1453 = vmatprep.mubr.bf16.mxu0 0
      %1454 = vmatmul.mubr.bf16.gmra.mrb[0].mxu0 %v1341
      %v1455 = vpop.f32.mrb[0].mxu0
      %v1456 = vadd.f32 0.0, %v1455
      %v1457 = vpop.f32.mrb[0].mxu0
      %v1458 = vpop.f32.mrb[0].mxu0
      %v1459 = vadd.f32 0.0, %v1458
      %v1460 = vpop.f32.mrb[0].mxu0
      %1461 = vmatprep.mubr.bf16.mxu0 0
      %1462 = vmatmul.mubr.bf16.gmra.mrb[0].mxu0 %v1344
      %v1463 = vpop.f32.mrb[0].mxu0
      %v1464 = vadd.f32 0.0, %v1463
      %v1465 = vpop.f32.mrb[0].mxu0
      %v1466 = vpop.f32.mrb[0].mxu0
      %v1467 = vadd.f32 0.0, %v1466
      %v1468 = vpop.f32.mrb[0].mxu0
      %1469 = vmatprep.mubr.bf16.mxu0 0
      %1470 = vmatmul.mubr.bf16.gmra.mrb[0].mxu0 %v1347
      %v1471 = vpop.f32.mrb[0].mxu0
      %v1472 = vadd.f32 0.0, %v1471
      %v1473 = vpop.f32.mrb[0].mxu0
      %v1474 = vpop.f32.mrb[0].mxu0
      %v1475 = vadd.f32 0.0, %v1474
      %v1476 = vpop.f32.mrb[0].mxu0
      %1477 = vmatprep.mubr.bf16.mxu0 0
      %1478 = vmatmul.mubr.bf16.gmra.mrb[0].mxu0 %v1350
      %v1479 = vpop.f32.mrb[0].mxu0
      %v1480 = vadd.f32 0.0, %v1479
      %v1481 = vpop.f32.mrb[0].mxu0
      %v1482 = vpop.f32.mrb[0].mxu0
      %v1483 = vadd.f32 0.0, %v1482
      %v1484 = vpop.f32.mrb[0].mxu0
      %1485 = vmatprep.mubr.bf16.mxu0 0
      %1486 = vmatmul.mubr.bf16.gmra.mrb[0].mxu0 %v1353
      %v1487 = vpop.f32.mrb[0].mxu0
      %v1488 = vadd.f32 0.0, %v1487
      %v1489 = vpop.f32.mrb[0].mxu0
      %v1490 = vpop.f32.mrb[0].mxu0
      %v1491 = vadd.f32 0.0, %v1490
      %v1492 = vpop.f32.mrb[0].mxu0
      %1493 = vmatprep.mubr.bf16.mxu0 0
      %1494 = vmatmul.mubr.bf16.gmra.mrb[0].mxu0 %v1356
      %v1495 = vpop.f32.mrb[0].mxu0
      %v1496 = vadd.f32 0.0, %v1495
      %v1497 = vpop.f32.mrb[0].mxu0
      %v1498 = vpop.f32.mrb[0].mxu0
      %v1499 = vadd.f32 0.0, %v1498
      %v1500 = vpop.f32.mrb[0].mxu0
      %1501 = vmatprep.mubr.bf16.mxu0 0
      %1502 = vmatmul.mubr.bf16.gmra.mrb[0].mxu0 %v1359
      %v1503 = vpop.f32.mrb[0].mxu0
      %v1504 = vadd.f32 0.0, %v1503
      %v1505 = vpop.f32.mrb[0].mxu0
      %v1506 = vpop.f32.mrb[0].mxu0
      %v1507 = vadd.f32 0.0, %v1506
      %v1508 = vpop.f32.mrb[0].mxu0
      %1509 = vmatprep.mubr.bf16.mxu0 0
      %1510 = vmatmul.mubr.bf16.gmra.mrb[0].mxu0 %v1362
      %v1511 = vpop.f32.mrb[0].mxu0
      %v1512 = vadd.f32 0.0, %v1511
      %v1513 = vpop.f32.mrb[0].mxu0
      %v1514 = vpop.f32.mrb[0].mxu0
      %v1515 = vadd.f32 0.0, %v1514
      %v1516 = vpop.f32.mrb[0].mxu0
      %1517 = vmatprep.mubr.bf16.mxu0 0
      %1518 = vmatmul.mubr.bf16.gmra.mrb[0].mxu0 %v1365
      %v1519 = vpop.f32.mrb[0].mxu0
      %v1520 = vadd.f32 0.0, %v1519
      %v1521 = vpop.f32.mrb[0].mxu0
      %v1522 = vpop.f32.mrb[0].mxu0
      %v1523 = vadd.f32 0.0, %v1522
      %v1524 = vpop.f32.mrb[0].mxu0
      %1525 = vmatprep.mubr.bf16.mxu0 0
      %1526 = vmatmul.mubr.bf16.gmra.mrb[0].mxu0 %v1368
      %v1527 = vpop.f32.mrb[0].mxu0
      %v1528 = vadd.f32 0.0, %v1527
      %v1529 = vpop.f32.mrb[0].mxu0
      %v1530 = vpop.f32.mrb[0].mxu0
      %v1531 = vadd.f32 0.0, %v1530
      %v1532 = vpop.f32.mrb[0].mxu0
      %1533 = vdwg.mxu0
      %v1534 = vadd.f32 %v1242, %v1408
      %v1535 = vadd.f32 %v1243, %v1411
      %v1536 = vadd.f32 %v1244, %v1416
      %v1537 = vadd.f32 %v1245, %v1419
      %v1538 = vadd.f32 %v1246, %v1424
      %v1539 = vadd.f32 %v1247, %v1427
      %v1540 = vadd.f32 %v1248, %v1432
      %v1541 = vadd.f32 %v1249, %v1435
      %v1542 = vadd.f32 %v1250, %v1440
      %v1543 = vadd.f32 %v1251, %v1443
      %v1544 = vadd.f32 %v1252, %v1448
      %v1545 = vadd.f32 %v1253, %v1451
      %v1546 = vadd.f32 %v1254, %v1456
      %v1547 = vadd.f32 %v1255, %v1459
      %v1548 = vadd.f32 %v1256, %v1464
      %v1549 = vadd.f32 %v1257, %v1467
      %v1550 = vadd.f32 %v1258, %v1472
      %v1551 = vadd.f32 %v1259, %v1475
      %v1552 = vadd.f32 %v1260, %v1480
      %v1553 = vadd.f32 %v1261, %v1483
      %v1554 = vadd.f32 %v1262, %v1488
      %v1555 = vadd.f32 %v1263, %v1491
      %v1556 = vadd.f32 %v1264, %v1496
      %v1557 = vadd.f32 %v1265, %v1499
      %v1558 = vadd.f32 %v1266, %v1504
      %v1559 = vadd.f32 %v1267, %v1507
      %v1560 = vadd.f32 %v1268, %v1512
      %v1561 = vadd.f32 %v1269, %v1515
      %v1562 = vadd.f32 %v1270, %v1520
      %v1563 = vadd.f32 %v1271, %v1523
      %v1564 = vadd.f32 %v1272, %v1528
      %v1565 = vadd.f32 %v1273, %v1531
      %v1566 = vld [vmem:[%s418 + $0x1] sm:$0xff]
      %v1567 = vld [vmem:[%s418 + $0x9] sm:$0xff]
      %v1568 = vld [vmem:[%s418 + $0x19] sm:$0xff]
      %v1569 = vld [vmem:[%s418 + $0x21] sm:$0xff]
      %v1570 = vld [vmem:[%s418 + $0x31] sm:$0xff]
      %v1571 = vld [vmem:[%s418 + $0x39] sm:$0xff]
      %v1572 = vld [vmem:[%s418 + $0x49] sm:$0xff]
      %v1573 = vld [vmem:[%s418 + $0x51] sm:$0xff]
      %v1574 = vld [vmem:[%s418 + $0x61] sm:$0xff]
      %v1575 = vld [vmem:[%s418 + $0x69] sm:$0xff]
      %v1576 = vld [vmem:[%s418 + $0x79] sm:$0xff]
      %v1577 = vld [vmem:[%s418 + $0x81] sm:$0xff]
      %v1578 = vld [vmem:[%s418 + $0x91] sm:$0xff]
      %v1579 = vld [vmem:[%s418 + $0x99] sm:$0xff]
      %v1580 = vld [vmem:[%s418 + $0xa9] sm:$0xff]
      %v1581 = vld [vmem:[%s418 + $0xb1] sm:$0xff]
      %v1582 = vld [vmem:[%s418 + $0xc1] sm:$0xff]
      %v1583 = vld [vmem:[%s418 + $0xc9] sm:$0xff]
      %v1584 = vld [vmem:[%s418 + $0xd9] sm:$0xff]
      %v1585 = vld [vmem:[%s418 + $0xe1] sm:$0xff]
      %v1586 = vld [vmem:[%s418 + $0xf1] sm:$0xff]
      %v1587 = vld [vmem:[%s418 + $0xf9] sm:$0xff]
      %v1588 = vld [vmem:[%s418 + $0x109] sm:$0xff]
      %v1589 = vld [vmem:[%s418 + $0x111] sm:$0xff]
      %v1590 = vld [vmem:[%s418 + $0x121] sm:$0xff]
      %v1591 = vld [vmem:[%s418 + $0x129] sm:$0xff]
      %v1592 = vld [vmem:[%s418 + $0x139] sm:$0xff]
      %v1593 = vld [vmem:[%s418 + $0x141] sm:$0xff]
      %v1594 = vld [vmem:[%s418 + $0x151] sm:$0xff]
      %v1595 = vld [vmem:[%s418 + $0x159] sm:$0xff]
      %v1596 = vld [vmem:[%s418 + $0x169] sm:$0xff]
      %v1597 = vld [vmem:[%s418 + $0x171] sm:$0xff]
      %v1598 = vpack.c.bf16 %v1567, %v1566
      %v1599 = vpack.c.bf16 %v1569, %v1568
      %v1600 = vpack.c.bf16 %v1571, %v1570
      %v1601 = vpack.c.bf16 %v1573, %v1572
      %v1602 = vpack.c.bf16 %v1575, %v1574
      %v1603 = vpack.c.bf16 %v1577, %v1576
      %v1604 = vpack.c.bf16 %v1579, %v1578
      %v1605 = vpack.c.bf16 %v1581, %v1580
      %v1606 = vpack.c.bf16 %v1583, %v1582
      %v1607 = vpack.c.bf16 %v1585, %v1584
      %v1608 = vpack.c.bf16 %v1587, %v1586
      %v1609 = vpack.c.bf16 %v1589, %v1588
      %v1610 = vpack.c.bf16 %v1591, %v1590
      %v1611 = vpack.c.bf16 %v1593, %v1592
      %v1612 = vpack.c.bf16 %v1595, %v1594
      %v1613 = vpack.c.bf16 %v1597, %v1596
      %v1615 = vsel %vm372, %v1598, 0
      %v1618 = vsel %vm372, %v1599, 0
      %v1621 = vsel %vm372, %v1600, 0
      %v1624 = vsel %vm372, %v1601, 0
      %v1627 = vsel %vm372, %v1602, 0
      %v1630 = vsel %vm372, %v1603, 0
      %v1633 = vsel %vm372, %v1604, 0
      %v1636 = vsel %vm372, %v1605, 0
      %v1639 = vsel %vm372, %v1606, 0
      %v1642 = vsel %vm372, %v1607, 0
      %v1645 = vsel %vm372, %v1608, 0
      %v1648 = vsel %vm372, %v1609, 0
      %v1651 = vsel %vm372, %v1610, 0
      %v1654 = vsel %vm372, %v1611, 0
      %v1657 = vsel %vm372, %v1612, 0
      %v1660 = vsel %vm372, %v1613, 0
      %v1663 = vsel %vm605, %v455, 0
      %1665 = vmatprep.subr.bf16.mxu0 0
      %1666 = vmatpush1.bf16.msra.mxu0 %v1663
      %1667 = vmatprep.subr.bf16.mxu0 0
      %1668 = vmatpush1.bf16.msra.mxu0 0
      %1669 = vmatprep.subr.bf16.mxu0 0
      %1670 = vmatpush1.bf16.msra.mxu0 0
      %1671 = vmatprep.subr.bf16.mxu0 0
      %1672 = vmatpush1.bf16.msra.mxu0 0
      %1673 = vmatprep.subr.bf16.mxu0 0
      %1674 = vmatpush1.bf16.msra.mxu0 0
      %1675 = vmatprep.subr.bf16.mxu0 0
      %1676 = vmatpush1.bf16.msra.mxu0 0
      %1677 = vmatprep.subr.bf16.mxu0 0
      %1678 = vmatpush1.bf16.msra.mxu0 0
      %1679 = vmatprep.subr.bf16.mxu0 0
      %1680 = vmatpush1.bf16.msra.mxu0 0
      %1681 = vmatprep.subr.bf16.mxu0 0
      %1682 = vmatpush1.bf16.msra.mxu0 0
      %1683 = vmatprep.subr.bf16.mxu0 0
      %1684 = vmatpush1.bf16.msra.mxu0 0
      %1685 = vmatprep.subr.bf16.mxu0 0
      %1686 = vmatpush1.bf16.msra.mxu0 0
      %1687 = vmatprep.subr.bf16.mxu0 0
      %1688 = vmatpush1.bf16.msra.mxu0 0
      %1689 = vmatprep.subr.bf16.mxu0 0
      %1690 = vmatpush1.bf16.msra.mxu0 0
      %1691 = vmatprep.subr.bf16.mxu0 0
      %1692 = vmatpush1.bf16.msra.mxu0 0
      %1693 = vmatprep.subr.bf16.mxu0 0
      %1694 = vmatpush1.bf16.msra.mxu0 0
      %1695 = vmatprep.subr.bf16.mxu0 0
      %1696 = vmatpush1.bf16.msra.mxu0 0
      %1697 = vmatprep.mubr.bf16.mxu0 0
      %1698 = vmatmul.mubr.bf16.gmra.mrb[0].mxu0 %v1615
      %v1699 = vpop.f32.mrb[0].mxu0
      %v1700 = vadd.f32 0.0, %v1699
      %v1701 = vpop.f32.mrb[0].mxu0
      %v1702 = vpop.f32.mrb[0].mxu0
      %v1703 = vadd.f32 0.0, %v1702
      %v1704 = vpop.f32.mrb[0].mxu0
      %1705 = vmatprep.mubr.bf16.mxu0 0
      %1706 = vmatmul.mubr.bf16.gmra.mrb[0].mxu0 %v1618
      %v1707 = vpop.f32.mrb[0].mxu0
      %v1708 = vadd.f32 0.0, %v1707
      %v1709 = vpop.f32.mrb[0].mxu0
      %v1710 = vpop.f32.mrb[0].mxu0
      %v1711 = vadd.f32 0.0, %v1710
      %v1712 = vpop.f32.mrb[0].mxu0
      %1713 = vmatprep.mubr.bf16.mxu0 0
      %1714 = vmatmul.mubr.bf16.gmra.mrb[0].mxu0 %v1621
      %v1715 = vpop.f32.mrb[0].mxu0
      %v1716 = vadd.f32 0.0, %v1715
      %v1717 = vpop.f32.mrb[0].mxu0
      %v1718 = vpop.f32.mrb[0].mxu0
      %v1719 = vadd.f32 0.0, %v1718
      %v1720 = vpop.f32.mrb[0].mxu0
      %1721 = vmatprep.mubr.bf16.mxu0 0
      %1722 = vmatmul.mubr.bf16.gmra.mrb[0].mxu0 %v1624
      %v1723 = vpop.f32.mrb[0].mxu0
      %v1724 = vadd.f32 0.0, %v1723
      %v1725 = vpop.f32.mrb[0].mxu0
      %v1726 = vpop.f32.mrb[0].mxu0
      %v1727 = vadd.f32 0.0, %v1726
      %v1728 = vpop.f32.mrb[0].mxu0
      %1729 = vmatprep.mubr.bf16.mxu0 0
      %1730 = vmatmul.mubr.bf16.gmra.mrb[0].mxu0 %v1627
      %v1731 = vpop.f32.mrb[0].mxu0
      %v1732 = vadd.f32 0.0, %v1731
      %v1733 = vpop.f32.mrb[0].mxu0
      %v1734 = vpop.f32.mrb[0].mxu0
      %v1735 = vadd.f32 0.0, %v1734
      %v1736 = vpop.f32.mrb[0].mxu0
      %1737 = vmatprep.mubr.bf16.mxu0 0
      %1738 = vmatmul.mubr.bf16.gmra.mrb[0].mxu0 %v1630
      %v1739 = vpop.f32.mrb[0].mxu0
      %v1740 = vadd.f32 0.0, %v1739
      %v1741 = vpop.f32.mrb[0].mxu0
      %v1742 = vpop.f32.mrb[0].mxu0
      %v1743 = vadd.f32 0.0, %v1742
      %v1744 = vpop.f32.mrb[0].mxu0
      %1745 = vmatprep.mubr.bf16.mxu0 0
      %1746 = vmatmul.mubr.bf16.gmra.mrb[0].mxu0 %v1633
      %v1747 = vpop.f32.mrb[0].mxu0
      %v1748 = vadd.f32 0.0, %v1747
      %v1749 = vpop.f32.mrb[0].mxu0
      %v1750 = vpop.f32.mrb[0].mxu0
      %v1751 = vadd.f32 0.0, %v1750
      %v1752 = vpop.f32.mrb[0].mxu0
      %1753 = vmatprep.mubr.bf16.mxu0 0
      %1754 = vmatmul.mubr.bf16.gmra.mrb[0].mxu0 %v1636
      %v1755 = vpop.f32.mrb[0].mxu0
      %v1756 = vadd.f32 0.0, %v1755
      %v1757 = vpop.f32.mrb[0].mxu0
      %v1758 = vpop.f32.mrb[0].mxu0
      %v1759 = vadd.f32 0.0, %v1758
      %v1760 = vpop.f32.mrb[0].mxu0
      %1761 = vmatprep.mubr.bf16.mxu0 0
      %1762 = vmatmul.mubr.bf16.gmra.mrb[0].mxu0 %v1639
      %v1763 = vpop.f32.mrb[0].mxu0
      %v1764 = vadd.f32 0.0, %v1763
      %v1765 = vpop.f32.mrb[0].mxu0
      %v1766 = vpop.f32.mrb[0].mxu0
      %v1767 = vadd.f32 0.0, %v1766
      %v1768 = vpop.f32.mrb[0].mxu0
      %1769 = vmatprep.mubr.bf16.mxu0 0
      %1770 = vmatmul.mubr.bf16.gmra.mrb[0].mxu0 %v1642
      %v1771 = vpop.f32.mrb[0].mxu0
      %v1772 = vadd.f32 0.0, %v1771
      %v1773 = vpop.f32.mrb[0].mxu0
      %v1774 = vpop.f32.mrb[0].mxu0
      %v1775 = vadd.f32 0.0, %v1774
      %v1776 = vpop.f32.mrb[0].mxu0
      %1777 = vmatprep.mubr.bf16.mxu0 0
      %1778 = vmatmul.mubr.bf16.gmra.mrb[0].mxu0 %v1645
      %v1779 = vpop.f32.mrb[0].mxu0
      %v1780 = vadd.f32 0.0, %v1779
      %v1781 = vpop.f32.mrb[0].mxu0
      %v1782 = vpop.f32.mrb[0].mxu0
      %v1783 = vadd.f32 0.0, %v1782
      %v1784 = vpop.f32.mrb[0].mxu0
      %1785 = vmatprep.mubr.bf16.mxu0 0
      %1786 = vmatmul.mubr.bf16.gmra.mrb[0].mxu0 %v1648
      %v1787 = vpop.f32.mrb[0].mxu0
      %v1788 = vadd.f32 0.0, %v1787
      %v1789 = vpop.f32.mrb[0].mxu0
      %v1790 = vpop.f32.mrb[0].mxu0
      %v1791 = vadd.f32 0.0, %v1790
      %v1792 = vpop.f32.mrb[0].mxu0
      %1793 = vmatprep.mubr.bf16.mxu0 0
      %1794 = vmatmul.mubr.bf16.gmra.mrb[0].mxu0 %v1651
      %v1795 = vpop.f32.mrb[0].mxu0
      %v1796 = vadd.f32 0.0, %v1795
      %v1797 = vpop.f32.mrb[0].mxu0
      %v1798 = vpop.f32.mrb[0].mxu0
      %v1799 = vadd.f32 0.0, %v1798
      %v1800 = vpop.f32.mrb[0].mxu0
      %1801 = vmatprep.mubr.bf16.mxu0 0
      %1802 = vmatmul.mubr.bf16.gmra.mrb[0].mxu0 %v1654
      %v1803 = vpop.f32.mrb[0].mxu0
      %v1804 = vadd.f32 0.0, %v1803
      %v1805 = vpop.f32.mrb[0].mxu0
      %v1806 = vpop.f32.mrb[0].mxu0
      %v1807 = vadd.f32 0.0, %v1806
      %v1808 = vpop.f32.mrb[0].mxu0
      %1809 = vmatprep.mubr.bf16.mxu0 0
      %1810 = vmatmul.mubr.bf16.gmra.mrb[0].mxu0 %v1657
      %v1811 = vpop.f32.mrb[0].mxu0
      %v1812 = vadd.f32 0.0, %v1811
      %v1813 = vpop.f32.mrb[0].mxu0
      %v1814 = vpop.f32.mrb[0].mxu0
      %v1815 = vadd.f32 0.0, %v1814
      %v1816 = vpop.f32.mrb[0].mxu0
      %1817 = vmatprep.mubr.bf16.mxu0 0
      %1818 = vmatmul.mubr.bf16.gmra.mrb[0].mxu0 %v1660
      %v1819 = vpop.f32.mrb[0].mxu0
      %v1820 = vadd.f32 0.0, %v1819
      %v1821 = vpop.f32.mrb[0].mxu0
      %v1822 = vpop.f32.mrb[0].mxu0
      %v1823 = vadd.f32 0.0, %v1822
      %v1824 = vpop.f32.mrb[0].mxu0
      %1825 = vdwg.mxu0
      %v1826 = vadd.f32 %v1534, %v1700
      %v1827 = vadd.f32 %v1535, %v1703
      %v1828 = vadd.f32 %v1536, %v1708
      %v1829 = vadd.f32 %v1537, %v1711
      %v1830 = vadd.f32 %v1538, %v1716
      %v1831 = vadd.f32 %v1539, %v1719
      %v1832 = vadd.f32 %v1540, %v1724
      %v1833 = vadd.f32 %v1541, %v1727
      %v1834 = vadd.f32 %v1542, %v1732
      %v1835 = vadd.f32 %v1543, %v1735
      %v1836 = vadd.f32 %v1544, %v1740
      %v1837 = vadd.f32 %v1545, %v1743
      %v1838 = vadd.f32 %v1546, %v1748
      %v1839 = vadd.f32 %v1547, %v1751
      %v1840 = vadd.f32 %v1548, %v1756
      %v1841 = vadd.f32 %v1549, %v1759
      %v1842 = vadd.f32 %v1550, %v1764
      %v1843 = vadd.f32 %v1551, %v1767
      %v1844 = vadd.f32 %v1552, %v1772
      %v1845 = vadd.f32 %v1553, %v1775
      %v1846 = vadd.f32 %v1554, %v1780
      %v1847 = vadd.f32 %v1555, %v1783
      %v1848 = vadd.f32 %v1556, %v1788
      %v1849 = vadd.f32 %v1557, %v1791
      %v1850 = vadd.f32 %v1558, %v1796
      %v1851 = vadd.f32 %v1559, %v1799
      %v1852 = vadd.f32 %v1560, %v1804
      %v1853 = vadd.f32 %v1561, %v1807
      %v1854 = vadd.f32 %v1562, %v1812
      %v1855 = vadd.f32 %v1563, %v1815
      %v1856 = vadd.f32 %v1564, %v1820
      %v1857 = vadd.f32 %v1565, %v1823
      %v1858 = vld [vmem:[%s418 + $0x2] sm:$0xff]
      %v1859 = vld [vmem:[%s418 + $0xa] sm:$0xff]
      %v1860 = vld [vmem:[%s418 + $0x1a] sm:$0xff]
      %v1861 = vld [vmem:[%s418 + $0x22] sm:$0xff]
      %v1862 = vld [vmem:[%s418 + $0x32] sm:$0xff]
      %v1863 = vld [vmem:[%s418 + $0x3a] sm:$0xff]
      %v1864 = vld [vmem:[%s418 + $0x4a] sm:$0xff]
      %v1865 = vld [vmem:[%s418 + $0x52] sm:$0xff]
      %v1866 = vld [vmem:[%s418 + $0x62] sm:$0xff]
      %v1867 = vld [vmem:[%s418 + $0x6a] sm:$0xff]
      %v1868 = vld [vmem:[%s418 + $0x7a] sm:$0xff]
      %v1869 = vld [vmem:[%s418 + $0x82] sm:$0xff]
      %v1870 = vld [vmem:[%s418 + $0x92] sm:$0xff]
      %v1871 = vld [vmem:[%s418 + $0x9a] sm:$0xff]
      %v1872 = vld [vmem:[%s418 + $0xaa] sm:$0xff]
      %v1873 = vld [vmem:[%s418 + $0xb2] sm:$0xff]
      %v1874 = vld [vmem:[%s418 + $0xc2] sm:$0xff]
      %v1875 = vld [vmem:[%s418 + $0xca] sm:$0xff]
      %v1876 = vld [vmem:[%s418 + $0xda] sm:$0xff]
      %v1877 = vld [vmem:[%s418 + $0xe2] sm:$0xff]
      %v1878 = vld [vmem:[%s418 + $0xf2] sm:$0xff]
      %v1879 = vld [vmem:[%s418 + $0xfa] sm:$0xff]
      %v1880 = vld [vmem:[%s418 + $0x10a] sm:$0xff]
      %v1881 = vld [vmem:[%s418 + $0x112] sm:$0xff]
      %v1882 = vld [vmem:[%s418 + $0x122] sm:$0xff]
      %v1883 = vld [vmem:[%s418 + $0x12a] sm:$0xff]
      %v1884 = vld [vmem:[%s418 + $0x13a] sm:$0xff]
      %v1885 = vld [vmem:[%s418 + $0x142] sm:$0xff]
      %v1886 = vld [vmem:[%s418 + $0x152] sm:$0xff]
      %v1887 = vld [vmem:[%s418 + $0x15a] sm:$0xff]
      %v1888 = vld [vmem:[%s418 + $0x16a] sm:$0xff]
      %v1889 = vld [vmem:[%s418 + $0x172] sm:$0xff]
      %v1890 = vpack.c.bf16 %v1859, %v1858
      %v1891 = vpack.c.bf16 %v1861, %v1860
      %v1892 = vpack.c.bf16 %v1863, %v1862
      %v1893 = vpack.c.bf16 %v1865, %v1864
      %v1894 = vpack.c.bf16 %v1867, %v1866
      %v1895 = vpack.c.bf16 %v1869, %v1868
      %v1896 = vpack.c.bf16 %v1871, %v1870
      %v1897 = vpack.c.bf16 %v1873, %v1872
      %v1898 = vpack.c.bf16 %v1875, %v1874
      %v1899 = vpack.c.bf16 %v1877, %v1876
      %v1900 = vpack.c.bf16 %v1879, %v1878
      %v1901 = vpack.c.bf16 %v1881, %v1880
      %v1902 = vpack.c.bf16 %v1883, %v1882
      %v1903 = vpack.c.bf16 %v1885, %v1884
      %v1904 = vpack.c.bf16 %v1887, %v1886
      %v1905 = vpack.c.bf16 %v1889, %v1888
      %v1907 = vsel %vm372, %v1890, 0
      %v1910 = vsel %vm372, %v1891, 0
      %v1913 = vsel %vm372, %v1892, 0
      %v1916 = vsel %vm372, %v1893, 0
      %v1919 = vsel %vm372, %v1894, 0
      %v1922 = vsel %vm372, %v1895, 0
      %v1925 = vsel %vm372, %v1896, 0
      %v1928 = vsel %vm372, %v1897, 0
      %v1931 = vsel %vm372, %v1898, 0
      %v1934 = vsel %vm372, %v1899, 0
      %v1937 = vsel %vm372, %v1900, 0
      %v1940 = vsel %vm372, %v1901, 0
      %v1943 = vsel %vm372, %v1902, 0
      %v1946 = vsel %vm372, %v1903, 0
      %v1949 = vsel %vm372, %v1904, 0
      %v1952 = vsel %vm372, %v1905, 0
      %v1955 = vsel %vm605, %v456, 0
      %1957 = vmatprep.subr.bf16.mxu0 0
      %1958 = vmatpush1.bf16.msra.mxu0 %v1955
      %1959 = vmatprep.subr.bf16.mxu0 0
      %1960 = vmatpush1.bf16.msra.mxu0 0
      %1961 = vmatprep.subr.bf16.mxu0 0
      %1962 = vmatpush1.bf16.msra.mxu0 0
      %1963 = vmatprep.subr.bf16.mxu0 0
      %1964 = vmatpush1.bf16.msra.mxu0 0
      %1965 = vmatprep.subr.bf16.mxu0 0
      %1966 = vmatpush1.bf16.msra.mxu0 0
      %1967 = vmatprep.subr.bf16.mxu0 0
      %1968 = vmatpush1.bf16.msra.mxu0 0
      %1969 = vmatprep.subr.bf16.mxu0 0
      %1970 = vmatpush1.bf16.msra.mxu0 0
      %1971 = vmatprep.subr.bf16.mxu0 0
      %1972 = vmatpush1.bf16.msra.mxu0 0
      %1973 = vmatprep.subr.bf16.mxu0 0
      %1974 = vmatpush1.bf16.msra.mxu0 0
      %1975 = vmatprep.subr.bf16.mxu0 0
      %1976 = vmatpush1.bf16.msra.mxu0 0
      %1977 = vmatprep.subr.bf16.mxu0 0
      %1978 = vmatpush1.bf16.msra.mxu0 0
      %1979 = vmatprep.subr.bf16.mxu0 0
      %1980 = vmatpush1.bf16.msra.mxu0 0
      %1981 = vmatprep.subr.bf16.mxu0 0
      %1982 = vmatpush1.bf16.msra.mxu0 0
      %1983 = vmatprep.subr.bf16.mxu0 0
      %1984 = vmatpush1.bf16.msra.mxu0 0
      %1985 = vmatprep.subr.bf16.mxu0 0
      %1986 = vmatpush1.bf16.msra.mxu0 0
      %1987 = vmatprep.subr.bf16.mxu0 0
      %1988 = vmatpush1.bf16.msra.mxu0 0
      %1989 = vmatprep.mubr.bf16.mxu0 0
      %1990 = vmatmul.mubr.bf16.gmra.mrb[0].mxu0 %v1907
      %v1991 = vpop.f32.mrb[0].mxu0
      %v1992 = vadd.f32 0.0, %v1991
      %v1993 = vpop.f32.mrb[0].mxu0
      %v1994 = vpop.f32.mrb[0].mxu0
      %v1995 = vadd.f32 0.0, %v1994
      %v1996 = vpop.f32.mrb[0].mxu0
      %1997 = vmatprep.mubr.bf16.mxu0 0
      %1998 = vmatmul.mubr.bf16.gmra.mrb[0].mxu0 %v1910
      %v1999 = vpop.f32.mrb[0].mxu0
      %v2000 = vadd.f32 0.0, %v1999
      %v2001 = vpop.f32.mrb[0].mxu0
      %v2002 = vpop.f32.mrb[0].mxu0
      %v2003 = vadd.f32 0.0, %v2002
      %v2004 = vpop.f32.mrb[0].mxu0
      %2005 = vmatprep.mubr.bf16.mxu0 0
      %2006 = vmatmul.mubr.bf16.gmra.mrb[0].mxu0 %v1913
      %v2007 = vpop.f32.mrb[0].mxu0
      %v2008 = vadd.f32 0.0, %v2007
      %v2009 = vpop.f32.mrb[0].mxu0
      %v2010 = vpop.f32.mrb[0].mxu0
      %v2011 = vadd.f32 0.0, %v2010
      %v2012 = vpop.f32.mrb[0].mxu0
      %2013 = vmatprep.mubr.bf16.mxu0 0
      %2014 = vmatmul.mubr.bf16.gmra.mrb[0].mxu0 %v1916
      %v2015 = vpop.f32.mrb[0].mxu0
      %v2016 = vadd.f32 0.0, %v2015
      %v2017 = vpop.f32.mrb[0].mxu0
      %v2018 = vpop.f32.mrb[0].mxu0
      %v2019 = vadd.f32 0.0, %v2018
      %v2020 = vpop.f32.mrb[0].mxu0
      %2021 = vmatprep.mubr.bf16.mxu0 0
      %2022 = vmatmul.mubr.bf16.gmra.mrb[0].mxu0 %v1919
      %v2023 = vpop.f32.mrb[0].mxu0
      %v2024 = vadd.f32 0.0, %v2023
      %v2025 = vpop.f32.mrb[0].mxu0
      %v2026 = vpop.f32.mrb[0].mxu0
      %v2027 = vadd.f32 0.0, %v2026
      %v2028 = vpop.f32.mrb[0].mxu0
      %2029 = vmatprep.mubr.bf16.mxu0 0
      %2030 = vmatmul.mubr.bf16.gmra.mrb[0].mxu0 %v1922
      %v2031 = vpop.f32.mrb[0].mxu0
      %v2032 = vadd.f32 0.0, %v2031
      %v2033 = vpop.f32.mrb[0].mxu0
      %v2034 = vpop.f32.mrb[0].mxu0
      %v2035 = vadd.f32 0.0, %v2034
      %v2036 = vpop.f32.mrb[0].mxu0
      %2037 = vmatprep.mubr.bf16.mxu0 0
      %2038 = vmatmul.mubr.bf16.gmra.mrb[0].mxu0 %v1925
      %v2039 = vpop.f32.mrb[0].mxu0
      %v2040 = vadd.f32 0.0, %v2039
      %v2041 = vpop.f32.mrb[0].mxu0
      %v2042 = vpop.f32.mrb[0].mxu0
      %v2043 = vadd.f32 0.0, %v2042
      %v2044 = vpop.f32.mrb[0].mxu0
      %2045 = vmatprep.mubr.bf16.mxu0 0
      %2046 = vmatmul.mubr.bf16.gmra.mrb[0].mxu0 %v1928
      %v2047 = vpop.f32.mrb[0].mxu0
      %v2048 = vadd.f32 0.0, %v2047
      %v2049 = vpop.f32.mrb[0].mxu0
      %v2050 = vpop.f32.mrb[0].mxu0
      %v2051 = vadd.f32 0.0, %v2050
      %v2052 = vpop.f32.mrb[0].mxu0
      %2053 = vmatprep.mubr.bf16.mxu0 0
      %2054 = vmatmul.mubr.bf16.gmra.mrb[0].mxu0 %v1931
      %v2055 = vpop.f32.mrb[0].mxu0
      %v2056 = vadd.f32 0.0, %v2055
      %v2057 = vpop.f32.mrb[0].mxu0
      %v2058 = vpop.f32.mrb[0].mxu0
      %v2059 = vadd.f32 0.0, %v2058
      %v2060 = vpop.f32.mrb[0].mxu0
      %2061 = vmatprep.mubr.bf16.mxu0 0
      %2062 = vmatmul.mubr.bf16.gmra.mrb[0].mxu0 %v1934
      %v2063 = vpop.f32.mrb[0].mxu0
      %v2064 = vadd.f32 0.0, %v2063
      %v2065 = vpop.f32.mrb[0].mxu0
      %v2066 = vpop.f32.mrb[0].mxu0
      %v2067 = vadd.f32 0.0, %v2066
      %v2068 = vpop.f32.mrb[0].mxu0
      %2069 = vmatprep.mubr.bf16.mxu0 0
      %2070 = vmatmul.mubr.bf16.gmra.mrb[0].mxu0 %v1937
      %v2071 = vpop.f32.mrb[0].mxu0
      %v2072 = vadd.f32 0.0, %v2071
      %v2073 = vpop.f32.mrb[0].mxu0
      %v2074 = vpop.f32.mrb[0].mxu0
      %v2075 = vadd.f32 0.0, %v2074
      %v2076 = vpop.f32.mrb[0].mxu0
      %2077 = vmatprep.mubr.bf16.mxu0 0
      %2078 = vmatmul.mubr.bf16.gmra.mrb[0].mxu0 %v1940
      %v2079 = vpop.f32.mrb[0].mxu0
      %v2080 = vadd.f32 0.0, %v2079
      %v2081 = vpop.f32.mrb[0].mxu0
      %v2082 = vpop.f32.mrb[0].mxu0
      %v2083 = vadd.f32 0.0, %v2082
      %v2084 = vpop.f32.mrb[0].mxu0
      %2085 = vmatprep.mubr.bf16.mxu0 0
      %2086 = vmatmul.mubr.bf16.gmra.mrb[0].mxu0 %v1943
      %v2087 = vpop.f32.mrb[0].mxu0
      %v2088 = vadd.f32 0.0, %v2087
      %v2089 = vpop.f32.mrb[0].mxu0
      %v2090 = vpop.f32.mrb[0].mxu0
      %v2091 = vadd.f32 0.0, %v2090
      %v2092 = vpop.f32.mrb[0].mxu0
      %2093 = vmatprep.mubr.bf16.mxu0 0
      %2094 = vmatmul.mubr.bf16.gmra.mrb[0].mxu0 %v1946
      %v2095 = vpop.f32.mrb[0].mxu0
      %v2096 = vadd.f32 0.0, %v2095
      %v2097 = vpop.f32.mrb[0].mxu0
      %v2098 = vpop.f32.mrb[0].mxu0
      %v2099 = vadd.f32 0.0, %v2098
      %v2100 = vpop.f32.mrb[0].mxu0
      %2101 = vmatprep.mubr.bf16.mxu0 0
      %2102 = vmatmul.mubr.bf16.gmra.mrb[0].mxu0 %v1949
      %v2103 = vpop.f32.mrb[0].mxu0
      %v2104 = vadd.f32 0.0, %v2103
      %v2105 = vpop.f32.mrb[0].mxu0
      %v2106 = vpop.f32.mrb[0].mxu0
      %v2107 = vadd.f32 0.0, %v2106
      %v2108 = vpop.f32.mrb[0].mxu0
      %2109 = vmatprep.mubr.bf16.mxu0 0
      %2110 = vmatmul.mubr.bf16.gmra.mrb[0].mxu0 %v1952
      %v2111 = vpop.f32.mrb[0].mxu0
      %v2112 = vadd.f32 0.0, %v2111
      %v2113 = vpop.f32.mrb[0].mxu0
      %v2114 = vpop.f32.mrb[0].mxu0
      %v2115 = vadd.f32 0.0, %v2114
      %v2116 = vpop.f32.mrb[0].mxu0
      %2117 = vdwg.mxu0
      %v2118 = vadd.f32 %v1826, %v1992
      %v2119 = vadd.f32 %v1827, %v1995
      %v2120 = vadd.f32 %v1828, %v2000
      %v2121 = vadd.f32 %v1829, %v2003
      %v2122 = vadd.f32 %v1830, %v2008
      %v2123 = vadd.f32 %v1831, %v2011
      %v2124 = vadd.f32 %v1832, %v2016
      %v2125 = vadd.f32 %v1833, %v2019
      %v2126 = vadd.f32 %v1834, %v2024
      %v2127 = vadd.f32 %v1835, %v2027
      %v2128 = vadd.f32 %v1836, %v2032
      %v2129 = vadd.f32 %v1837, %v2035
      %v2130 = vadd.f32 %v1838, %v2040
      %v2131 = vadd.f32 %v1839, %v2043
      %v2132 = vadd.f32 %v1840, %v2048
      %v2133 = vadd.f32 %v1841, %v2051
      %v2134 = vadd.f32 %v1842, %v2056
      %v2135 = vadd.f32 %v1843, %v2059
      %v2136 = vadd.f32 %v1844, %v2064
      %v2137 = vadd.f32 %v1845, %v2067
      %v2138 = vadd.f32 %v1846, %v2072
      %v2139 = vadd.f32 %v1847, %v2075
      %v2140 = vadd.f32 %v1848, %v2080
      %v2141 = vadd.f32 %v1849, %v2083
      %v2142 = vadd.f32 %v1850, %v2088
      %v2143 = vadd.f32 %v1851, %v2091
      %v2144 = vadd.f32 %v1852, %v2096
      %v2145 = vadd.f32 %v1853, %v2099
      %v2146 = vadd.f32 %v1854, %v2104
      %v2147 = vadd.f32 %v1855, %v2107
      %v2148 = vadd.f32 %v1856, %v2112
      %v2149 = vadd.f32 %v1857, %v2115
      %s2150 = scalar_lea.vmem [#allocation2], 48
      %v2151 = vld [vmem:[%s2150] sm:$0xff]
      %v2152 = vld [vmem:[%s2150 + $0x8] sm:$0xff]
      %v2153 = vld [vmem:[%s2150 + $0x18] sm:$0xff]
      %v2154 = vld [vmem:[%s2150 + $0x20] sm:$0xff]
      %v2155 = vld [vmem:[%s2150 + $0x30] sm:$0xff]
      %v2156 = vld [vmem:[%s2150 + $0x38] sm:$0xff]
      %v2157 = vld [vmem:[%s2150 + $0x48] sm:$0xff]
      %v2158 = vld [vmem:[%s2150 + $0x50] sm:$0xff]
      %v2159 = vld [vmem:[%s2150 + $0x60] sm:$0xff]
      %v2160 = vld [vmem:[%s2150 + $0x68] sm:$0xff]
      %v2161 = vld [vmem:[%s2150 + $0x78] sm:$0xff]
      %v2162 = vld [vmem:[%s2150 + $0x80] sm:$0xff]
      %v2163 = vld [vmem:[%s2150 + $0x90] sm:$0xff]
      %v2164 = vld [vmem:[%s2150 + $0x98] sm:$0xff]
      %v2165 = vld [vmem:[%s2150 + $0xa8] sm:$0xff]
      %v2166 = vld [vmem:[%s2150 + $0xb0] sm:$0xff]
      %v2167 = vld [vmem:[%s2150 + $0xc0] sm:$0xff]
      %v2168 = vld [vmem:[%s2150 + $0xc8] sm:$0xff]
      %v2169 = vld [vmem:[%s2150 + $0xd8] sm:$0xff]
      %v2170 = vld [vmem:[%s2150 + $0xe0] sm:$0xff]
      %v2171 = vld [vmem:[%s2150 + $0xf0] sm:$0xff]
      %v2172 = vld [vmem:[%s2150 + $0xf8] sm:$0xff]
      %v2173 = vld [vmem:[%s2150 + $0x108] sm:$0xff]
      %v2174 = vld [vmem:[%s2150 + $0x110] sm:$0xff]
      %v2175 = vld [vmem:[%s2150 + $0x120] sm:$0xff]
      %v2176 = vld [vmem:[%s2150 + $0x128] sm:$0xff]
      %v2177 = vld [vmem:[%s2150 + $0x138] sm:$0xff]
      %v2178 = vld [vmem:[%s2150 + $0x140] sm:$0xff]
      %v2179 = vld [vmem:[%s2150 + $0x150] sm:$0xff]
      %v2180 = vld [vmem:[%s2150 + $0x158] sm:$0xff]
      %v2181 = vld [vmem:[%s2150 + $0x168] sm:$0xff]
      %v2182 = vld [vmem:[%s2150 + $0x170] sm:$0xff]
      %v2183 = vpack.c.bf16 %v2152, %v2151
      %v2184 = vpack.c.bf16 %v2154, %v2153
      %v2185 = vpack.c.bf16 %v2156, %v2155
      %v2186 = vpack.c.bf16 %v2158, %v2157
      %v2187 = vpack.c.bf16 %v2160, %v2159
      %v2188 = vpack.c.bf16 %v2162, %v2161
      %v2189 = vpack.c.bf16 %v2164, %v2163
      %v2190 = vpack.c.bf16 %v2166, %v2165
      %v2191 = vpack.c.bf16 %v2168, %v2167
      %v2192 = vpack.c.bf16 %v2170, %v2169
      %v2193 = vpack.c.bf16 %v2172, %v2171
      %v2194 = vpack.c.bf16 %v2174, %v2173
      %v2195 = vpack.c.bf16 %v2176, %v2175
      %v2196 = vpack.c.bf16 %v2178, %v2177
      %v2197 = vpack.c.bf16 %v2180, %v2179
      %v2198 = vpack.c.bf16 %v2182, %v2181
      %v2200 = vsel %vm372, %v2183, 0
      %v2203 = vsel %vm372, %v2184, 0
      %v2206 = vsel %vm372, %v2185, 0
      %v2209 = vsel %vm372, %v2186, 0
      %v2212 = vsel %vm372, %v2187, 0
      %v2215 = vsel %vm372, %v2188, 0
      %v2218 = vsel %vm372, %v2189, 0
      %v2221 = vsel %vm372, %v2190, 0
      %v2224 = vsel %vm372, %v2191, 0
      %v2227 = vsel %vm372, %v2192, 0
      %v2230 = vsel %vm372, %v2193, 0
      %v2233 = vsel %vm372, %v2194, 0
      %v2236 = vsel %vm372, %v2195, 0
      %v2239 = vsel %vm372, %v2196, 0
      %v2242 = vsel %vm372, %v2197, 0
      %v2245 = vsel %vm372, %v2198, 0
      %v2248 = vsel %vm605, %v457, 0
      %2250 = vmatprep.subr.bf16.mxu0 0
      %2251 = vmatpush1.bf16.msra.mxu0 %v2248
      %2252 = vmatprep.subr.bf16.mxu0 0
      %2253 = vmatpush1.bf16.msra.mxu0 0
      %2254 = vmatprep.subr.bf16.mxu0 0
      %2255 = vmatpush1.bf16.msra.mxu0 0
      %2256 = vmatprep.subr.bf16.mxu0 0
      %2257 = vmatpush1.bf16.msra.mxu0 0
      %2258 = vmatprep.subr.bf16.mxu0 0
      %2259 = vmatpush1.bf16.msra.mxu0 0
      %2260 = vmatprep.subr.bf16.mxu0 0
      %2261 = vmatpush1.bf16.msra.mxu0 0
      %2262 = vmatprep.subr.bf16.mxu0 0
      %2263 = vmatpush1.bf16.msra.mxu0 0
      %2264 = vmatprep.subr.bf16.mxu0 0
      %2265 = vmatpush1.bf16.msra.mxu0 0
      %2266 = vmatprep.subr.bf16.mxu0 0
      %2267 = vmatpush1.bf16.msra.mxu0 0
      %2268 = vmatprep.subr.bf16.mxu0 0
      %2269 = vmatpush1.bf16.msra.mxu0 0
      %2270 = vmatprep.subr.bf16.mxu0 0
      %2271 = vmatpush1.bf16.msra.mxu0 0
      %2272 = vmatprep.subr.bf16.mxu0 0
      %2273 = vmatpush1.bf16.msra.mxu0 0
      %2274 = vmatprep.subr.bf16.mxu0 0
      %2275 = vmatpush1.bf16.msra.mxu0 0
      %2276 = vmatprep.subr.bf16.mxu0 0
      %2277 = vmatpush1.bf16.msra.mxu0 0
      %2278 = vmatprep.subr.bf16.mxu0 0
      %2279 = vmatpush1.bf16.msra.mxu0 0
      %2280 = vmatprep.subr.bf16.mxu0 0
      %2281 = vmatpush1.bf16.msra.mxu0 0
      %2282 = vmatprep.mubr.bf16.mxu0 0
      %2283 = vmatmul.mubr.bf16.gmra.mrb[0].mxu0 %v2200
      %v2284 = vpop.f32.mrb[0].mxu0
      %v2285 = vadd.f32 0.0, %v2284
      %v2286 = vpop.f32.mrb[0].mxu0
      %v2287 = vpop.f32.mrb[0].mxu0
      %v2288 = vadd.f32 0.0, %v2287
      %v2289 = vpop.f32.mrb[0].mxu0
      %2290 = vmatprep.mubr.bf16.mxu0 0
      %2291 = vmatmul.mubr.bf16.gmra.mrb[0].mxu0 %v2203
      %v2292 = vpop.f32.mrb[0].mxu0
      %v2293 = vadd.f32 0.0, %v2292
      %v2294 = vpop.f32.mrb[0].mxu0
      %v2295 = vpop.f32.mrb[0].mxu0
      %v2296 = vadd.f32 0.0, %v2295
      %v2297 = vpop.f32.mrb[0].mxu0
      %2298 = vmatprep.mubr.bf16.mxu0 0
      %2299 = vmatmul.mubr.bf16.gmra.mrb[0].mxu0 %v2206
      %v2300 = vpop.f32.mrb[0].mxu0
      %v2301 = vadd.f32 0.0, %v2300
      %v2302 = vpop.f32.mrb[0].mxu0
      %v2303 = vpop.f32.mrb[0].mxu0
      %v2304 = vadd.f32 0.0, %v2303
      %v2305 = vpop.f32.mrb[0].mxu0
      %2306 = vmatprep.mubr.bf16.mxu0 0
      %2307 = vmatmul.mubr.bf16.gmra.mrb[0].mxu0 %v2209
      %v2308 = vpop.f32.mrb[0].mxu0
      %v2309 = vadd.f32 0.0, %v2308
      %v2310 = vpop.f32.mrb[0].mxu0
      %v2311 = vpop.f32.mrb[0].mxu0
      %v2312 = vadd.f32 0.0, %v2311
      %v2313 = vpop.f32.mrb[0].mxu0
      %2314 = vmatprep.mubr.bf16.mxu0 0
      %2315 = vmatmul.mubr.bf16.gmra.mrb[0].mxu0 %v2212
      %v2316 = vpop.f32.mrb[0].mxu0
      %v2317 = vadd.f32 0.0, %v2316
      %v2318 = vpop.f32.mrb[0].mxu0
      %v2319 = vpop.f32.mrb[0].mxu0
      %v2320 = vadd.f32 0.0, %v2319
      %v2321 = vpop.f32.mrb[0].mxu0
      %2322 = vmatprep.mubr.bf16.mxu0 0
      %2323 = vmatmul.mubr.bf16.gmra.mrb[0].mxu0 %v2215
      %v2324 = vpop.f32.mrb[0].mxu0
      %v2325 = vadd.f32 0.0, %v2324
      %v2326 = vpop.f32.mrb[0].mxu0
      %v2327 = vpop.f32.mrb[0].mxu0
      %v2328 = vadd.f32 0.0, %v2327
      %v2329 = vpop.f32.mrb[0].mxu0
      %2330 = vmatprep.mubr.bf16.mxu0 0
      %2331 = vmatmul.mubr.bf16.gmra.mrb[0].mxu0 %v2218
      %v2332 = vpop.f32.mrb[0].mxu0
      %v2333 = vadd.f32 0.0, %v2332
      %v2334 = vpop.f32.mrb[0].mxu0
      %v2335 = vpop.f32.mrb[0].mxu0
      %v2336 = vadd.f32 0.0, %v2335
      %v2337 = vpop.f32.mrb[0].mxu0
      %2338 = vmatprep.mubr.bf16.mxu0 0
      %2339 = vmatmul.mubr.bf16.gmra.mrb[0].mxu0 %v2221
      %v2340 = vpop.f32.mrb[0].mxu0
      %v2341 = vadd.f32 0.0, %v2340
      %v2342 = vpop.f32.mrb[0].mxu0
      %v2343 = vpop.f32.mrb[0].mxu0
      %v2344 = vadd.f32 0.0, %v2343
      %v2345 = vpop.f32.mrb[0].mxu0
      %2346 = vmatprep.mubr.bf16.mxu0 0
      %2347 = vmatmul.mubr.bf16.gmra.mrb[0].mxu0 %v2224
      %v2348 = vpop.f32.mrb[0].mxu0
      %v2349 = vadd.f32 0.0, %v2348
      %v2350 = vpop.f32.mrb[0].mxu0
      %v2351 = vpop.f32.mrb[0].mxu0
      %v2352 = vadd.f32 0.0, %v2351
      %v2353 = vpop.f32.mrb[0].mxu0
      %2354 = vmatprep.mubr.bf16.mxu0 0
      %2355 = vmatmul.mubr.bf16.gmra.mrb[0].mxu0 %v2227
      %v2356 = vpop.f32.mrb[0].mxu0
      %v2357 = vadd.f32 0.0, %v2356
      %v2358 = vpop.f32.mrb[0].mxu0
      %v2359 = vpop.f32.mrb[0].mxu0
      %v2360 = vadd.f32 0.0, %v2359
      %v2361 = vpop.f32.mrb[0].mxu0
      %2362 = vmatprep.mubr.bf16.mxu0 0
      %2363 = vmatmul.mubr.bf16.gmra.mrb[0].mxu0 %v2230
      %v2364 = vpop.f32.mrb[0].mxu0
      %v2365 = vadd.f32 0.0, %v2364
      %v2366 = vpop.f32.mrb[0].mxu0
      %v2367 = vpop.f32.mrb[0].mxu0
      %v2368 = vadd.f32 0.0, %v2367
      %v2369 = vpop.f32.mrb[0].mxu0
      %2370 = vmatprep.mubr.bf16.mxu0 0
      %2371 = vmatmul.mubr.bf16.gmra.mrb[0].mxu0 %v2233
      %v2372 = vpop.f32.mrb[0].mxu0
      %v2373 = vadd.f32 0.0, %v2372
      %v2374 = vpop.f32.mrb[0].mxu0
      %v2375 = vpop.f32.mrb[0].mxu0
      %v2376 = vadd.f32 0.0, %v2375
      %v2377 = vpop.f32.mrb[0].mxu0
      %2378 = vmatprep.mubr.bf16.mxu0 0
      %2379 = vmatmul.mubr.bf16.gmra.mrb[0].mxu0 %v2236
      %v2380 = vpop.f32.mrb[0].mxu0
      %v2381 = vadd.f32 0.0, %v2380
      %v2382 = vpop.f32.mrb[0].mxu0
      %v2383 = vpop.f32.mrb[0].mxu0
      %v2384 = vadd.f32 0.0, %v2383
      %v2385 = vpop.f32.mrb[0].mxu0
      %2386 = vmatprep.mubr.bf16.mxu0 0
      %2387 = vmatmul.mubr.bf16.gmra.mrb[0].mxu0 %v2239
      %v2388 = vpop.f32.mrb[0].mxu0
      %v2389 = vadd.f32 0.0, %v2388
      %v2390 = vpop.f32.mrb[0].mxu0
      %v2391 = vpop.f32.mrb[0].mxu0
      %v2392 = vadd.f32 0.0, %v2391
      %v2393 = vpop.f32.mrb[0].mxu0
      %2394 = vmatprep.mubr.bf16.mxu0 0
      %2395 = vmatmul.mubr.bf16.gmra.mrb[0].mxu0 %v2242
      %v2396 = vpop.f32.mrb[0].mxu0
      %v2397 = vadd.f32 0.0, %v2396
      %v2398 = vpop.f32.mrb[0].mxu0
      %v2399 = vpop.f32.mrb[0].mxu0
      %v2400 = vadd.f32 0.0, %v2399
      %v2401 = vpop.f32.mrb[0].mxu0
      %2402 = vmatprep.mubr.bf16.mxu0 0
      %2403 = vmatmul.mubr.bf16.gmra.mrb[0].mxu0 %v2245
      %v2404 = vpop.f32.mrb[0].mxu0
      %v2405 = vadd.f32 0.0, %v2404
      %v2406 = vpop.f32.mrb[0].mxu0
      %v2407 = vpop.f32.mrb[0].mxu0
      %v2408 = vadd.f32 0.0, %v2407
      %v2409 = vpop.f32.mrb[0].mxu0
      %2410 = vdwg.mxu0
      %v2411 = vadd.f32 %v2118, %v2285
      %v2412 = vadd.f32 %v2119, %v2288
      %v2413 = vadd.f32 %v2120, %v2293
      %v2414 = vadd.f32 %v2121, %v2296
      %v2415 = vadd.f32 %v2122, %v2301
      %v2416 = vadd.f32 %v2123, %v2304
      %v2417 = vadd.f32 %v2124, %v2309
      %v2418 = vadd.f32 %v2125, %v2312
      %v2419 = vadd.f32 %v2126, %v2317
      %v2420 = vadd.f32 %v2127, %v2320
      %v2421 = vadd.f32 %v2128, %v2325
      %v2422 = vadd.f32 %v2129, %v2328
      %v2423 = vadd.f32 %v2130, %v2333
      %v2424 = vadd.f32 %v2131, %v2336
      %v2425 = vadd.f32 %v2132, %v2341
      %v2426 = vadd.f32 %v2133, %v2344
      %v2427 = vadd.f32 %v2134, %v2349
      %v2428 = vadd.f32 %v2135, %v2352
      %v2429 = vadd.f32 %v2136, %v2357
      %v2430 = vadd.f32 %v2137, %v2360
      %v2431 = vadd.f32 %v2138, %v2365
      %v2432 = vadd.f32 %v2139, %v2368
      %v2433 = vadd.f32 %v2140, %v2373
      %v2434 = vadd.f32 %v2141, %v2376
      %v2435 = vadd.f32 %v2142, %v2381
      %v2436 = vadd.f32 %v2143, %v2384
      %v2437 = vadd.f32 %v2144, %v2389
      %v2438 = vadd.f32 %v2145, %v2392
      %v2439 = vadd.f32 %v2146, %v2397
      %v2440 = vadd.f32 %v2147, %v2400
      %v2441 = vadd.f32 %v2148, %v2405
      %v2442 = vadd.f32 %v2149, %v2408
      %v2443 = vld [vmem:[%s2150 + $0x1] sm:$0xff]
      %v2444 = vld [vmem:[%s2150 + $0x9] sm:$0xff]
      %v2445 = vld [vmem:[%s2150 + $0x19] sm:$0xff]
      %v2446 = vld [vmem:[%s2150 + $0x21] sm:$0xff]
      %v2447 = vld [vmem:[%s2150 + $0x31] sm:$0xff]
      %v2448 = vld [vmem:[%s2150 + $0x39] sm:$0xff]
      %v2449 = vld [vmem:[%s2150 + $0x49] sm:$0xff]
      %v2450 = vld [vmem:[%s2150 + $0x51] sm:$0xff]
      %v2451 = vld [vmem:[%s2150 + $0x61] sm:$0xff]
      %v2452 = vld [vmem:[%s2150 + $0x69] sm:$0xff]
      %v2453 = vld [vmem:[%s2150 + $0x79] sm:$0xff]
      %v2454 = vld [vmem:[%s2150 + $0x81] sm:$0xff]
      %v2455 = vld [vmem:[%s2150 + $0x91] sm:$0xff]
      %v2456 = vld [vmem:[%s2150 + $0x99] sm:$0xff]
      %v2457 = vld [vmem:[%s2150 + $0xa9] sm:$0xff]
      %v2458 = vld [vmem:[%s2150 + $0xb1] sm:$0xff]
      %v2459 = vld [vmem:[%s2150 + $0xc1] sm:$0xff]
      %v2460 = vld [vmem:[%s2150 + $0xc9] sm:$0xff]
      %v2461 = vld [vmem:[%s2150 + $0xd9] sm:$0xff]
      %v2462 = vld [vmem:[%s2150 + $0xe1] sm:$0xff]
      %v2463 = vld [vmem:[%s2150 + $0xf1] sm:$0xff]
      %v2464 = vld [vmem:[%s2150 + $0xf9] sm:$0xff]
      %v2465 = vld [vmem:[%s2150 + $0x109] sm:$0xff]
      %v2466 = vld [vmem:[%s2150 + $0x111] sm:$0xff]
      %v2467 = vld [vmem:[%s2150 + $0x121] sm:$0xff]
      %v2468 = vld [vmem:[%s2150 + $0x129] sm:$0xff]
      %v2469 = vld [vmem:[%s2150 + $0x139] sm:$0xff]
      %v2470 = vld [vmem:[%s2150 + $0x141] sm:$0xff]
      %v2471 = vld [vmem:[%s2150 + $0x151] sm:$0xff]
      %v2472 = vld [vmem:[%s2150 + $0x159] sm:$0xff]
      %v2473 = vld [vmem:[%s2150 + $0x169] sm:$0xff]
      %v2474 = vld [vmem:[%s2150 + $0x171] sm:$0xff]
      %v2475 = vpack.c.bf16 %v2444, %v2443
      %v2476 = vpack.c.bf16 %v2446, %v2445
      %v2477 = vpack.c.bf16 %v2448, %v2447
      %v2478 = vpack.c.bf16 %v2450, %v2449
      %v2479 = vpack.c.bf16 %v2452, %v2451
      %v2480 = vpack.c.bf16 %v2454, %v2453
      %v2481 = vpack.c.bf16 %v2456, %v2455
      %v2482 = vpack.c.bf16 %v2458, %v2457
      %v2483 = vpack.c.bf16 %v2460, %v2459
      %v2484 = vpack.c.bf16 %v2462, %v2461
      %v2485 = vpack.c.bf16 %v2464, %v2463
      %v2486 = vpack.c.bf16 %v2466, %v2465
      %v2487 = vpack.c.bf16 %v2468, %v2467
      %v2488 = vpack.c.bf16 %v2470, %v2469
      %v2489 = vpack.c.bf16 %v2472, %v2471
      %v2490 = vpack.c.bf16 %v2474, %v2473
      %v2492 = vsel %vm372, %v2475, 0
      %v2495 = vsel %vm372, %v2476, 0
      %v2498 = vsel %vm372, %v2477, 0
      %v2501 = vsel %vm372, %v2478, 0
      %v2504 = vsel %vm372, %v2479, 0
      %v2507 = vsel %vm372, %v2480, 0
      %v2510 = vsel %vm372, %v2481, 0
      %v2513 = vsel %vm372, %v2482, 0
      %v2516 = vsel %vm372, %v2483, 0
      %v2519 = vsel %vm372, %v2484, 0
      %v2522 = vsel %vm372, %v2485, 0
      %v2525 = vsel %vm372, %v2486, 0
      %v2528 = vsel %vm372, %v2487, 0
      %v2531 = vsel %vm372, %v2488, 0
      %v2534 = vsel %vm372, %v2489, 0
      %v2537 = vsel %vm372, %v2490, 0
      %v2540 = vsel %vm605, %v458, 0
      %2542 = vmatprep.subr.bf16.mxu0 0
      %2543 = vmatpush1.bf16.msra.mxu0 %v2540
      %2544 = vmatprep.subr.bf16.mxu0 0
      %2545 = vmatpush1.bf16.msra.mxu0 0
      %2546 = vmatprep.subr.bf16.mxu0 0
      %2547 = vmatpush1.bf16.msra.mxu0 0
      %2548 = vmatprep.subr.bf16.mxu0 0
      %2549 = vmatpush1.bf16.msra.mxu0 0
      %2550 = vmatprep.subr.bf16.mxu0 0
      %2551 = vmatpush1.bf16.msra.mxu0 0
      %2552 = vmatprep.subr.bf16.mxu0 0
      %2553 = vmatpush1.bf16.msra.mxu0 0
      %2554 = vmatprep.subr.bf16.mxu0 0
      %2555 = vmatpush1.bf16.msra.mxu0 0
      %2556 = vmatprep.subr.bf16.mxu0 0
      %2557 = vmatpush1.bf16.msra.mxu0 0
      %2558 = vmatprep.subr.bf16.mxu0 0
      %2559 = vmatpush1.bf16.msra.mxu0 0
      %2560 = vmatprep.subr.bf16.mxu0 0
      %2561 = vmatpush1.bf16.msra.mxu0 0
      %2562 = vmatprep.subr.bf16.mxu0 0
      %2563 = vmatpush1.bf16.msra.mxu0 0
      %2564 = vmatprep.subr.bf16.mxu0 0
      %2565 = vmatpush1.bf16.msra.mxu0 0
      %2566 = vmatprep.subr.bf16.mxu0 0
      %2567 = vmatpush1.bf16.msra.mxu0 0
      %2568 = vmatprep.subr.bf16.mxu0 0
      %2569 = vmatpush1.bf16.msra.mxu0 0
      %2570 = vmatprep.subr.bf16.mxu0 0
      %2571 = vmatpush1.bf16.msra.mxu0 0
      %2572 = vmatprep.subr.bf16.mxu0 0
      %2573 = vmatpush1.bf16.msra.mxu0 0
      %2574 = vmatprep.mubr.bf16.mxu0 0
      %2575 = vmatmul.mubr.bf16.gmra.mrb[0].mxu0 %v2492
      %v2576 = vpop.f32.mrb[0].mxu0
      %v2577 = vadd.f32 0.0, %v2576
      %v2578 = vpop.f32.mrb[0].mxu0
      %v2579 = vpop.f32.mrb[0].mxu0
      %v2580 = vadd.f32 0.0, %v2579
      %v2581 = vpop.f32.mrb[0].mxu0
      %2582 = vmatprep.mubr.bf16.mxu0 0
      %2583 = vmatmul.mubr.bf16.gmra.mrb[0].mxu0 %v2495
      %v2584 = vpop.f32.mrb[0].mxu0
      %v2585 = vadd.f32 0.0, %v2584
      %v2586 = vpop.f32.mrb[0].mxu0
      %v2587 = vpop.f32.mrb[0].mxu0
      %v2588 = vadd.f32 0.0, %v2587
      %v2589 = vpop.f32.mrb[0].mxu0
      %2590 = vmatprep.mubr.bf16.mxu0 0
      %2591 = vmatmul.mubr.bf16.gmra.mrb[0].mxu0 %v2498
      %v2592 = vpop.f32.mrb[0].mxu0
      %v2593 = vadd.f32 0.0, %v2592
      %v2594 = vpop.f32.mrb[0].mxu0
      %v2595 = vpop.f32.mrb[0].mxu0
      %v2596 = vadd.f32 0.0, %v2595
      %v2597 = vpop.f32.mrb[0].mxu0
      %2598 = vmatprep.mubr.bf16.mxu0 0
      %2599 = vmatmul.mubr.bf16.gmra.mrb[0].mxu0 %v2501
      %v2600 = vpop.f32.mrb[0].mxu0
      %v2601 = vadd.f32 0.0, %v2600
      %v2602 = vpop.f32.mrb[0].mxu0
      %v2603 = vpop.f32.mrb[0].mxu0
      %v2604 = vadd.f32 0.0, %v2603
      %v2605 = vpop.f32.mrb[0].mxu0
      %2606 = vmatprep.mubr.bf16.mxu0 0
      %2607 = vmatmul.mubr.bf16.gmra.mrb[0].mxu0 %v2504
      %v2608 = vpop.f32.mrb[0].mxu0
      %v2609 = vadd.f32 0.0, %v2608
      %v2610 = vpop.f32.mrb[0].mxu0
      %v2611 = vpop.f32.mrb[0].mxu0
      %v2612 = vadd.f32 0.0, %v2611
      %v2613 = vpop.f32.mrb[0].mxu0
      %2614 = vmatprep.mubr.bf16.mxu0 0
      %2615 = vmatmul.mubr.bf16.gmra.mrb[0].mxu0 %v2507
      %v2616 = vpop.f32.mrb[0].mxu0
      %v2617 = vadd.f32 0.0, %v2616
      %v2618 = vpop.f32.mrb[0].mxu0
      %v2619 = vpop.f32.mrb[0].mxu0
      %v2620 = vadd.f32 0.0, %v2619
      %v2621 = vpop.f32.mrb[0].mxu0
      %2622 = vmatprep.mubr.bf16.mxu0 0
      %2623 = vmatmul.mubr.bf16.gmra.mrb[0].mxu0 %v2510
      %v2624 = vpop.f32.mrb[0].mxu0
      %v2625 = vadd.f32 0.0, %v2624
      %v2626 = vpop.f32.mrb[0].mxu0
      %v2627 = vpop.f32.mrb[0].mxu0
      %v2628 = vadd.f32 0.0, %v2627
      %v2629 = vpop.f32.mrb[0].mxu0
      %2630 = vmatprep.mubr.bf16.mxu0 0
      %2631 = vmatmul.mubr.bf16.gmra.mrb[0].mxu0 %v2513
      %v2632 = vpop.f32.mrb[0].mxu0
      %v2633 = vadd.f32 0.0, %v2632
      %v2634 = vpop.f32.mrb[0].mxu0
      %v2635 = vpop.f32.mrb[0].mxu0
      %v2636 = vadd.f32 0.0, %v2635
      %v2637 = vpop.f32.mrb[0].mxu0
      %2638 = vmatprep.mubr.bf16.mxu0 0
      %2639 = vmatmul.mubr.bf16.gmra.mrb[0].mxu0 %v2516
      %v2640 = vpop.f32.mrb[0].mxu0
      %v2641 = vadd.f32 0.0, %v2640
      %v2642 = vpop.f32.mrb[0].mxu0
      %v2643 = vpop.f32.mrb[0].mxu0
      %v2644 = vadd.f32 0.0, %v2643
      %v2645 = vpop.f32.mrb[0].mxu0
      %2646 = vmatprep.mubr.bf16.mxu0 0
      %2647 = vmatmul.mubr.bf16.gmra.mrb[0].mxu0 %v2519
      %v2648 = vpop.f32.mrb[0].mxu0
      %v2649 = vadd.f32 0.0, %v2648
      %v2650 = vpop.f32.mrb[0].mxu0
      %v2651 = vpop.f32.mrb[0].mxu0
      %v2652 = vadd.f32 0.0, %v2651
      %v2653 = vpop.f32.mrb[0].mxu0
      %2654 = vmatprep.mubr.bf16.mxu0 0
      %2655 = vmatmul.mubr.bf16.gmra.mrb[0].mxu0 %v2522
      %v2656 = vpop.f32.mrb[0].mxu0
      %v2657 = vadd.f32 0.0, %v2656
      %v2658 = vpop.f32.mrb[0].mxu0
      %v2659 = vpop.f32.mrb[0].mxu0
      %v2660 = vadd.f32 0.0, %v2659
      %v2661 = vpop.f32.mrb[0].mxu0
      %2662 = vmatprep.mubr.bf16.mxu0 0
      %2663 = vmatmul.mubr.bf16.gmra.mrb[0].mxu0 %v2525
      %v2664 = vpop.f32.mrb[0].mxu0
      %v2665 = vadd.f32 0.0, %v2664
      %v2666 = vpop.f32.mrb[0].mxu0
      %v2667 = vpop.f32.mrb[0].mxu0
      %v2668 = vadd.f32 0.0, %v2667
      %v2669 = vpop.f32.mrb[0].mxu0
      %2670 = vmatprep.mubr.bf16.mxu0 0
      %2671 = vmatmul.mubr.bf16.gmra.mrb[0].mxu0 %v2528
      %v2672 = vpop.f32.mrb[0].mxu0
      %v2673 = vadd.f32 0.0, %v2672
      %v2674 = vpop.f32.mrb[0].mxu0
      %v2675 = vpop.f32.mrb[0].mxu0
      %v2676 = vadd.f32 0.0, %v2675
      %v2677 = vpop.f32.mrb[0].mxu0
      %2678 = vmatprep.mubr.bf16.mxu0 0
      %2679 = vmatmul.mubr.bf16.gmra.mrb[0].mxu0 %v2531
      %v2680 = vpop.f32.mrb[0].mxu0
      %v2681 = vadd.f32 0.0, %v2680
      %v2682 = vpop.f32.mrb[0].mxu0
      %v2683 = vpop.f32.mrb[0].mxu0
      %v2684 = vadd.f32 0.0, %v2683
      %v2685 = vpop.f32.mrb[0].mxu0
      %2686 = vmatprep.mubr.bf16.mxu0 0
      %2687 = vmatmul.mubr.bf16.gmra.mrb[0].mxu0 %v2534
      %v2688 = vpop.f32.mrb[0].mxu0
      %v2689 = vadd.f32 0.0, %v2688
      %v2690 = vpop.f32.mrb[0].mxu0
      %v2691 = vpop.f32.mrb[0].mxu0
      %v2692 = vadd.f32 0.0, %v2691
      %v2693 = vpop.f32.mrb[0].mxu0
      %2694 = vmatprep.mubr.bf16.mxu0 0
      %2695 = vmatmul.mubr.bf16.gmra.mrb[0].mxu0 %v2537
      %v2696 = vpop.f32.mrb[0].mxu0
      %v2697 = vadd.f32 0.0, %v2696
      %v2698 = vpop.f32.mrb[0].mxu0
      %v2699 = vpop.f32.mrb[0].mxu0
      %v2700 = vadd.f32 0.0, %v2699
      %v2701 = vpop.f32.mrb[0].mxu0
      %2702 = vdwg.mxu0
      %v2703 = vadd.f32 %v2411, %v2577
      %v2704 = vadd.f32 %v2412, %v2580
      %v2705 = vadd.f32 %v2413, %v2585
      %v2706 = vadd.f32 %v2414, %v2588
      %v2707 = vadd.f32 %v2415, %v2593
      %v2708 = vadd.f32 %v2416, %v2596
      %v2709 = vadd.f32 %v2417, %v2601
      %v2710 = vadd.f32 %v2418, %v2604
      %v2711 = vadd.f32 %v2419, %v2609
      %v2712 = vadd.f32 %v2420, %v2612
      %v2713 = vadd.f32 %v2421, %v2617
      %v2714 = vadd.f32 %v2422, %v2620
      %v2715 = vadd.f32 %v2423, %v2625
      %v2716 = vadd.f32 %v2424, %v2628
      %v2717 = vadd.f32 %v2425, %v2633
      %v2718 = vadd.f32 %v2426, %v2636
      %v2719 = vadd.f32 %v2427, %v2641
      %v2720 = vadd.f32 %v2428, %v2644
      %v2721 = vadd.f32 %v2429, %v2649
      %v2722 = vadd.f32 %v2430, %v2652
      %v2723 = vadd.f32 %v2431, %v2657
      %v2724 = vadd.f32 %v2432, %v2660
      %v2725 = vadd.f32 %v2433, %v2665
      %v2726 = vadd.f32 %v2434, %v2668
      %v2727 = vadd.f32 %v2435, %v2673
      %v2728 = vadd.f32 %v2436, %v2676
      %v2729 = vadd.f32 %v2437, %v2681
      %v2730 = vadd.f32 %v2438, %v2684
      %v2731 = vadd.f32 %v2439, %v2689
      %v2732 = vadd.f32 %v2440, %v2692
      %v2733 = vadd.f32 %v2441, %v2697
      %v2734 = vadd.f32 %v2442, %v2700
      %v2735 = vld [vmem:[%s2150 + $0x2] sm:$0xff]
      %v2736 = vld [vmem:[%s2150 + $0xa] sm:$0xff]
      %v2737 = vld [vmem:[%s2150 + $0x1a] sm:$0xff]
      %v2738 = vld [vmem:[%s2150 + $0x22] sm:$0xff]
      %v2739 = vld [vmem:[%s2150 + $0x32] sm:$0xff]
      %v2740 = vld [vmem:[%s2150 + $0x3a] sm:$0xff]
      %v2741 = vld [vmem:[%s2150 + $0x4a] sm:$0xff]
      %v2742 = vld [vmem:[%s2150 + $0x52] sm:$0xff]
      %v2743 = vld [vmem:[%s2150 + $0x62] sm:$0xff]
      %v2744 = vld [vmem:[%s2150 + $0x6a] sm:$0xff]
      %v2745 = vld [vmem:[%s2150 + $0x7a] sm:$0xff]
      %v2746 = vld [vmem:[%s2150 + $0x82] sm:$0xff]
      %v2747 = vld [vmem:[%s2150 + $0x92] sm:$0xff]
      %v2748 = vld [vmem:[%s2150 + $0x9a] sm:$0xff]
      %v2749 = vld [vmem:[%s2150 + $0xaa] sm:$0xff]
      %v2750 = vld [vmem:[%s2150 + $0xb2] sm:$0xff]
      %v2751 = vld [vmem:[%s2150 + $0xc2] sm:$0xff]
      %v2752 = vld [vmem:[%s2150 + $0xca] sm:$0xff]
      %v2753 = vld [vmem:[%s2150 + $0xda] sm:$0xff]
      %v2754 = vld [vmem:[%s2150 + $0xe2] sm:$0xff]
      %v2755 = vld [vmem:[%s2150 + $0xf2] sm:$0xff]
      %v2756 = vld [vmem:[%s2150 + $0xfa] sm:$0xff]
      %v2757 = vld [vmem:[%s2150 + $0x10a] sm:$0xff]
      %v2758 = vld [vmem:[%s2150 + $0x112] sm:$0xff]
      %v2759 = vld [vmem:[%s2150 + $0x122] sm:$0xff]
      %v2760 = vld [vmem:[%s2150 + $0x12a] sm:$0xff]
      %v2761 = vld [vmem:[%s2150 + $0x13a] sm:$0xff]
      %v2762 = vld [vmem:[%s2150 + $0x142] sm:$0xff]
      %v2763 = vld [vmem:[%s2150 + $0x152] sm:$0xff]
      %v2764 = vld [vmem:[%s2150 + $0x15a] sm:$0xff]
      %v2765 = vld [vmem:[%s2150 + $0x16a] sm:$0xff]
      %v2766 = vld [vmem:[%s2150 + $0x172] sm:$0xff]
      %v2767 = vpack.c.bf16 %v2736, %v2735
      %v2768 = vpack.c.bf16 %v2738, %v2737
      %v2769 = vpack.c.bf16 %v2740, %v2739
      %v2770 = vpack.c.bf16 %v2742, %v2741
      %v2771 = vpack.c.bf16 %v2744, %v2743
      %v2772 = vpack.c.bf16 %v2746, %v2745
      %v2773 = vpack.c.bf16 %v2748, %v2747
      %v2774 = vpack.c.bf16 %v2750, %v2749
      %v2775 = vpack.c.bf16 %v2752, %v2751
      %v2776 = vpack.c.bf16 %v2754, %v2753
      %v2777 = vpack.c.bf16 %v2756, %v2755
      %v2778 = vpack.c.bf16 %v2758, %v2757
      %v2779 = vpack.c.bf16 %v2760, %v2759
      %v2780 = vpack.c.bf16 %v2762, %v2761
      %v2781 = vpack.c.bf16 %v2764, %v2763
      %v2782 = vpack.c.bf16 %v2766, %v2765
      %v2784 = vsel %vm372, %v2767, 0
      %v2787 = vsel %vm372, %v2768, 0
      %v2790 = vsel %vm372, %v2769, 0
      %v2793 = vsel %vm372, %v2770, 0
      %v2796 = vsel %vm372, %v2771, 0
      %v2799 = vsel %vm372, %v2772, 0
      %v2802 = vsel %vm372, %v2773, 0
      %v2805 = vsel %vm372, %v2774, 0
      %v2808 = vsel %vm372, %v2775, 0
      %v2811 = vsel %vm372, %v2776, 0
      %v2814 = vsel %vm372, %v2777, 0
      %v2817 = vsel %vm372, %v2778, 0
      %v2820 = vsel %vm372, %v2779, 0
      %v2823 = vsel %vm372, %v2780, 0
      %v2826 = vsel %vm372, %v2781, 0
      %v2829 = vsel %vm372, %v2782, 0
      %v2832 = vsel %vm605, %v459, 0
      %2834 = vmatprep.subr.bf16.mxu0 0
      %2835 = vmatpush1.bf16.msra.mxu0 %v2832
      %2836 = vmatprep.subr.bf16.mxu0 0
      %2837 = vmatpush1.bf16.msra.mxu0 0
      %2838 = vmatprep.subr.bf16.mxu0 0
      %2839 = vmatpush1.bf16.msra.mxu0 0
      %2840 = vmatprep.subr.bf16.mxu0 0
      %2841 = vmatpush1.bf16.msra.mxu0 0
      %2842 = vmatprep.subr.bf16.mxu0 0
      %2843 = vmatpush1.bf16.msra.mxu0 0
      %2844 = vmatprep.subr.bf16.mxu0 0
      %2845 = vmatpush1.bf16.msra.mxu0 0
      %2846 = vmatprep.subr.bf16.mxu0 0
      %2847 = vmatpush1.bf16.msra.mxu0 0
      %2848 = vmatprep.subr.bf16.mxu0 0
      %2849 = vmatpush1.bf16.msra.mxu0 0
      %2850 = vmatprep.subr.bf16.mxu0 0
      %2851 = vmatpush1.bf16.msra.mxu0 0
      %2852 = vmatprep.subr.bf16.mxu0 0
      %2853 = vmatpush1.bf16.msra.mxu0 0
      %2854 = vmatprep.subr.bf16.mxu0 0
      %2855 = vmatpush1.bf16.msra.mxu0 0
      %2856 = vmatprep.subr.bf16.mxu0 0
      %2857 = vmatpush1.bf16.msra.mxu0 0
      %2858 = vmatprep.subr.bf16.mxu0 0
      %2859 = vmatpush1.bf16.msra.mxu0 0
      %2860 = vmatprep.subr.bf16.mxu0 0
      %2861 = vmatpush1.bf16.msra.mxu0 0
      %2862 = vmatprep.subr.bf16.mxu0 0
      %2863 = vmatpush1.bf16.msra.mxu0 0
      %2864 = vmatprep.subr.bf16.mxu0 0
      %2865 = vmatpush1.bf16.msra.mxu0 0
      %2866 = vmatprep.mubr.bf16.mxu0 0
      %2867 = vmatmul.mubr.bf16.gmra.mrb[0].mxu0 %v2784
      %v2868 = vpop.f32.mrb[0].mxu0
      %v2869 = vadd.f32 0.0, %v2868
      %v2870 = vpop.f32.mrb[0].mxu0
      %v2871 = vpop.f32.mrb[0].mxu0
      %v2872 = vadd.f32 0.0, %v2871
      %v2873 = vpop.f32.mrb[0].mxu0
      %2874 = vmatprep.mubr.bf16.mxu0 0
      %2875 = vmatmul.mubr.bf16.gmra.mrb[0].mxu0 %v2787
      %v2876 = vpop.f32.mrb[0].mxu0
      %v2877 = vadd.f32 0.0, %v2876
      %v2878 = vpop.f32.mrb[0].mxu0
      %v2879 = vpop.f32.mrb[0].mxu0
      %v2880 = vadd.f32 0.0, %v2879
      %v2881 = vpop.f32.mrb[0].mxu0
      %2882 = vmatprep.mubr.bf16.mxu0 0
      %2883 = vmatmul.mubr.bf16.gmra.mrb[0].mxu0 %v2790
      %v2884 = vpop.f32.mrb[0].mxu0
      %v2885 = vadd.f32 0.0, %v2884
      %v2886 = vpop.f32.mrb[0].mxu0
      %v2887 = vpop.f32.mrb[0].mxu0
      %v2888 = vadd.f32 0.0, %v2887
      %v2889 = vpop.f32.mrb[0].mxu0
      %2890 = vmatprep.mubr.bf16.mxu0 0
      %2891 = vmatmul.mubr.bf16.gmra.mrb[0].mxu0 %v2793
      %v2892 = vpop.f32.mrb[0].mxu0
      %v2893 = vadd.f32 0.0, %v2892
      %v2894 = vpop.f32.mrb[0].mxu0
      %v2895 = vpop.f32.mrb[0].mxu0
      %v2896 = vadd.f32 0.0, %v2895
      %v2897 = vpop.f32.mrb[0].mxu0
      %2898 = vmatprep.mubr.bf16.mxu0 0
      %2899 = vmatmul.mubr.bf16.gmra.mrb[0].mxu0 %v2796
      %v2900 = vpop.f32.mrb[0].mxu0
      %v2901 = vadd.f32 0.0, %v2900
      %v2902 = vpop.f32.mrb[0].mxu0
      %v2903 = vpop.f32.mrb[0].mxu0
      %v2904 = vadd.f32 0.0, %v2903
      %v2905 = vpop.f32.mrb[0].mxu0
      %2906 = vmatprep.mubr.bf16.mxu0 0
      %2907 = vmatmul.mubr.bf16.gmra.mrb[0].mxu0 %v2799
      %v2908 = vpop.f32.mrb[0].mxu0
      %v2909 = vadd.f32 0.0, %v2908
      %v2910 = vpop.f32.mrb[0].mxu0
      %v2911 = vpop.f32.mrb[0].mxu0
      %v2912 = vadd.f32 0.0, %v2911
      %v2913 = vpop.f32.mrb[0].mxu0
      %2914 = vmatprep.mubr.bf16.mxu0 0
      %2915 = vmatmul.mubr.bf16.gmra.mrb[0].mxu0 %v2802
      %v2916 = vpop.f32.mrb[0].mxu0
      %v2917 = vadd.f32 0.0, %v2916
      %v2918 = vpop.f32.mrb[0].mxu0
      %v2919 = vpop.f32.mrb[0].mxu0
      %v2920 = vadd.f32 0.0, %v2919
      %v2921 = vpop.f32.mrb[0].mxu0
      %2922 = vmatprep.mubr.bf16.mxu0 0
      %2923 = vmatmul.mubr.bf16.gmra.mrb[0].mxu0 %v2805
      %v2924 = vpop.f32.mrb[0].mxu0
      %v2925 = vadd.f32 0.0, %v2924
      %v2926 = vpop.f32.mrb[0].mxu0
      %v2927 = vpop.f32.mrb[0].mxu0
      %v2928 = vadd.f32 0.0, %v2927
      %v2929 = vpop.f32.mrb[0].mxu0
      %2930 = vmatprep.mubr.bf16.mxu0 0
      %2931 = vmatmul.mubr.bf16.gmra.mrb[0].mxu0 %v2808
      %v2932 = vpop.f32.mrb[0].mxu0
      %v2933 = vadd.f32 0.0, %v2932
      %v2934 = vpop.f32.mrb[0].mxu0
      %v2935 = vpop.f32.mrb[0].mxu0
      %v2936 = vadd.f32 0.0, %v2935
      %v2937 = vpop.f32.mrb[0].mxu0
      %2938 = vmatprep.mubr.bf16.mxu0 0
      %2939 = vmatmul.mubr.bf16.gmra.mrb[0].mxu0 %v2811
      %v2940 = vpop.f32.mrb[0].mxu0
      %v2941 = vadd.f32 0.0, %v2940
      %v2942 = vpop.f32.mrb[0].mxu0
      %v2943 = vpop.f32.mrb[0].mxu0
      %v2944 = vadd.f32 0.0, %v2943
      %v2945 = vpop.f32.mrb[0].mxu0
      %2946 = vmatprep.mubr.bf16.mxu0 0
      %2947 = vmatmul.mubr.bf16.gmra.mrb[0].mxu0 %v2814
      %v2948 = vpop.f32.mrb[0].mxu0
      %v2949 = vadd.f32 0.0, %v2948
      %v2950 = vpop.f32.mrb[0].mxu0
      %v2951 = vpop.f32.mrb[0].mxu0
      %v2952 = vadd.f32 0.0, %v2951
      %v2953 = vpop.f32.mrb[0].mxu0
      %2954 = vmatprep.mubr.bf16.mxu0 0
      %2955 = vmatmul.mubr.bf16.gmra.mrb[0].mxu0 %v2817
      %v2956 = vpop.f32.mrb[0].mxu0
      %v2957 = vadd.f32 0.0, %v2956
      %v2958 = vpop.f32.mrb[0].mxu0
      %v2959 = vpop.f32.mrb[0].mxu0
      %v2960 = vadd.f32 0.0, %v2959
      %v2961 = vpop.f32.mrb[0].mxu0
      %2962 = vmatprep.mubr.bf16.mxu0 0
      %2963 = vmatmul.mubr.bf16.gmra.mrb[0].mxu0 %v2820
      %v2964 = vpop.f32.mrb[0].mxu0
      %v2965 = vadd.f32 0.0, %v2964
      %v2966 = vpop.f32.mrb[0].mxu0
      %v2967 = vpop.f32.mrb[0].mxu0
      %v2968 = vadd.f32 0.0, %v2967
      %v2969 = vpop.f32.mrb[0].mxu0
      %2970 = vmatprep.mubr.bf16.mxu0 0
      %2971 = vmatmul.mubr.bf16.gmra.mrb[0].mxu0 %v2823
      %v2972 = vpop.f32.mrb[0].mxu0
      %v2973 = vadd.f32 0.0, %v2972
      %v2974 = vpop.f32.mrb[0].mxu0
      %v2975 = vpop.f32.mrb[0].mxu0
      %v2976 = vadd.f32 0.0, %v2975
      %v2977 = vpop.f32.mrb[0].mxu0
      %2978 = vmatprep.mubr.bf16.mxu0 0
      %2979 = vmatmul.mubr.bf16.gmra.mrb[0].mxu0 %v2826
      %v2980 = vpop.f32.mrb[0].mxu0
      %v2981 = vadd.f32 0.0, %v2980
      %v2982 = vpop.f32.mrb[0].mxu0
      %v2983 = vpop.f32.mrb[0].mxu0
      %v2984 = vadd.f32 0.0, %v2983
      %v2985 = vpop.f32.mrb[0].mxu0
      %2986 = vmatprep.mubr.bf16.mxu0 0
      %2987 = vmatmul.mubr.bf16.gmra.mrb[0].mxu0 %v2829
      %v2988 = vpop.f32.mrb[0].mxu0
      %v2989 = vadd.f32 0.0, %v2988
      %v2990 = vpop.f32.mrb[0].mxu0
      %v2991 = vpop.f32.mrb[0].mxu0
      %v2992 = vadd.f32 0.0, %v2991
      %v2993 = vpop.f32.mrb[0].mxu0
      %2994 = vdwg.mxu0
      %v2995 = vadd.f32 %v2703, %v2869
      %v2996 = vadd.f32 %v2704, %v2872
      %v2997 = vadd.f32 %v2705, %v2877
      %v2998 = vadd.f32 %v2706, %v2880
      %v2999 = vadd.f32 %v2707, %v2885
      %v3000 = vadd.f32 %v2708, %v2888
      %v3001 = vadd.f32 %v2709, %v2893
      %v3002 = vadd.f32 %v2710, %v2896
      %v3003 = vadd.f32 %v2711, %v2901
      %v3004 = vadd.f32 %v2712, %v2904
      %v3005 = vadd.f32 %v2713, %v2909
      %v3006 = vadd.f32 %v2714, %v2912
      %v3007 = vadd.f32 %v2715, %v2917
      %v3008 = vadd.f32 %v2716, %v2920
      %v3009 = vadd.f32 %v2717, %v2925
      %v3010 = vadd.f32 %v2718, %v2928
      %v3011 = vadd.f32 %v2719, %v2933
      %v3012 = vadd.f32 %v2720, %v2936
      %v3013 = vadd.f32 %v2721, %v2941
      %v3014 = vadd.f32 %v2722, %v2944
      %v3015 = vadd.f32 %v2723, %v2949
      %v3016 = vadd.f32 %v2724, %v2952
      %v3017 = vadd.f32 %v2725, %v2957
      %v3018 = vadd.f32 %v2726, %v2960
      %v3019 = vadd.f32 %v2727, %v2965
      %v3020 = vadd.f32 %v2728, %v2968
      %v3021 = vadd.f32 %v2729, %v2973
      %v3022 = vadd.f32 %v2730, %v2976
      %v3023 = vadd.f32 %v2731, %v2981
      %v3024 = vadd.f32 %v2732, %v2984
      %v3025 = vadd.f32 %v2733, %v2989
      %v3026 = vadd.f32 %v2734, %v2992
      %v3028 = vlaneseq
      %v3029 = vshrl.u32 %v3028, 7
      %v3030 = vsub.s32 0, %v3029
      %v3031 = vrot.slane %v460, %v3030
      %v3033 = vadd.f32 %v2995, %v3031
      %v3034 = vadd.f32 %v2996, %v3031
      %v3035 = vadd.f32 %v2997, %v3031
      %v3036 = vadd.f32 %v2998, %v3031
      %v3037 = vadd.f32 %v2999, %v3031
      %v3038 = vadd.f32 %v3000, %v3031
      %v3039 = vadd.f32 %v3001, %v3031
      %v3040 = vadd.f32 %v3002, %v3031
      %v3041 = vadd.f32 %v3003, %v3031
      %v3042 = vadd.f32 %v3004, %v3031
      %v3043 = vadd.f32 %v3005, %v3031
      %v3044 = vadd.f32 %v3006, %v3031
      %v3045 = vadd.f32 %v3007, %v3031
      %v3046 = vadd.f32 %v3008, %v3031
      %v3047 = vadd.f32 %v3009, %v3031
      %v3048 = vadd.f32 %v3010, %v3031
      %v3049 = vadd.f32 %v3011, %v3031
      %v3050 = vadd.f32 %v3012, %v3031
      %v3051 = vadd.f32 %v3013, %v3031
      %v3052 = vadd.f32 %v3014, %v3031
      %v3053 = vadd.f32 %v3015, %v3031
      %v3054 = vadd.f32 %v3016, %v3031
      %v3055 = vadd.f32 %v3017, %v3031
      %v3056 = vadd.f32 %v3018, %v3031
      %v3057 = vadd.f32 %v3019, %v3031
      %v3058 = vadd.f32 %v3020, %v3031
      %v3059 = vadd.f32 %v3021, %v3031
      %v3060 = vadd.f32 %v3022, %v3031
      %v3061 = vadd.f32 %v3023, %v3031
      %v3062 = vadd.f32 %v3024, %v3031
      %v3063 = vadd.f32 %v3025, %v3031
      %v3064 = vadd.f32 %v3026, %v3031
      %v3065 = vpack.c.bf16 %v3034, %v3033
      %v3066 = vpack.c.bf16 %v3036, %v3035
      %v3067 = vpack.c.bf16 %v3038, %v3037
      %v3068 = vpack.c.bf16 %v3040, %v3039
      %v3069 = vpack.c.bf16 %v3042, %v3041
      %v3070 = vpack.c.bf16 %v3044, %v3043
      %v3071 = vpack.c.bf16 %v3046, %v3045
      %v3072 = vpack.c.bf16 %v3048, %v3047
      %v3073 = vpack.c.bf16 %v3050, %v3049
      %v3074 = vpack.c.bf16 %v3052, %v3051
      %v3075 = vpack.c.bf16 %v3054, %v3053
      %v3076 = vpack.c.bf16 %v3056, %v3055
      %v3077 = vpack.c.bf16 %v3058, %v3057
      %v3078 = vpack.c.bf16 %v3060, %v3059
      %v3079 = vpack.c.bf16 %v3062, %v3061
      %v3080 = vpack.c.bf16 %v3064, %v3063
      %v3097 = vunpack.c.l.b16 %v3065
      %v3098 = vunpack.c.h.b16 %v3065
      %v3099 = vunpack.c.l.b16 %v3066
      %v3100 = vunpack.c.h.b16 %v3066
      %v3101 = vunpack.c.l.b16 %v3067
      %v3102 = vunpack.c.h.b16 %v3067
      %v3103 = vunpack.c.l.b16 %v3068
      %v3104 = vunpack.c.h.b16 %v3068
      %v3105 = vunpack.c.l.b16 %v3069
      %v3106 = vunpack.c.h.b16 %v3069
      %v3107 = vunpack.c.l.b16 %v3070
      %v3108 = vunpack.c.h.b16 %v3070
      %v3109 = vunpack.c.l.b16 %v3071
      %v3110 = vunpack.c.h.b16 %v3071
      %v3111 = vunpack.c.l.b16 %v3072
      %v3112 = vunpack.c.h.b16 %v3072
      %v3113 = vunpack.c.l.b16 %v3073
      %v3114 = vunpack.c.h.b16 %v3073
      %v3115 = vunpack.c.l.b16 %v3074
      %v3116 = vunpack.c.h.b16 %v3074
      %v3117 = vunpack.c.l.b16 %v3075
      %v3118 = vunpack.c.h.b16 %v3075
      %v3119 = vunpack.c.l.b16 %v3076
      %v3120 = vunpack.c.h.b16 %v3076
      %v3121 = vunpack.c.l.b16 %v3077
      %v3122 = vunpack.c.h.b16 %v3077
      %v3123 = vunpack.c.l.b16 %v3078
      %v3124 = vunpack.c.h.b16 %v3078
      %v3125 = vunpack.c.l.b16 %v3079
      %v3126 = vunpack.c.h.b16 %v3079
      %v3127 = vunpack.c.l.b16 %v3080
      %v3128 = vunpack.c.h.b16 %v3080
      %v3129 = vpack.c.b16 %v3097, %v3097
      %v3130 = vpack.c.b16 %v3098, %v3098
      %v3131 = vpack.c.b16 %v3099, %v3099
      %v3132 = vpack.c.b16 %v3100, %v3100
      %v3133 = vpack.c.b16 %v3101, %v3101
      %v3134 = vpack.c.b16 %v3102, %v3102
      %v3135 = vpack.c.b16 %v3103, %v3103
      %v3136 = vpack.c.b16 %v3104, %v3104
      %v3137 = vpack.c.b16 %v3105, %v3105
      %v3138 = vpack.c.b16 %v3106, %v3106
      %v3139 = vpack.c.b16 %v3107, %v3107
      %v3140 = vpack.c.b16 %v3108, %v3108
      %v3141 = vpack.c.b16 %v3109, %v3109
      %v3142 = vpack.c.b16 %v3110, %v3110
      %v3143 = vpack.c.b16 %v3111, %v3111
      %v3144 = vpack.c.b16 %v3112, %v3112
      %v3145 = vpack.c.b16 %v3113, %v3113
      %v3146 = vpack.c.b16 %v3114, %v3114
      %v3147 = vpack.c.b16 %v3115, %v3115
      %v3148 = vpack.c.b16 %v3116, %v3116
      %v3149 = vpack.c.b16 %v3117, %v3117
      %v3150 = vpack.c.b16 %v3118, %v3118
      %v3151 = vpack.c.b16 %v3119, %v3119
      %v3152 = vpack.c.b16 %v3120, %v3120
      %v3153 = vpack.c.b16 %v3121, %v3121
      %v3154 = vpack.c.b16 %v3122, %v3122
      %v3155 = vpack.c.b16 %v3123, %v3123
      %v3156 = vpack.c.b16 %v3124, %v3124
      %v3157 = vpack.c.b16 %v3125, %v3125
      %v3158 = vpack.c.b16 %v3126, %v3126
      %v3159 = vpack.c.b16 %v3127, %v3127
      %v3160 = vpack.c.b16 %v3128, %v3128
      %vm3193 = vcmask 60416
      %3194 = vst.msk [vmem:[%s325] sm:$0xf] %vm3193, %v3129
      %3195 = vst.msk [vmem:[%s325 + $0x4] sm:$0xf] %vm3193, %v3130
      %3196 = vst.msk [vmem:[%s325 + $0x8] sm:$0xf] %vm3193, %v3131
      %3197 = vst.msk [vmem:[%s325 + $0xc] sm:$0xf] %vm3193, %v3132
      %3198 = vst.msk [vmem:[%s325 + $0x10] sm:$0xf] %vm3193, %v3133
      %3199 = vst.msk [vmem:[%s325 + $0x14] sm:$0xf] %vm3193, %v3134
      %3200 = vst.msk [vmem:[%s325 + $0x18] sm:$0xf] %vm3193, %v3135
      %3201 = vst.msk [vmem:[%s325 + $0x1c] sm:$0xf] %vm3193, %v3136
      %3202 = vst.msk [vmem:[%s325 + $0x20] sm:$0xf] %vm3193, %v3137
      %3203 = vst.msk [vmem:[%s325 + $0x24] sm:$0xf] %vm3193, %v3138
      %3204 = vst.msk [vmem:[%s325 + $0x28] sm:$0xf] %vm3193, %v3139
      %3205 = vst.msk [vmem:[%s325 + $0x2c] sm:$0xf] %vm3193, %v3140
      %3206 = vst.msk [vmem:[%s325 + $0x30] sm:$0xf] %vm3193, %v3141
      %3207 = vst.msk [vmem:[%s325 + $0x34] sm:$0xf] %vm3193, %v3142
      %3208 = vst.msk [vmem:[%s325 + $0x38] sm:$0xf] %vm3193, %v3143
      %3209 = vst.msk [vmem:[%s325 + $0x3c] sm:$0xf] %vm3193, %v3144
      %3210 = vst.msk [vmem:[%s325 + $0x40] sm:$0xf] %vm3193, %v3145
      %3211 = vst.msk [vmem:[%s325 + $0x44] sm:$0xf] %vm3193, %v3146
      %3212 = vst.msk [vmem:[%s325 + $0x48] sm:$0xf] %vm3193, %v3147
      %3213 = vst.msk [vmem:[%s325 + $0x4c] sm:$0xf] %vm3193, %v3148
      %3214 = vst.msk [vmem:[%s325 + $0x50] sm:$0xf] %vm3193, %v3149
      %3215 = vst.msk [vmem:[%s325 + $0x54] sm:$0xf] %vm3193, %v3150
      %3216 = vst.msk [vmem:[%s325 + $0x58] sm:$0xf] %vm3193, %v3151
      %3217 = vst.msk [vmem:[%s325 + $0x5c] sm:$0xf] %vm3193, %v3152
      %3218 = vst.msk [vmem:[%s325 + $0x60] sm:$0xf] %vm3193, %v3153
      %3219 = vst.msk [vmem:[%s325 + $0x64] sm:$0xf] %vm3193, %v3154
      %3220 = vst.msk [vmem:[%s325 + $0x68] sm:$0xf] %vm3193, %v3155
      %3221 = vst.msk [vmem:[%s325 + $0x6c] sm:$0xf] %vm3193, %v3156
      %3222 = vst.msk [vmem:[%s325 + $0x70] sm:$0xf] %vm3193, %v3157
      %3223 = vst.msk [vmem:[%s325 + $0x74] sm:$0xf] %vm3193, %v3158
      %3224 = vst.msk [vmem:[%s325 + $0x78] sm:$0xf] %vm3193, %v3159
      %3225 = vst.msk [vmem:[%s325 + $0x7c] sm:$0xf] %vm3193, %v3160
      %vm3226 = vcmask 64512
      %v3227 = vsel %vm3226, %v3033, 0.0
      %v3228 = vsel %vm3226, %v3034, 0.0
      %v3229 = vadd.f32 %v3227, %v3228
      %v3230 = vsel %vm3226, %v3035, 0.0
      %v3231 = vadd.f32 %v3229, %v3230
      %v3232 = vsel %vm3226, %v3036, 0.0
      %v3233 = vadd.f32 %v3231, %v3232
      %v3234 = vsel %vm3226, %v3037, 0.0
      %v3235 = vadd.f32 %v3233, %v3234
      %v3236 = vsel %vm3226, %v3038, 0.0
      %v3237 = vadd.f32 %v3235, %v3236
      %v3238 = vsel %vm3226, %v3039, 0.0
      %v3239 = vadd.f32 %v3237, %v3238
      %v3240 = vsel %vm3226, %v3040, 0.0
      %v3241 = vadd.f32 %v3239, %v3240
      %v3242 = vsel %vm3226, %v3041, 0.0
      %v3243 = vadd.f32 %v3241, %v3242
      %v3244 = vsel %vm3226, %v3042, 0.0
      %v3245 = vadd.f32 %v3243, %v3244
      %v3246 = vsel %vm3226, %v3043, 0.0
      %v3247 = vadd.f32 %v3245, %v3246
      %v3248 = vsel %vm3226, %v3044, 0.0
      %v3249 = vadd.f32 %v3247, %v3248
      %v3250 = vsel %vm3226, %v3045, 0.0
      %v3251 = vadd.f32 %v3249, %v3250
      %v3252 = vsel %vm3226, %v3046, 0.0
      %v3253 = vadd.f32 %v3251, %v3252
      %v3254 = vsel %vm3226, %v3047, 0.0
      %v3255 = vadd.f32 %v3253, %v3254
      %v3256 = vsel %vm3226, %v3048, 0.0
      %v3257 = vadd.f32 %v3255, %v3256
      %v3258 = vsel %vm3226, %v3049, 0.0
      %v3259 = vadd.f32 %v3257, %v3258
      %v3260 = vsel %vm3226, %v3050, 0.0
      %v3261 = vadd.f32 %v3259, %v3260
      %v3262 = vsel %vm3226, %v3051, 0.0
      %v3263 = vadd.f32 %v3261, %v3262
      %v3264 = vsel %vm3226, %v3052, 0.0
      %v3265 = vadd.f32 %v3263, %v3264
      %v3266 = vsel %vm3226, %v3053, 0.0
      %v3267 = vadd.f32 %v3265, %v3266
      %v3268 = vsel %vm3226, %v3054, 0.0
      %v3269 = vadd.f32 %v3267, %v3268
      %v3270 = vsel %vm3226, %v3055, 0.0
      %v3271 = vadd.f32 %v3269, %v3270
      %v3272 = vsel %vm3226, %v3056, 0.0
      %v3273 = vadd.f32 %v3271, %v3272
      %v3274 = vsel %vm3226, %v3057, 0.0
      %v3275 = vadd.f32 %v3273, %v3274
      %v3276 = vsel %vm3226, %v3058, 0.0
      %v3277 = vadd.f32 %v3275, %v3276
      %v3278 = vsel %vm3226, %v3059, 0.0
      %v3279 = vadd.f32 %v3277, %v3278
      %v3280 = vsel %vm3226, %v3060, 0.0
      %v3281 = vadd.f32 %v3279, %v3280
      %v3282 = vsel %vm3226, %v3061, 0.0
      %v3283 = vadd.f32 %v3281, %v3282
      %v3284 = vsel %vm3226, %v3062, 0.0
      %v3285 = vadd.f32 %v3283, %v3284
      %v3286 = vsel %vm3226, %v3063, 0.0
      %v3287 = vadd.f32 %v3285, %v3286
      %v3288 = vsel %vm3226, %v3064, 0.0
      %v3289 = vadd.f32 %v3287, %v3288
      %v3290 = vrot.slane %v3289, 4
      %v3291 = vadd.f32 %v3289, %v3290
      %v3292 = vrot.slane %v3291, 2
      %v3293 = vadd.f32 %v3291, %v3292
      %v3294 = vrot.slane %v3293, 1
      %v3295 = vadd.f32 %v3293, %v3294
      %vm3296 = vcmask 57344
      %3297 = vst.msk [vmem:[%s334] sm:$0x1] %vm3296, %v3295
      %v3298 = vmul.f32 %v3033, %v3033
      %v3299 = vmul.f32 %v3034, %v3034
      %v3300 = vmul.f32 %v3035, %v3035
      %v3301 = vmul.f32 %v3036, %v3036
      %v3302 = vmul.f32 %v3037, %v3037
      %v3303 = vmul.f32 %v3038, %v3038
      %v3304 = vmul.f32 %v3039, %v3039
      %v3305 = vmul.f32 %v3040, %v3040
      %v3306 = vmul.f32 %v3041, %v3041
      %v3307 = vmul.f32 %v3042, %v3042
      %v3308 = vmul.f32 %v3043, %v3043
      %v3309 = vmul.f32 %v3044, %v3044
      %v3310 = vmul.f32 %v3045, %v3045
      %v3311 = vmul.f32 %v3046, %v3046
      %v3312 = vmul.f32 %v3047, %v3047
      %v3313 = vmul.f32 %v3048, %v3048
      %v3314 = vmul.f32 %v3049, %v3049
      %v3315 = vmul.f32 %v3050, %v3050
      %v3316 = vmul.f32 %v3051, %v3051
      %v3317 = vmul.f32 %v3052, %v3052
      %v3318 = vmul.f32 %v3053, %v3053
      %v3319 = vmul.f32 %v3054, %v3054
      %v3320 = vmul.f32 %v3055, %v3055
      %v3321 = vmul.f32 %v3056, %v3056
      %v3322 = vmul.f32 %v3057, %v3057
      %v3323 = vmul.f32 %v3058, %v3058
      %v3324 = vmul.f32 %v3059, %v3059
      %v3325 = vmul.f32 %v3060, %v3060
      %v3326 = vmul.f32 %v3061, %v3061
      %v3327 = vmul.f32 %v3062, %v3062
      %v3328 = vmul.f32 %v3063, %v3063
      %v3329 = vmul.f32 %v3064, %v3064
      %v3330 = vsel %vm3226, %v3298, 0.0
      %v3331 = vsel %vm3226, %v3299, 0.0
      %v3332 = vadd.f32 %v3330, %v3331
      %v3333 = vsel %vm3226, %v3300, 0.0
      %v3334 = vadd.f32 %v3332, %v3333
      %v3335 = vsel %vm3226, %v3301, 0.0
      %v3336 = vadd.f32 %v3334, %v3335
      %v3337 = vsel %vm3226, %v3302, 0.0
      %v3338 = vadd.f32 %v3336, %v3337
      %v3339 = vsel %vm3226, %v3303, 0.0
      %v3340 = vadd.f32 %v3338, %v3339
      %v3341 = vsel %vm3226, %v3304, 0.0
      %v3342 = vadd.f32 %v3340, %v3341
      %v3343 = vsel %vm3226, %v3305, 0.0
      %v3344 = vadd.f32 %v3342, %v3343
      %v3345 = vsel %vm3226, %v3306, 0.0
      %v3346 = vadd.f32 %v3344, %v3345
      %v3347 = vsel %vm3226, %v3307, 0.0
      %v3348 = vadd.f32 %v3346, %v3347
      %v3349 = vsel %vm3226, %v3308, 0.0
      %v3350 = vadd.f32 %v3348, %v3349
      %v3351 = vsel %vm3226, %v3309, 0.0
      %v3352 = vadd.f32 %v3350, %v3351
      %v3353 = vsel %vm3226, %v3310, 0.0
      %v3354 = vadd.f32 %v3352, %v3353
      %v3355 = vsel %vm3226, %v3311, 0.0
      %v3356 = vadd.f32 %v3354, %v3355
      %v3357 = vsel %vm3226, %v3312, 0.0
      %v3358 = vadd.f32 %v3356, %v3357
      %v3359 = vsel %vm3226, %v3313, 0.0
      %v3360 = vadd.f32 %v3358, %v3359
      %v3361 = vsel %vm3226, %v3314, 0.0
      %v3362 = vadd.f32 %v3360, %v3361
      %v3363 = vsel %vm3226, %v3315, 0.0
      %v3364 = vadd.f32 %v3362, %v3363
      %v3365 = vsel %vm3226, %v3316, 0.0
      %v3366 = vadd.f32 %v3364, %v3365
      %v3367 = vsel %vm3226, %v3317, 0.0
      %v3368 = vadd.f32 %v3366, %v3367
      %v3369 = vsel %vm3226, %v3318, 0.0
      %v3370 = vadd.f32 %v3368, %v3369
      %v3371 = vsel %vm3226, %v3319, 0.0
      %v3372 = vadd.f32 %v3370, %v3371
      %v3373 = vsel %vm3226, %v3320, 0.0
      %v3374 = vadd.f32 %v3372, %v3373
      %v3375 = vsel %vm3226, %v3321, 0.0
      %v3376 = vadd.f32 %v3374, %v3375
      %v3377 = vsel %vm3226, %v3322, 0.0
      %v3378 = vadd.f32 %v3376, %v3377
      %v3379 = vsel %vm3226, %v3323, 0.0
      %v3380 = vadd.f32 %v3378, %v3379
      %v3381 = vsel %vm3226, %v3324, 0.0
      %v3382 = vadd.f32 %v3380, %v3381
      %v3383 = vsel %vm3226, %v3325, 0.0
      %v3384 = vadd.f32 %v3382, %v3383
      %v3385 = vsel %vm3226, %v3326, 0.0
      %v3386 = vadd.f32 %v3384, %v3385
      %v3387 = vsel %vm3226, %v3327, 0.0
      %v3388 = vadd.f32 %v3386, %v3387
      %v3389 = vsel %vm3226, %v3328, 0.0
      %v3390 = vadd.f32 %v3388, %v3389
      %v3391 = vsel %vm3226, %v3329, 0.0
      %v3392 = vadd.f32 %v3390, %v3391
      %v3393 = vrot.slane %v3392, 4
      %v3394 = vadd.f32 %v3392, %v3393
      %v3395 = vrot.slane %v3394, 2
      %v3396 = vadd.f32 %v3394, %v3395
      %v3397 = vrot.slane %v3396, 1
      %v3398 = vadd.f32 %v3396, %v3397
      %3399 = vst.msk [vmem:[%s334 + $0x1] sm:$0x1] %vm3296, %v3398
      %v3400 = vpack.c.bf16 %v341, %v340
      %v3401 = vpack.c.bf16 %v343, %v342
      %v3402 = vpack.c.bf16 %v345, %v344
      %v3403 = vpack.c.bf16 %v347, %v346
      %v3404 = vpack.c.bf16 %v349, %v348
      %v3405 = vpack.c.bf16 %v351, %v350
      %v3406 = vpack.c.bf16 %v353, %v352
      %v3407 = vpack.c.bf16 %v355, %v354
      %v3408 = vpack.c.bf16 %v357, %v356
      %v3409 = vpack.c.bf16 %v359, %v358
      %v3410 = vpack.c.bf16 %v361, %v360
      %v3411 = vpack.c.bf16 %v363, %v362
      %v3412 = vpack.c.bf16 %v365, %v364
      %v3413 = vpack.c.bf16 %v367, %v366
      %v3414 = vpack.c.bf16 %v369, %v368
      %v3415 = vpack.c.bf16 %v371, %v370
      %v3416 = vld [vmem:[%s3] sm:$0x3]
      %v3417 = vld [vmem:[%s4] sm:$0x1]
      %v3419 = vlaneseq
      %v3420 = vshrl.u32 %v3419, 7
      %v3421 = vsub.s32 0, %v3420
      %v3422 = vrot.slane %v3417, %v3421
      %v3425 = vsel %vm372, %v3400, 0
      %v3428 = vsel %vm372, %v3401, 0
      %v3431 = vsel %vm372, %v3402, 0
      %v3434 = vsel %vm372, %v3403, 0
      %v3437 = vsel %vm372, %v3404, 0
      %v3440 = vsel %vm372, %v3405, 0
      %v3443 = vsel %vm372, %v3406, 0
      %v3446 = vsel %vm372, %v3407, 0
      %v3449 = vsel %vm372, %v3408, 0
      %v3452 = vsel %vm372, %v3409, 0
      %v3455 = vsel %vm372, %v3410, 0
      %v3458 = vsel %vm372, %v3411, 0
      %v3461 = vsel %vm372, %v3412, 0
      %v3464 = vsel %vm372, %v3413, 0
      %v3467 = vsel %vm372, %v3414, 0
      %v3470 = vsel %vm372, %v3415, 0
      %v3473 = vsel %vm605, %v3416, 0
      %3475 = vmatprep.subr.bf16.mxu0 0
      %3476 = vmatpush1.bf16.msra.mxu0 %v3473
      %3477 = vmatprep.subr.bf16.mxu0 0
      %3478 = vmatpush1.bf16.msra.mxu0 0
      %3479 = vmatprep.subr.bf16.mxu0 0
      %3480 = vmatpush1.bf16.msra.mxu0 0
      %3481 = vmatprep.subr.bf16.mxu0 0
      %3482 = vmatpush1.bf16.msra.mxu0 0
      %3483 = vmatprep.subr.bf16.mxu0 0
      %3484 = vmatpush1.bf16.msra.mxu0 0
      %3485 = vmatprep.subr.bf16.mxu0 0
      %3486 = vmatpush1.bf16.msra.mxu0 0
      %3487 = vmatprep.subr.bf16.mxu0 0
      %3488 = vmatpush1.bf16.msra.mxu0 0
      %3489 = vmatprep.subr.bf16.mxu0 0
      %3490 = vmatpush1.bf16.msra.mxu0 0
      %3491 = vmatprep.subr.bf16.mxu0 0
      %3492 = vmatpush1.bf16.msra.mxu0 0
      %3493 = vmatprep.subr.bf16.mxu0 0
      %3494 = vmatpush1.bf16.msra.mxu0 0
      %3495 = vmatprep.subr.bf16.mxu0 0
      %3496 = vmatpush1.bf16.msra.mxu0 0
      %3497 = vmatprep.subr.bf16.mxu0 0
      %3498 = vmatpush1.bf16.msra.mxu0 0
      %3499 = vmatprep.subr.bf16.mxu0 0
      %3500 = vmatpush1.bf16.msra.mxu0 0
      %3501 = vmatprep.subr.bf16.mxu0 0
      %3502 = vmatpush1.bf16.msra.mxu0 0
      %3503 = vmatprep.subr.bf16.mxu0 0
      %3504 = vmatpush1.bf16.msra.mxu0 0
      %3505 = vmatprep.subr.bf16.mxu0 0
      %3506 = vmatpush1.bf16.msra.mxu0 0
      %3507 = vmatprep.mubr.bf16.mxu0 0
      %3508 = vmatmul.mubr.bf16.gmra.mrb[0].mxu0 %v3425
      %v3509 = vpop.f32.mrb[0].mxu0
      %v3510 = vadd.f32 %v3422, %v3509
      %v3511 = vpop.f32.mrb[0].mxu0
      %v3512 = vpop.f32.mrb[0].mxu0
      %v3513 = vadd.f32 %v3422, %v3512
      %v3514 = vpop.f32.mrb[0].mxu0
      %3515 = vmatprep.mubr.bf16.mxu0 0
      %3516 = vmatmul.mubr.bf16.gmra.mrb[0].mxu0 %v3428
      %v3517 = vpop.f32.mrb[0].mxu0
      %v3518 = vadd.f32 %v3422, %v3517
      %v3519 = vpop.f32.mrb[0].mxu0
      %v3520 = vpop.f32.mrb[0].mxu0
      %v3521 = vadd.f32 %v3422, %v3520
      %v3522 = vpop.f32.mrb[0].mxu0
      %3523 = vmatprep.mubr.bf16.mxu0 0
      %3524 = vmatmul.mubr.bf16.gmra.mrb[0].mxu0 %v3431
      %v3525 = vpop.f32.mrb[0].mxu0
      %v3526 = vadd.f32 %v3422, %v3525
      %v3527 = vpop.f32.mrb[0].mxu0
      %v3528 = vpop.f32.mrb[0].mxu0
      %v3529 = vadd.f32 %v3422, %v3528
      %v3530 = vpop.f32.mrb[0].mxu0
      %3531 = vmatprep.mubr.bf16.mxu0 0
      %3532 = vmatmul.mubr.bf16.gmra.mrb[0].mxu0 %v3434
      %v3533 = vpop.f32.mrb[0].mxu0
      %v3534 = vadd.f32 %v3422, %v3533
      %v3535 = vpop.f32.mrb[0].mxu0
      %v3536 = vpop.f32.mrb[0].mxu0
      %v3537 = vadd.f32 %v3422, %v3536
      %v3538 = vpop.f32.mrb[0].mxu0
      %3539 = vmatprep.mubr.bf16.mxu0 0
      %3540 = vmatmul.mubr.bf16.gmra.mrb[0].mxu0 %v3437
      %v3541 = vpop.f32.mrb[0].mxu0
      %v3542 = vadd.f32 %v3422, %v3541
      %v3543 = vpop.f32.mrb[0].mxu0
      %v3544 = vpop.f32.mrb[0].mxu0
      %v3545 = vadd.f32 %v3422, %v3544
      %v3546 = vpop.f32.mrb[0].mxu0
      %3547 = vmatprep.mubr.bf16.mxu0 0
      %3548 = vmatmul.mubr.bf16.gmra.mrb[0].mxu0 %v3440
      %v3549 = vpop.f32.mrb[0].mxu0
      %v3550 = vadd.f32 %v3422, %v3549
      %v3551 = vpop.f32.mrb[0].mxu0
      %v3552 = vpop.f32.mrb[0].mxu0
      %v3553 = vadd.f32 %v3422, %v3552
      %v3554 = vpop.f32.mrb[0].mxu0
      %3555 = vmatprep.mubr.bf16.mxu0 0
      %3556 = vmatmul.mubr.bf16.gmra.mrb[0].mxu0 %v3443
      %v3557 = vpop.f32.mrb[0].mxu0
      %v3558 = vadd.f32 %v3422, %v3557
      %v3559 = vpop.f32.mrb[0].mxu0
      %v3560 = vpop.f32.mrb[0].mxu0
      %v3561 = vadd.f32 %v3422, %v3560
      %v3562 = vpop.f32.mrb[0].mxu0
      %3563 = vmatprep.mubr.bf16.mxu0 0
      %3564 = vmatmul.mubr.bf16.gmra.mrb[0].mxu0 %v3446
      %v3565 = vpop.f32.mrb[0].mxu0
      %v3566 = vadd.f32 %v3422, %v3565
      %v3567 = vpop.f32.mrb[0].mxu0
      %v3568 = vpop.f32.mrb[0].mxu0
      %v3569 = vadd.f32 %v3422, %v3568
      %v3570 = vpop.f32.mrb[0].mxu0
      %3571 = vmatprep.mubr.bf16.mxu0 0
      %3572 = vmatmul.mubr.bf16.gmra.mrb[0].mxu0 %v3449
      %v3573 = vpop.f32.mrb[0].mxu0
      %v3574 = vadd.f32 %v3422, %v3573
      %v3575 = vpop.f32.mrb[0].mxu0
      %v3576 = vpop.f32.mrb[0].mxu0
      %v3577 = vadd.f32 %v3422, %v3576
      %v3578 = vpop.f32.mrb[0].mxu0
      %3579 = vmatprep.mubr.bf16.mxu0 0
      %3580 = vmatmul.mubr.bf16.gmra.mrb[0].mxu0 %v3452
      %v3581 = vpop.f32.mrb[0].mxu0
      %v3582 = vadd.f32 %v3422, %v3581
      %v3583 = vpop.f32.mrb[0].mxu0
      %v3584 = vpop.f32.mrb[0].mxu0
      %v3585 = vadd.f32 %v3422, %v3584
      %v3586 = vpop.f32.mrb[0].mxu0
      %3587 = vmatprep.mubr.bf16.mxu0 0
      %3588 = vmatmul.mubr.bf16.gmra.mrb[0].mxu0 %v3455
      %v3589 = vpop.f32.mrb[0].mxu0
      %v3590 = vadd.f32 %v3422, %v3589
      %v3591 = vpop.f32.mrb[0].mxu0
      %v3592 = vpop.f32.mrb[0].mxu0
      %v3593 = vadd.f32 %v3422, %v3592
      %v3594 = vpop.f32.mrb[0].mxu0
      %3595 = vmatprep.mubr.bf16.mxu0 0
      %3596 = vmatmul.mubr.bf16.gmra.mrb[0].mxu0 %v3458
      %v3597 = vpop.f32.mrb[0].mxu0
      %v3598 = vadd.f32 %v3422, %v3597
      %v3599 = vpop.f32.mrb[0].mxu0
      %v3600 = vpop.f32.mrb[0].mxu0
      %v3601 = vadd.f32 %v3422, %v3600
      %v3602 = vpop.f32.mrb[0].mxu0
      %3603 = vmatprep.mubr.bf16.mxu0 0
      %3604 = vmatmul.mubr.bf16.gmra.mrb[0].mxu0 %v3461
      %v3605 = vpop.f32.mrb[0].mxu0
      %v3606 = vadd.f32 %v3422, %v3605
      %v3607 = vpop.f32.mrb[0].mxu0
      %v3608 = vpop.f32.mrb[0].mxu0
      %v3609 = vadd.f32 %v3422, %v3608
      %v3610 = vpop.f32.mrb[0].mxu0
      %3611 = vmatprep.mubr.bf16.mxu0 0
      %3612 = vmatmul.mubr.bf16.gmra.mrb[0].mxu0 %v3464
      %v3613 = vpop.f32.mrb[0].mxu0
      %v3614 = vadd.f32 %v3422, %v3613
      %v3615 = vpop.f32.mrb[0].mxu0
      %v3616 = vpop.f32.mrb[0].mxu0
      %v3617 = vadd.f32 %v3422, %v3616
      %v3618 = vpop.f32.mrb[0].mxu0
      %3619 = vmatprep.mubr.bf16.mxu0 0
      %3620 = vmatmul.mubr.bf16.gmra.mrb[0].mxu0 %v3467
      %v3621 = vpop.f32.mrb[0].mxu0
      %v3622 = vadd.f32 %v3422, %v3621
      %v3623 = vpop.f32.mrb[0].mxu0
      %v3624 = vpop.f32.mrb[0].mxu0
      %v3625 = vadd.f32 %v3422, %v3624
      %v3626 = vpop.f32.mrb[0].mxu0
      %3627 = vmatprep.mubr.bf16.mxu0 0
      %3628 = vmatmul.mubr.bf16.gmra.mrb[0].mxu0 %v3470
      %v3629 = vpop.f32.mrb[0].mxu0
      %v3630 = vadd.f32 %v3422, %v3629
      %v3631 = vpop.f32.mrb[0].mxu0
      %v3632 = vpop.f32.mrb[0].mxu0
      %v3633 = vadd.f32 %v3422, %v3632
      %v3634 = vpop.f32.mrb[0].mxu0
      %3635 = vdwg.mxu0
      %v3636 = vpack.c.bf16 %v3513, %v3510
      %v3637 = vpack.c.bf16 %v3521, %v3518
      %v3638 = vpack.c.bf16 %v3529, %v3526
      %v3639 = vpack.c.bf16 %v3537, %v3534
      %v3640 = vpack.c.bf16 %v3545, %v3542
      %v3641 = vpack.c.bf16 %v3553, %v3550
      %v3642 = vpack.c.bf16 %v3561, %v3558
      %v3643 = vpack.c.bf16 %v3569, %v3566
      %v3644 = vpack.c.bf16 %v3577, %v3574
      %v3645 = vpack.c.bf16 %v3585, %v3582
      %v3646 = vpack.c.bf16 %v3593, %v3590
      %v3647 = vpack.c.bf16 %v3601, %v3598
      %v3648 = vpack.c.bf16 %v3609, %v3606
      %v3649 = vpack.c.bf16 %v3617, %v3614
      %v3650 = vpack.c.bf16 %v3625, %v3622
      %v3651 = vpack.c.bf16 %v3633, %v3630
      %v3668 = vunpack.c.l.b16 %v3636
      %v3669 = vunpack.c.h.b16 %v3636
      %v3670 = vunpack.c.l.b16 %v3637
      %v3671 = vunpack.c.h.b16 %v3637
      %v3672 = vunpack.c.l.b16 %v3638
      %v3673 = vunpack.c.h.b16 %v3638
      %v3674 = vunpack.c.l.b16 %v3639
      %v3675 = vunpack.c.h.b16 %v3639
      %v3676 = vunpack.c.l.b16 %v3640
      %v3677 = vunpack.c.h.b16 %v3640
      %v3678 = vunpack.c.l.b16 %v3641
      %v3679 = vunpack.c.h.b16 %v3641
      %v3680 = vunpack.c.l.b16 %v3642
      %v3681 = vunpack.c.h.b16 %v3642
      %v3682 = vunpack.c.l.b16 %v3643
      %v3683 = vunpack.c.h.b16 %v3643
      %v3684 = vunpack.c.l.b16 %v3644
      %v3685 = vunpack.c.h.b16 %v3644
      %v3686 = vunpack.c.l.b16 %v3645
      %v3687 = vunpack.c.h.b16 %v3645
      %v3688 = vunpack.c.l.b16 %v3646
      %v3689 = vunpack.c.h.b16 %v3646
      %v3690 = vunpack.c.l.b16 %v3647
      %v3691 = vunpack.c.h.b16 %v3647
      %v3692 = vunpack.c.l.b16 %v3648
      %v3693 = vunpack.c.h.b16 %v3648
      %v3694 = vunpack.c.l.b16 %v3649
      %v3695 = vunpack.c.h.b16 %v3649
      %v3696 = vunpack.c.l.b16 %v3650
      %v3697 = vunpack.c.h.b16 %v3650
      %v3698 = vunpack.c.l.b16 %v3651
      %v3699 = vunpack.c.h.b16 %v3651
      %v3700 = vpack.c.b16 %v3668, %v3668
      %v3701 = vpack.c.b16 %v3669, %v3669
      %v3702 = vpack.c.b16 %v3670, %v3670
      %v3703 = vpack.c.b16 %v3671, %v3671
      %v3704 = vpack.c.b16 %v3672, %v3672
      %v3705 = vpack.c.b16 %v3673, %v3673
      %v3706 = vpack.c.b16 %v3674, %v3674
      %v3707 = vpack.c.b16 %v3675, %v3675
      %v3708 = vpack.c.b16 %v3676, %v3676
      %v3709 = vpack.c.b16 %v3677, %v3677
      %v3710 = vpack.c.b16 %v3678, %v3678
      %v3711 = vpack.c.b16 %v3679, %v3679
      %v3712 = vpack.c.b16 %v3680, %v3680
      %v3713 = vpack.c.b16 %v3681, %v3681
      %v3714 = vpack.c.b16 %v3682, %v3682
      %v3715 = vpack.c.b16 %v3683, %v3683
      %v3716 = vpack.c.b16 %v3684, %v3684
      %v3717 = vpack.c.b16 %v3685, %v3685
      %v3718 = vpack.c.b16 %v3686, %v3686
      %v3719 = vpack.c.b16 %v3687, %v3687
      %v3720 = vpack.c.b16 %v3688, %v3688
      %v3721 = vpack.c.b16 %v3689, %v3689
      %v3722 = vpack.c.b16 %v3690, %v3690
      %v3723 = vpack.c.b16 %v3691, %v3691
      %v3724 = vpack.c.b16 %v3692, %v3692
      %v3725 = vpack.c.b16 %v3693, %v3693
      %v3726 = vpack.c.b16 %v3694, %v3694
      %v3727 = vpack.c.b16 %v3695, %v3695
      %v3728 = vpack.c.b16 %v3696, %v3696
      %v3729 = vpack.c.b16 %v3697, %v3697
      %v3730 = vpack.c.b16 %v3698, %v3698
      %v3731 = vpack.c.b16 %v3699, %v3699
      %3764 = vst.msk [vmem:[%s330] sm:$0xf] %vm3193, %v3700
      %3765 = vst.msk [vmem:[%s330 + $0x4] sm:$0xf] %vm3193, %v3701
      %3766 = vst.msk [vmem:[%s330 + $0x8] sm:$0xf] %vm3193, %v3702
      %3767 = vst.msk [vmem:[%s330 + $0xc] sm:$0xf] %vm3193, %v3703
      %3768 = vst.msk [vmem:[%s330 + $0x10] sm:$0xf] %vm3193, %v3704
      %3769 = vst.msk [vmem:[%s330 + $0x14] sm:$0xf] %vm3193, %v3705
      %3770 = vst.msk [vmem:[%s330 + $0x18] sm:$0xf] %vm3193, %v3706
      %3771 = vst.msk [vmem:[%s330 + $0x1c] sm:$0xf] %vm3193, %v3707
      %3772 = vst.msk [vmem:[%s330 + $0x20] sm:$0xf] %vm3193, %v3708
      %3773 = vst.msk [vmem:[%s330 + $0x24] sm:$0xf] %vm3193, %v3709
      %3774 = vst.msk [vmem:[%s330 + $0x28] sm:$0xf] %vm3193, %v3710
      %3775 = vst.msk [vmem:[%s330 + $0x2c] sm:$0xf] %vm3193, %v3711
      %3776 = vst.msk [vmem:[%s330 + $0x30] sm:$0xf] %vm3193, %v3712
      %3777 = vst.msk [vmem:[%s330 + $0x34] sm:$0xf] %vm3193, %v3713
      %3778 = vst.msk [vmem:[%s330 + $0x38] sm:$0xf] %vm3193, %v3714
      %3779 = vst.msk [vmem:[%s330 + $0x3c] sm:$0xf] %vm3193, %v3715
      %3780 = vst.msk [vmem:[%s330 + $0x40] sm:$0xf] %vm3193, %v3716
      %3781 = vst.msk [vmem:[%s330 + $0x44] sm:$0xf] %vm3193, %v3717
      %3782 = vst.msk [vmem:[%s330 + $0x48] sm:$0xf] %vm3193, %v3718
      %3783 = vst.msk [vmem:[%s330 + $0x4c] sm:$0xf] %vm3193, %v3719
      %3784 = vst.msk [vmem:[%s330 + $0x50] sm:$0xf] %vm3193, %v3720
      %3785 = vst.msk [vmem:[%s330 + $0x54] sm:$0xf] %vm3193, %v3721
      %3786 = vst.msk [vmem:[%s330 + $0x58] sm:$0xf] %vm3193, %v3722
      %3787 = vst.msk [vmem:[%s330 + $0x5c] sm:$0xf] %vm3193, %v3723
      %3788 = vst.msk [vmem:[%s330 + $0x60] sm:$0xf] %vm3193, %v3724
      %3789 = vst.msk [vmem:[%s330 + $0x64] sm:$0xf] %vm3193, %v3725
      %3790 = vst.msk [vmem:[%s330 + $0x68] sm:$0xf] %vm3193, %v3726
      %3791 = vst.msk [vmem:[%s330 + $0x6c] sm:$0xf] %vm3193, %v3727
      %3792 = vst.msk [vmem:[%s330 + $0x70] sm:$0xf] %vm3193, %v3728
      %3793 = vst.msk [vmem:[%s330 + $0x74] sm:$0xf] %vm3193, %v3729
      %3794 = vst.msk [vmem:[%s330 + $0x78] sm:$0xf] %vm3193, %v3730
      %3795 = vst.msk [vmem:[%s330 + $0x7c] sm:$0xf] %vm3193, %v3731
      %v3796 = vsel %vm3226, %v3510, 0.0
      %v3797 = vsel %vm3226, %v3513, 0.0
      %v3798 = vadd.f32 %v3796, %v3797
      %v3799 = vsel %vm3226, %v3518, 0.0
      %v3800 = vadd.f32 %v3798, %v3799
      %v3801 = vsel %vm3226, %v3521, 0.0
      %v3802 = vadd.f32 %v3800, %v3801
      %v3803 = vsel %vm3226, %v3526, 0.0
      %v3804 = vadd.f32 %v3802, %v3803
      %v3805 = vsel %vm3226, %v3529, 0.0
      %v3806 = vadd.f32 %v3804, %v3805
      %v3807 = vsel %vm3226, %v3534, 0.0
      %v3808 = vadd.f32 %v3806, %v3807
      %v3809 = vsel %vm3226, %v3537, 0.0
      %v3810 = vadd.f32 %v3808, %v3809
      %v3811 = vsel %vm3226, %v3542, 0.0
      %v3812 = vadd.f32 %v3810, %v3811
      %v3813 = vsel %vm3226, %v3545, 0.0
      %v3814 = vadd.f32 %v3812, %v3813
      %v3815 = vsel %vm3226, %v3550, 0.0
      %v3816 = vadd.f32 %v3814, %v3815
      %v3817 = vsel %vm3226, %v3553, 0.0
      %v3818 = vadd.f32 %v3816, %v3817
      %v3819 = vsel %vm3226, %v3558, 0.0
      %v3820 = vadd.f32 %v3818, %v3819
      %v3821 = vsel %vm3226, %v3561, 0.0
      %v3822 = vadd.f32 %v3820, %v3821
      %v3823 = vsel %vm3226, %v3566, 0.0
      %v3824 = vadd.f32 %v3822, %v3823
      %v3825 = vsel %vm3226, %v3569, 0.0
      %v3826 = vadd.f32 %v3824, %v3825
      %v3827 = vsel %vm3226, %v3574, 0.0
      %v3828 = vadd.f32 %v3826, %v3827
      %v3829 = vsel %vm3226, %v3577, 0.0
      %v3830 = vadd.f32 %v3828, %v3829
      %v3831 = vsel %vm3226, %v3582, 0.0
      %v3832 = vadd.f32 %v3830, %v3831
      %v3833 = vsel %vm3226, %v3585, 0.0
      %v3834 = vadd.f32 %v3832, %v3833
      %v3835 = vsel %vm3226, %v3590, 0.0
      %v3836 = vadd.f32 %v3834, %v3835
      %v3837 = vsel %vm3226, %v3593, 0.0
      %v3838 = vadd.f32 %v3836, %v3837
      %v3839 = vsel %vm3226, %v3598, 0.0
      %v3840 = vadd.f32 %v3838, %v3839
      %v3841 = vsel %vm3226, %v3601, 0.0
      %v3842 = vadd.f32 %v3840, %v3841
      %v3843 = vsel %vm3226, %v3606, 0.0
      %v3844 = vadd.f32 %v3842, %v3843
      %v3845 = vsel %vm3226, %v3609, 0.0
      %v3846 = vadd.f32 %v3844, %v3845
      %v3847 = vsel %vm3226, %v3614, 0.0
      %v3848 = vadd.f32 %v3846, %v3847
      %v3849 = vsel %vm3226, %v3617, 0.0
      %v3850 = vadd.f32 %v3848, %v3849
      %v3851 = vsel %vm3226, %v3622, 0.0
      %v3852 = vadd.f32 %v3850, %v3851
      %v3853 = vsel %vm3226, %v3625, 0.0
      %v3854 = vadd.f32 %v3852, %v3853
      %v3855 = vsel %vm3226, %v3630, 0.0
      %v3856 = vadd.f32 %v3854, %v3855
      %v3857 = vsel %vm3226, %v3633, 0.0
      %v3858 = vadd.f32 %v3856, %v3857
      %v3859 = vrot.slane %v3858, 4
      %v3860 = vadd.f32 %v3858, %v3859
      %v3861 = vrot.slane %v3860, 2
      %v3862 = vadd.f32 %v3860, %v3861
      %v3863 = vrot.slane %v3862, 1
      %v3864 = vadd.f32 %v3862, %v3863
      %3865 = vst.msk [vmem:[%s338] sm:$0x1] %vm3296, %v3864
      %v3866 = vmul.f32 %v3510, %v3510
      %v3867 = vmul.f32 %v3513, %v3513
      %v3868 = vmul.f32 %v3518, %v3518
      %v3869 = vmul.f32 %v3521, %v3521
      %v3870 = vmul.f32 %v3526, %v3526
      %v3871 = vmul.f32 %v3529, %v3529
      %v3872 = vmul.f32 %v3534, %v3534
      %v3873 = vmul.f32 %v3537, %v3537
      %v3874 = vmul.f32 %v3542, %v3542
      %v3875 = vmul.f32 %v3545, %v3545
      %v3876 = vmul.f32 %v3550, %v3550
      %v3877 = vmul.f32 %v3553, %v3553
      %v3878 = vmul.f32 %v3558, %v3558
      %v3879 = vmul.f32 %v3561, %v3561
      %v3880 = vmul.f32 %v3566, %v3566
      %v3881 = vmul.f32 %v3569, %v3569
      %v3882 = vmul.f32 %v3574, %v3574
      %v3883 = vmul.f32 %v3577, %v3577
      %v3884 = vmul.f32 %v3582, %v3582
      %v3885 = vmul.f32 %v3585, %v3585
      %v3886 = vmul.f32 %v3590, %v3590
      %v3887 = vmul.f32 %v3593, %v3593
      %v3888 = vmul.f32 %v3598, %v3598
      %v3889 = vmul.f32 %v3601, %v3601
      %v3890 = vmul.f32 %v3606, %v3606
      %v3891 = vmul.f32 %v3609, %v3609
      %v3892 = vmul.f32 %v3614, %v3614
      %v3893 = vmul.f32 %v3617, %v3617
      %v3894 = vmul.f32 %v3622, %v3622
      %v3895 = vmul.f32 %v3625, %v3625
      %v3896 = vmul.f32 %v3630, %v3630
      %v3897 = vmul.f32 %v3633, %v3633
      %v3898 = vsel %vm3226, %v3866, 0.0
      %v3899 = vsel %vm3226, %v3867, 0.0
      %v3900 = vadd.f32 %v3898, %v3899
      %v3901 = vsel %vm3226, %v3868, 0.0
      %v3902 = vadd.f32 %v3900, %v3901
      %v3903 = vsel %vm3226, %v3869, 0.0
      %v3904 = vadd.f32 %v3902, %v3903
      %v3905 = vsel %vm3226, %v3870, 0.0
      %v3906 = vadd.f32 %v3904, %v3905
      %v3907 = vsel %vm3226, %v3871, 0.0
      %v3908 = vadd.f32 %v3906, %v3907
      %v3909 = vsel %vm3226, %v3872, 0.0
      %v3910 = vadd.f32 %v3908, %v3909
      %v3911 = vsel %vm3226, %v3873, 0.0
      %v3912 = vadd.f32 %v3910, %v3911
      %v3913 = vsel %vm3226, %v3874, 0.0
      %v3914 = vadd.f32 %v3912, %v3913
      %v3915 = vsel %vm3226, %v3875, 0.0
      %v3916 = vadd.f32 %v3914, %v3915
      %v3917 = vsel %vm3226, %v3876, 0.0
      %v3918 = vadd.f32 %v3916, %v3917
      %v3919 = vsel %vm3226, %v3877, 0.0
      %v3920 = vadd.f32 %v3918, %v3919
      %v3921 = vsel %vm3226, %v3878, 0.0
      %v3922 = vadd.f32 %v3920, %v3921
      %v3923 = vsel %vm3226, %v3879, 0.0
      %v3924 = vadd.f32 %v3922, %v3923
      %v3925 = vsel %vm3226, %v3880, 0.0
      %v3926 = vadd.f32 %v3924, %v3925
      %v3927 = vsel %vm3226, %v3881, 0.0
      %v3928 = vadd.f32 %v3926, %v3927
      %v3929 = vsel %vm3226, %v3882, 0.0
      %v3930 = vadd.f32 %v3928, %v3929
      %v3931 = vsel %vm3226, %v3883, 0.0
      %v3932 = vadd.f32 %v3930, %v3931
      %v3933 = vsel %vm3226, %v3884, 0.0
      %v3934 = vadd.f32 %v3932, %v3933
      %v3935 = vsel %vm3226, %v3885, 0.0
      %v3936 = vadd.f32 %v3934, %v3935
      %v3937 = vsel %vm3226, %v3886, 0.0
      %v3938 = vadd.f32 %v3936, %v3937
      %v3939 = vsel %vm3226, %v3887, 0.0
      %v3940 = vadd.f32 %v3938, %v3939
      %v3941 = vsel %vm3226, %v3888, 0.0
      %v3942 = vadd.f32 %v3940, %v3941
      %v3943 = vsel %vm3226, %v3889, 0.0
      %v3944 = vadd.f32 %v3942, %v3943
      %v3945 = vsel %vm3226, %v3890, 0.0
      %v3946 = vadd.f32 %v3944, %v3945
      %v3947 = vsel %vm3226, %v3891, 0.0
      %v3948 = vadd.f32 %v3946, %v3947
      %v3949 = vsel %vm3226, %v3892, 0.0
      %v3950 = vadd.f32 %v3948, %v3949
      %v3951 = vsel %vm3226, %v3893, 0.0
      %v3952 = vadd.f32 %v3950, %v3951
      %v3953 = vsel %vm3226, %v3894, 0.0
      %v3954 = vadd.f32 %v3952, %v3953
      %v3955 = vsel %vm3226, %v3895, 0.0
      %v3956 = vadd.f32 %v3954, %v3955
      %v3957 = vsel %vm3226, %v3896, 0.0
      %v3958 = vadd.f32 %v3956, %v3957
      %v3959 = vsel %vm3226, %v3897, 0.0
      %v3960 = vadd.f32 %v3958, %v3959
      %v3961 = vrot.slane %v3960, 4
      %v3962 = vadd.f32 %v3960, %v3961
      %v3963 = vrot.slane %v3962, 2
      %v3964 = vadd.f32 %v3962, %v3963
      %v3965 = vrot.slane %v3964, 1
      %v3966 = vadd.f32 %v3964, %v3965
      %3967 = vst.msk [vmem:[%s338 + $0x1] sm:$0x1] %vm3296, %v3966
      %p3968 = scmp.lt.s32.totalorder %s20, 1
      %s3969 = scalar_select %p3968, %s20, 1
      %s3970 = smul.addr %s3969, 32
      %s3971 = smul.addr %s3970, 4
      %s3972 = scalar_lea.vmem %s5, %s3971
      %p3973 = scmp.lt.s32.totalorder %s20, 1
      %s3974 = scalar_select %p3973, %s20, 1
      %s3975 = smul.addr %s3974, 32
      %s3976 = smul.addr %s3975, 4
      %s3977 = scalar_lea.vmem %s6, %s3976
      %p3978 = scmp.lt.s32.totalorder %s20, 1
      %s3979 = scalar_select %p3978, %s20, 1
      %s3980 = smul.addr %s3979, 2
      %s3981 = scalar_lea.vmem %s7, %s3980
      %p3982 = scmp.lt.s32.totalorder %s20, 1
      %s3983 = scalar_select %p3982, %s20, 1
      %s3984 = smul.addr %s3983, 2
      %s3985 = scalar_lea.vmem %s8, %s3984
      // Predicated region
      $region41: #{residual_block_pallas.3} parent=39 // pred_check
        %p3986 = pneg %p148
      $region42: #{residual_block_pallas.3} parent=39 // pred_check_branch
        %3988 = sbr.rel (%p3986) target = $region44
      $region43: #{residual_block_pallas.3} parent=39 // pred_region
        _
      $region44: #{residual_block_pallas.3} parent=39 // pred_fallthru
        _
      // Predicated region
      $region45: #{residual_block_pallas.3} parent=39 // pred_check
        %p3989 = pneg %p174
      $region46: #{residual_block_pallas.3} parent=39 // pred_check_branch
        %3991 = sbr.rel (%p3989) target = $region48
      $region47: #{residual_block_pallas.3} parent=39 // pred_region
        _
      $region48: #{residual_block_pallas.3} parent=39 // pred_fallthru
        _
      // Predicated region
      $region49: #{residual_block_pallas.3} parent=39 // pred_check
        %p3992 = pneg %p200
      $region50: #{residual_block_pallas.3} parent=39 // pred_check_branch
        %3994 = sbr.rel (%p3992) target = $region52
      $region51: #{residual_block_pallas.3} parent=39 // pred_region
        _
      $region52: #{residual_block_pallas.3} parent=39 // pred_fallthru
        _
      // Predicated region
      $region53: #{residual_block_pallas.3} parent=39 // pred_check
        %p3995 = pneg %p226
      $region54: #{residual_block_pallas.3} parent=39 // pred_check_branch
        %3997 = sbr.rel (%p3995) target = $region56
      $region55: #{residual_block_pallas.3} parent=39 // pred_region
        _
      $region56: #{residual_block_pallas.3} parent=39 // pred_fallthru
        _
    $region40: #{residual_block_pallas.3} parent=5 // pred_fallthru
      _
    %p3998 = scmp.le.s32.totalorder 2, %s15
    // Predicated region
    $region57: #{residual_block_pallas.3} parent=5 // pred_check
      %p3999 = pneg %p3998
    $region58: #{residual_block_pallas.3} parent=5 // pred_check_branch
      %4001 = sbr.rel (%p3999) target = $region60
    $region59: #{residual_block_pallas.3} parent=5 // pred_region
      %s4002 = ssub.s32 %s15, 2
      // Predicated region
      $region61: #{residual_block_pallas.3} parent=59 // pred_check
        %p4003 = pneg %p154
      $region62: #{residual_block_pallas.3} parent=59 // pred_check_branch
        %4005 = sbr.rel (%p4003) target = $region64
      $region63: #{residual_block_pallas.3} parent=59 // pred_region
        %p4006 = scmp.lt.s32.totalorder %s21, 1
        %s4007 = scalar_select %p4006, %s21, 1
        %s4008 = smul.addr %s4007, 32
        %s4009 = smul.addr %s4008, 4
        %s4010 = scalar_lea.vmem %s5, %s4009
      $region64: #{residual_block_pallas.3} parent=59 // pred_fallthru
        _
      // Predicated region
      $region65: #{residual_block_pallas.3} parent=59 // pred_check
        %p4011 = pneg %p180
      $region66: #{residual_block_pallas.3} parent=59 // pred_check_branch
        %4013 = sbr.rel (%p4011) target = $region68
      $region67: #{residual_block_pallas.3} parent=59 // pred_region
        %p4014 = scmp.lt.s32.totalorder %s21, 1
        %s4015 = scalar_select %p4014, %s21, 1
        %s4016 = smul.addr %s4015, 32
        %s4017 = smul.addr %s4016, 4
        %s4018 = scalar_lea.vmem %s6, %s4017
      $region68: #{residual_block_pallas.3} parent=59 // pred_fallthru
        _
      // Predicated region
      $region69: #{residual_block_pallas.3} parent=59 // pred_check
        %p4019 = pneg %p206
      $region70: #{residual_block_pallas.3} parent=59 // pred_check_branch
        %4021 = sbr.rel (%p4019) target = $region72
      $region71: #{residual_block_pallas.3} parent=59 // pred_region
        %p4022 = scmp.lt.s32.totalorder %s21, 1
        %s4023 = scalar_select %p4022, %s21, 1
        %s4024 = smul.addr %s4023, 2
        %s4025 = scalar_lea.vmem %s7, %s4024
      $region72: #{residual_block_pallas.3} parent=59 // pred_fallthru
        _
      // Predicated region
      $region73: #{residual_block_pallas.3} parent=59 // pred_check
        %p4026 = pneg %p232
      $region74: #{residual_block_pallas.3} parent=59 // pred_check_branch
        %4028 = sbr.rel (%p4026) target = $region76
      $region75: #{residual_block_pallas.3} parent=59 // pred_region
        %p4029 = scmp.lt.s32.totalorder %s21, 1
        %s4030 = scalar_select %p4029, %s21, 1
        %s4031 = smul.addr %s4030, 2
        %s4032 = scalar_lea.vmem %s8, %s4031
      $region76: #{residual_block_pallas.3} parent=59 // pred_fallthru
        _
    $region60: #{residual_block_pallas.3} parent=5 // pred_fallthru
      _
  $region6: #{residual_block_pallas.3} parent=0 // loop_footer
    %s19 = sadd.s32 1, %s15
  $region7: #{residual_block_pallas.3} parent=0 // loop_footer_branch
    %14 = sbr.rel target = $region3
  $region8: #{residual_block_pallas.3} parent=0 // loop_exit
    _

</llo_original>
